<compile_context>
chip_gen: v7x
topology: tpu7x:2x2x1
jax: 0.10.0
libtpu: 0.0.40
codegen_flags: <defaults>
</compile_context>

<pallas_src>
import math
from functools import partial

import jax
import jax.numpy as jnp
from jax.experimental import pallas as pl
from jax.experimental.pallas import tpu as pltpu


def _round_up(x, m):
    return (x + m - 1) // m * m


# --------------------------------------------------------------------------------------
# Matmul with fused bias (+optional ReLU): used for ConvTranspose2d(k=2, s=2)
# --------------------------------------------------------------------------------------

def _mm_bias_kernel(a_ref, b_ref, sh_ref, o_ref, acc_ref, *, relu):
    k = pl.program_id(2)

    @pl.when(k == 0)
    def _():
        acc_ref[...] = jnp.zeros_like(acc_ref)

    acc_ref[...] += jnp.dot(a_ref[...], b_ref[...], preferred_element_type=jnp.float32)

    @pl.when(k == pl.num_programs(2) - 1)
    def _():
        y = acc_ref[...] + sh_ref[...]
        if relu:
            y = jnp.maximum(y, 0.0)
        o_ref[...] = y.astype(o_ref.dtype)


def matmul_bias(a16, b16, shift_row, relu=False, out_dtype=jnp.bfloat16):
    """out[m, n] = act(sum_k a[m,k] b[k,n] + shift[n]); bf16 operands, f32 accumulate."""
    M, K = a16.shape
    K2, Nn = b16.shape
    assert K == K2

    tm = min(_round_up(M, 16), 256)
    Mp = _round_up(M, tm)
    tk = min(_round_up(K, 128), 512)
    Kp = _round_up(K, tk)
    tn = min(_round_up(Nn, 128), 512)
    Np = _round_up(Nn, tn)

    if (Mp, Kp) != (M, K):
        a16 = jnp.zeros((Mp, Kp), jnp.bfloat16).at[:M, :K].set(a16)
    if (Kp, Np) != (K, Nn):
        b16 = jnp.zeros((Kp, Np), jnp.bfloat16).at[:K, :Nn].set(b16)
    if shift_row.shape != (1, Np):
        shift_row = jnp.zeros((1, Np), jnp.float32).at[:, :shift_row.shape[-1]].set(
            shift_row.astype(jnp.float32))

    out = pl.pallas_call(
        partial(_mm_bias_kernel, relu=relu),
        out_shape=jax.ShapeDtypeStruct((Mp, Np), out_dtype),
        grid_spec=pltpu.PrefetchScalarGridSpec(
            num_scalar_prefetch=0,
            grid=(Mp // tm, Np // tn, Kp // tk),
            in_specs=[
                pl.BlockSpec((tm, tk), lambda i, j, k: (i, k)),
                pl.BlockSpec((tk, tn), lambda i, j, k: (k, j)),
                pl.BlockSpec((1, tn), lambda i, j, k: (0, j)),
            ],
            out_specs=pl.BlockSpec((tm, tn), lambda i, j, k: (i, j)),
            scratch_shapes=[pltpu.VMEM((tm, tn), jnp.float32)],
        ),
        compiler_params=pltpu.CompilerParams(
            dimension_semantics=("parallel", "parallel", "arbitrary"),
            vmem_limit_bytes=32 * 1024 * 1024),
    )(a16, b16, shift_row)
    return out[:M, :Nn]


def conv_transpose_2x2_s2(x, bmat16, shift_row, cout):
    """x: (N, H, W, Cin) NHWC; bmat16: pre-packed (Kp, Np) bf16; shift_row: (1, Np) f32."""
    N, H, W, Cin = x.shape
    a16 = x.reshape(N * H * W, Cin).astype(jnp.bfloat16)
    if a16.shape[1] != bmat16.shape[0]:
        a16 = jnp.zeros((a16.shape[0], bmat16.shape[0]), jnp.bfloat16).at[:, :Cin].set(a16)
    y = matmul_bias(a16, bmat16, shift_row, relu=False, out_dtype=jnp.bfloat16)
    y = y[:, :4 * cout].reshape(N, H, W, 2, 2, cout)
    y = jnp.transpose(y, (0, 1, 3, 2, 4, 5)).reshape(N, 2 * H, 2 * W, cout)
    return y


# --------------------------------------------------------------------------------------
# Wide padded-row layout helpers
# --------------------------------------------------------------------------------------

def wide_geom(N, H, W, tm=256):
    Wq = _round_up(W + 2, 8)
    Hp = H + 2
    # TODO(synk): very wide images (Wq + 2 > TM) need an extra W-tiling level.
    assert Wq + 2 <= tm, "image too wide for single-row-tile fused conv"
    HB = _round_up(Wq + 2, 16)            # halo rows: >= Wq+2, multiple of 16, divides TM
    while tm % HB:
        HB += 16
    M_wide = N * Hp * Wq
    Mp = _round_up(M_wide, tm)
    return dict(Wq=Wq, Hp=Hp, M_wide=M_wide, Mp=Mp, TM=tm, HB=HB)


def to_wide(x, g):
    """(N, H, W, C) -> (Mp, Cp) bf16 wide layout (zero pad ring + lane pad + tail rows)."""
    N, H, W, C = x.shape
    Cp = _round_up(C, 128)
    xp = jnp.pad(x.astype(jnp.bfloat16),
                 ((0, 0), (1, 1), (1, g['Wq'] - W - 1), (0, Cp - C)))
    flat = xp.reshape(N * g['Hp'] * g['Wq'], Cp)
    if flat.shape[0] != g['Mp']:
        flat = jnp.pad(flat, ((0, g['Mp'] - flat.shape[0]), (0, 0)))
    return flat


def from_wide(h, g, N, H, W, C):
    x = h[:g['M_wide']].reshape(N, g['Hp'], g['Wq'], h.shape[1])
    return x[:, 1:H + 1, 1:W + 1, :C]


def wide_mask(N, H, W, g):
    """(Mp, 1) f32: 1 on interior pixels, 0 on the pad ring / lane-tail / tail rows."""
    r = jnp.arange(g['Mp'], dtype=jnp.int32)
    rr = r % (g['Hp'] * g['Wq'])
    i = rr // g['Wq']
    j = rr % g['Wq']
    valid = (r < g['M_wide']) & (i >= 1) & (i <= H) & (j >= 1) & (j <= W)
    return valid.astype(jnp.float32).reshape(g['Mp'], 1)


# --------------------------------------------------------------------------------------
# Fused-tap 3x3 conv (stride 1, pad 1) + bias + ReLU on the wide layout.
#   Multiple input streams (fused channel concat); kw taps folded along K.
# --------------------------------------------------------------------------------------

def _conv3x3_kernel(*refs, n_streams, base, wq, relu):
    xs = refs[:3 * n_streams]                   # (prev-halo, main, next-halo) per stream
    ws = refs[3 * n_streams:4 * n_streams]      # (3, 3*Cp, TN) per stream
    bias_ref = refs[4 * n_streams]
    mask_ref = refs[4 * n_streams + 1]
    o_ref = refs[4 * n_streams + 2]
    acc_ref = refs[4 * n_streams + 3]

    tm = o_ref.shape[0]
    first = True
    for s in range(n_streams):
        prev_r, main_r, nxt_r = xs[3 * s], xs[3 * s + 1], xs[3 * s + 2]
        x2 = jnp.concatenate([prev_r[...], main_r[...], nxt_r[...]], axis=0)   # bf16
        cp = x2.shape[1]
        w_ref = ws[s]
        for kh in range(3):
            off = base + kh * wq
            # fold the 3 kw taps along K -> one (TM, 3*Cp) @ (3*Cp, TN) MXU push per kh
            lhs = jnp.concatenate(
                [jax.lax.slice(x2, (off + kw, 0), (off + kw + tm, cp)) for kw in range(3)],
                axis=1)
            contrib = jnp.dot(lhs, w_ref[kh], preferred_element_type=jnp.float32)
            if first:
                acc_ref[...] = contrib
                first = False
            else:
                acc_ref[...] += contrib

    y = acc_ref[...] + bias_ref[...]
    if relu:
        y = jnp.maximum(y, 0.0)
    y = jnp.where(mask_ref[...] > 0.0, y, 0.0)      # re-zero pad ring (NaN-safe)
    o_ref[...] = y.astype(o_ref.dtype)


def conv3x3_fused(streams, weights, bias_row, mask, g, relu=True, out_dtype=jnp.bfloat16):
    """streams: list of (Mp, Cp_s) bf16 wide buffers; weights: list of (3, 3*Cp_s, Cop)."""
    TM, HB, Mp, Wq = g['TM'], g['HB'], g['Mp'], g['Wq']
    n_streams = len(streams)
    Cop = weights[0].shape[-1]
    TN = 256 if Cop % 256 == 0 else 128
    assert Cop % TN == 0

    for s in range(n_streams):
        assert streams[s].shape[0] == Mp
        assert weights[s].shape == (3, 3 * streams[s].shape[1], Cop)

    nb = TM // HB
    last_hb = Mp // HB - 1

    def prev_map(j, m):               # HB-row halo just before the tile (clamped at 0)
        return (jnp.maximum(m * nb - 1, 0), 0)

    def main_map(j, m):
        return (m, 0)

    def next_map(j, m):               # HB-row halo just after the tile (clamped at end)
        return (jnp.minimum((m + 1) * nb, last_hb), 0)

    in_specs, args = [], []
    for s in range(n_streams):
        cp = streams[s].shape[1]
        in_specs += [
            pl.BlockSpec((HB, cp), prev_map),
            pl.BlockSpec((TM, cp), main_map),
            pl.BlockSpec((HB, cp), next_map),
        ]
        args += [streams[s], streams[s], streams[s]]
    for s in range(n_streams):
        in_specs.append(pl.BlockSpec((3, weights[s].shape[1], TN), lambda j, m: (0, 0, j)))
        args.append(weights[s])
    in_specs.append(pl.BlockSpec((1, TN), lambda j, m: (0, j)))        # bias
    in_specs.append(pl.BlockSpec((TM, 1), lambda j, m: (m, 0)))        # validity mask
    args += [bias_row, mask]

    out = pl.pallas_call(
        partial(_conv3x3_kernel, n_streams=n_streams, base=HB - Wq - 1, wq=Wq, relu=relu),
        out_shape=jax.ShapeDtypeStruct((Mp, Cop), out_dtype),
        grid_spec=pltpu.PrefetchScalarGridSpec(
            num_scalar_prefetch=0,
            grid=(Cop // TN, Mp // TM),
            in_specs=in_specs,
            out_specs=pl.BlockSpec((TM, TN), lambda j, m: (m, j)),
            scratch_shapes=[pltpu.VMEM((TM, TN), jnp.float32)],
        ),
        compiler_params=pltpu.CompilerParams(
            dimension_semantics=("parallel", "parallel"),
            vmem_limit_bytes=32 * 1024 * 1024),
    )(*args)
    return out


# --------------------------------------------------------------------------------------
# Bilinear resize (align_corners=True) — plain-JAX glue
# --------------------------------------------------------------------------------------

def bilinear_resize_align_corners(x, oh, ow):
    # TODO(synk): gather/lerp glue stays in plain JAX (no MXU/VPU work to fuse at these sizes).
    N, H, W, C = x.shape
    if (oh, ow) == (H, W):
        return x
    dt = x.dtype

    def axis_coords(insz, outsz):
        if outsz == 1:
            src = jnp.zeros((outsz,), jnp.float32)
        else:
            src = jnp.arange(outsz, dtype=jnp.float32) * ((insz - 1) / (outsz - 1))
        i0 = jnp.clip(jnp.floor(src).astype(jnp.int32), 0, insz - 1)
        i1 = jnp.clip(i0 + 1, 0, insz - 1)
        frac = src - i0.astype(jnp.float32)
        return i0, i1, frac

    xf = x.astype(jnp.float32)
    h0, h1, hf = axis_coords(H, oh)
    w0, w1, wf = axis_coords(W, ow)
    rows = xf[:, h0] * (1.0 - hf)[None, :, None, None] + xf[:, h1] * hf[None, :, None, None]
    out = (rows[:, :, w0] * (1.0 - wf)[None, None, :, None]
           + rows[:, :, w1] * wf[None, None, :, None])
    return out.astype(dt)


# --------------------------------------------------------------------------------------
# Parameters (deterministic; mirrors PyTorch default uniform init scales)
# --------------------------------------------------------------------------------------

def _uniform(key, shape, bound):
    return jax.random.uniform(key, shape, jnp.float32, -bound, bound)


def init_unet_up(key, in_size, out_size, is_deconv=True):
    ks = jax.random.split(key, 6)
    p = {}
    if is_deconv:
        bu = 1.0 / math.sqrt(in_size * 2 * 2)
        p['up_w'] = _uniform(ks[0], (in_size, out_size, 2, 2), bu)    # torch CT2d layout
        p['up_b'] = _uniform(ks[1], (out_size,), bu)
    cin1 = out_size * 2
    b1 = 1.0 / math.sqrt(cin1 * 9)
    p['conv1_w'] = _uniform(ks[2], (out_size, cin1, 3, 3), b1)
    p['conv1_b'] = _uniform(ks[3], (out_size,), b1)
    b2 = 1.0 / math.sqrt(out_size * 9)
    p['conv2_w'] = _uniform(ks[4], (out_size, out_size, 3, 3), b2)
    p['conv2_b'] = _uniform(ks[5], (out_size,), b2)
    return p


def _pack_conv_w(w):
    """torch (Cout, Cin, 3, 3) -> (3, 3*Cp, Cop) bf16; rows ordered (kw, ci) per kh."""
    cout, cin = w.shape[:2]
    Cp = _round_up(cin, 128)
    Cop = _round_up(cout, 128)
    wt = jnp.transpose(w, (2, 3, 1, 0))                               # (kh, kw, ci, co)
    wp = jnp.zeros((3, 3, Cp, Cop), jnp.float32).at[:, :, :cin, :cout].set(wt)
    return wp.reshape(3, 3 * Cp, Cop).astype(jnp.bfloat16)


def _pack_bias(b, cop):
    return jnp.zeros((1, cop), jnp.float32).at[0, :b.shape[0]].set(b.astype(jnp.float32))


def prepare_params(params, in_size, out_size, is_deconv=True):
    """Hoist all weight repacking (cast / pad / transpose) out of the forward pass."""
    Cop = _round_up(out_size, 128)
    prep = {}
    if is_deconv:
        bmat = jnp.transpose(params['up_w'], (0, 2, 3, 1)).reshape(in_size, 4 * out_size)
        Kp = _round_up(in_size, 128)
        Np = _round_up(4 * out_size, 128)
        prep['up_bmat'] = jnp.zeros((Kp, Np), jnp.bfloat16).at[:in_size, :4 * out_size].set(
            bmat.astype(jnp.bfloat16))
        prep['up_shift'] = jnp.zeros((1, Np), jnp.float32).at[0, :4 * out_size].set(
            jnp.tile(params['up_b'].astype(jnp.float32), 4))
    prep['w1a'] = _pack_conv_w(params['conv1_w'][:, :out_size])       # skip-connection half
    prep['w1b'] = _pack_conv_w(params['conv1_w'][:, out_size:])       # upsampled half
    prep['b1'] = _pack_bias(params['conv1_b'], Cop)
    prep['w2'] = _pack_conv_w(params['conv2_w'])
    prep['b2'] = _pack_bias(params['conv2_b'], Cop)
    return prep


# --------------------------------------------------------------------------------------
# Forward pass (PyTorch NCHW interface)
# --------------------------------------------------------------------------------------

def unet_up_forward(prep, inputs1, inputs2, *, out_size, is_deconv=True):
    x1 = jnp.transpose(inputs1, (0, 2, 3, 1))          # NCHW -> NHWC
    x2 = jnp.transpose(inputs2, (0, 2, 3, 1))
    N, H, W, _ = x1.shape

    if is_deconv:
        up = conv_transpose_2x2_s2(x2, prep['up_bmat'], prep['up_shift'], out_size)
    else:
        # nn.UpsamplingBilinear2d(scale_factor=2) == bilinear, align_corners=True
        up = bilinear_resize_align_corners(x2, 2 * x2.shape[1], 2 * x2.shape[2])
    up = bilinear_resize_align_corners(up, H, W)        # identity when sizes already match

    g = wide_geom(N, H, W)
    mask = wide_mask(N, H, W, g)
    x1w = to_wide(x1, g)
    upw = to_wide(up, g)

    # conv1: torch.cat([x1, up], 1) fused as two input streams into one accumulator
    h1 = conv3x3_fused([x1w, upw], [prep['w1a'], prep['w1b']], prep['b1'], mask, g,
                       relu=True, out_dtype=jnp.bfloat16)
    # conv2 consumes conv1's wide-layout output directly (no crop / re-pad round trip)
    h2 = conv3x3_fused([h1], [prep['w2']], prep['b2'], mask, g,
                       relu=True, out_dtype=jnp.float32)

    out = from_wide(h2, g, N, H, W, out_size)
    return jnp.transpose(out, (0, 3, 1, 2))             # NHWC -> NCHW


# --------------------------------------------------------------------------------------
# Main
# --------------------------------------------------------------------------------------

if __name__ == "__main__":
    root = jax.random.PRNGKey(0)
    k_in1, k_in2, k_par = jax.random.split(root, 3)

    # unetUp(in_size=128, out_size=64, is_deconv=True): the channel-consistent config
    # (deconv output 64ch + skip 64ch -> unetConv2 expects 2*out_size = 128 channels).
    in_size, out_size = 128, 64
    N, H1, W1, H2, W2 = 2, 16, 16, 8, 8

    inputs1 = jax.random.normal(k_in1, (N, out_size, H1, W1), jnp.float32)   # skip (NCHW)
    inputs2 = jax.random.normal(k_in2, (N, in_size, H2, W2), jnp.float32)    # deep (NCHW)
    params = init_unet_up(k_par, in_size, out_size, is_deconv=True)
    prep = prepare_params(params, in_size, out_size, is_deconv=True)

    fwd = jax.jit(partial(unet_up_forward, out_size=out_size, is_deconv=True))
    out = jax.block_until_ready(fwd(prep, inputs1, inputs2))

    assert out.shape == (N, out_size, H1, W1), out.shape
    assert bool(jnp.all(jnp.isfinite(out)))
    print("KERNEL_OK")
</pallas_src>

<mosaic_0001>
module attributes {stable_mosaic.version = 11 : i64} {
  func.func @_mm_bias_kernel(%arg0: i32, %arg1: i32, %arg2: i32, %arg3: memref<128x128xbf16, #tpu.memory_space<vmem>>, %arg4: memref<128x256xbf16, #tpu.memory_space<vmem>>, %arg5: memref<1x256xf32, #tpu.memory_space<vmem>>, %arg6: memref<128x256xbf16, #tpu.memory_space<vmem>>, %arg7: memref<128x256xf32, #tpu.memory_space<vmem>>) attributes {dimension_semantics = [#tpu.dimension_semantics<parallel>, #tpu.dimension_semantics<parallel>, #tpu.dimension_semantics<arbitrary>], iteration_bounds = array<i64: 1, 1, 1>, scalar_prefetch = 0 : i64, scratch_operands = 1 : i64, tpu.core_type = #tpu.core_type<tc>, window_params = [{transform_indices = @transform_0, window_bounds = array<i64: 128, 128>}, {transform_indices = @transform_1, window_bounds = array<i64: 128, 256>}, {transform_indices = @transform_2, window_bounds = array<i64: 1, 256>}, {transform_indices = @transform_3, window_bounds = array<i64: 128, 256>}]} {
    %c0_i32 = arith.constant 0 : i32
    %0 = arith.cmpi eq, %arg2, %c0_i32 : i32
    %1 = arith.extui %0 : i1 to i32
    %c0_i32_0 = arith.constant 0 : i32
    %2 = arith.cmpi ne, %1, %c0_i32_0 : i32
    scf.if %2 {
      %cst_10 = arith.constant 0.000000e+00 : f32
      %12 = vector.broadcast %cst_10 : f32 to vector<128x256xf32>
      %c0_11 = arith.constant 0 : index
      %c0_12 = arith.constant 0 : index
      %13 = vector.load %arg7[%c0_11, %c0_12] : memref<128x256xf32, #tpu.memory_space<vmem>>, vector<128x256xf32>
      tpu.vector_store %arg7[%c0_11, %c0_12], %12 {strides = array<i32>} : memref<128x256xf32, #tpu.memory_space<vmem>>, vector<128x256xf32>,
    } else {
    }
    %c0 = arith.constant 0 : index
    %c0_1 = arith.constant 0 : index
    %3 = vector.load %arg7[%c0, %c0_1] : memref<128x256xf32, #tpu.memory_space<vmem>>, vector<128x256xf32>
    %c0_2 = arith.constant 0 : index
    %c0_3 = arith.constant 0 : index
    %4 = vector.load %arg3[%c0_2, %c0_3] : memref<128x128xbf16, #tpu.memory_space<vmem>>, vector<128x128xbf16>
    %c0_4 = arith.constant 0 : index
    %c0_5 = arith.constant 0 : index
    %5 = vector.load %arg4[%c0_4, %c0_5] : memref<128x256xbf16, #tpu.memory_space<vmem>>, vector<128x256xbf16>
    %cst = arith.constant dense<0.000000e+00> : vector<128x256xf32>
    %6 = tpu.matmul %4, %5, %cst {dimension_numbers = #tpu.dot_dimension_numbers<[1], [0], [0], [1], [0, 0, 1, 1], [], []>} : vector<128x128xbf16>, vector<128x256xbf16>, vector<128x256xf32> -> vector<128x256xf32>
    %7 = arith.addf %3, %6 : vector<128x256xf32>
    %c0_6 = arith.constant 0 : index
    %c0_7 = arith.constant 0 : index
    %8 = vector.load %arg7[%c0_6, %c0_7] : memref<128x256xf32, #tpu.memory_space<vmem>>, vector<128x256xf32>
    tpu.vector_store %arg7[%c0_6, %c0_7], %7 {strides = array<i32>} : memref<128x256xf32, #tpu.memory_space<vmem>>, vector<128x256xf32>,
    %c0_i32_8 = arith.constant 0 : i32
    %9 = arith.cmpi eq, %arg2, %c0_i32_8 : i32
    %10 = arith.extui %9 : i1 to i32
    %c0_i32_9 = arith.constant 0 : i32
    %11 = arith.cmpi ne, %10, %c0_i32_9 : i32
    scf.if %11 {
      %c0_10 = arith.constant 0 : index
      %c0_11 = arith.constant 0 : index
      %12 = vector.load %arg7[%c0_10, %c0_11] : memref<128x256xf32, #tpu.memory_space<vmem>>, vector<128x256xf32>
      %c0_12 = arith.constant 0 : index
      %c0_13 = arith.constant 0 : index
      %13 = vector.load %arg5[%c0_12, %c0_13] : memref<1x256xf32, #tpu.memory_space<vmem>>, vector<1x256xf32>
      %14 = vector.broadcast %13 : vector<1x256xf32> to vector<128x256xf32>
      %15 = arith.addf %12, %14 : vector<128x256xf32>
      %16 = arith.truncf %15 : vector<128x256xf32> to vector<128x256xbf16>
      %c0_14 = arith.constant 0 : index
      %c0_15 = arith.constant 0 : index
      %17 = vector.load %arg6[%c0_14, %c0_15] : memref<128x256xbf16, #tpu.memory_space<vmem>>, vector<128x256xbf16>
      tpu.vector_store %arg6[%c0_14, %c0_15], %16 {strides = array<i32>} : memref<128x256xbf16, #tpu.memory_space<vmem>>, vector<128x256xbf16>,
    } else {
    }
    return
  }
  func.func @transform_0(%arg0: i32, %arg1: i32, %arg2: i32) -> (i32, i32) {
    %c0_i32 = arith.constant 0 : i32
    return %arg0, %arg2 : i32, i32
  }
  func.func @transform_1(%arg0: i32, %arg1: i32, %arg2: i32) -> (i32, i32) {
    %c0_i32 = arith.constant 0 : i32
    return %arg2, %arg1 : i32, i32
  }
  func.func @transform_2(%arg0: i32, %arg1: i32, %arg2: i32) -> (i32, i32) {
    %c0_i32 = arith.constant 0 : i32
    %c0_i32_0 = arith.constant 0 : i32
    return %c0_i32, %arg1 : i32, i32
  }
  func.func @transform_3(%arg0: i32, %arg1: i32, %arg2: i32) -> (i32, i32) {
    %c0_i32 = arith.constant 0 : i32
    return %arg0, %arg1 : i32, i32
  }
}

module attributes {stable_mosaic.version = 11 : i64} {
  func.func @_conv3x3_kernel(%arg0: i32, %arg1: i32, %arg2: memref<32x128xbf16, #tpu.memory_space<vmem>>, %arg3: memref<256x128xbf16, #tpu.memory_space<vmem>>, %arg4: memref<32x128xbf16, #tpu.memory_space<vmem>>, %arg5: memref<32x128xbf16, #tpu.memory_space<vmem>>, %arg6: memref<256x128xbf16, #tpu.memory_space<vmem>>, %arg7: memref<32x128xbf16, #tpu.memory_space<vmem>>, %arg8: memref<3x384x128xbf16, #tpu.memory_space<vmem>>, %arg9: memref<3x384x128xbf16, #tpu.memory_space<vmem>>, %arg10: memref<1x128xf32, #tpu.memory_space<vmem>>, %arg11: memref<256x1xf32, #tpu.memory_space<vmem>>, %arg12: memref<256x128xbf16, #tpu.memory_space<vmem>>, %arg13: memref<256x128xf32, #tpu.memory_space<vmem>>) attributes {dimension_semantics = [#tpu.dimension_semantics<parallel>, #tpu.dimension_semantics<parallel>], iteration_bounds = array<i64: 1, 4>, scalar_prefetch = 0 : i64, scratch_operands = 1 : i64, tpu.core_type = #tpu.core_type<tc>, window_params = [{transform_indices = @transform_0, window_bounds = array<i64: 32, 128>}, {transform_indices = @transform_1, window_bounds = array<i64: 256, 128>}, {transform_indices = @transform_2, window_bounds = array<i64: 32, 128>}, {transform_indices = @transform_3, window_bounds = array<i64: 32, 128>}, {transform_indices = @transform_4, window_bounds = array<i64: 256, 128>}, {transform_indices = @transform_5, window_bounds = array<i64: 32, 128>}, {transform_indices = @transform_6, window_bounds = array<i64: 3, 384, 128>}, {transform_indices = @transform_7, window_bounds = array<i64: 3, 384, 128>}, {transform_indices = @transform_8, window_bounds = array<i64: 1, 128>}, {transform_indices = @transform_9, window_bounds = array<i64: 256, 1>}, {transform_indices = @transform_10, window_bounds = array<i64: 256, 128>}]} {
    %c0 = arith.constant 0 : index
    %c0_0 = arith.constant 0 : index
    %0 = vector.load %arg2[%c0, %c0_0] : memref<32x128xbf16, #tpu.memory_space<vmem>>, vector<32x128xbf16>
    %c0_1 = arith.constant 0 : index
    %c0_2 = arith.constant 0 : index
    %1 = vector.load %arg3[%c0_1, %c0_2] : memref<256x128xbf16, #tpu.memory_space<vmem>>, vector<256x128xbf16>
    %c0_3 = arith.constant 0 : index
    %c0_4 = arith.constant 0 : index
    %2 = vector.load %arg4[%c0_3, %c0_4] : memref<32x128xbf16, #tpu.memory_space<vmem>>, vector<32x128xbf16>
    %3 = tpu.concatenate %0, %1, %2 in 0 : vector<32x128xbf16>, vector<256x128xbf16>, vector<32x128xbf16> -> vector<320x128xbf16>
    %4 = vector.extract_strided_slice %3 {offsets = [7, 0], sizes = [256, 128], strides = [1, 1]} : vector<320x128xbf16> to vector<256x128xbf16>
    %5 = vector.extract_strided_slice %3 {offsets = [8, 0], sizes = [256, 128], strides = [1, 1]} : vector<320x128xbf16> to vector<256x128xbf16>
    %6 = vector.extract_strided_slice %3 {offsets = [9, 0], sizes = [256, 128], strides = [1, 1]} : vector<320x128xbf16> to vector<256x128xbf16>
    %7 = tpu.concatenate %4, %5, %6 in 1 : vector<256x128xbf16>, vector<256x128xbf16>, vector<256x128xbf16> -> vector<256x384xbf16>
    %c0_5 = arith.constant 0 : index
    %c0_6 = arith.constant 0 : index
    %c0_7 = arith.constant 0 : index
    %8 = vector.load %arg8[%c0_5, %c0_6, %c0_7] : memref<3x384x128xbf16, #tpu.memory_space<vmem>>, vector<1x384x128xbf16>
    %9 = vector.shape_cast %8 : vector<1x384x128xbf16> to vector<384x128xbf16>
    %cst = arith.constant dense<0.000000e+00> : vector<256x128xf32>
    %10 = tpu.matmul %7, %9, %cst {dimension_numbers = #tpu.dot_dimension_numbers<[1], [0], [0], [1], [0, 0, 1, 1], [], []>} : vector<256x384xbf16>, vector<384x128xbf16>, vector<256x128xf32> -> vector<256x128xf32>
    %c0_8 = arith.constant 0 : index
    %c0_9 = arith.constant 0 : index
    %11 = vector.load %arg13[%c0_8, %c0_9] : memref<256x128xf32, #tpu.memory_space<vmem>>, vector<256x128xf32>
    tpu.vector_store %arg13[%c0_8, %c0_9], %10 {strides = array<i32>} : memref<256x128xf32, #tpu.memory_space<vmem>>, vector<256x128xf32>,
    %12 = vector.extract_strided_slice %3 {offsets = [31, 0], sizes = [256, 128], strides = [1, 1]} : vector<320x128xbf16> to vector<256x128xbf16>
    %13 = vector.extract_strided_slice %3 {offsets = [32, 0], sizes = [256, 128], strides = [1, 1]} : vector<320x128xbf16> to vector<256x128xbf16>
    %14 = vector.extract_strided_slice %3 {offsets = [33, 0], sizes = [256, 128], strides = [1, 1]} : vector<320x128xbf16> to vector<256x128xbf16>
    %15 = tpu.concatenate %12, %13, %14 in 1 : vector<256x128xbf16>, vector<256x128xbf16>, vector<256x128xbf16> -> vector<256x384xbf16>
    %c1 = arith.constant 1 : index
    %c0_10 = arith.constant 0 : index
    %c0_11 = arith.constant 0 : index
    %16 = vector.load %arg8[%c1, %c0_10, %c0_11] : memref<3x384x128xbf16, #tpu.memory_space<vmem>>, vector<1x384x128xbf16>
    %17 = vector.shape_cast %16 : vector<1x384x128xbf16> to vector<384x128xbf16>
    %cst_12 = arith.constant dense<0.000000e+00> : vector<256x128xf32>
    %18 = tpu.matmul %15, %17, %cst_12 {dimension_numbers = #tpu.dot_dimension_numbers<[1], [0], [0], [1], [0, 0, 1, 1], [], []>} : vector<256x384xbf16>, vector<384x128xbf16>, vector<256x128xf32> -> vector<256x128xf32>
    %c0_13 = arith.constant 0 : index
    %c0_14 = arith.constant 0 : index
    %19 = vector.load %arg13[%c0_13, %c0_14] : memref<256x128xf32, #tpu.memory_space<vmem>>, vector<256x128xf32>
    %20 = arith.addf %19, %18 : vector<256x128xf32>
    %c0_15 = arith.constant 0 : index
    %c0_16 = arith.constant 0 : index
    %21 = vector.load %arg13[%c0_15, %c0_16] : memref<256x128xf32, #tpu.memory_space<vmem>>, vector<256x128xf32>
    tpu.vector_store %arg13[%c0_15, %c0_16], %20 {strides = array<i32>} : memref<256x128xf32, #tpu.memory_space<vmem>>, vector<256x128xf32>,
    %22 = vector.extract_strided_slice %3 {offsets = [55, 0], sizes = [256, 128], strides = [1, 1]} : vector<320x128xbf16> to vector<256x128xbf16>
    %23 = vector.extract_strided_slice %3 {offsets = [56, 0], sizes = [256, 128], strides = [1, 1]} : vector<320x128xbf16> to vector<256x128xbf16>
    %24 = vector.extract_strided_slice %3 {offsets = [57, 0], sizes = [256, 128], strides = [1, 1]} : vector<320x128xbf16> to vector<256x128xbf16>
    %25 = tpu.concatenate %22, %23, %24 in 1 : vector<256x128xbf16>, vector<256x128xbf16>, vector<256x128xbf16> -> vector<256x384xbf16>
    %c2 = arith.constant 2 : index
    %c0_17 = arith.constant 0 : index
    %c0_18 = arith.constant 0 : index
    %26 = vector.load %arg8[%c2, %c0_17, %c0_18] : memref<3x384x128xbf16, #tpu.memory_space<vmem>>, vector<1x384x128xbf16>
    %27 = vector.shape_cast %26 : vector<1x384x128xbf16> to vector<384x128xbf16>
    %cst_19 = arith.constant dense<0.000000e+00> : vector<256x128xf32>
    %28 = tpu.matmul %25, %27, %cst_19 {dimension_numbers = #tpu.dot_dimension_numbers<[1], [0], [0], [1], [0, 0, 1, 1], [], []>} : vector<256x384xbf16>, vector<384x128xbf16>, vector<256x128xf32> -> vector<256x128xf32>
    %c0_20 = arith.constant 0 : index
    %c0_21 = arith.constant 0 : index
    %29 = vector.load %arg13[%c0_20, %c0_21] : memref<256x128xf32, #tpu.memory_space<vmem>>, vector<256x128xf32>
    %30 = arith.addf %29, %28 : vector<256x128xf32>
    %c0_22 = arith.constant 0 : index
    %c0_23 = arith.constant 0 : index
    %31 = vector.load %arg13[%c0_22, %c0_23] : memref<256x128xf32, #tpu.memory_space<vmem>>, vector<256x128xf32>
    tpu.vector_store %arg13[%c0_22, %c0_23], %30 {strides = array<i32>} : memref<256x128xf32, #tpu.memory_space<vmem>>, vector<256x128xf32>,
    %c0_24 = arith.constant 0 : index
    %c0_25 = arith.constant 0 : index
    %32 = vector.load %arg5[%c0_24, %c0_25] : memref<32x128xbf16, #tpu.memory_space<vmem>>, vector<32x128xbf16>
    %c0_26 = arith.constant 0 : index
    %c0_27 = arith.constant 0 : index
    %33 = vector.load %arg6[%c0_26, %c0_27] : memref<256x128xbf16, #tpu.memory_space<vmem>>, vector<256x128xbf16>
    %c0_28 = arith.constant 0 : index
    %c0_29 = arith.constant 0 : index
    %34 = vector.load %arg7[%c0_28, %c0_29] : memref<32x128xbf16, #tpu.memory_space<vmem>>, vector<32x128xbf16>
    %35 = tpu.concatenate %32, %33, %34 in 0 : vector<32x128xbf16>, vector<256x128xbf16>, vector<32x128xbf16> -> vector<320x128xbf16>
    %36 = vector.extract_strided_slice %35 {offsets = [7, 0], sizes = [256, 128], strides = [1, 1]} : vector<320x128xbf16> to vector<256x128xbf16>
    %37 = vector.extract_strided_slice %35 {offsets = [8, 0], sizes = [256, 128], strides = [1, 1]} : vector<320x128xbf16> to vector<256x128xbf16>
    %38 = vector.extract_strided_slice %35 {offsets = [9, 0], sizes = [256, 128], strides = [1, 1]} : vector<320x128xbf16> to vector<256x128xbf16>
    %39 = tpu.concatenate %36, %37, %38 in 1 : vector<256x128xbf16>, vector<256x128xbf16>, vector<256x128xbf16> -> vector<256x384xbf16>
    %c0_30 = arith.constant 0 : index
    %c0_31 = arith.constant 0 : index
    %c0_32 = arith.constant 0 : index
    %40 = vector.load %arg9[%c0_30, %c0_31, %c0_32] : memref<3x384x128xbf16, #tpu.memory_space<vmem>>, vector<1x384x128xbf16>
    %41 = vector.shape_cast %40 : vector<1x384x128xbf16> to vector<384x128xbf16>
    %cst_33 = arith.constant dense<0.000000e+00> : vector<256x128xf32>
    %42 = tpu.matmul %39, %41, %cst_33 {dimension_numbers = #tpu.dot_dimension_numbers<[1], [0], [0], [1], [0, 0, 1, 1], [], []>} : vector<256x384xbf16>, vector<384x128xbf16>, vector<256x128xf32> -> vector<256x128xf32>
    %c0_34 = arith.constant 0 : index
    %c0_35 = arith.constant 0 : index
    %43 = vector.load %arg13[%c0_34, %c0_35] : memref<256x128xf32, #tpu.memory_space<vmem>>, vector<256x128xf32>
    %44 = arith.addf %43, %42 : vector<256x128xf32>
    %c0_36 = arith.constant 0 : index
    %c0_37 = arith.constant 0 : index
    %45 = vector.load %arg13[%c0_36, %c0_37] : memref<256x128xf32, #tpu.memory_space<vmem>>, vector<256x128xf32>
    tpu.vector_store %arg13[%c0_36, %c0_37], %44 {strides = array<i32>} : memref<256x128xf32, #tpu.memory_space<vmem>>, vector<256x128xf32>,
    %46 = vector.extract_strided_slice %35 {offsets = [31, 0], sizes = [256, 128], strides = [1, 1]} : vector<320x128xbf16> to vector<256x128xbf16>
    %47 = vector.extract_strided_slice %35 {offsets = [32, 0], sizes = [256, 128], strides = [1, 1]} : vector<320x128xbf16> to vector<256x128xbf16>
    %48 = vector.extract_strided_slice %35 {offsets = [33, 0], sizes = [256, 128], strides = [1, 1]} : vector<320x128xbf16> to vector<256x128xbf16>
    %49 = tpu.concatenate %46, %47, %48 in 1 : vector<256x128xbf16>, vector<256x128xbf16>, vector<256x128xbf16> -> vector<256x384xbf16>
    %c1_38 = arith.constant 1 : index
    %c0_39 = arith.constant 0 : index
    %c0_40 = arith.constant 0 : index
    %50 = vector.load %arg9[%c1_38, %c0_39, %c0_40] : memref<3x384x128xbf16, #tpu.memory_space<vmem>>, vector<1x384x128xbf16>
    %51 = vector.shape_cast %50 : vector<1x384x128xbf16> to vector<384x128xbf16>
    %cst_41 = arith.constant dense<0.000000e+00> : vector<256x128xf32>
    %52 = tpu.matmul %49, %51, %cst_41 {dimension_numbers = #tpu.dot_dimension_numbers<[1], [0], [0], [1], [0, 0, 1, 1], [], []>} : vector<256x384xbf16>, vector<384x128xbf16>, vector<256x128xf32> -> vector<256x128xf32>
    %c0_42 = arith.constant 0 : index
    %c0_43 = arith.constant 0 : index
    %53 = vector.load %arg13[%c0_42, %c0_43] : memref<256x128xf32, #tpu.memory_space<vmem>>, vector<256x128xf32>
    %54 = arith.addf %53, %52 : vector<256x128xf32>
    %c0_44 = arith.constant 0 : index
    %c0_45 = arith.constant 0 : index
    %55 = vector.load %arg13[%c0_44, %c0_45] : memref<256x128xf32, #tpu.memory_space<vmem>>, vector<256x128xf32>
    tpu.vector_store %arg13[%c0_44, %c0_45], %54 {strides = array<i32>} : memref<256x128xf32, #tpu.memory_space<vmem>>, vector<256x128xf32>,
    %56 = vector.extract_strided_slice %35 {offsets = [55, 0], sizes = [256, 128], strides = [1, 1]} : vector<320x128xbf16> to vector<256x128xbf16>
    %57 = vector.extract_strided_slice %35 {offsets = [56, 0], sizes = [256, 128], strides = [1, 1]} : vector<320x128xbf16> to vector<256x128xbf16>
    %58 = vector.extract_strided_slice %35 {offsets = [57, 0], sizes = [256, 128], strides = [1, 1]} : vector<320x128xbf16> to vector<256x128xbf16>
    %59 = tpu.concatenate %56, %57, %58 in 1 : vector<256x128xbf16>, vector<256x128xbf16>, vector<256x128xbf16> -> vector<256x384xbf16>
    %c2_46 = arith.constant 2 : index
    %c0_47 = arith.constant 0 : index
    %c0_48 = arith.constant 0 : index
    %60 = vector.load %arg9[%c2_46, %c0_47, %c0_48] : memref<3x384x128xbf16, #tpu.memory_space<vmem>>, vector<1x384x128xbf16>
    %61 = vector.shape_cast %60 : vector<1x384x128xbf16> to vector<384x128xbf16>
    %cst_49 = arith.constant dense<0.000000e+00> : vector<256x128xf32>
    %62 = tpu.matmul %59, %61, %cst_49 {dimension_numbers = #tpu.dot_dimension_numbers<[1], [0], [0], [1], [0, 0, 1, 1], [], []>} : vector<256x384xbf16>, vector<384x128xbf16>, vector<256x128xf32> -> vector<256x128xf32>
    %c0_50 = arith.constant 0 : index
    %c0_51 = arith.constant 0 : index
    %63 = vector.load %arg13[%c0_50, %c0_51] : memref<256x128xf32, #tpu.memory_space<vmem>>, vector<256x128xf32>
    %64 = arith.addf %63, %62 : vector<256x128xf32>
    %c0_52 = arith.constant 0 : index
    %c0_53 = arith.constant 0 : index
    %65 = vector.load %arg13[%c0_52, %c0_53] : memref<256x128xf32, #tpu.memory_space<vmem>>, vector<256x128xf32>
    tpu.vector_store %arg13[%c0_52, %c0_53], %64 {strides = array<i32>} : memref<256x128xf32, #tpu.memory_space<vmem>>, vector<256x128xf32>,
    %c0_54 = arith.constant 0 : index
    %c0_55 = arith.constant 0 : index
    %66 = vector.load %arg13[%c0_54, %c0_55] : memref<256x128xf32, #tpu.memory_space<vmem>>, vector<256x128xf32>
    %c0_56 = arith.constant 0 : index
    %c0_57 = arith.constant 0 : index
    %67 = vector.load %arg10[%c0_56, %c0_57] : memref<1x128xf32, #tpu.memory_space<vmem>>, vector<1x128xf32>
    %68 = vector.broadcast %67 : vector<1x128xf32> to vector<256x128xf32>
    %69 = arith.addf %66, %68 : vector<256x128xf32>
    %cst_58 = arith.constant 0.000000e+00 : f32
    %70 = vector.broadcast %cst_58 : f32 to vector<256x128xf32>
    %71 = arith.maximumf %69, %70 : vector<256x128xf32>
    %c0_59 = arith.constant 0 : index
    %c0_60 = arith.constant 0 : index
    %72 = vector.load %arg11[%c0_59, %c0_60] : memref<256x1xf32, #tpu.memory_space<vmem>>, vector<256x1xf32>
    %cst_61 = arith.constant 0.000000e+00 : f32
    %73 = vector.broadcast %cst_61 : f32 to vector<256x1xf32>
    %74 = arith.cmpf ogt, %72, %73 : vector<256x1xf32>
    %cst_62 = arith.constant 0.000000e+00 : f32
    %75 = vector.shape_cast %74 : vector<256x1xi1> to vector<256x1xi1>
    %76 = vector.broadcast %75 : vector<256x1xi1> to vector<256x128xi1>
    %77 = vector.broadcast %cst_62 : f32 to vector<256x128xf32>
    %78 = arith.select %76, %71, %77 : vector<256x128xi1>, vector<256x128xf32>
    %79 = arith.truncf %78 : vector<256x128xf32> to vector<256x128xbf16>
    %c0_63 = arith.constant 0 : index
    %c0_64 = arith.constant 0 : index
    %80 = vector.load %arg12[%c0_63, %c0_64] : memref<256x128xbf16, #tpu.memory_space<vmem>>, vector<256x128xbf16>
    tpu.vector_store %arg12[%c0_63, %c0_64], %79 {strides = array<i32>} : memref<256x128xbf16, #tpu.memory_space<vmem>>, vector<256x128xbf16>,
    return
  }
  func.func @transform_0(%arg0: i32, %arg1: i32) -> (i32, i32) {
    %c8_i32 = arith.constant 8 : i32
    %0 = arith.muli %arg1, %c8_i32 : i32
    %c1_i32 = arith.constant 1 : i32
    %1 = arith.subi %0, %c1_i32 : i32
    %c0_i32 = arith.constant 0 : i32
    %2 = arith.maxsi %1, %c0_i32 : i32
    %c0_i32_0 = arith.constant 0 : i32
    %c0_i32_1 = arith.constant 0 : i32
    return %2, %c0_i32_0 : i32, i32
  }
  func.func @transform_1(%arg0: i32, %arg1: i32) -> (i32, i32) {
    %c0_i32 = arith.constant 0 : i32
    %c0_i32_0 = arith.constant 0 : i32
    return %arg1, %c0_i32 : i32, i32
  }
  func.func @transform_2(%arg0: i32, %arg1: i32) -> (i32, i32) {
    %c1_i32 = arith.constant 1 : i32
    %0 = arith.addi %arg1, %c1_i32 : i32
    %c8_i32 = arith.constant 8 : i32
    %1 = arith.muli %0, %c8_i32 : i32
    %c31_i32 = arith.constant 31 : i32
    %2 = arith.minsi %1, %c31_i32 : i32
    %c0_i32 = arith.constant 0 : i32
    %c0_i32_0 = arith.constant 0 : i32
    return %2, %c0_i32 : i32, i32
  }
  func.func @transform_3(%arg0: i32, %arg1: i32) -> (i32, i32) {
    %c8_i32 = arith.constant 8 : i32
    %0 = arith.muli %arg1, %c8_i32 : i32
    %c1_i32 = arith.constant 1 : i32
    %1 = arith.subi %0, %c1_i32 : i32
    %c0_i32 = arith.constant 0 : i32
    %2 = arith.maxsi %1, %c0_i32 : i32
    %c0_i32_0 = arith.constant 0 : i32
    %c0_i32_1 = arith.constant 0 : i32
    return %2, %c0_i32_0 : i32, i32
  }
  func.func @transform_4(%arg0: i32, %arg1: i32) -> (i32, i32) {
    %c0_i32 = arith.constant 0 : i32
    %c0_i32_0 = arith.constant 0 : i32
    return %arg1, %c0_i32 : i32, i32
  }
  func.func @transform_5(%arg0: i32, %arg1: i32) -> (i32, i32) {
    %c1_i32 = arith.constant 1 : i32
    %0 = arith.addi %arg1, %c1_i32 : i32
    %c8_i32 = arith.constant 8 : i32
    %1 = arith.muli %0, %c8_i32 : i32
    %c31_i32 = arith.constant 31 : i32
    %2 = arith.minsi %1, %c31_i32 : i32
    %c0_i32 = arith.constant 0 : i32
    %c0_i32_0 = arith.constant 0 : i32
    return %2, %c0_i32 : i32, i32
  }
  func.func @transform_6(%arg0: i32, %arg1: i32) -> (i32, i32, i32) {
    %c0_i32 = arith.constant 0 : i32
    %c0_i32_0 = arith.constant 0 : i32
    %c0_i32_1 = arith.constant 0 : i32
    return %c0_i32, %c0_i32_0, %arg0 : i32, i32, i32
  }
  func.func @transform_7(%arg0: i32, %arg1: i32) -> (i32, i32, i32) {
    %c0_i32 = arith.constant 0 : i32
    %c0_i32_0 = arith.constant 0 : i32
    %c0_i32_1 = arith.constant 0 : i32
    return %c0_i32, %c0_i32_0, %arg0 : i32, i32, i32
  }
  func.func @transform_8(%arg0: i32, %arg1: i32) -> (i32, i32) {
    %c0_i32 = arith.constant 0 : i32
    %c0_i32_0 = arith.constant 0 : i32
    return %c0_i32, %arg0 : i32, i32
  }
  func.func @transform_9(%arg0: i32, %arg1: i32) -> (i32, i32) {
    %c0_i32 = arith.constant 0 : i32
    %c0_i32_0 = arith.constant 0 : i32
    return %arg1, %c0_i32 : i32, i32
  }
  func.func @transform_10(%arg0: i32, %arg1: i32) -> (i32, i32) {
    %c0_i32 = arith.constant 0 : i32
    return %arg1, %arg0 : i32, i32
  }
}

module attributes {stable_mosaic.version = 11 : i64} {
  func.func @_conv3x3_kernel(%arg0: i32, %arg1: i32, %arg2: memref<32x128xbf16, #tpu.memory_space<vmem>>, %arg3: memref<256x128xbf16, #tpu.memory_space<vmem>>, %arg4: memref<32x128xbf16, #tpu.memory_space<vmem>>, %arg5: memref<3x384x128xbf16, #tpu.memory_space<vmem>>, %arg6: memref<1x128xf32, #tpu.memory_space<vmem>>, %arg7: memref<256x1xf32, #tpu.memory_space<vmem>>, %arg8: memref<256x128xf32, #tpu.memory_space<vmem>>, %arg9: memref<256x128xf32, #tpu.memory_space<vmem>>) attributes {dimension_semantics = [#tpu.dimension_semantics<parallel>, #tpu.dimension_semantics<parallel>], iteration_bounds = array<i64: 1, 4>, scalar_prefetch = 0 : i64, scratch_operands = 1 : i64, tpu.core_type = #tpu.core_type<tc>, window_params = [{transform_indices = @transform_0, window_bounds = array<i64: 32, 128>}, {transform_indices = @transform_1, window_bounds = array<i64: 256, 128>}, {transform_indices = @transform_2, window_bounds = array<i64: 32, 128>}, {transform_indices = @transform_3, window_bounds = array<i64: 3, 384, 128>}, {transform_indices = @transform_4, window_bounds = array<i64: 1, 128>}, {transform_indices = @transform_5, window_bounds = array<i64: 256, 1>}, {transform_indices = @transform_6, window_bounds = array<i64: 256, 128>}]} {
    %c0 = arith.constant 0 : index
    %c0_0 = arith.constant 0 : index
    %0 = vector.load %arg2[%c0, %c0_0] : memref<32x128xbf16, #tpu.memory_space<vmem>>, vector<32x128xbf16>
    %c0_1 = arith.constant 0 : index
    %c0_2 = arith.constant 0 : index
    %1 = vector.load %arg3[%c0_1, %c0_2] : memref<256x128xbf16, #tpu.memory_space<vmem>>, vector<256x128xbf16>
    %c0_3 = arith.constant 0 : index
    %c0_4 = arith.constant 0 : index
    %2 = vector.load %arg4[%c0_3, %c0_4] : memref<32x128xbf16, #tpu.memory_space<vmem>>, vector<32x128xbf16>
    %3 = tpu.concatenate %0, %1, %2 in 0 : vector<32x128xbf16>, vector<256x128xbf16>, vector<32x128xbf16> -> vector<320x128xbf16>
    %4 = vector.extract_strided_slice %3 {offsets = [7, 0], sizes = [256, 128], strides = [1, 1]} : vector<320x128xbf16> to vector<256x128xbf16>
    %5 = vector.extract_strided_slice %3 {offsets = [8, 0], sizes = [256, 128], strides = [1, 1]} : vector<320x128xbf16> to vector<256x128xbf16>
    %6 = vector.extract_strided_slice %3 {offsets = [9, 0], sizes = [256, 128], strides = [1, 1]} : vector<320x128xbf16> to vector<256x128xbf16>
    %7 = tpu.concatenate %4, %5, %6 in 1 : vector<256x128xbf16>, vector<256x128xbf16>, vector<256x128xbf16> -> vector<256x384xbf16>
    %c0_5 = arith.constant 0 : index
    %c0_6 = arith.constant 0 : index
    %c0_7 = arith.constant 0 : index
    %8 = vector.load %arg5[%c0_5, %c0_6, %c0_7] : memref<3x384x128xbf16, #tpu.memory_space<vmem>>, vector<1x384x128xbf16>
    %9 = vector.shape_cast %8 : vector<1x384x128xbf16> to vector<384x128xbf16>
    %cst = arith.constant dense<0.000000e+00> : vector<256x128xf32>
    %10 = tpu.matmul %7, %9, %cst {dimension_numbers = #tpu.dot_dimension_numbers<[1], [0], [0], [1], [0, 0, 1, 1], [], []>} : vector<256x384xbf16>, vector<384x128xbf16>, vector<256x128xf32> -> vector<256x128xf32>
    %c0_8 = arith.constant 0 : index
    %c0_9 = arith.constant 0 : index
    %11 = vector.load %arg9[%c0_8, %c0_9] : memref<256x128xf32, #tpu.memory_space<vmem>>, vector<256x128xf32>
    tpu.vector_store %arg9[%c0_8, %c0_9], %10 {strides = array<i32>} : memref<256x128xf32, #tpu.memory_space<vmem>>, vector<256x128xf32>,
    %12 = vector.extract_strided_slice %3 {offsets = [31, 0], sizes = [256, 128], strides = [1, 1]} : vector<320x128xbf16> to vector<256x128xbf16>
    %13 = vector.extract_strided_slice %3 {offsets = [32, 0], sizes = [256, 128], strides = [1, 1]} : vector<320x128xbf16> to vector<256x128xbf16>
    %14 = vector.extract_strided_slice %3 {offsets = [33, 0], sizes = [256, 128], strides = [1, 1]} : vector<320x128xbf16> to vector<256x128xbf16>
    %15 = tpu.concatenate %12, %13, %14 in 1 : vector<256x128xbf16>, vector<256x128xbf16>, vector<256x128xbf16> -> vector<256x384xbf16>
    %c1 = arith.constant 1 : index
    %c0_10 = arith.constant 0 : index
    %c0_11 = arith.constant 0 : index
    %16 = vector.load %arg5[%c1, %c0_10, %c0_11] : memref<3x384x128xbf16, #tpu.memory_space<vmem>>, vector<1x384x128xbf16>
    %17 = vector.shape_cast %16 : vector<1x384x128xbf16> to vector<384x128xbf16>
    %cst_12 = arith.constant dense<0.000000e+00> : vector<256x128xf32>
    %18 = tpu.matmul %15, %17, %cst_12 {dimension_numbers = #tpu.dot_dimension_numbers<[1], [0], [0], [1], [0, 0, 1, 1], [], []>} : vector<256x384xbf16>, vector<384x128xbf16>, vector<256x128xf32> -> vector<256x128xf32>
    %c0_13 = arith.constant 0 : index
    %c0_14 = arith.constant 0 : index
    %19 = vector.load %arg9[%c0_13, %c0_14] : memref<256x128xf32, #tpu.memory_space<vmem>>, vector<256x128xf32>
    %20 = arith.addf %19, %18 : vector<256x128xf32>
    %c0_15 = arith.constant 0 : index
    %c0_16 = arith.constant 0 : index
    %21 = vector.load %arg9[%c0_15, %c0_16] : memref<256x128xf32, #tpu.memory_space<vmem>>, vector<256x128xf32>
    tpu.vector_store %arg9[%c0_15, %c0_16], %20 {strides = array<i32>} : memref<256x128xf32, #tpu.memory_space<vmem>>, vector<256x128xf32>,
    %22 = vector.extract_strided_slice %3 {offsets = [55, 0], sizes = [256, 128], strides = [1, 1]} : vector<320x128xbf16> to vector<256x128xbf16>
    %23 = vector.extract_strided_slice %3 {offsets = [56, 0], sizes = [256, 128], strides = [1, 1]} : vector<320x128xbf16> to vector<256x128xbf16>
    %24 = vector.extract_strided_slice %3 {offsets = [57, 0], sizes = [256, 128], strides = [1, 1]} : vector<320x128xbf16> to vector<256x128xbf16>
    %25 = tpu.concatenate %22, %23, %24 in 1 : vector<256x128xbf16>, vector<256x128xbf16>, vector<256x128xbf16> -> vector<256x384xbf16>
    %c2 = arith.constant 2 : index
    %c0_17 = arith.constant 0 : index
    %c0_18 = arith.constant 0 : index
    %26 = vector.load %arg5[%c2, %c0_17, %c0_18] : memref<3x384x128xbf16, #tpu.memory_space<vmem>>, vector<1x384x128xbf16>
    %27 = vector.shape_cast %26 : vector<1x384x128xbf16> to vector<384x128xbf16>
    %cst_19 = arith.constant dense<0.000000e+00> : vector<256x128xf32>
    %28 = tpu.matmul %25, %27, %cst_19 {dimension_numbers = #tpu.dot_dimension_numbers<[1], [0], [0], [1], [0, 0, 1, 1], [], []>} : vector<256x384xbf16>, vector<384x128xbf16>, vector<256x128xf32> -> vector<256x128xf32>
    %c0_20 = arith.constant 0 : index
    %c0_21 = arith.constant 0 : index
    %29 = vector.load %arg9[%c0_20, %c0_21] : memref<256x128xf32, #tpu.memory_space<vmem>>, vector<256x128xf32>
    %30 = arith.addf %29, %28 : vector<256x128xf32>
    %c0_22 = arith.constant 0 : index
    %c0_23 = arith.constant 0 : index
    %31 = vector.load %arg9[%c0_22, %c0_23] : memref<256x128xf32, #tpu.memory_space<vmem>>, vector<256x128xf32>
    tpu.vector_store %arg9[%c0_22, %c0_23], %30 {strides = array<i32>} : memref<256x128xf32, #tpu.memory_space<vmem>>, vector<256x128xf32>,
    %c0_24 = arith.constant 0 : index
    %c0_25 = arith.constant 0 : index
    %32 = vector.load %arg9[%c0_24, %c0_25] : memref<256x128xf32, #tpu.memory_space<vmem>>, vector<256x128xf32>
    %c0_26 = arith.constant 0 : index
    %c0_27 = arith.constant 0 : index
    %33 = vector.load %arg6[%c0_26, %c0_27] : memref<1x128xf32, #tpu.memory_space<vmem>>, vector<1x128xf32>
    %34 = vector.broadcast %33 : vector<1x128xf32> to vector<256x128xf32>
    %35 = arith.addf %32, %34 : vector<256x128xf32>
    %cst_28 = arith.constant 0.000000e+00 : f32
    %36 = vector.broadcast %cst_28 : f32 to vector<256x128xf32>
    %37 = arith.maximumf %35, %36 : vector<256x128xf32>
    %c0_29 = arith.constant 0 : index
    %c0_30 = arith.constant 0 : index
    %38 = vector.load %arg7[%c0_29, %c0_30] : memref<256x1xf32, #tpu.memory_space<vmem>>, vector<256x1xf32>
    %cst_31 = arith.constant 0.000000e+00 : f32
    %39 = vector.broadcast %cst_31 : f32 to vector<256x1xf32>
    %40 = arith.cmpf ogt, %38, %39 : vector<256x1xf32>
    %cst_32 = arith.constant 0.000000e+00 : f32
    %41 = vector.shape_cast %40 : vector<256x1xi1> to vector<256x1xi1>
    %42 = vector.broadcast %41 : vector<256x1xi1> to vector<256x128xi1>
    %43 = vector.broadcast %cst_32 : f32 to vector<256x128xf32>
    %44 = arith.select %42, %37, %43 : vector<256x128xi1>, vector<256x128xf32>
    %c0_33 = arith.constant 0 : index
    %c0_34 = arith.constant 0 : index
    %45 = vector.load %arg8[%c0_33, %c0_34] : memref<256x128xf32, #tpu.memory_space<vmem>>, vector<256x128xf32>
    tpu.vector_store %arg8[%c0_33, %c0_34], %44 {strides = array<i32>} : memref<256x128xf32, #tpu.memory_space<vmem>>, vector<256x128xf32>,
    return
  }
  func.func @transform_0(%arg0: i32, %arg1: i32) -> (i32, i32) {
    %c8_i32 = arith.constant 8 : i32
    %0 = arith.muli %arg1, %c8_i32 : i32
    %c1_i32 = arith.constant 1 : i32
    %1 = arith.subi %0, %c1_i32 : i32
    %c0_i32 = arith.constant 0 : i32
    %2 = arith.maxsi %1, %c0_i32 : i32
    %c0_i32_0 = arith.constant 0 : i32
    %c0_i32_1 = arith.constant 0 : i32
    return %2, %c0_i32_0 : i32, i32
  }
  func.func @transform_1(%arg0: i32, %arg1: i32) -> (i32, i32) {
    %c0_i32 = arith.constant 0 : i32
    %c0_i32_0 = arith.constant 0 : i32
    return %arg1, %c0_i32 : i32, i32
  }
  func.func @transform_2(%arg0: i32, %arg1: i32) -> (i32, i32) {
    %c1_i32 = arith.constant 1 : i32
    %0 = arith.addi %arg1, %c1_i32 : i32
    %c8_i32 = arith.constant 8 : i32
    %1 = arith.muli %0, %c8_i32 : i32
    %c31_i32 = arith.constant 31 : i32
    %2 = arith.minsi %1, %c31_i32 : i32
    %c0_i32 = arith.constant 0 : i32
    %c0_i32_0 = arith.constant 0 : i32
    return %2, %c0_i32 : i32, i32
  }
  func.func @transform_3(%arg0: i32, %arg1: i32) -> (i32, i32, i32) {
    %c0_i32 = arith.constant 0 : i32
    %c0_i32_0 = arith.constant 0 : i32
    %c0_i32_1 = arith.constant 0 : i32
    return %c0_i32, %c0_i32_0, %arg0 : i32, i32, i32
  }
  func.func @transform_4(%arg0: i32, %arg1: i32) -> (i32, i32) {
    %c0_i32 = arith.constant 0 : i32
    %c0_i32_0 = arith.constant 0 : i32
    return %c0_i32, %arg0 : i32, i32
  }
  func.func @transform_5(%arg0: i32, %arg1: i32) -> (i32, i32) {
    %c0_i32 = arith.constant 0 : i32
    %c0_i32_0 = arith.constant 0 : i32
    return %arg1, %c0_i32 : i32, i32
  }
  func.func @transform_6(%arg0: i32, %arg1: i32) -> (i32, i32) {
    %c0_i32 = arith.constant 0 : i32
    return %arg1, %arg0 : i32, i32
  }
}

</mosaic_0001>

<llo_original>
// kernel: unet_up_forward.3
$region0: #{unet_up_forward.3}
  #allocation0 [shape = 'u32[]', space=smem, size = 0x4, offset = 0x4, fixed_abs, tag = 'smem constant byte address 0x4 - core index']
  #allocation1 [shape = 'u32[144,128]{1,0:T(1,128)}', space=vmem, size = 0x12000, scoped, tag = 'internal scratch']
  #allocation2 [shape = 'f32[128,256]{1,0:T(8,128)}', space=vmem, size = 0x20000, scoped, tag = 'scratch operand']
  %s0 = inlined_call_operand.vmem [shape: bf16[128,128], index: 0, kind: input, shape index: {}]
  %s1 = inlined_call_operand.vmem [shape: bf16[128,256], index: 1, kind: input, shape index: {}]
  %s2 = inlined_call_operand.vmem [shape: f32[1,256], index: 2, kind: input, shape index: {}]
  %s3 = inlined_call_operand.vmem [shape: bf16[128,256], index: 3, kind: output, shape index: {}]
  %s4 = sld [smem:[#allocation0]]
  $region30: #{unet_up_forward.3} parent=0
    _
  %s6 = ssub.s32 1, %s4
  %s7 = scalar_select 0, %s6, %s4
  // Predicated region
  $region2: #{unet_up_forward.3} parent=0 // pred_check
    _
  $region3: #{unet_up_forward.3} parent=0 // pred_check_branch
    %9 = sbr.rel (0) target = $region5
  $region4: #{unet_up_forward.3} parent=0 // pred_region
    _
  $region5: #{unet_up_forward.3} parent=0 // pred_fallthru
    _
  // Predicated region
  $region6: #{unet_up_forward.3} parent=0 // pred_check
    _
  $region7: #{unet_up_forward.3} parent=0 // pred_check_branch
    %11 = sbr.rel (0) target = $region9
  $region8: #{unet_up_forward.3} parent=0 // pred_region
    _
  $region9: #{unet_up_forward.3} parent=0 // pred_fallthru
    _
  // Predicated region
  $region10: #{unet_up_forward.3} parent=0 // pred_check
    _
  $region11: #{unet_up_forward.3} parent=0 // pred_check_branch
    %13 = sbr.rel (0) target = $region13
  $region12: #{unet_up_forward.3} parent=0 // pred_region
    _
  $region13: #{unet_up_forward.3} parent=0 // pred_fallthru
    _
  %p15 = scmp.eq.s32.totalorder 0, 0
  // Predicated region
  $region14: #{unet_up_forward.3} parent=0 // pred_check
    %p16 = pneg %p15
  $region15: #{unet_up_forward.3} parent=0 // pred_check_branch
    %18 = sbr.rel (%p16) target = $region17
  $region16: #{unet_up_forward.3} parent=0 // pred_region
    %19 = vst [vmem:[#allocation2] sm:$0xff] 0.0
    %20 = vst [vmem:[#allocation2 + $0x8] sm:$0xff] 0.0
    %21 = vst [vmem:[#allocation2 + $0x10] sm:$0xff] 0.0
    %22 = vst [vmem:[#allocation2 + $0x18] sm:$0xff] 0.0
    %23 = vst [vmem:[#allocation2 + $0x20] sm:$0xff] 0.0
    %24 = vst [vmem:[#allocation2 + $0x28] sm:$0xff] 0.0
    %25 = vst [vmem:[#allocation2 + $0x30] sm:$0xff] 0.0
    %26 = vst [vmem:[#allocation2 + $0x38] sm:$0xff] 0.0
    %27 = vst [vmem:[#allocation2 + $0x40] sm:$0xff] 0.0
    %28 = vst [vmem:[#allocation2 + $0x48] sm:$0xff] 0.0
    %29 = vst [vmem:[#allocation2 + $0x50] sm:$0xff] 0.0
    %30 = vst [vmem:[#allocation2 + $0x58] sm:$0xff] 0.0
    %31 = vst [vmem:[#allocation2 + $0x60] sm:$0xff] 0.0
    %32 = vst [vmem:[#allocation2 + $0x68] sm:$0xff] 0.0
    %33 = vst [vmem:[#allocation2 + $0x70] sm:$0xff] 0.0
    %34 = vst [vmem:[#allocation2 + $0x78] sm:$0xff] 0.0
    %35 = vst [vmem:[#allocation2 + $0x80] sm:$0xff] 0.0
    %36 = vst [vmem:[#allocation2 + $0x88] sm:$0xff] 0.0
    %37 = vst [vmem:[#allocation2 + $0x90] sm:$0xff] 0.0
    %38 = vst [vmem:[#allocation2 + $0x98] sm:$0xff] 0.0
    %39 = vst [vmem:[#allocation2 + $0xa0] sm:$0xff] 0.0
    %40 = vst [vmem:[#allocation2 + $0xa8] sm:$0xff] 0.0
    %41 = vst [vmem:[#allocation2 + $0xb0] sm:$0xff] 0.0
    %42 = vst [vmem:[#allocation2 + $0xb8] sm:$0xff] 0.0
    %43 = vst [vmem:[#allocation2 + $0xc0] sm:$0xff] 0.0
    %44 = vst [vmem:[#allocation2 + $0xc8] sm:$0xff] 0.0
    %45 = vst [vmem:[#allocation2 + $0xd0] sm:$0xff] 0.0
    %46 = vst [vmem:[#allocation2 + $0xd8] sm:$0xff] 0.0
    %47 = vst [vmem:[#allocation2 + $0xe0] sm:$0xff] 0.0
    %48 = vst [vmem:[#allocation2 + $0xe8] sm:$0xff] 0.0
    %49 = vst [vmem:[#allocation2 + $0xf0] sm:$0xff] 0.0
    %50 = vst [vmem:[#allocation2 + $0xf8] sm:$0xff] 0.0
  $region17: #{unet_up_forward.3} parent=0 // pred_fallthru
    _
  %v51 = vld [vmem:[#allocation2] sm:$0xff]
  %v52 = vld [vmem:[#allocation2 + $0x8] sm:$0xff]
  %v53 = vld [vmem:[#allocation2 + $0x10] sm:$0xff]
  %v54 = vld [vmem:[#allocation2 + $0x18] sm:$0xff]
  %v55 = vld [vmem:[#allocation2 + $0x20] sm:$0xff]
  %v56 = vld [vmem:[#allocation2 + $0x28] sm:$0xff]
  %v57 = vld [vmem:[#allocation2 + $0x30] sm:$0xff]
  %v58 = vld [vmem:[#allocation2 + $0x38] sm:$0xff]
  %v59 = vld [vmem:[#allocation2 + $0x40] sm:$0xff]
  %v60 = vld [vmem:[#allocation2 + $0x48] sm:$0xff]
  %v61 = vld [vmem:[#allocation2 + $0x50] sm:$0xff]
  %v62 = vld [vmem:[#allocation2 + $0x58] sm:$0xff]
  %v63 = vld [vmem:[#allocation2 + $0x60] sm:$0xff]
  %v64 = vld [vmem:[#allocation2 + $0x68] sm:$0xff]
  %v65 = vld [vmem:[#allocation2 + $0x70] sm:$0xff]
  %v66 = vld [vmem:[#allocation2 + $0x78] sm:$0xff]
  %v67 = vld [vmem:[#allocation2 + $0x80] sm:$0xff]
  %v68 = vld [vmem:[#allocation2 + $0x88] sm:$0xff]
  %v69 = vld [vmem:[#allocation2 + $0x90] sm:$0xff]
  %v70 = vld [vmem:[#allocation2 + $0x98] sm:$0xff]
  %v71 = vld [vmem:[#allocation2 + $0xa0] sm:$0xff]
  %v72 = vld [vmem:[#allocation2 + $0xa8] sm:$0xff]
  %v73 = vld [vmem:[#allocation2 + $0xb0] sm:$0xff]
  %v74 = vld [vmem:[#allocation2 + $0xb8] sm:$0xff]
  %v75 = vld [vmem:[#allocation2 + $0xc0] sm:$0xff]
  %v76 = vld [vmem:[#allocation2 + $0xc8] sm:$0xff]
  %v77 = vld [vmem:[#allocation2 + $0xd0] sm:$0xff]
  %v78 = vld [vmem:[#allocation2 + $0xd8] sm:$0xff]
  %v79 = vld [vmem:[#allocation2 + $0xe0] sm:$0xff]
  %v80 = vld [vmem:[#allocation2 + $0xe8] sm:$0xff]
  %v81 = vld [vmem:[#allocation2 + $0xf0] sm:$0xff]
  %v82 = vld [vmem:[#allocation2 + $0xf8] sm:$0xff]
  %v83 = vld [vmem:[%s0] sm:$0xf]
  %v84 = vld [vmem:[%s0 + $0x4] sm:$0xf]
  %v85 = vld [vmem:[%s0 + $0x8] sm:$0xf]
  %v86 = vld [vmem:[%s0 + $0xc] sm:$0xf]
  %v87 = vld [vmem:[%s0 + $0x10] sm:$0xf]
  %v88 = vld [vmem:[%s0 + $0x14] sm:$0xf]
  %v89 = vld [vmem:[%s0 + $0x18] sm:$0xf]
  %v90 = vld [vmem:[%s0 + $0x1c] sm:$0xf]
  %v91 = vld [vmem:[%s0 + $0x20] sm:$0xf]
  %v92 = vld [vmem:[%s0 + $0x24] sm:$0xf]
  %v93 = vld [vmem:[%s0 + $0x28] sm:$0xf]
  %v94 = vld [vmem:[%s0 + $0x2c] sm:$0xf]
  %v95 = vld [vmem:[%s0 + $0x30] sm:$0xf]
  %v96 = vld [vmem:[%s0 + $0x34] sm:$0xf]
  %v97 = vld [vmem:[%s0 + $0x38] sm:$0xf]
  %v98 = vld [vmem:[%s0 + $0x3c] sm:$0xf]
  %v99 = vld [vmem:[%s1] sm:$0xff]
  %v100 = vld [vmem:[%s1 + $0x8] sm:$0xff]
  %v101 = vld [vmem:[%s1 + $0x10] sm:$0xff]
  %v102 = vld [vmem:[%s1 + $0x18] sm:$0xff]
  %v103 = vld [vmem:[%s1 + $0x20] sm:$0xff]
  %v104 = vld [vmem:[%s1 + $0x28] sm:$0xff]
  %v105 = vld [vmem:[%s1 + $0x30] sm:$0xff]
  %v106 = vld [vmem:[%s1 + $0x38] sm:$0xff]
  %v107 = vld [vmem:[%s1 + $0x40] sm:$0xff]
  %v108 = vld [vmem:[%s1 + $0x48] sm:$0xff]
  %v109 = vld [vmem:[%s1 + $0x50] sm:$0xff]
  %v110 = vld [vmem:[%s1 + $0x58] sm:$0xff]
  %v111 = vld [vmem:[%s1 + $0x60] sm:$0xff]
  %v112 = vld [vmem:[%s1 + $0x68] sm:$0xff]
  %v113 = vld [vmem:[%s1 + $0x70] sm:$0xff]
  %v114 = vld [vmem:[%s1 + $0x78] sm:$0xff]
  %v131 = vunpack.c.l.b16 %v83
  %v132 = vunpack.c.l.b16 %v84
  %v133 = vunpack.c.l.b16 %v85
  %v134 = vunpack.c.l.b16 %v86
  %v135 = vunpack.c.l.b16 %v87
  %v136 = vunpack.c.l.b16 %v88
  %v137 = vunpack.c.l.b16 %v89
  %v138 = vunpack.c.l.b16 %v90
  %v139 = vunpack.c.l.b16 %v91
  %v140 = vunpack.c.l.b16 %v92
  %v141 = vunpack.c.l.b16 %v93
  %v142 = vunpack.c.l.b16 %v94
  %v143 = vunpack.c.l.b16 %v95
  %v144 = vunpack.c.l.b16 %v96
  %v145 = vunpack.c.l.b16 %v97
  %v146 = vunpack.c.l.b16 %v98
  %v147 = vpack.c.b16 %v132, %v131
  %v148 = vpack.c.b16 %v134, %v133
  %v149 = vpack.c.b16 %v136, %v135
  %v150 = vpack.c.b16 %v138, %v137
  %v151 = vpack.c.b16 %v140, %v139
  %v152 = vpack.c.b16 %v142, %v141
  %v153 = vpack.c.b16 %v144, %v143
  %v154 = vpack.c.b16 %v146, %v145
  %v179 = vunpack.c.l.b16 %v99
  %v180 = vunpack.c.h.b16 %v99
  %v181 = vunpack.c.l.b16 %v100
  %v182 = vunpack.c.h.b16 %v100
  %v183 = vunpack.c.l.b16 %v101
  %v184 = vunpack.c.h.b16 %v101
  %v185 = vunpack.c.l.b16 %v102
  %v186 = vunpack.c.h.b16 %v102
  %v187 = vunpack.c.l.b16 %v103
  %v188 = vunpack.c.h.b16 %v103
  %v189 = vunpack.c.l.b16 %v104
  %v190 = vunpack.c.h.b16 %v104
  %v191 = vunpack.c.l.b16 %v105
  %v192 = vunpack.c.h.b16 %v105
  %v193 = vunpack.c.l.b16 %v106
  %v194 = vunpack.c.h.b16 %v106
  %v195 = vunpack.c.l.b16 %v107
  %v196 = vunpack.c.h.b16 %v107
  %v197 = vunpack.c.l.b16 %v108
  %v198 = vunpack.c.h.b16 %v108
  %v199 = vunpack.c.l.b16 %v109
  %v200 = vunpack.c.h.b16 %v109
  %v201 = vunpack.c.l.b16 %v110
  %v202 = vunpack.c.h.b16 %v110
  %v203 = vunpack.c.l.b16 %v111
  %v204 = vunpack.c.h.b16 %v111
  %v205 = vunpack.c.l.b16 %v112
  %v206 = vunpack.c.h.b16 %v112
  %v207 = vunpack.c.l.b16 %v113
  %v208 = vunpack.c.h.b16 %v113
  %v209 = vunpack.c.l.b16 %v114
  %v210 = vunpack.c.h.b16 %v114
  %v211 = vpack.c.b16 %v181, %v179
  %v212 = vpack.c.b16 %v182, %v180
  %v213 = vpack.c.b16 %v185, %v183
  %v214 = vpack.c.b16 %v186, %v184
  %v215 = vpack.c.b16 %v189, %v187
  %v216 = vpack.c.b16 %v190, %v188
  %v217 = vpack.c.b16 %v193, %v191
  %v218 = vpack.c.b16 %v194, %v192
  %v219 = vpack.c.b16 %v197, %v195
  %v220 = vpack.c.b16 %v198, %v196
  %v221 = vpack.c.b16 %v201, %v199
  %v222 = vpack.c.b16 %v202, %v200
  %v223 = vpack.c.b16 %v205, %v203
  %v224 = vpack.c.b16 %v206, %v204
  %v225 = vpack.c.b16 %v209, %v207
  %v226 = vpack.c.b16 %v210, %v208
  %243 = vmatprep.subr.bf16.mxu0 %v212
  %244 = vmatpush1.bf16.msra.mxu0 %v211
  %245 = vmatprep.subr.bf16.mxu0 %v214
  %246 = vmatpush1.bf16.msra.mxu0 %v213
  %247 = vmatprep.subr.bf16.mxu0 %v216
  %248 = vmatpush1.bf16.msra.mxu0 %v215
  %249 = vmatprep.subr.bf16.mxu0 %v218
  %250 = vmatpush1.bf16.msra.mxu0 %v217
  %251 = vmatprep.subr.bf16.mxu0 %v220
  %252 = vmatpush1.bf16.msra.mxu0 %v219
  %253 = vmatprep.subr.bf16.mxu0 %v222
  %254 = vmatpush1.bf16.msra.mxu0 %v221
  %255 = vmatprep.subr.bf16.mxu0 %v224
  %256 = vmatpush1.bf16.msra.mxu0 %v223
  %257 = vmatprep.subr.bf16.mxu0 %v226
  %258 = vmatpush1.bf16.msra.mxu0 %v225
  %259 = vmatprep.subr.bf16.mxu0 0
  %260 = vmatpush1.bf16.msra.mxu0 0
  %261 = vmatprep.subr.bf16.mxu0 0
  %262 = vmatpush1.bf16.msra.mxu0 0
  %263 = vmatprep.subr.bf16.mxu0 0
  %264 = vmatpush1.bf16.msra.mxu0 0
  %265 = vmatprep.subr.bf16.mxu0 0
  %266 = vmatpush1.bf16.msra.mxu0 0
  %267 = vmatprep.subr.bf16.mxu0 0
  %268 = vmatpush1.bf16.msra.mxu0 0
  %269 = vmatprep.subr.bf16.mxu0 0
  %270 = vmatpush1.bf16.msra.mxu0 0
  %271 = vmatprep.subr.bf16.mxu0 0
  %272 = vmatpush1.bf16.msra.mxu0 0
  %273 = vmatprep.subr.bf16.mxu0 0
  %274 = vmatpush1.bf16.msra.mxu0 0
  %275 = vmatprep.mubr.bf16.mxu0 0
  %276 = vmatmul.mubr.bf16.gmra.mrb[0].mxu0 %v147
  %v277 = vpop.f32.mrb[0].mxu0
  %v278 = vadd.f32 0.0, %v277
  %v279 = vpop.f32.mrb[0].mxu0
  %v280 = vadd.f32 0.0, %v279
  %v281 = vpop.f32.mrb[0].mxu0
  %v282 = vadd.f32 0.0, %v281
  %v283 = vpop.f32.mrb[0].mxu0
  %v284 = vadd.f32 0.0, %v283
  %285 = vmatprep.mubr.bf16.mxu0 0
  %286 = vmatmul.mubr.bf16.gmra.mrb[0].mxu0 %v148
  %v287 = vpop.f32.mrb[0].mxu0
  %v288 = vadd.f32 0.0, %v287
  %v289 = vpop.f32.mrb[0].mxu0
  %v290 = vadd.f32 0.0, %v289
  %v291 = vpop.f32.mrb[0].mxu0
  %v292 = vadd.f32 0.0, %v291
  %v293 = vpop.f32.mrb[0].mxu0
  %v294 = vadd.f32 0.0, %v293
  %295 = vmatprep.mubr.bf16.mxu0 0
  %296 = vmatmul.mubr.bf16.gmra.mrb[0].mxu0 %v149
  %v297 = vpop.f32.mrb[0].mxu0
  %v298 = vadd.f32 0.0, %v297
  %v299 = vpop.f32.mrb[0].mxu0
  %v300 = vadd.f32 0.0, %v299
  %v301 = vpop.f32.mrb[0].mxu0
  %v302 = vadd.f32 0.0, %v301
  %v303 = vpop.f32.mrb[0].mxu0
  %v304 = vadd.f32 0.0, %v303
  %305 = vmatprep.mubr.bf16.mxu0 0
  %306 = vmatmul.mubr.bf16.gmra.mrb[0].mxu0 %v150
  %v307 = vpop.f32.mrb[0].mxu0
  %v308 = vadd.f32 0.0, %v307
  %v309 = vpop.f32.mrb[0].mxu0
  %v310 = vadd.f32 0.0, %v309
  %v311 = vpop.f32.mrb[0].mxu0
  %v312 = vadd.f32 0.0, %v311
  %v313 = vpop.f32.mrb[0].mxu0
  %v314 = vadd.f32 0.0, %v313
  %315 = vmatprep.mubr.bf16.mxu0 0
  %316 = vmatmul.mubr.bf16.gmra.mrb[0].mxu0 %v151
  %v317 = vpop.f32.mrb[0].mxu0
  %v318 = vadd.f32 0.0, %v317
  %v319 = vpop.f32.mrb[0].mxu0
  %v320 = vadd.f32 0.0, %v319
  %v321 = vpop.f32.mrb[0].mxu0
  %v322 = vadd.f32 0.0, %v321
  %v323 = vpop.f32.mrb[0].mxu0
  %v324 = vadd.f32 0.0, %v323
  %325 = vmatprep.mubr.bf16.mxu0 0
  %326 = vmatmul.mubr.bf16.gmra.mrb[0].mxu0 %v152
  %v327 = vpop.f32.mrb[0].mxu0
  %v328 = vadd.f32 0.0, %v327
  %v329 = vpop.f32.mrb[0].mxu0
  %v330 = vadd.f32 0.0, %v329
  %v331 = vpop.f32.mrb[0].mxu0
  %v332 = vadd.f32 0.0, %v331
  %v333 = vpop.f32.mrb[0].mxu0
  %v334 = vadd.f32 0.0, %v333
  %335 = vmatprep.mubr.bf16.mxu0 0
  %336 = vmatmul.mubr.bf16.gmra.mrb[0].mxu0 %v153
  %v337 = vpop.f32.mrb[0].mxu0
  %v338 = vadd.f32 0.0, %v337
  %v339 = vpop.f32.mrb[0].mxu0
  %v340 = vadd.f32 0.0, %v339
  %v341 = vpop.f32.mrb[0].mxu0
  %v342 = vadd.f32 0.0, %v341
  %v343 = vpop.f32.mrb[0].mxu0
  %v344 = vadd.f32 0.0, %v343
  %345 = vmatprep.mubr.bf16.mxu0 0
  %346 = vmatmul.mubr.bf16.gmra.mrb[0].mxu0 %v154
  %v347 = vpop.f32.mrb[0].mxu0
  %v348 = vadd.f32 0.0, %v347
  %v349 = vpop.f32.mrb[0].mxu0
  %v350 = vadd.f32 0.0, %v349
  %v351 = vpop.f32.mrb[0].mxu0
  %v352 = vadd.f32 0.0, %v351
  %v353 = vpop.f32.mrb[0].mxu0
  %v354 = vadd.f32 0.0, %v353
  %355 = vdwg.mxu0
  %v356 = vadd.f32 %v51, %v278
  %v357 = vadd.f32 %v52, %v280
  %v358 = vadd.f32 %v53, %v282
  %v359 = vadd.f32 %v54, %v284
  %v360 = vadd.f32 %v55, %v288
  %v361 = vadd.f32 %v56, %v290
  %v362 = vadd.f32 %v57, %v292
  %v363 = vadd.f32 %v58, %v294
  %v364 = vadd.f32 %v59, %v298
  %v365 = vadd.f32 %v60, %v300
  %v366 = vadd.f32 %v61, %v302
  %v367 = vadd.f32 %v62, %v304
  %v368 = vadd.f32 %v63, %v308
  %v369 = vadd.f32 %v64, %v310
  %v370 = vadd.f32 %v65, %v312
  %v371 = vadd.f32 %v66, %v314
  %v372 = vadd.f32 %v67, %v318
  %v373 = vadd.f32 %v68, %v320
  %v374 = vadd.f32 %v69, %v322
  %v375 = vadd.f32 %v70, %v324
  %v376 = vadd.f32 %v71, %v328
  %v377 = vadd.f32 %v72, %v330
  %v378 = vadd.f32 %v73, %v332
  %v379 = vadd.f32 %v74, %v334
  %v380 = vadd.f32 %v75, %v338
  %v381 = vadd.f32 %v76, %v340
  %v382 = vadd.f32 %v77, %v342
  %v383 = vadd.f32 %v78, %v344
  %v384 = vadd.f32 %v79, %v348
  %v385 = vadd.f32 %v80, %v350
  %v386 = vadd.f32 %v81, %v352
  %v387 = vadd.f32 %v82, %v354
  %388 = vst [vmem:[#allocation2] sm:$0xff] %v356
  %389 = vst [vmem:[#allocation2 + $0x8] sm:$0xff] %v357
  %390 = vst [vmem:[#allocation2 + $0x10] sm:$0xff] %v358
  %391 = vst [vmem:[#allocation2 + $0x18] sm:$0xff] %v359
  %392 = vst [vmem:[#allocation2 + $0x20] sm:$0xff] %v360
  %393 = vst [vmem:[#allocation2 + $0x28] sm:$0xff] %v361
  %394 = vst [vmem:[#allocation2 + $0x30] sm:$0xff] %v362
  %395 = vst [vmem:[#allocation2 + $0x38] sm:$0xff] %v363
  %396 = vst [vmem:[#allocation2 + $0x40] sm:$0xff] %v364
  %397 = vst [vmem:[#allocation2 + $0x48] sm:$0xff] %v365
  %398 = vst [vmem:[#allocation2 + $0x50] sm:$0xff] %v366
  %399 = vst [vmem:[#allocation2 + $0x58] sm:$0xff] %v367
  %400 = vst [vmem:[#allocation2 + $0x60] sm:$0xff] %v368
  %401 = vst [vmem:[#allocation2 + $0x68] sm:$0xff] %v369
  %402 = vst [vmem:[#allocation2 + $0x70] sm:$0xff] %v370
  %403 = vst [vmem:[#allocation2 + $0x78] sm:$0xff] %v371
  %404 = vst [vmem:[#allocation2 + $0x80] sm:$0xff] %v372
  %405 = vst [vmem:[#allocation2 + $0x88] sm:$0xff] %v373
  %406 = vst [vmem:[#allocation2 + $0x90] sm:$0xff] %v374
  %407 = vst [vmem:[#allocation2 + $0x98] sm:$0xff] %v375
  %408 = vst [vmem:[#allocation2 + $0xa0] sm:$0xff] %v376
  %409 = vst [vmem:[#allocation2 + $0xa8] sm:$0xff] %v377
  %410 = vst [vmem:[#allocation2 + $0xb0] sm:$0xff] %v378
  %411 = vst [vmem:[#allocation2 + $0xb8] sm:$0xff] %v379
  %412 = vst [vmem:[#allocation2 + $0xc0] sm:$0xff] %v380
  %413 = vst [vmem:[#allocation2 + $0xc8] sm:$0xff] %v381
  %414 = vst [vmem:[#allocation2 + $0xd0] sm:$0xff] %v382
  %415 = vst [vmem:[#allocation2 + $0xd8] sm:$0xff] %v383
  %416 = vst [vmem:[#allocation2 + $0xe0] sm:$0xff] %v384
  %417 = vst [vmem:[#allocation2 + $0xe8] sm:$0xff] %v385
  %418 = vst [vmem:[#allocation2 + $0xf0] sm:$0xff] %v386
  %419 = vst [vmem:[#allocation2 + $0xf8] sm:$0xff] %v387
  // Predicated region
  $region18: #{unet_up_forward.3} parent=0 // pred_check
    %p420 = pneg %p15
  $region19: #{unet_up_forward.3} parent=0 // pred_check_branch
    %422 = sbr.rel (%p420) target = $region21
  $region20: #{unet_up_forward.3} parent=0 // pred_region
    %v423 = vld [vmem:[#allocation2] sm:$0xff]
    %v424 = vld [vmem:[#allocation2 + $0x8] sm:$0xff]
    %v425 = vld [vmem:[#allocation2 + $0x10] sm:$0xff]
    %v426 = vld [vmem:[#allocation2 + $0x18] sm:$0xff]
    %v427 = vld [vmem:[#allocation2 + $0x20] sm:$0xff]
    %v428 = vld [vmem:[#allocation2 + $0x28] sm:$0xff]
    %v429 = vld [vmem:[#allocation2 + $0x30] sm:$0xff]
    %v430 = vld [vmem:[#allocation2 + $0x38] sm:$0xff]
    %v431 = vld [vmem:[#allocation2 + $0x40] sm:$0xff]
    %v432 = vld [vmem:[#allocation2 + $0x48] sm:$0xff]
    %v433 = vld [vmem:[#allocation2 + $0x50] sm:$0xff]
    %v434 = vld [vmem:[#allocation2 + $0x58] sm:$0xff]
    %v435 = vld [vmem:[#allocation2 + $0x60] sm:$0xff]
    %v436 = vld [vmem:[#allocation2 + $0x68] sm:$0xff]
    %v437 = vld [vmem:[#allocation2 + $0x70] sm:$0xff]
    %v438 = vld [vmem:[#allocation2 + $0x78] sm:$0xff]
    %v439 = vld [vmem:[#allocation2 + $0x80] sm:$0xff]
    %v440 = vld [vmem:[#allocation2 + $0x88] sm:$0xff]
    %v441 = vld [vmem:[#allocation2 + $0x90] sm:$0xff]
    %v442 = vld [vmem:[#allocation2 + $0x98] sm:$0xff]
    %v443 = vld [vmem:[#allocation2 + $0xa0] sm:$0xff]
    %v444 = vld [vmem:[#allocation2 + $0xa8] sm:$0xff]
    %v445 = vld [vmem:[#allocation2 + $0xb0] sm:$0xff]
    %v446 = vld [vmem:[#allocation2 + $0xb8] sm:$0xff]
    %v447 = vld [vmem:[#allocation2 + $0xc0] sm:$0xff]
    %v448 = vld [vmem:[#allocation2 + $0xc8] sm:$0xff]
    %v449 = vld [vmem:[#allocation2 + $0xd0] sm:$0xff]
    %v450 = vld [vmem:[#allocation2 + $0xd8] sm:$0xff]
    %v451 = vld [vmem:[#allocation2 + $0xe0] sm:$0xff]
    %v452 = vld [vmem:[#allocation2 + $0xe8] sm:$0xff]
    %v453 = vld [vmem:[#allocation2 + $0xf0] sm:$0xff]
    %v454 = vld [vmem:[#allocation2 + $0xf8] sm:$0xff]
    %v455 = vld [vmem:[%s2] sm:$0x3]
    %v457 = vlaneseq
    %v458 = vshrl.u32 %v457, 7
    %v459 = vsub.s32 0, %v458
    %v460 = vrot.slane %v455, %v459
    %v461 = vlaneseq
    %v462 = vshrl.u32 %v461, 7
    %v463 = vsub.s32 1, %v462
    %v464 = vrot.slane %v455, %v463
    %v467 = vadd.f32 %v423, %v460
    %v468 = vadd.f32 %v424, %v464
    %v469 = vadd.f32 %v425, %v460
    %v470 = vadd.f32 %v426, %v464
    %v471 = vadd.f32 %v427, %v460
    %v472 = vadd.f32 %v428, %v464
    %v473 = vadd.f32 %v429, %v460
    %v474 = vadd.f32 %v430, %v464
    %v475 = vadd.f32 %v431, %v460
    %v476 = vadd.f32 %v432, %v464
    %v477 = vadd.f32 %v433, %v460
    %v478 = vadd.f32 %v434, %v464
    %v479 = vadd.f32 %v435, %v460
    %v480 = vadd.f32 %v436, %v464
    %v481 = vadd.f32 %v437, %v460
    %v482 = vadd.f32 %v438, %v464
    %v483 = vadd.f32 %v439, %v460
    %v484 = vadd.f32 %v440, %v464
    %v485 = vadd.f32 %v441, %v460
    %v486 = vadd.f32 %v442, %v464
    %v487 = vadd.f32 %v443, %v460
    %v488 = vadd.f32 %v444, %v464
    %v489 = vadd.f32 %v445, %v460
    %v490 = vadd.f32 %v446, %v464
    %v491 = vadd.f32 %v447, %v460
    %v492 = vadd.f32 %v448, %v464
    %v493 = vadd.f32 %v449, %v460
    %v494 = vadd.f32 %v450, %v464
    %v495 = vadd.f32 %v451, %v460
    %v496 = vadd.f32 %v452, %v464
    %v497 = vadd.f32 %v453, %v460
    %v498 = vadd.f32 %v454, %v464
    %v499 = vpack.c.bf16 %v469, %v467
    %v500 = vpack.c.bf16 %v470, %v468
    %v501 = vpack.c.bf16 %v473, %v471
    %v502 = vpack.c.bf16 %v474, %v472
    %v503 = vpack.c.bf16 %v477, %v475
    %v504 = vpack.c.bf16 %v478, %v476
    %v505 = vpack.c.bf16 %v481, %v479
    %v506 = vpack.c.bf16 %v482, %v480
    %v507 = vpack.c.bf16 %v485, %v483
    %v508 = vpack.c.bf16 %v486, %v484
    %v509 = vpack.c.bf16 %v489, %v487
    %v510 = vpack.c.bf16 %v490, %v488
    %v511 = vpack.c.bf16 %v493, %v491
    %v512 = vpack.c.bf16 %v494, %v492
    %v513 = vpack.c.bf16 %v497, %v495
    %v514 = vpack.c.bf16 %v498, %v496
    %v531 = vunpack.c.l.b16 %v499
    %v532 = vunpack.c.l.b16 %v500
    %v533 = vunpack.c.h.b16 %v499
    %v534 = vunpack.c.h.b16 %v500
    %v535 = vunpack.c.l.b16 %v501
    %v536 = vunpack.c.l.b16 %v502
    %v537 = vunpack.c.h.b16 %v501
    %v538 = vunpack.c.h.b16 %v502
    %v539 = vunpack.c.l.b16 %v503
    %v540 = vunpack.c.l.b16 %v504
    %v541 = vunpack.c.h.b16 %v503
    %v542 = vunpack.c.h.b16 %v504
    %v543 = vunpack.c.l.b16 %v505
    %v544 = vunpack.c.l.b16 %v506
    %v545 = vunpack.c.h.b16 %v505
    %v546 = vunpack.c.h.b16 %v506
    %v547 = vunpack.c.l.b16 %v507
    %v548 = vunpack.c.l.b16 %v508
    %v549 = vunpack.c.h.b16 %v507
    %v550 = vunpack.c.h.b16 %v508
    %v551 = vunpack.c.l.b16 %v509
    %v552 = vunpack.c.l.b16 %v510
    %v553 = vunpack.c.h.b16 %v509
    %v554 = vunpack.c.h.b16 %v510
    %v555 = vunpack.c.l.b16 %v511
    %v556 = vunpack.c.l.b16 %v512
    %v557 = vunpack.c.h.b16 %v511
    %v558 = vunpack.c.h.b16 %v512
    %v559 = vunpack.c.l.b16 %v513
    %v560 = vunpack.c.l.b16 %v514
    %v561 = vunpack.c.h.b16 %v513
    %v562 = vunpack.c.h.b16 %v514
    %v563 = vpack.c.b16 %v532, %v531
    %v564 = vpack.c.b16 %v534, %v533
    %v565 = vpack.c.b16 %v536, %v535
    %v566 = vpack.c.b16 %v538, %v537
    %v567 = vpack.c.b16 %v540, %v539
    %v568 = vpack.c.b16 %v542, %v541
    %v569 = vpack.c.b16 %v544, %v543
    %v570 = vpack.c.b16 %v546, %v545
    %v571 = vpack.c.b16 %v548, %v547
    %v572 = vpack.c.b16 %v550, %v549
    %v573 = vpack.c.b16 %v552, %v551
    %v574 = vpack.c.b16 %v554, %v553
    %v575 = vpack.c.b16 %v556, %v555
    %v576 = vpack.c.b16 %v558, %v557
    %v577 = vpack.c.b16 %v560, %v559
    %v578 = vpack.c.b16 %v562, %v561
    %595 = vst [vmem:[%s3] sm:$0xff] %v563
    %596 = vst [vmem:[%s3 + $0x8] sm:$0xff] %v564
    %597 = vst [vmem:[%s3 + $0x10] sm:$0xff] %v565
    %598 = vst [vmem:[%s3 + $0x18] sm:$0xff] %v566
    %599 = vst [vmem:[%s3 + $0x20] sm:$0xff] %v567
    %600 = vst [vmem:[%s3 + $0x28] sm:$0xff] %v568
    %601 = vst [vmem:[%s3 + $0x30] sm:$0xff] %v569
    %602 = vst [vmem:[%s3 + $0x38] sm:$0xff] %v570
    %603 = vst [vmem:[%s3 + $0x40] sm:$0xff] %v571
    %604 = vst [vmem:[%s3 + $0x48] sm:$0xff] %v572
    %605 = vst [vmem:[%s3 + $0x50] sm:$0xff] %v573
    %606 = vst [vmem:[%s3 + $0x58] sm:$0xff] %v574
    %607 = vst [vmem:[%s3 + $0x60] sm:$0xff] %v575
    %608 = vst [vmem:[%s3 + $0x68] sm:$0xff] %v576
    %609 = vst [vmem:[%s3 + $0x70] sm:$0xff] %v577
    %610 = vst [vmem:[%s3 + $0x78] sm:$0xff] %v578
  $region21: #{unet_up_forward.3} parent=0 // pred_fallthru
    _
  // Predicated region
  $region22: #{unet_up_forward.3} parent=0 // pred_check
    _
  $region23: #{unet_up_forward.3} parent=0 // pred_check_branch
    %612 = sbr.rel (0) target = $region25
  $region24: #{unet_up_forward.3} parent=0 // pred_region
    _
  $region25: #{unet_up_forward.3} parent=0 // pred_fallthru
    _
  // Predicated region
  $region26: #{unet_up_forward.3} parent=0 // pred_check
    _
  $region27: #{unet_up_forward.3} parent=0 // pred_check_branch
    %614 = sbr.rel (0) target = $region29
  $region28: #{unet_up_forward.3} parent=0 // pred_region
    _
  $region29: #{unet_up_forward.3} parent=0 // pred_fallthru
    _

// kernel: unet_up_forward.5
$region0: #{unet_up_forward.5}
  #allocation0 [shape = 'u32[]', space=smem, size = 0x4, offset = 0x4, fixed_abs, tag = 'smem constant byte address 0x4 - core index']
  #allocation1 [shape = 'u32[144,128]{1,0:T(1,128)}', space=vmem, size = 0x12000, scoped, tag = 'internal scratch']
  #allocation2 [shape = 'f32[256,128]{1,0:T(8,128)}', space=vmem, size = 0x20000, scoped, tag = 'scratch operand']
  %s0 = inlined_call_operand.vmem [shape: bf16[1024,128], index: 0, kind: input, shape index: {}, may-alias: {0,1,2}]
  %s1 = inlined_call_operand.vmem [shape: bf16[1024,128], index: 1, kind: input, shape index: {}, may-alias: {0,1,2}]
  %s2 = inlined_call_operand.vmem [shape: bf16[1024,128], index: 2, kind: input, shape index: {}, may-alias: {0,1,2}]
  %s3 = inlined_call_operand.vmem [shape: bf16[3,384,128], index: 3, kind: input, shape index: {}]
  %s4 = inlined_call_operand.vmem [shape: f32[1,128], index: 4, kind: input, shape index: {}]
  %s5 = inlined_call_operand.vmem [shape: f32[1024,1], index: 5, kind: input, shape index: {}]
  %s6 = inlined_call_operand.vmem [shape: f32[1024,128], index: 6, kind: output, shape index: {}]
  %s7 = sld [smem:[#allocation0]]
  $region57: #{unet_up_forward.5} parent=0
    _
  %s9 = ssub.s32 1, %s7
  %s10 = scalar_select 0, %s9, %s7
  loop: start=0, step=1, limit=6
  $region2: #{unet_up_forward.5} parent=0 // loop_pre_header
    _
  $region3: #{unet_up_forward.5} parent=0 // loop_header
    %s12 = sphi 0, %s16
    %p13 = scmp.ge.s32.totalorder %s12, 6
    %s19 = sphi 0, %s31
    %s20 = sphi 0, %s27
    %s21 = sphi 0, %s19
    %s22 = sphi 0, %s20
    %s23 = sphi 0, %s21
    %s24 = sphi 0, %s22
    %s42 = sphi 0, %s44
    %s45 = sphi 0, %s42
    %s46 = sphi 0, %s45
    %s62 = sphi 0, %s46
    %s68 = sphi 0, %s70
    %s71 = sphi 0, %s68
    %s72 = sphi 0, %s71
    %s88 = sphi 0, %s72
    %s102 = sphi 0, %s104
    %s105 = sphi 0, %s102
    %s106 = sphi 0, %s105
    %s122 = sphi 0, %s106
    %s128 = sphi 0, %s130
    %s131 = sphi 0, %s128
    %s132 = sphi 0, %s131
    %s148 = sphi 0, %s132
    %s154 = sphi 0, %s156
    %s157 = sphi 0, %s154
    %s158 = sphi 0, %s157
    %s174 = sphi 0, %s158
    %s180 = sphi 0, %s182
    %s183 = sphi 0, %s180
    %s184 = sphi 0, %s183
    %s200 = sphi 0, %s184
    %s208 = sphi 0, %s210
    %s211 = sphi 0, %s208
    %s212 = sphi 0, %s211
    %s228 = sphi 0, %s212
  $region4: #{unet_up_forward.5} parent=0 // loop_header_branch
    %15 = sbr.rel (%p13) target = $region8
  $region5: #{unet_up_forward.5} parent=0 // loop_body
    %s17 = ssub.s32 %s12, 1
    %s18 = ssub.s32 %s12, 2
    %s25 = sadd.s32 1, %s20
    %p26 = scmp.ge.s32.totalorder %s25, 4
    %s27 = scalar_select %p26, 0, %s25
    %s28 = sadd.s32 1, %s19
    %s29 = scalar_select %p26, %s28, %s19
    %p30 = scmp.ge.s32.totalorder %s29, 1
    %s31 = scalar_select %p30, 0, %s29
    %s32 = smul.u32 %s20, 8
    %s33 = ssub.s32 %s32, 1
    %p34 = scmp.gt.s32.totalorder %s33, 0
    %s35 = scalar_select %p34, %s33, 0
    %s36 = smul.u32 %s27, 8
    %s37 = ssub.s32 %s36, 1
    %p38 = scmp.gt.s32.totalorder %s37, 0
    %s39 = scalar_select %p38, %s37, 0
    %s40 = ssub.s32 %s35, %s39
    %p41 = scmp.eq.s32.totalorder %s40, 0
    %s43 = sadd.s32 %s42, 1
    %s44 = scalar_select %p41, %s42, %s43
    %p47 = pneg %p41
    %p48 = scmp.eq.s32.totalorder %s12, 3
    %p49 = por %p47, %p48
    %p50 = scmp.ne.s32.totalorder %s42, %s45
    %p51 = scmp.eq.s32.totalorder %s12, 0
    %p52 = por %p50, %p51
    %p53 = scmp.ne.s32.totalorder %s42, %s45
    %p54 = scmp.eq.s32.totalorder %s17, 3
    %p55 = por %p53, %p54
    %p56 = scmp.ne.s32.totalorder %s45, %s46
    %p57 = scmp.eq.s32.totalorder %s17, 0
    %p58 = por %p56, %p57
    %p59 = scmp.ne.s32.totalorder %s45, %s46
    %p60 = scmp.eq.s32.totalorder %s18, 3
    %p61 = por %p59, %p60
    %p63 = scmp.ne.s32.totalorder %s46, %s62
    %p64 = scmp.eq.s32.totalorder %s18, 0
    %p65 = por %p63, %p64
    %s66 = ssub.s32 %s20, %s27
    %p67 = scmp.eq.s32.totalorder %s66, 0
    %s69 = sadd.s32 %s68, 1
    %s70 = scalar_select %p67, %s68, %s69
    %p73 = pneg %p67
    %p74 = scmp.eq.s32.totalorder %s12, 3
    %p75 = por %p73, %p74
    %p76 = scmp.ne.s32.totalorder %s68, %s71
    %p77 = scmp.eq.s32.totalorder %s12, 0
    %p78 = por %p76, %p77
    %p79 = scmp.ne.s32.totalorder %s68, %s71
    %p80 = scmp.eq.s32.totalorder %s17, 3
    %p81 = por %p79, %p80
    %p82 = scmp.ne.s32.totalorder %s71, %s72
    %p83 = scmp.eq.s32.totalorder %s17, 0
    %p84 = por %p82, %p83
    %p85 = scmp.ne.s32.totalorder %s71, %s72
    %p86 = scmp.eq.s32.totalorder %s18, 3
    %p87 = por %p85, %p86
    %p89 = scmp.ne.s32.totalorder %s72, %s88
    %p90 = scmp.eq.s32.totalorder %s18, 0
    %p91 = por %p89, %p90
    %s92 = sadd.s32 %s20, 1
    %s93 = smul.u32 %s92, 8
    %p94 = scmp.lt.s32.totalorder %s93, 31
    %s95 = scalar_select %p94, %s93, 31
    %s96 = sadd.s32 %s27, 1
    %s97 = smul.u32 %s96, 8
    %p98 = scmp.lt.s32.totalorder %s97, 31
    %s99 = scalar_select %p98, %s97, 31
    %s100 = ssub.s32 %s95, %s99
    %p101 = scmp.eq.s32.totalorder %s100, 0
    %s103 = sadd.s32 %s102, 1
    %s104 = scalar_select %p101, %s102, %s103
    %p107 = pneg %p101
    %p108 = scmp.eq.s32.totalorder %s12, 3
    %p109 = por %p107, %p108
    %p110 = scmp.ne.s32.totalorder %s102, %s105
    %p111 = scmp.eq.s32.totalorder %s12, 0
    %p112 = por %p110, %p111
    %p113 = scmp.ne.s32.totalorder %s102, %s105
    %p114 = scmp.eq.s32.totalorder %s17, 3
    %p115 = por %p113, %p114
    %p116 = scmp.ne.s32.totalorder %s105, %s106
    %p117 = scmp.eq.s32.totalorder %s17, 0
    %p118 = por %p116, %p117
    %p119 = scmp.ne.s32.totalorder %s105, %s106
    %p120 = scmp.eq.s32.totalorder %s18, 3
    %p121 = por %p119, %p120
    %p123 = scmp.ne.s32.totalorder %s106, %s122
    %p124 = scmp.eq.s32.totalorder %s18, 0
    %p125 = por %p123, %p124
    %s126 = ssub.s32 %s19, %s31
    %p127 = scmp.eq.s32.totalorder %s126, 0
    %s129 = sadd.s32 %s128, 1
    %s130 = scalar_select %p127, %s128, %s129
    %p133 = pneg %p127
    %p134 = scmp.eq.s32.totalorder %s12, 3
    %p135 = por %p133, %p134
    %p136 = scmp.ne.s32.totalorder %s128, %s131
    %p137 = scmp.eq.s32.totalorder %s12, 0
    %p138 = por %p136, %p137
    %p139 = scmp.ne.s32.totalorder %s128, %s131
    %p140 = scmp.eq.s32.totalorder %s17, 3
    %p141 = por %p139, %p140
    %p142 = scmp.ne.s32.totalorder %s131, %s132
    %p143 = scmp.eq.s32.totalorder %s17, 0
    %p144 = por %p142, %p143
    %p145 = scmp.ne.s32.totalorder %s131, %s132
    %p146 = scmp.eq.s32.totalorder %s18, 3
    %p147 = por %p145, %p146
    %p149 = scmp.ne.s32.totalorder %s132, %s148
    %p150 = scmp.eq.s32.totalorder %s18, 0
    %p151 = por %p149, %p150
    %s152 = ssub.s32 %s19, %s31
    %p153 = scmp.eq.s32.totalorder %s152, 0
    %s155 = sadd.s32 %s154, 1
    %s156 = scalar_select %p153, %s154, %s155
    %p159 = pneg %p153
    %p160 = scmp.eq.s32.totalorder %s12, 3
    %p161 = por %p159, %p160
    %p162 = scmp.ne.s32.totalorder %s154, %s157
    %p163 = scmp.eq.s32.totalorder %s12, 0
    %p164 = por %p162, %p163
    %p165 = scmp.ne.s32.totalorder %s154, %s157
    %p166 = scmp.eq.s32.totalorder %s17, 3
    %p167 = por %p165, %p166
    %p168 = scmp.ne.s32.totalorder %s157, %s158
    %p169 = scmp.eq.s32.totalorder %s17, 0
    %p170 = por %p168, %p169
    %p171 = scmp.ne.s32.totalorder %s157, %s158
    %p172 = scmp.eq.s32.totalorder %s18, 3
    %p173 = por %p171, %p172
    %p175 = scmp.ne.s32.totalorder %s158, %s174
    %p176 = scmp.eq.s32.totalorder %s18, 0
    %p177 = por %p175, %p176
    %s178 = ssub.s32 %s20, %s27
    %p179 = scmp.eq.s32.totalorder %s178, 0
    %s181 = sadd.s32 %s180, 1
    %s182 = scalar_select %p179, %s180, %s181
    %p185 = pneg %p179
    %p186 = scmp.eq.s32.totalorder %s12, 3
    %p187 = por %p185, %p186
    %p188 = scmp.ne.s32.totalorder %s180, %s183
    %p189 = scmp.eq.s32.totalorder %s12, 0
    %p190 = por %p188, %p189
    %p191 = scmp.ne.s32.totalorder %s180, %s183
    %p192 = scmp.eq.s32.totalorder %s17, 3
    %p193 = por %p191, %p192
    %p194 = scmp.ne.s32.totalorder %s183, %s184
    %p195 = scmp.eq.s32.totalorder %s17, 0
    %p196 = por %p194, %p195
    %p197 = scmp.ne.s32.totalorder %s183, %s184
    %p198 = scmp.eq.s32.totalorder %s18, 3
    %p199 = por %p197, %p198
    %p201 = scmp.ne.s32.totalorder %s184, %s200
    %p202 = scmp.eq.s32.totalorder %s18, 0
    %p203 = por %p201, %p202
    %s204 = ssub.s32 %s20, %s27
    %s205 = ssub.s32 %s19, %s31
    %s206 = sor.u32 %s204, %s205
    %p207 = scmp.eq.s32.totalorder %s206, 0
    %s209 = sadd.s32 %s208, 1
    %s210 = scalar_select %p207, %s208, %s209
    %p213 = pneg %p207
    %p214 = scmp.eq.s32.totalorder %s12, 3
    %p215 = por %p213, %p214
    %p216 = scmp.ne.s32.totalorder %s208, %s211
    %p217 = scmp.eq.s32.totalorder %s12, 0
    %p218 = por %p216, %p217
    %p219 = scmp.ne.s32.totalorder %s208, %s211
    %p220 = scmp.eq.s32.totalorder %s17, 3
    %p221 = por %p219, %p220
    %p222 = scmp.ne.s32.totalorder %s211, %s212
    %p223 = scmp.eq.s32.totalorder %s17, 0
    %p224 = por %p222, %p223
    %p225 = scmp.ne.s32.totalorder %s211, %s212
    %p226 = scmp.eq.s32.totalorder %s18, 3
    %p227 = por %p225, %p226
    %p229 = scmp.ne.s32.totalorder %s212, %s228
    %p230 = scmp.eq.s32.totalorder %s18, 0
    %p231 = por %p229, %p230
    %p232 = scmp.le.s32.totalorder 1, %s12
    %p233 = scmp.lt.s32.totalorder %s12, 5
    %p234 = pnand %p232, %p233
    %p235 = pneg %p234
    // Predicated region
    $region9: #{unet_up_forward.5} parent=5 // pred_check
      _
    $region10: #{unet_up_forward.5} parent=5 // pred_check_branch
      %237 = sbr.rel (%p234) target = $region12
    $region11: #{unet_up_forward.5} parent=5 // pred_region
      %s238 = ssub.s32 %s12, 1
      // Predicated region
      $region13: #{unet_up_forward.5} parent=11 // pred_check
        %p239 = pneg %p144
      $region14: #{unet_up_forward.5} parent=11 // pred_check_branch
        %241 = sbr.rel (%p239) target = $region16
      $region15: #{unet_up_forward.5} parent=11 // pred_region
        %p242 = scmp.lt.s32.totalorder %s21, 0
        %s243 = scalar_select %p242, %s21, 0
        %s244 = smul.addr %s243, 4
        %s245 = scalar_lea.vmem %s3, %s244
      $region16: #{unet_up_forward.5} parent=11 // pred_fallthru
        _
      // Predicated region
      $region17: #{unet_up_forward.5} parent=11 // pred_check
        %p246 = pneg %p170
      $region18: #{unet_up_forward.5} parent=11 // pred_check_branch
        %248 = sbr.rel (%p246) target = $region20
      $region19: #{unet_up_forward.5} parent=11 // pred_region
        %p249 = scmp.lt.s32.totalorder %s21, 0
        %s250 = scalar_select %p249, %s21, 0
        %s251 = scalar_lea.vmem %s4, %s250
      $region20: #{unet_up_forward.5} parent=11 // pred_fallthru
        _
    $region12: #{unet_up_forward.5} parent=5 // pred_fallthru
      _
    %p252 = scmp.lt.s32.totalorder %s12, 4
    // Predicated region
    $region21: #{unet_up_forward.5} parent=5 // pred_check
      %p253 = pneg %p252
    $region22: #{unet_up_forward.5} parent=5 // pred_check_branch
      %255 = sbr.rel (%p253) target = $region24
    $region23: #{unet_up_forward.5} parent=5 // pred_region
      // Predicated region
      $region25: #{unet_up_forward.5} parent=23 // pred_check
        %p256 = pneg %p52
      $region26: #{unet_up_forward.5} parent=23 // pred_check_branch
        %258 = sbr.rel (%p256) target = $region28
      $region27: #{unet_up_forward.5} parent=23 // pred_region
        %s259 = smul.u32 %s20, 8
        %s260 = ssub.s32 %s259, 1
        %p261 = scmp.gt.s32.totalorder %s260, 0
        %s262 = scalar_select %p261, %s260, 0
        %s263 = smul.u32 4, %s262
        %p264 = scmp.lt.s32.totalorder %s263, 127
        %s265 = scalar_select %p264, %s263, 127
        %s266 = smul.addr %s265, 4
        %s267 = scalar_lea.vmem %s0, %s266
        %s268 = smul.u32 %s20, 8
        %s269 = ssub.s32 %s268, 1
        %p270 = scmp.gt.s32.totalorder %s269, 0
        %s271 = scalar_select %p270, %s269, 0
        %s272 = smul.u32 4, %s271
      $region28: #{unet_up_forward.5} parent=23 // pred_fallthru
        _
      // Predicated region
      $region29: #{unet_up_forward.5} parent=23 // pred_check
        %p273 = pneg %p78
      $region30: #{unet_up_forward.5} parent=23 // pred_check_branch
        %275 = sbr.rel (%p273) target = $region32
      $region31: #{unet_up_forward.5} parent=23 // pred_region
        %s276 = smul.u32 32, %s20
        %p277 = scmp.lt.s32.totalorder %s276, 127
        %s278 = scalar_select %p277, %s276, 127
        %s279 = smul.addr %s278, 4
        %s280 = scalar_lea.vmem %s1, %s279
        %s281 = smul.u32 32, %s20
      $region32: #{unet_up_forward.5} parent=23 // pred_fallthru
        _
      // Predicated region
      $region33: #{unet_up_forward.5} parent=23 // pred_check
        %p282 = pneg %p112
      $region34: #{unet_up_forward.5} parent=23 // pred_check_branch
        %284 = sbr.rel (%p282) target = $region36
      $region35: #{unet_up_forward.5} parent=23 // pred_region
        %s285 = sadd.s32 %s20, 1
        %s286 = smul.u32 %s285, 8
        %p287 = scmp.lt.s32.totalorder %s286, 31
        %s288 = scalar_select %p287, %s286, 31
        %s289 = smul.u32 4, %s288
        %p290 = scmp.lt.s32.totalorder %s289, 127
        %s291 = scalar_select %p290, %s289, 127
        %s292 = smul.addr %s291, 4
        %s293 = scalar_lea.vmem %s2, %s292
        %s294 = sadd.s32 %s20, 1
        %s295 = smul.u32 %s294, 8
        %p296 = scmp.lt.s32.totalorder %s295, 31
        %s297 = scalar_select %p296, %s295, 31
        %s298 = smul.u32 4, %s297
      $region36: #{unet_up_forward.5} parent=23 // pred_fallthru
        _
      // Predicated region
      $region37: #{unet_up_forward.5} parent=23 // pred_check
        %p299 = pneg %p190
      $region38: #{unet_up_forward.5} parent=23 // pred_check_branch
        %301 = sbr.rel (%p299) target = $region40
      $region39: #{unet_up_forward.5} parent=23 // pred_region
        %s302 = smul.u32 32, %s20
        %p303 = scmp.lt.s32.totalorder %s302, 127
        %s304 = scalar_select %p303, %s302, 127
        %s305 = smul.addr %s304, 8
        %s306 = scalar_lea.vmem %s5, %s305
        %s307 = smul.u32 32, %s20
      $region40: #{unet_up_forward.5} parent=23 // pred_fallthru
        _
    $region24: #{unet_up_forward.5} parent=5 // pred_fallthru
      _
    %p308 = scmp.le.s32.totalorder 1, %s12
    %p309 = scmp.lt.s32.totalorder %s12, 5
    %p310 = pnand %p308, %p309
    %p311 = pneg %p310
    // Predicated region
    $region41: #{unet_up_forward.5} parent=5 // pred_check
      _
    $region42: #{unet_up_forward.5} parent=5 // pred_check_branch
      %313 = sbr.rel (%p310) target = $region44
    $region43: #{unet_up_forward.5} parent=5 // pred_region
      %s314 = ssub.s32 %s12, 1
      %s315 = smul.u32 %s22, 8
      %s316 = ssub.s32 %s315, 1
      %p317 = scmp.gt.s32.totalorder %s316, 0
      %s318 = scalar_select %p317, %s316, 0
      %s319 = smul.u32 4, %s318
      %p320 = scmp.lt.s32.totalorder %s319, 127
      %s321 = scalar_select %p320, %s319, 127
      %s322 = smul.addr %s321, 4
      %s323 = scalar_lea.vmem %s0, %s322
      %p324 = pneg %p58
      %p325 = pneg %p55
      %s326 = smul.u32 32, %s22
      %p327 = scmp.lt.s32.totalorder %s326, 127
      %s328 = scalar_select %p327, %s326, 127
      %s329 = smul.addr %s328, 4
      %s330 = scalar_lea.vmem %s1, %s329
      %p331 = pneg %p84
      %p332 = pneg %p81
      %s333 = sadd.s32 %s22, 1
      %s334 = smul.u32 %s333, 8
      %p335 = scmp.lt.s32.totalorder %s334, 31
      %s336 = scalar_select %p335, %s334, 31
      %s337 = smul.u32 4, %s336
      %p338 = scmp.lt.s32.totalorder %s337, 127
      %s339 = scalar_select %p338, %s337, 127
      %s340 = smul.addr %s339, 4
      %s341 = scalar_lea.vmem %s2, %s340
      %p342 = pneg %p118
      %p343 = pneg %p115
      %p344 = scmp.lt.s32.totalorder %s21, 0
      %s345 = scalar_select %p344, %s21, 0
      %s346 = smul.addr %s345, 4
      %s347 = scalar_lea.vmem %s3, %s346
      %p348 = pneg %p144
      %p349 = pneg %p141
      %p350 = scmp.lt.s32.totalorder %s21, 0
      %s351 = scalar_select %p350, %s21, 0
      %s352 = scalar_lea.vmem %s4, %s351
      %p353 = pneg %p170
      %p354 = pneg %p167
      %s355 = smul.u32 32, %s22
      %p356 = scmp.lt.s32.totalorder %s355, 127
      %s357 = scalar_select %p356, %s355, 127
      %s358 = smul.addr %s357, 8
      %s359 = scalar_lea.vmem %s5, %s358
      %p360 = pneg %p196
      %p361 = pneg %p193
      %p362 = pneg %p224
      %p363 = pneg %p221
      %s364 = smul.u32 32, %s22
      %p365 = scmp.lt.s32.totalorder %s364, 127
      %s366 = scalar_select %p365, %s364, 127
      %p367 = scmp.lt.s32.totalorder %s21, 0
      %s368 = scalar_select %p367, %s21, 0
      %s369 = sadd.s32 %s368, %s366
      %s370 = smul.addr %s369, 8
      %s371 = scalar_lea.vmem %s6, %s370
      %s372 = smul.u32 %s22, 8
      %s373 = ssub.s32 %s372, 1
      %p374 = scmp.gt.s32.totalorder %s373, 0
      %s375 = scalar_select %p374, %s373, 0
      %s376 = smul.u32 4, %s375
      %p377 = scmp.lt.s32.totalorder %s376, 127
      %s378 = scalar_select %p377, %s376, 127
      %s379 = smul.addr %s378, 4
      %s380 = scalar_lea.vmem %s0, %s379
      %s381 = smul.u32 %s22, 8
      %s382 = ssub.s32 %s381, 1
      %p383 = scmp.gt.s32.totalorder %s382, 0
      %s384 = scalar_select %p383, %s382, 0
      %s385 = smul.u32 4, %s384
      %s386 = smul.u32 32, %s22
      %p387 = scmp.lt.s32.totalorder %s386, 127
      %s388 = scalar_select %p387, %s386, 127
      %s389 = smul.addr %s388, 4
      %s390 = scalar_lea.vmem %s1, %s389
      %s391 = smul.u32 32, %s22
      %s392 = sadd.s32 %s22, 1
      %s393 = smul.u32 %s392, 8
      %p394 = scmp.lt.s32.totalorder %s393, 31
      %s395 = scalar_select %p394, %s393, 31
      %s396 = smul.u32 4, %s395
      %p397 = scmp.lt.s32.totalorder %s396, 127
      %s398 = scalar_select %p397, %s396, 127
      %s399 = smul.addr %s398, 4
      %s400 = scalar_lea.vmem %s2, %s399
      %s401 = sadd.s32 %s22, 1
      %s402 = smul.u32 %s401, 8
      %p403 = scmp.lt.s32.totalorder %s402, 31
      %s404 = scalar_select %p403, %s402, 31
      %s405 = smul.u32 4, %s404
      %p406 = scmp.lt.s32.totalorder %s21, 0
      %s407 = scalar_select %p406, %s21, 0
      %s408 = smul.addr %s407, 4
      %s409 = scalar_lea.vmem %s3, %s408
      %p410 = scmp.lt.s32.totalorder %s21, 0
      %s411 = scalar_select %p410, %s21, 0
      %s412 = scalar_lea.vmem %s4, %s411
      %s413 = smul.u32 32, %s22
      %p414 = scmp.lt.s32.totalorder %s413, 127
      %s415 = scalar_select %p414, %s413, 127
      %s416 = smul.addr %s415, 8
      %s417 = scalar_lea.vmem %s5, %s416
      %s418 = smul.u32 32, %s22
      %s419 = smul.u32 32, %s22
      %p420 = scmp.lt.s32.totalorder %s419, 127
      %s421 = scalar_select %p420, %s419, 127
      %p422 = scmp.lt.s32.totalorder %s21, 0
      %s423 = scalar_select %p422, %s21, 0
      %s424 = sadd.s32 %s423, %s421
      %s425 = smul.addr %s424, 8
      %s426 = scalar_lea.vmem %s6, %s425
      %s427 = smul.u32 32, %s22
      %v429 = vld [vmem:[%s380] sm:$0xf]
      %v430 = vld [vmem:[%s380 + $0x4] sm:$0xf]
      %v431 = vld [vmem:[%s380 + $0x8] sm:$0xf]
      %v432 = vld [vmem:[%s380 + $0xc] sm:$0xf]
      %v433 = vld [vmem:[%s390] sm:$0xf]
      %v434 = vld [vmem:[%s390 + $0x4] sm:$0xf]
      %v435 = vld [vmem:[%s390 + $0x8] sm:$0xf]
      %v436 = vld [vmem:[%s390 + $0xc] sm:$0xf]
      %v437 = vld [vmem:[%s390 + $0x10] sm:$0xf]
      %v438 = vld [vmem:[%s390 + $0x14] sm:$0xf]
      %v439 = vld [vmem:[%s390 + $0x18] sm:$0xf]
      %v440 = vld [vmem:[%s390 + $0x1c] sm:$0xf]
      %v441 = vld [vmem:[%s390 + $0x20] sm:$0xf]
      %v442 = vld [vmem:[%s390 + $0x24] sm:$0xf]
      %v443 = vld [vmem:[%s390 + $0x28] sm:$0xf]
      %v444 = vld [vmem:[%s390 + $0x2c] sm:$0xf]
      %v445 = vld [vmem:[%s390 + $0x30] sm:$0xf]
      %v446 = vld [vmem:[%s390 + $0x34] sm:$0xf]
      %v447 = vld [vmem:[%s390 + $0x38] sm:$0xf]
      %v448 = vld [vmem:[%s390 + $0x3c] sm:$0xf]
      %v449 = vld [vmem:[%s390 + $0x40] sm:$0xf]
      %v450 = vld [vmem:[%s390 + $0x44] sm:$0xf]
      %v451 = vld [vmem:[%s390 + $0x48] sm:$0xf]
      %v452 = vld [vmem:[%s390 + $0x4c] sm:$0xf]
      %v453 = vld [vmem:[%s390 + $0x50] sm:$0xf]
      %v454 = vld [vmem:[%s390 + $0x54] sm:$0xf]
      %v455 = vld [vmem:[%s390 + $0x58] sm:$0xf]
      %v456 = vld [vmem:[%s390 + $0x5c] sm:$0xf]
      %v457 = vld [vmem:[%s390 + $0x60] sm:$0xf]
      %v458 = vld [vmem:[%s390 + $0x64] sm:$0xf]
      %v459 = vld [vmem:[%s390 + $0x68] sm:$0xf]
      %v460 = vld [vmem:[%s390 + $0x6c] sm:$0xf]
      %v461 = vld [vmem:[%s390 + $0x70] sm:$0xf]
      %v462 = vld [vmem:[%s390 + $0x74] sm:$0xf]
      %v463 = vld [vmem:[%s390 + $0x78] sm:$0xf]
      %v464 = vld [vmem:[%s390 + $0x7c] sm:$0xf]
      %v465 = vld [vmem:[%s400] sm:$0xf]
      %v466 = vld [vmem:[%s400 + $0x4] sm:$0xf]
      %v467 = vld [vmem:[%s400 + $0x8] sm:$0xf]
      %v468 = vld [vmem:[%s400 + $0xc] sm:$0xf]
      %v473 = vunpack.c.l.b16 %v429
      %v474 = vunpack.c.l.b16 %v430
      %v475 = vunpack.c.l.b16 %v431
      %v476 = vunpack.c.l.b16 %v432
      %v477 = vpack.c.b16 %v474, %v473
      %v478 = vpack.c.b16 %v476, %v475
      %v511 = vunpack.c.l.b16 %v433
      %v512 = vunpack.c.l.b16 %v434
      %v513 = vunpack.c.l.b16 %v435
      %v514 = vunpack.c.l.b16 %v436
      %v515 = vunpack.c.l.b16 %v437
      %v516 = vunpack.c.l.b16 %v438
      %v517 = vunpack.c.l.b16 %v439
      %v518 = vunpack.c.l.b16 %v440
      %v519 = vunpack.c.l.b16 %v441
      %v520 = vunpack.c.l.b16 %v442
      %v521 = vunpack.c.l.b16 %v443
      %v522 = vunpack.c.l.b16 %v444
      %v523 = vunpack.c.l.b16 %v445
      %v524 = vunpack.c.l.b16 %v446
      %v525 = vunpack.c.l.b16 %v447
      %v526 = vunpack.c.l.b16 %v448
      %v527 = vunpack.c.l.b16 %v449
      %v528 = vunpack.c.l.b16 %v450
      %v529 = vunpack.c.l.b16 %v451
      %v530 = vunpack.c.l.b16 %v452
      %v531 = vunpack.c.l.b16 %v453
      %v532 = vunpack.c.l.b16 %v454
      %v533 = vunpack.c.l.b16 %v455
      %v534 = vunpack.c.l.b16 %v456
      %v535 = vunpack.c.l.b16 %v457
      %v536 = vunpack.c.l.b16 %v458
      %v537 = vunpack.c.l.b16 %v459
      %v538 = vunpack.c.l.b16 %v460
      %v539 = vunpack.c.l.b16 %v461
      %v540 = vunpack.c.l.b16 %v462
      %v541 = vunpack.c.l.b16 %v463
      %v542 = vunpack.c.l.b16 %v464
      %v543 = vpack.c.b16 %v512, %v511
      %v544 = vpack.c.b16 %v514, %v513
      %v545 = vpack.c.b16 %v516, %v515
      %v546 = vpack.c.b16 %v518, %v517
      %v547 = vpack.c.b16 %v520, %v519
      %v548 = vpack.c.b16 %v522, %v521
      %v549 = vpack.c.b16 %v524, %v523
      %v550 = vpack.c.b16 %v526, %v525
      %v551 = vpack.c.b16 %v528, %v527
      %v552 = vpack.c.b16 %v530, %v529
      %v553 = vpack.c.b16 %v532, %v531
      %v554 = vpack.c.b16 %v534, %v533
      %v555 = vpack.c.b16 %v536, %v535
      %v556 = vpack.c.b16 %v538, %v537
      %v557 = vpack.c.b16 %v540, %v539
      %v558 = vpack.c.b16 %v542, %v541
      %v563 = vunpack.c.l.b16 %v465
      %v564 = vunpack.c.l.b16 %v466
      %v565 = vunpack.c.l.b16 %v467
      %v566 = vunpack.c.l.b16 %v468
      %v567 = vpack.c.b16 %v564, %v563
      %v568 = vpack.c.b16 %v566, %v565
      %vm569 = vsmask.f32 7424
      %v571 = vshrl.u32 %v477, 16
      %v573 = vshll.u32 %v477, 16
      %v575 = vrot.slane %v573, 1
      %v576 = vor.u32 %v571, %v575
      %v578 = vshll.u32 %v478, 16
      %v580 = vrot.slane %v578, 1
      %v581 = vsel %vm569, %v576, %v580
      %v582 = vshrl.u32 %v478, 16
      %v584 = vor.u32 %v582, %v580
      %v586 = vshll.u32 %v543, 16
      %v588 = vrot.slane %v586, 1
      %v589 = vsel %vm569, %v584, %v588
      %v590 = vshrl.u32 %v543, 16
      %v592 = vor.u32 %v590, %v588
      %v594 = vshll.u32 %v544, 16
      %v596 = vrot.slane %v594, 1
      %v597 = vsel %vm569, %v592, %v596
      %v598 = vshrl.u32 %v544, 16
      %v600 = vor.u32 %v598, %v596
      %v602 = vshll.u32 %v545, 16
      %v604 = vrot.slane %v602, 1
      %v605 = vsel %vm569, %v600, %v604
      %v606 = vshrl.u32 %v545, 16
      %v608 = vor.u32 %v606, %v604
      %v610 = vshll.u32 %v546, 16
      %v612 = vrot.slane %v610, 1
      %v613 = vsel %vm569, %v608, %v612
      %v614 = vshrl.u32 %v546, 16
      %v616 = vor.u32 %v614, %v612
      %v618 = vshll.u32 %v547, 16
      %v620 = vrot.slane %v618, 1
      %v621 = vsel %vm569, %v616, %v620
      %v622 = vshrl.u32 %v547, 16
      %v624 = vor.u32 %v622, %v620
      %v626 = vshll.u32 %v548, 16
      %v628 = vrot.slane %v626, 1
      %v629 = vsel %vm569, %v624, %v628
      %v630 = vshrl.u32 %v548, 16
      %v632 = vor.u32 %v630, %v628
      %v634 = vshll.u32 %v549, 16
      %v636 = vrot.slane %v634, 1
      %v637 = vsel %vm569, %v632, %v636
      %v638 = vshrl.u32 %v549, 16
      %v640 = vor.u32 %v638, %v636
      %v642 = vshll.u32 %v550, 16
      %v644 = vrot.slane %v642, 1
      %v645 = vsel %vm569, %v640, %v644
      %v646 = vshrl.u32 %v550, 16
      %v648 = vor.u32 %v646, %v644
      %v650 = vshll.u32 %v551, 16
      %v652 = vrot.slane %v650, 1
      %v653 = vsel %vm569, %v648, %v652
      %v654 = vshrl.u32 %v551, 16
      %v656 = vor.u32 %v654, %v652
      %v658 = vshll.u32 %v552, 16
      %v660 = vrot.slane %v658, 1
      %v661 = vsel %vm569, %v656, %v660
      %v662 = vshrl.u32 %v552, 16
      %v664 = vor.u32 %v662, %v660
      %v666 = vshll.u32 %v553, 16
      %v668 = vrot.slane %v666, 1
      %v669 = vsel %vm569, %v664, %v668
      %v670 = vshrl.u32 %v553, 16
      %v672 = vor.u32 %v670, %v668
      %v674 = vshll.u32 %v554, 16
      %v676 = vrot.slane %v674, 1
      %v677 = vsel %vm569, %v672, %v676
      %v678 = vshrl.u32 %v554, 16
      %v680 = vor.u32 %v678, %v676
      %v682 = vshll.u32 %v555, 16
      %v684 = vrot.slane %v682, 1
      %v685 = vsel %vm569, %v680, %v684
      %v686 = vshrl.u32 %v555, 16
      %v688 = vor.u32 %v686, %v684
      %v690 = vshll.u32 %v556, 16
      %v692 = vrot.slane %v690, 1
      %v693 = vsel %vm569, %v688, %v692
      %v694 = vshrl.u32 %v556, 16
      %v696 = vor.u32 %v694, %v692
      %v698 = vshll.u32 %v557, 16
      %v700 = vrot.slane %v698, 1
      %v701 = vsel %vm569, %v696, %v700
      %v702 = vshrl.u32 %v557, 16
      %v704 = vor.u32 %v702, %v700
      %vm705 = vcmask 1046528
      %v706 = vrot.slane %v477, 1
      %v707 = vrot.slane %v478, 1
      %v708 = vsel %vm705, %v706, %v707
      %v709 = vrot.slane %v543, 1
      %v710 = vsel %vm705, %v707, %v709
      %v711 = vrot.slane %v544, 1
      %v712 = vsel %vm705, %v709, %v711
      %v713 = vrot.slane %v545, 1
      %v714 = vsel %vm705, %v711, %v713
      %v715 = vrot.slane %v546, 1
      %v716 = vsel %vm705, %v713, %v715
      %v717 = vrot.slane %v547, 1
      %v718 = vsel %vm705, %v715, %v717
      %v719 = vrot.slane %v548, 1
      %v720 = vsel %vm705, %v717, %v719
      %v721 = vrot.slane %v549, 1
      %v722 = vsel %vm705, %v719, %v721
      %v723 = vrot.slane %v550, 1
      %v724 = vsel %vm705, %v721, %v723
      %v725 = vrot.slane %v551, 1
      %v726 = vsel %vm705, %v723, %v725
      %v727 = vrot.slane %v552, 1
      %v728 = vsel %vm705, %v725, %v727
      %v729 = vrot.slane %v553, 1
      %v730 = vsel %vm705, %v727, %v729
      %v731 = vrot.slane %v554, 1
      %v732 = vsel %vm705, %v729, %v731
      %v733 = vrot.slane %v555, 1
      %v734 = vsel %vm705, %v731, %v733
      %v735 = vrot.slane %v556, 1
      %v736 = vsel %vm705, %v733, %v735
      %v737 = vrot.slane %v557, 1
      %v738 = vsel %vm705, %v735, %v737
      %v739 = vld [vmem:[%s409] sm:$0xf]
      %v740 = vld [vmem:[%s409 + $0x4] sm:$0xf]
      %v741 = vld [vmem:[%s409 + $0x8] sm:$0xf]
      %v742 = vld [vmem:[%s409 + $0xc] sm:$0xf]
      %v743 = vld [vmem:[%s409 + $0x10] sm:$0xf]
      %v744 = vld [vmem:[%s409 + $0x14] sm:$0xf]
      %v745 = vld [vmem:[%s409 + $0x18] sm:$0xf]
      %v746 = vld [vmem:[%s409 + $0x1c] sm:$0xf]
      %v747 = vld [vmem:[%s409 + $0x20] sm:$0xf]
      %v748 = vld [vmem:[%s409 + $0x24] sm:$0xf]
      %v749 = vld [vmem:[%s409 + $0x28] sm:$0xf]
      %v750 = vld [vmem:[%s409 + $0x2c] sm:$0xf]
      %v751 = vld [vmem:[%s409 + $0x30] sm:$0xf]
      %v752 = vld [vmem:[%s409 + $0x34] sm:$0xf]
      %v753 = vld [vmem:[%s409 + $0x38] sm:$0xf]
      %v754 = vld [vmem:[%s409 + $0x3c] sm:$0xf]
      %v755 = vld [vmem:[%s409 + $0x40] sm:$0xf]
      %v756 = vld [vmem:[%s409 + $0x44] sm:$0xf]
      %v757 = vld [vmem:[%s409 + $0x48] sm:$0xf]
      %v758 = vld [vmem:[%s409 + $0x4c] sm:$0xf]
      %v759 = vld [vmem:[%s409 + $0x50] sm:$0xf]
      %v760 = vld [vmem:[%s409 + $0x54] sm:$0xf]
      %v761 = vld [vmem:[%s409 + $0x58] sm:$0xf]
      %v762 = vld [vmem:[%s409 + $0x5c] sm:$0xf]
      %v763 = vld [vmem:[%s409 + $0x60] sm:$0xf]
      %v764 = vld [vmem:[%s409 + $0x64] sm:$0xf]
      %v765 = vld [vmem:[%s409 + $0x68] sm:$0xf]
      %v766 = vld [vmem:[%s409 + $0x6c] sm:$0xf]
      %v767 = vld [vmem:[%s409 + $0x70] sm:$0xf]
      %v768 = vld [vmem:[%s409 + $0x74] sm:$0xf]
      %v769 = vld [vmem:[%s409 + $0x78] sm:$0xf]
      %v770 = vld [vmem:[%s409 + $0x7c] sm:$0xf]
      %v771 = vld [vmem:[%s409 + $0x80] sm:$0xf]
      %v772 = vld [vmem:[%s409 + $0x84] sm:$0xf]
      %v773 = vld [vmem:[%s409 + $0x88] sm:$0xf]
      %v774 = vld [vmem:[%s409 + $0x8c] sm:$0xf]
      %v775 = vld [vmem:[%s409 + $0x90] sm:$0xf]
      %v776 = vld [vmem:[%s409 + $0x94] sm:$0xf]
      %v777 = vld [vmem:[%s409 + $0x98] sm:$0xf]
      %v778 = vld [vmem:[%s409 + $0x9c] sm:$0xf]
      %v779 = vld [vmem:[%s409 + $0xa0] sm:$0xf]
      %v780 = vld [vmem:[%s409 + $0xa4] sm:$0xf]
      %v781 = vld [vmem:[%s409 + $0xa8] sm:$0xf]
      %v782 = vld [vmem:[%s409 + $0xac] sm:$0xf]
      %v783 = vld [vmem:[%s409 + $0xb0] sm:$0xf]
      %v784 = vld [vmem:[%s409 + $0xb4] sm:$0xf]
      %v785 = vld [vmem:[%s409 + $0xb8] sm:$0xf]
      %v786 = vld [vmem:[%s409 + $0xbc] sm:$0xf]
      %vm787 = vsmask.f32 4352
      %v788 = vrot.slane %v571, 3
      %v789 = vrot.slane %v573, 4
      %v790 = vor.u32 %v788, %v789
      %v791 = vrot.slane %v582, 3
      %v792 = vrot.slane %v578, 4
      %v793 = vor.u32 %v791, %v792
      %v794 = vsel %vm787, %v790, %v793
      %v796 = vshrl.u32 %v581, 16
      %v798 = vrot.slane %v796, 3
      %v799 = vshll.u32 %v581, 16
      %v801 = vrot.slane %v799, 4
      %v802 = vor.u32 %v798, %v801
      %v804 = vshrl.u32 %v589, 16
      %v806 = vrot.slane %v804, 3
      %v807 = vshll.u32 %v589, 16
      %v809 = vrot.slane %v807, 4
      %v810 = vor.u32 %v806, %v809
      %v811 = vsel %vm787, %v802, %v810
      %v813 = vshrl.u32 %v708, 16
      %v815 = vrot.slane %v813, 3
      %v816 = vshll.u32 %v708, 16
      %v818 = vrot.slane %v816, 4
      %v819 = vor.u32 %v815, %v818
      %v821 = vshrl.u32 %v710, 16
      %v823 = vrot.slane %v821, 3
      %v824 = vshll.u32 %v710, 16
      %v826 = vrot.slane %v824, 4
      %v827 = vor.u32 %v823, %v826
      %v828 = vsel %vm787, %v819, %v827
      %v829 = vrot.slane %v590, 3
      %v830 = vrot.slane %v586, 4
      %v831 = vor.u32 %v829, %v830
      %v832 = vsel %vm787, %v793, %v831
      %v834 = vshrl.u32 %v597, 16
      %v836 = vrot.slane %v834, 3
      %v837 = vshll.u32 %v597, 16
      %v839 = vrot.slane %v837, 4
      %v840 = vor.u32 %v836, %v839
      %v841 = vsel %vm787, %v810, %v840
      %v843 = vshrl.u32 %v712, 16
      %v845 = vrot.slane %v843, 3
      %v846 = vshll.u32 %v712, 16
      %v848 = vrot.slane %v846, 4
      %v849 = vor.u32 %v845, %v848
      %v850 = vsel %vm787, %v827, %v849
      %v851 = vrot.slane %v598, 3
      %v852 = vrot.slane %v594, 4
      %v853 = vor.u32 %v851, %v852
      %v854 = vsel %vm787, %v831, %v853
      %v856 = vshrl.u32 %v605, 16
      %v858 = vrot.slane %v856, 3
      %v859 = vshll.u32 %v605, 16
      %v861 = vrot.slane %v859, 4
      %v862 = vor.u32 %v858, %v861
      %v863 = vsel %vm787, %v840, %v862
      %v865 = vshrl.u32 %v714, 16
      %v867 = vrot.slane %v865, 3
      %v868 = vshll.u32 %v714, 16
      %v870 = vrot.slane %v868, 4
      %v871 = vor.u32 %v867, %v870
      %v872 = vsel %vm787, %v849, %v871
      %v873 = vrot.slane %v606, 3
      %v874 = vrot.slane %v602, 4
      %v875 = vor.u32 %v873, %v874
      %v876 = vsel %vm787, %v853, %v875
      %v878 = vshrl.u32 %v613, 16
      %v880 = vrot.slane %v878, 3
      %v881 = vshll.u32 %v613, 16
      %v883 = vrot.slane %v881, 4
      %v884 = vor.u32 %v880, %v883
      %v885 = vsel %vm787, %v862, %v884
      %v887 = vshrl.u32 %v716, 16
      %v889 = vrot.slane %v887, 3
      %v890 = vshll.u32 %v716, 16
      %v892 = vrot.slane %v890, 4
      %v893 = vor.u32 %v889, %v892
      %v894 = vsel %vm787, %v871, %v893
      %v895 = vrot.slane %v614, 3
      %v896 = vrot.slane %v610, 4
      %v897 = vor.u32 %v895, %v896
      %v898 = vsel %vm787, %v875, %v897
      %v900 = vshrl.u32 %v621, 16
      %v902 = vrot.slane %v900, 3
      %v903 = vshll.u32 %v621, 16
      %v905 = vrot.slane %v903, 4
      %v906 = vor.u32 %v902, %v905
      %v907 = vsel %vm787, %v884, %v906
      %v909 = vshrl.u32 %v718, 16
      %v911 = vrot.slane %v909, 3
      %v912 = vshll.u32 %v718, 16
      %v914 = vrot.slane %v912, 4
      %v915 = vor.u32 %v911, %v914
      %v916 = vsel %vm787, %v893, %v915
      %v917 = vrot.slane %v622, 3
      %v918 = vrot.slane %v618, 4
      %v919 = vor.u32 %v917, %v918
      %v920 = vsel %vm787, %v897, %v919
      %v922 = vshrl.u32 %v629, 16
      %v924 = vrot.slane %v922, 3
      %v925 = vshll.u32 %v629, 16
      %v927 = vrot.slane %v925, 4
      %v928 = vor.u32 %v924, %v927
      %v929 = vsel %vm787, %v906, %v928
      %v931 = vshrl.u32 %v720, 16
      %v933 = vrot.slane %v931, 3
      %v934 = vshll.u32 %v720, 16
      %v936 = vrot.slane %v934, 4
      %v937 = vor.u32 %v933, %v936
      %v938 = vsel %vm787, %v915, %v937
      %v939 = vrot.slane %v630, 3
      %v940 = vrot.slane %v626, 4
      %v941 = vor.u32 %v939, %v940
      %v942 = vsel %vm787, %v919, %v941
      %v944 = vshrl.u32 %v637, 16
      %v946 = vrot.slane %v944, 3
      %v947 = vshll.u32 %v637, 16
      %v949 = vrot.slane %v947, 4
      %v950 = vor.u32 %v946, %v949
      %v951 = vsel %vm787, %v928, %v950
      %v953 = vshrl.u32 %v722, 16
      %v955 = vrot.slane %v953, 3
      %v956 = vshll.u32 %v722, 16
      %v958 = vrot.slane %v956, 4
      %v959 = vor.u32 %v955, %v958
      %v960 = vsel %vm787, %v937, %v959
      %v961 = vrot.slane %v638, 3
      %v962 = vrot.slane %v634, 4
      %v963 = vor.u32 %v961, %v962
      %v964 = vsel %vm787, %v941, %v963
      %v966 = vshrl.u32 %v645, 16
      %v968 = vrot.slane %v966, 3
      %v969 = vshll.u32 %v645, 16
      %v971 = vrot.slane %v969, 4
      %v972 = vor.u32 %v968, %v971
      %v973 = vsel %vm787, %v950, %v972
      %v975 = vshrl.u32 %v724, 16
      %v977 = vrot.slane %v975, 3
      %v978 = vshll.u32 %v724, 16
      %v980 = vrot.slane %v978, 4
      %v981 = vor.u32 %v977, %v980
      %v982 = vsel %vm787, %v959, %v981
      %v983 = vrot.slane %v646, 3
      %v984 = vrot.slane %v642, 4
      %v985 = vor.u32 %v983, %v984
      %v986 = vsel %vm787, %v963, %v985
      %v988 = vshrl.u32 %v653, 16
      %v990 = vrot.slane %v988, 3
      %v991 = vshll.u32 %v653, 16
      %v993 = vrot.slane %v991, 4
      %v994 = vor.u32 %v990, %v993
      %v995 = vsel %vm787, %v972, %v994
      %v997 = vshrl.u32 %v726, 16
      %v999 = vrot.slane %v997, 3
      %v1000 = vshll.u32 %v726, 16
      %v1002 = vrot.slane %v1000, 4
      %v1003 = vor.u32 %v999, %v1002
      %v1004 = vsel %vm787, %v981, %v1003
      %v1005 = vrot.slane %v654, 3
      %v1006 = vrot.slane %v650, 4
      %v1007 = vor.u32 %v1005, %v1006
      %v1008 = vsel %vm787, %v985, %v1007
      %v1010 = vshrl.u32 %v661, 16
      %v1012 = vrot.slane %v1010, 3
      %v1013 = vshll.u32 %v661, 16
      %v1015 = vrot.slane %v1013, 4
      %v1016 = vor.u32 %v1012, %v1015
      %v1017 = vsel %vm787, %v994, %v1016
      %v1019 = vshrl.u32 %v728, 16
      %v1021 = vrot.slane %v1019, 3
      %v1022 = vshll.u32 %v728, 16
      %v1024 = vrot.slane %v1022, 4
      %v1025 = vor.u32 %v1021, %v1024
      %v1026 = vsel %vm787, %v1003, %v1025
      %v1027 = vrot.slane %v662, 3
      %v1028 = vrot.slane %v658, 4
      %v1029 = vor.u32 %v1027, %v1028
      %v1030 = vsel %vm787, %v1007, %v1029
      %v1032 = vshrl.u32 %v669, 16
      %v1034 = vrot.slane %v1032, 3
      %v1035 = vshll.u32 %v669, 16
      %v1037 = vrot.slane %v1035, 4
      %v1038 = vor.u32 %v1034, %v1037
      %v1039 = vsel %vm787, %v1016, %v1038
      %v1041 = vshrl.u32 %v730, 16
      %v1043 = vrot.slane %v1041, 3
      %v1044 = vshll.u32 %v730, 16
      %v1046 = vrot.slane %v1044, 4
      %v1047 = vor.u32 %v1043, %v1046
      %v1048 = vsel %vm787, %v1025, %v1047
      %v1049 = vrot.slane %v670, 3
      %v1050 = vrot.slane %v666, 4
      %v1051 = vor.u32 %v1049, %v1050
      %v1052 = vsel %vm787, %v1029, %v1051
      %v1054 = vshrl.u32 %v677, 16
      %v1056 = vrot.slane %v1054, 3
      %v1057 = vshll.u32 %v677, 16
      %v1059 = vrot.slane %v1057, 4
      %v1060 = vor.u32 %v1056, %v1059
      %v1061 = vsel %vm787, %v1038, %v1060
      %v1063 = vshrl.u32 %v732, 16
      %v1065 = vrot.slane %v1063, 3
      %v1066 = vshll.u32 %v732, 16
      %v1068 = vrot.slane %v1066, 4
      %v1069 = vor.u32 %v1065, %v1068
      %v1070 = vsel %vm787, %v1047, %v1069
      %v1071 = vrot.slane %v678, 3
      %v1072 = vrot.slane %v674, 4
      %v1073 = vor.u32 %v1071, %v1072
      %v1074 = vsel %vm787, %v1051, %v1073
      %v1076 = vshrl.u32 %v685, 16
      %v1078 = vrot.slane %v1076, 3
      %v1079 = vshll.u32 %v685, 16
      %v1081 = vrot.slane %v1079, 4
      %v1082 = vor.u32 %v1078, %v1081
      %v1083 = vsel %vm787, %v1060, %v1082
      %v1085 = vshrl.u32 %v734, 16
      %v1087 = vrot.slane %v1085, 3
      %v1088 = vshll.u32 %v734, 16
      %v1090 = vrot.slane %v1088, 4
      %v1091 = vor.u32 %v1087, %v1090
      %v1092 = vsel %vm787, %v1069, %v1091
      %v1093 = vrot.slane %v686, 3
      %v1094 = vrot.slane %v682, 4
      %v1095 = vor.u32 %v1093, %v1094
      %v1096 = vsel %vm787, %v1073, %v1095
      %v1098 = vshrl.u32 %v693, 16
      %v1100 = vrot.slane %v1098, 3
      %v1101 = vshll.u32 %v693, 16
      %v1103 = vrot.slane %v1101, 4
      %v1104 = vor.u32 %v1100, %v1103
      %v1105 = vsel %vm787, %v1082, %v1104
      %v1107 = vshrl.u32 %v736, 16
      %v1109 = vrot.slane %v1107, 3
      %v1110 = vshll.u32 %v736, 16
      %v1112 = vrot.slane %v1110, 4
      %v1113 = vor.u32 %v1109, %v1112
      %v1114 = vsel %vm787, %v1091, %v1113
      %v1115 = vrot.slane %v694, 3
      %v1116 = vrot.slane %v690, 4
      %v1117 = vor.u32 %v1115, %v1116
      %v1118 = vsel %vm787, %v1095, %v1117
      %v1120 = vshrl.u32 %v701, 16
      %v1122 = vrot.slane %v1120, 3
      %v1123 = vshll.u32 %v701, 16
      %v1125 = vrot.slane %v1123, 4
      %v1126 = vor.u32 %v1122, %v1125
      %v1127 = vsel %vm787, %v1104, %v1126
      %v1129 = vshrl.u32 %v738, 16
      %v1131 = vrot.slane %v1129, 3
      %v1132 = vshll.u32 %v738, 16
      %v1134 = vrot.slane %v1132, 4
      %v1135 = vor.u32 %v1131, %v1134
      %v1136 = vsel %vm787, %v1113, %v1135
      %v1137 = vrot.slane %v702, 3
      %v1138 = vrot.slane %v698, 4
      %v1139 = vor.u32 %v1137, %v1138
      %v1140 = vsel %vm787, %v1117, %v1139
      %v1142 = vshrl.u32 %v704, 16
      %v1144 = vrot.slane %v1142, 3
      %v1145 = vshll.u32 %v704, 16
      %v1147 = vrot.slane %v1145, 4
      %v1148 = vor.u32 %v1144, %v1147
      %v1149 = vsel %vm787, %v1126, %v1148
      %v1151 = vshrl.u32 %v737, 16
      %v1153 = vrot.slane %v1151, 3
      %v1154 = vshll.u32 %v737, 16
      %v1156 = vrot.slane %v1154, 4
      %v1157 = vor.u32 %v1153, %v1156
      %v1158 = vsel %vm787, %v1135, %v1157
      %v1255 = vunpack.c.l.b16 %v739
      %v1256 = vunpack.c.l.b16 %v740
      %v1257 = vunpack.c.l.b16 %v741
      %v1258 = vunpack.c.l.b16 %v742
      %v1259 = vunpack.c.l.b16 %v743
      %v1260 = vunpack.c.l.b16 %v744
      %v1261 = vunpack.c.l.b16 %v745
      %v1262 = vunpack.c.l.b16 %v746
      %v1263 = vunpack.c.l.b16 %v747
      %v1264 = vunpack.c.l.b16 %v748
      %v1265 = vunpack.c.l.b16 %v749
      %v1266 = vunpack.c.l.b16 %v750
      %v1267 = vunpack.c.l.b16 %v751
      %v1268 = vunpack.c.l.b16 %v752
      %v1269 = vunpack.c.l.b16 %v753
      %v1270 = vunpack.c.l.b16 %v754
      %v1271 = vunpack.c.l.b16 %v755
      %v1272 = vunpack.c.l.b16 %v756
      %v1273 = vunpack.c.l.b16 %v757
      %v1274 = vunpack.c.l.b16 %v758
      %v1275 = vunpack.c.l.b16 %v759
      %v1276 = vunpack.c.l.b16 %v760
      %v1277 = vunpack.c.l.b16 %v761
      %v1278 = vunpack.c.l.b16 %v762
      %v1279 = vunpack.c.l.b16 %v763
      %v1280 = vunpack.c.l.b16 %v764
      %v1281 = vunpack.c.l.b16 %v765
      %v1282 = vunpack.c.l.b16 %v766
      %v1283 = vunpack.c.l.b16 %v767
      %v1284 = vunpack.c.l.b16 %v768
      %v1285 = vunpack.c.l.b16 %v769
      %v1286 = vunpack.c.l.b16 %v770
      %v1287 = vunpack.c.l.b16 %v771
      %v1288 = vunpack.c.l.b16 %v772
      %v1289 = vunpack.c.l.b16 %v773
      %v1290 = vunpack.c.l.b16 %v774
      %v1291 = vunpack.c.l.b16 %v775
      %v1292 = vunpack.c.l.b16 %v776
      %v1293 = vunpack.c.l.b16 %v777
      %v1294 = vunpack.c.l.b16 %v778
      %v1295 = vunpack.c.l.b16 %v779
      %v1296 = vunpack.c.l.b16 %v780
      %v1297 = vunpack.c.l.b16 %v781
      %v1298 = vunpack.c.l.b16 %v782
      %v1299 = vunpack.c.l.b16 %v783
      %v1300 = vunpack.c.l.b16 %v784
      %v1301 = vunpack.c.l.b16 %v785
      %v1302 = vunpack.c.l.b16 %v786
      %v1303 = vpack.c.b16 %v1256, %v1255
      %v1304 = vpack.c.b16 %v1258, %v1257
      %v1305 = vpack.c.b16 %v1260, %v1259
      %v1306 = vpack.c.b16 %v1262, %v1261
      %v1307 = vpack.c.b16 %v1264, %v1263
      %v1308 = vpack.c.b16 %v1266, %v1265
      %v1309 = vpack.c.b16 %v1268, %v1267
      %v1310 = vpack.c.b16 %v1270, %v1269
      %v1311 = vpack.c.b16 %v1272, %v1271
      %v1312 = vpack.c.b16 %v1274, %v1273
      %v1313 = vpack.c.b16 %v1276, %v1275
      %v1314 = vpack.c.b16 %v1278, %v1277
      %v1315 = vpack.c.b16 %v1280, %v1279
      %v1316 = vpack.c.b16 %v1282, %v1281
      %v1317 = vpack.c.b16 %v1284, %v1283
      %v1318 = vpack.c.b16 %v1286, %v1285
      %v1319 = vpack.c.b16 %v1288, %v1287
      %v1320 = vpack.c.b16 %v1290, %v1289
      %v1321 = vpack.c.b16 %v1292, %v1291
      %v1322 = vpack.c.b16 %v1294, %v1293
      %v1323 = vpack.c.b16 %v1296, %v1295
      %v1324 = vpack.c.b16 %v1298, %v1297
      %v1325 = vpack.c.b16 %v1300, %v1299
      %v1326 = vpack.c.b16 %v1302, %v1301
      %1351 = vmatprep.subr.bf16.mxu0 0
      %1352 = vmatpush1.bf16.msra.mxu0 %v1303
      %1353 = vmatprep.subr.bf16.mxu0 0
      %1354 = vmatpush1.bf16.msra.mxu0 %v1304
      %1355 = vmatprep.subr.bf16.mxu0 0
      %1356 = vmatpush1.bf16.msra.mxu0 %v1305
      %1357 = vmatprep.subr.bf16.mxu0 0
      %1358 = vmatpush1.bf16.msra.mxu0 %v1306
      %1359 = vmatprep.subr.bf16.mxu0 0
      %1360 = vmatpush1.bf16.msra.mxu0 %v1307
      %1361 = vmatprep.subr.bf16.mxu0 0
      %1362 = vmatpush1.bf16.msra.mxu0 %v1308
      %1363 = vmatprep.subr.bf16.mxu0 0
      %1364 = vmatpush1.bf16.msra.mxu0 %v1309
      %1365 = vmatprep.subr.bf16.mxu0 0
      %1366 = vmatpush1.bf16.msra.mxu0 %v1310
      %1367 = vmatprep.subr.bf16.mxu0 0
      %1368 = vmatpush1.bf16.msra.mxu0 %v1311
      %1369 = vmatprep.subr.bf16.mxu0 0
      %1370 = vmatpush1.bf16.msra.mxu0 %v1312
      %1371 = vmatprep.subr.bf16.mxu0 0
      %1372 = vmatpush1.bf16.msra.mxu0 %v1313
      %1373 = vmatprep.subr.bf16.mxu0 0
      %1374 = vmatpush1.bf16.msra.mxu0 %v1314
      %1375 = vmatprep.subr.bf16.mxu0 0
      %1376 = vmatpush1.bf16.msra.mxu0 %v1315
      %1377 = vmatprep.subr.bf16.mxu0 0
      %1378 = vmatpush1.bf16.msra.mxu0 %v1316
      %1379 = vmatprep.subr.bf16.mxu0 0
      %1380 = vmatpush1.bf16.msra.mxu0 %v1317
      %1381 = vmatprep.subr.bf16.mxu0 0
      %1382 = vmatpush1.bf16.msra.mxu0 %v1318
      %1383 = vmatprep.mubr.bf16.mxu0 %v811
      %1384 = vmatmul.mubr.bf16.gmra.mrb[0].mxu0 %v794
      %v1385 = vpop.f32.mrb[0].mxu0
      %v1386 = vadd.f32 0.0, %v1385
      %v1387 = vpop.f32.mrb[0].mxu0
      %v1388 = vpop.f32.mrb[0].mxu0
      %v1389 = vadd.f32 0.0, %v1388
      %v1390 = vpop.f32.mrb[0].mxu0
      %1391 = vmatprep.mubr.bf16.mxu0 %v841
      %1392 = vmatmul.mubr.bf16.gmra.mrb[0].mxu0 %v832
      %v1393 = vpop.f32.mrb[0].mxu0
      %v1394 = vadd.f32 0.0, %v1393
      %v1395 = vpop.f32.mrb[0].mxu0
      %v1396 = vpop.f32.mrb[0].mxu0
      %v1397 = vadd.f32 0.0, %v1396
      %v1398 = vpop.f32.mrb[0].mxu0
      %1399 = vmatprep.mubr.bf16.mxu0 %v863
      %1400 = vmatmul.mubr.bf16.gmra.mrb[0].mxu0 %v854
      %v1401 = vpop.f32.mrb[0].mxu0
      %v1402 = vadd.f32 0.0, %v1401
      %v1403 = vpop.f32.mrb[0].mxu0
      %v1404 = vpop.f32.mrb[0].mxu0
      %v1405 = vadd.f32 0.0, %v1404
      %v1406 = vpop.f32.mrb[0].mxu0
      %1407 = vmatprep.mubr.bf16.mxu0 %v885
      %1408 = vmatmul.mubr.bf16.gmra.mrb[0].mxu0 %v876
      %v1409 = vpop.f32.mrb[0].mxu0
      %v1410 = vadd.f32 0.0, %v1409
      %v1411 = vpop.f32.mrb[0].mxu0
      %v1412 = vpop.f32.mrb[0].mxu0
      %v1413 = vadd.f32 0.0, %v1412
      %v1414 = vpop.f32.mrb[0].mxu0
      %1415 = vmatprep.mubr.bf16.mxu0 %v907
      %1416 = vmatmul.mubr.bf16.gmra.mrb[0].mxu0 %v898
      %v1417 = vpop.f32.mrb[0].mxu0
      %v1418 = vadd.f32 0.0, %v1417
      %v1419 = vpop.f32.mrb[0].mxu0
      %v1420 = vpop.f32.mrb[0].mxu0
      %v1421 = vadd.f32 0.0, %v1420
      %v1422 = vpop.f32.mrb[0].mxu0
      %1423 = vmatprep.mubr.bf16.mxu0 %v929
      %1424 = vmatmul.mubr.bf16.gmra.mrb[0].mxu0 %v920
      %v1425 = vpop.f32.mrb[0].mxu0
      %v1426 = vadd.f32 0.0, %v1425
      %v1427 = vpop.f32.mrb[0].mxu0
      %v1428 = vpop.f32.mrb[0].mxu0
      %v1429 = vadd.f32 0.0, %v1428
      %v1430 = vpop.f32.mrb[0].mxu0
      %1431 = vmatprep.mubr.bf16.mxu0 %v951
      %1432 = vmatmul.mubr.bf16.gmra.mrb[0].mxu0 %v942
      %v1433 = vpop.f32.mrb[0].mxu0
      %v1434 = vadd.f32 0.0, %v1433
      %v1435 = vpop.f32.mrb[0].mxu0
      %v1436 = vpop.f32.mrb[0].mxu0
      %v1437 = vadd.f32 0.0, %v1436
      %v1438 = vpop.f32.mrb[0].mxu0
      %1439 = vmatprep.mubr.bf16.mxu0 %v973
      %1440 = vmatmul.mubr.bf16.gmra.mrb[0].mxu0 %v964
      %v1441 = vpop.f32.mrb[0].mxu0
      %v1442 = vadd.f32 0.0, %v1441
      %v1443 = vpop.f32.mrb[0].mxu0
      %v1444 = vpop.f32.mrb[0].mxu0
      %v1445 = vadd.f32 0.0, %v1444
      %v1446 = vpop.f32.mrb[0].mxu0
      %1447 = vmatprep.mubr.bf16.mxu0 %v995
      %1448 = vmatmul.mubr.bf16.gmra.mrb[0].mxu0 %v986
      %v1449 = vpop.f32.mrb[0].mxu0
      %v1450 = vadd.f32 0.0, %v1449
      %v1451 = vpop.f32.mrb[0].mxu0
      %v1452 = vpop.f32.mrb[0].mxu0
      %v1453 = vadd.f32 0.0, %v1452
      %v1454 = vpop.f32.mrb[0].mxu0
      %1455 = vmatprep.mubr.bf16.mxu0 %v1017
      %1456 = vmatmul.mubr.bf16.gmra.mrb[0].mxu0 %v1008
      %v1457 = vpop.f32.mrb[0].mxu0
      %v1458 = vadd.f32 0.0, %v1457
      %v1459 = vpop.f32.mrb[0].mxu0
      %v1460 = vpop.f32.mrb[0].mxu0
      %v1461 = vadd.f32 0.0, %v1460
      %v1462 = vpop.f32.mrb[0].mxu0
      %1463 = vmatprep.mubr.bf16.mxu0 %v1039
      %1464 = vmatmul.mubr.bf16.gmra.mrb[0].mxu0 %v1030
      %v1465 = vpop.f32.mrb[0].mxu0
      %v1466 = vadd.f32 0.0, %v1465
      %v1467 = vpop.f32.mrb[0].mxu0
      %v1468 = vpop.f32.mrb[0].mxu0
      %v1469 = vadd.f32 0.0, %v1468
      %v1470 = vpop.f32.mrb[0].mxu0
      %1471 = vmatprep.mubr.bf16.mxu0 %v1061
      %1472 = vmatmul.mubr.bf16.gmra.mrb[0].mxu0 %v1052
      %v1473 = vpop.f32.mrb[0].mxu0
      %v1474 = vadd.f32 0.0, %v1473
      %v1475 = vpop.f32.mrb[0].mxu0
      %v1476 = vpop.f32.mrb[0].mxu0
      %v1477 = vadd.f32 0.0, %v1476
      %v1478 = vpop.f32.mrb[0].mxu0
      %1479 = vmatprep.mubr.bf16.mxu0 %v1083
      %1480 = vmatmul.mubr.bf16.gmra.mrb[0].mxu0 %v1074
      %v1481 = vpop.f32.mrb[0].mxu0
      %v1482 = vadd.f32 0.0, %v1481
      %v1483 = vpop.f32.mrb[0].mxu0
      %v1484 = vpop.f32.mrb[0].mxu0
      %v1485 = vadd.f32 0.0, %v1484
      %v1486 = vpop.f32.mrb[0].mxu0
      %1487 = vmatprep.mubr.bf16.mxu0 %v1105
      %1488 = vmatmul.mubr.bf16.gmra.mrb[0].mxu0 %v1096
      %v1489 = vpop.f32.mrb[0].mxu0
      %v1490 = vadd.f32 0.0, %v1489
      %v1491 = vpop.f32.mrb[0].mxu0
      %v1492 = vpop.f32.mrb[0].mxu0
      %v1493 = vadd.f32 0.0, %v1492
      %v1494 = vpop.f32.mrb[0].mxu0
      %1495 = vmatprep.mubr.bf16.mxu0 %v1127
      %1496 = vmatmul.mubr.bf16.gmra.mrb[0].mxu0 %v1118
      %v1497 = vpop.f32.mrb[0].mxu0
      %v1498 = vadd.f32 0.0, %v1497
      %v1499 = vpop.f32.mrb[0].mxu0
      %v1500 = vpop.f32.mrb[0].mxu0
      %v1501 = vadd.f32 0.0, %v1500
      %v1502 = vpop.f32.mrb[0].mxu0
      %1503 = vmatprep.mubr.bf16.mxu0 %v1149
      %1504 = vmatmul.mubr.bf16.gmra.mrb[0].mxu0 %v1140
      %v1505 = vpop.f32.mrb[0].mxu0
      %v1506 = vadd.f32 0.0, %v1505
      %v1507 = vpop.f32.mrb[0].mxu0
      %v1508 = vpop.f32.mrb[0].mxu0
      %v1509 = vadd.f32 0.0, %v1508
      %v1510 = vpop.f32.mrb[0].mxu0
      %1511 = vdwg.mxu0
      %1512 = vmatprep.subr.bf16.mxu0 0
      %1513 = vmatpush1.bf16.msra.mxu0 %v1319
      %1514 = vmatprep.subr.bf16.mxu0 0
      %1515 = vmatpush1.bf16.msra.mxu0 %v1320
      %1516 = vmatprep.subr.bf16.mxu0 0
      %1517 = vmatpush1.bf16.msra.mxu0 %v1321
      %1518 = vmatprep.subr.bf16.mxu0 0
      %1519 = vmatpush1.bf16.msra.mxu0 %v1322
      %1520 = vmatprep.subr.bf16.mxu0 0
      %1521 = vmatpush1.bf16.msra.mxu0 %v1323
      %1522 = vmatprep.subr.bf16.mxu0 0
      %1523 = vmatpush1.bf16.msra.mxu0 %v1324
      %1524 = vmatprep.subr.bf16.mxu0 0
      %1525 = vmatpush1.bf16.msra.mxu0 %v1325
      %1526 = vmatprep.subr.bf16.mxu0 0
      %1527 = vmatpush1.bf16.msra.mxu0 %v1326
      %1528 = vmatprep.subr.bf16.mxu0 0
      %1529 = vmatpush1.bf16.msra.mxu0 0
      %1530 = vmatprep.subr.bf16.mxu0 0
      %1531 = vmatpush1.bf16.msra.mxu0 0
      %1532 = vmatprep.subr.bf16.mxu0 0
      %1533 = vmatpush1.bf16.msra.mxu0 0
      %1534 = vmatprep.subr.bf16.mxu0 0
      %1535 = vmatpush1.bf16.msra.mxu0 0
      %1536 = vmatprep.subr.bf16.mxu0 0
      %1537 = vmatpush1.bf16.msra.mxu0 0
      %1538 = vmatprep.subr.bf16.mxu0 0
      %1539 = vmatpush1.bf16.msra.mxu0 0
      %1540 = vmatprep.subr.bf16.mxu0 0
      %1541 = vmatpush1.bf16.msra.mxu0 0
      %1542 = vmatprep.subr.bf16.mxu0 0
      %1543 = vmatpush1.bf16.msra.mxu0 0
      %1544 = vmatprep.mubr.bf16.mxu0 0
      %1545 = vmatmul.mubr.bf16.gmra.mrb[0].mxu0 %v828
      %v1546 = vpop.f32.mrb[0].mxu0
      %v1547 = vadd.f32 %v1386, %v1546
      %v1548 = vpop.f32.mrb[0].mxu0
      %v1549 = vpop.f32.mrb[0].mxu0
      %v1550 = vadd.f32 %v1389, %v1549
      %v1551 = vpop.f32.mrb[0].mxu0
      %1552 = vmatprep.mubr.bf16.mxu0 0
      %1553 = vmatmul.mubr.bf16.gmra.mrb[0].mxu0 %v850
      %v1554 = vpop.f32.mrb[0].mxu0
      %v1555 = vadd.f32 %v1394, %v1554
      %v1556 = vpop.f32.mrb[0].mxu0
      %v1557 = vpop.f32.mrb[0].mxu0
      %v1558 = vadd.f32 %v1397, %v1557
      %v1559 = vpop.f32.mrb[0].mxu0
      %1560 = vmatprep.mubr.bf16.mxu0 0
      %1561 = vmatmul.mubr.bf16.gmra.mrb[0].mxu0 %v872
      %v1562 = vpop.f32.mrb[0].mxu0
      %v1563 = vadd.f32 %v1402, %v1562
      %v1564 = vpop.f32.mrb[0].mxu0
      %v1565 = vpop.f32.mrb[0].mxu0
      %v1566 = vadd.f32 %v1405, %v1565
      %v1567 = vpop.f32.mrb[0].mxu0
      %1568 = vmatprep.mubr.bf16.mxu0 0
      %1569 = vmatmul.mubr.bf16.gmra.mrb[0].mxu0 %v894
      %v1570 = vpop.f32.mrb[0].mxu0
      %v1571 = vadd.f32 %v1410, %v1570
      %v1572 = vpop.f32.mrb[0].mxu0
      %v1573 = vpop.f32.mrb[0].mxu0
      %v1574 = vadd.f32 %v1413, %v1573
      %v1575 = vpop.f32.mrb[0].mxu0
      %1576 = vmatprep.mubr.bf16.mxu0 0
      %1577 = vmatmul.mubr.bf16.gmra.mrb[0].mxu0 %v916
      %v1578 = vpop.f32.mrb[0].mxu0
      %v1579 = vadd.f32 %v1418, %v1578
      %v1580 = vpop.f32.mrb[0].mxu0
      %v1581 = vpop.f32.mrb[0].mxu0
      %v1582 = vadd.f32 %v1421, %v1581
      %v1583 = vpop.f32.mrb[0].mxu0
      %1584 = vmatprep.mubr.bf16.mxu0 0
      %1585 = vmatmul.mubr.bf16.gmra.mrb[0].mxu0 %v938
      %v1586 = vpop.f32.mrb[0].mxu0
      %v1587 = vadd.f32 %v1426, %v1586
      %v1588 = vpop.f32.mrb[0].mxu0
      %v1589 = vpop.f32.mrb[0].mxu0
      %v1590 = vadd.f32 %v1429, %v1589
      %v1591 = vpop.f32.mrb[0].mxu0
      %1592 = vmatprep.mubr.bf16.mxu0 0
      %1593 = vmatmul.mubr.bf16.gmra.mrb[0].mxu0 %v960
      %v1594 = vpop.f32.mrb[0].mxu0
      %v1595 = vadd.f32 %v1434, %v1594
      %v1596 = vpop.f32.mrb[0].mxu0
      %v1597 = vpop.f32.mrb[0].mxu0
      %v1598 = vadd.f32 %v1437, %v1597
      %v1599 = vpop.f32.mrb[0].mxu0
      %1600 = vmatprep.mubr.bf16.mxu0 0
      %1601 = vmatmul.mubr.bf16.gmra.mrb[0].mxu0 %v982
      %v1602 = vpop.f32.mrb[0].mxu0
      %v1603 = vadd.f32 %v1442, %v1602
      %v1604 = vpop.f32.mrb[0].mxu0
      %v1605 = vpop.f32.mrb[0].mxu0
      %v1606 = vadd.f32 %v1445, %v1605
      %v1607 = vpop.f32.mrb[0].mxu0
      %1608 = vmatprep.mubr.bf16.mxu0 0
      %1609 = vmatmul.mubr.bf16.gmra.mrb[0].mxu0 %v1004
      %v1610 = vpop.f32.mrb[0].mxu0
      %v1611 = vadd.f32 %v1450, %v1610
      %v1612 = vpop.f32.mrb[0].mxu0
      %v1613 = vpop.f32.mrb[0].mxu0
      %v1614 = vadd.f32 %v1453, %v1613
      %v1615 = vpop.f32.mrb[0].mxu0
      %1616 = vmatprep.mubr.bf16.mxu0 0
      %1617 = vmatmul.mubr.bf16.gmra.mrb[0].mxu0 %v1026
      %v1618 = vpop.f32.mrb[0].mxu0
      %v1619 = vadd.f32 %v1458, %v1618
      %v1620 = vpop.f32.mrb[0].mxu0
      %v1621 = vpop.f32.mrb[0].mxu0
      %v1622 = vadd.f32 %v1461, %v1621
      %v1623 = vpop.f32.mrb[0].mxu0
      %1624 = vmatprep.mubr.bf16.mxu0 0
      %1625 = vmatmul.mubr.bf16.gmra.mrb[0].mxu0 %v1048
      %v1626 = vpop.f32.mrb[0].mxu0
      %v1627 = vadd.f32 %v1466, %v1626
      %v1628 = vpop.f32.mrb[0].mxu0
      %v1629 = vpop.f32.mrb[0].mxu0
      %v1630 = vadd.f32 %v1469, %v1629
      %v1631 = vpop.f32.mrb[0].mxu0
      %1632 = vmatprep.mubr.bf16.mxu0 0
      %1633 = vmatmul.mubr.bf16.gmra.mrb[0].mxu0 %v1070
      %v1634 = vpop.f32.mrb[0].mxu0
      %v1635 = vadd.f32 %v1474, %v1634
      %v1636 = vpop.f32.mrb[0].mxu0
      %v1637 = vpop.f32.mrb[0].mxu0
      %v1638 = vadd.f32 %v1477, %v1637
      %v1639 = vpop.f32.mrb[0].mxu0
      %1640 = vmatprep.mubr.bf16.mxu0 0
      %1641 = vmatmul.mubr.bf16.gmra.mrb[0].mxu0 %v1092
      %v1642 = vpop.f32.mrb[0].mxu0
      %v1643 = vadd.f32 %v1482, %v1642
      %v1644 = vpop.f32.mrb[0].mxu0
      %v1645 = vpop.f32.mrb[0].mxu0
      %v1646 = vadd.f32 %v1485, %v1645
      %v1647 = vpop.f32.mrb[0].mxu0
      %1648 = vmatprep.mubr.bf16.mxu0 0
      %1649 = vmatmul.mubr.bf16.gmra.mrb[0].mxu0 %v1114
      %v1650 = vpop.f32.mrb[0].mxu0
      %v1651 = vadd.f32 %v1490, %v1650
      %v1652 = vpop.f32.mrb[0].mxu0
      %v1653 = vpop.f32.mrb[0].mxu0
      %v1654 = vadd.f32 %v1493, %v1653
      %v1655 = vpop.f32.mrb[0].mxu0
      %1656 = vmatprep.mubr.bf16.mxu0 0
      %1657 = vmatmul.mubr.bf16.gmra.mrb[0].mxu0 %v1136
      %v1658 = vpop.f32.mrb[0].mxu0
      %v1659 = vadd.f32 %v1498, %v1658
      %v1660 = vpop.f32.mrb[0].mxu0
      %v1661 = vpop.f32.mrb[0].mxu0
      %v1662 = vadd.f32 %v1501, %v1661
      %v1663 = vpop.f32.mrb[0].mxu0
      %1664 = vmatprep.mubr.bf16.mxu0 0
      %1665 = vmatmul.mubr.bf16.gmra.mrb[0].mxu0 %v1158
      %v1666 = vpop.f32.mrb[0].mxu0
      %v1667 = vadd.f32 %v1506, %v1666
      %v1668 = vpop.f32.mrb[0].mxu0
      %v1669 = vpop.f32.mrb[0].mxu0
      %v1670 = vadd.f32 %v1509, %v1669
      %v1671 = vpop.f32.mrb[0].mxu0
      %1672 = vdwg.mxu0
      %1673 = vst [vmem:[#allocation2] sm:$0xff] %v1547
      %1674 = vst [vmem:[#allocation2 + $0x8] sm:$0xff] %v1550
      %1675 = vst [vmem:[#allocation2 + $0x10] sm:$0xff] %v1555
      %1676 = vst [vmem:[#allocation2 + $0x18] sm:$0xff] %v1558
      %1677 = vst [vmem:[#allocation2 + $0x20] sm:$0xff] %v1563
      %1678 = vst [vmem:[#allocation2 + $0x28] sm:$0xff] %v1566
      %1679 = vst [vmem:[#allocation2 + $0x30] sm:$0xff] %v1571
      %1680 = vst [vmem:[#allocation2 + $0x38] sm:$0xff] %v1574
      %1681 = vst [vmem:[#allocation2 + $0x40] sm:$0xff] %v1579
      %1682 = vst [vmem:[#allocation2 + $0x48] sm:$0xff] %v1582
      %1683 = vst [vmem:[#allocation2 + $0x50] sm:$0xff] %v1587
      %1684 = vst [vmem:[#allocation2 + $0x58] sm:$0xff] %v1590
      %1685 = vst [vmem:[#allocation2 + $0x60] sm:$0xff] %v1595
      %1686 = vst [vmem:[#allocation2 + $0x68] sm:$0xff] %v1598
      %1687 = vst [vmem:[#allocation2 + $0x70] sm:$0xff] %v1603
      %1688 = vst [vmem:[#allocation2 + $0x78] sm:$0xff] %v1606
      %1689 = vst [vmem:[#allocation2 + $0x80] sm:$0xff] %v1611
      %1690 = vst [vmem:[#allocation2 + $0x88] sm:$0xff] %v1614
      %1691 = vst [vmem:[#allocation2 + $0x90] sm:$0xff] %v1619
      %1692 = vst [vmem:[#allocation2 + $0x98] sm:$0xff] %v1622
      %1693 = vst [vmem:[#allocation2 + $0xa0] sm:$0xff] %v1627
      %1694 = vst [vmem:[#allocation2 + $0xa8] sm:$0xff] %v1630
      %1695 = vst [vmem:[#allocation2 + $0xb0] sm:$0xff] %v1635
      %1696 = vst [vmem:[#allocation2 + $0xb8] sm:$0xff] %v1638
      %1697 = vst [vmem:[#allocation2 + $0xc0] sm:$0xff] %v1643
      %1698 = vst [vmem:[#allocation2 + $0xc8] sm:$0xff] %v1646
      %1699 = vst [vmem:[#allocation2 + $0xd0] sm:$0xff] %v1651
      %1700 = vst [vmem:[#allocation2 + $0xd8] sm:$0xff] %v1654
      %1701 = vst [vmem:[#allocation2 + $0xe0] sm:$0xff] %v1659
      %1702 = vst [vmem:[#allocation2 + $0xe8] sm:$0xff] %v1662
      %1703 = vst [vmem:[#allocation2 + $0xf0] sm:$0xff] %v1667
      %1704 = vst [vmem:[#allocation2 + $0xf8] sm:$0xff] %v1670
      %v1706 = vshll.u32 %v558, 16
      %v1708 = vrot.slane %v1706, 1
      %v1709 = vsel %vm569, %v704, %v1708
      %v1710 = vshrl.u32 %v558, 16
      %v1712 = vor.u32 %v1710, %v1708
      %v1713 = vrot.slane %v558, 1
      %v1714 = vsel %vm705, %v737, %v1713
      %v1715 = vrot.slane %v567, 1
      %v1716 = vsel %vm705, %v1713, %v1715
      %s1717 = scalar_lea.vmem %s409, 192
      %v1718 = vld [vmem:[%s1717] sm:$0xf]
      %v1719 = vld [vmem:[%s1717 + $0x4] sm:$0xf]
      %v1720 = vld [vmem:[%s1717 + $0x8] sm:$0xf]
      %v1721 = vld [vmem:[%s1717 + $0xc] sm:$0xf]
      %v1722 = vld [vmem:[%s1717 + $0x10] sm:$0xf]
      %v1723 = vld [vmem:[%s1717 + $0x14] sm:$0xf]
      %v1724 = vld [vmem:[%s1717 + $0x18] sm:$0xf]
      %v1725 = vld [vmem:[%s1717 + $0x1c] sm:$0xf]
      %v1726 = vld [vmem:[%s1717 + $0x20] sm:$0xf]
      %v1727 = vld [vmem:[%s1717 + $0x24] sm:$0xf]
      %v1728 = vld [vmem:[%s1717 + $0x28] sm:$0xf]
      %v1729 = vld [vmem:[%s1717 + $0x2c] sm:$0xf]
      %v1730 = vld [vmem:[%s1717 + $0x30] sm:$0xf]
      %v1731 = vld [vmem:[%s1717 + $0x34] sm:$0xf]
      %v1732 = vld [vmem:[%s1717 + $0x38] sm:$0xf]
      %v1733 = vld [vmem:[%s1717 + $0x3c] sm:$0xf]
      %v1734 = vld [vmem:[%s1717 + $0x40] sm:$0xf]
      %v1735 = vld [vmem:[%s1717 + $0x44] sm:$0xf]
      %v1736 = vld [vmem:[%s1717 + $0x48] sm:$0xf]
      %v1737 = vld [vmem:[%s1717 + $0x4c] sm:$0xf]
      %v1738 = vld [vmem:[%s1717 + $0x50] sm:$0xf]
      %v1739 = vld [vmem:[%s1717 + $0x54] sm:$0xf]
      %v1740 = vld [vmem:[%s1717 + $0x58] sm:$0xf]
      %v1741 = vld [vmem:[%s1717 + $0x5c] sm:$0xf]
      %v1742 = vld [vmem:[%s1717 + $0x60] sm:$0xf]
      %v1743 = vld [vmem:[%s1717 + $0x64] sm:$0xf]
      %v1744 = vld [vmem:[%s1717 + $0x68] sm:$0xf]
      %v1745 = vld [vmem:[%s1717 + $0x6c] sm:$0xf]
      %v1746 = vld [vmem:[%s1717 + $0x70] sm:$0xf]
      %v1747 = vld [vmem:[%s1717 + $0x74] sm:$0xf]
      %v1748 = vld [vmem:[%s1717 + $0x78] sm:$0xf]
      %v1749 = vld [vmem:[%s1717 + $0x7c] sm:$0xf]
      %v1750 = vld [vmem:[%s1717 + $0x80] sm:$0xf]
      %v1751 = vld [vmem:[%s1717 + $0x84] sm:$0xf]
      %v1752 = vld [vmem:[%s1717 + $0x88] sm:$0xf]
      %v1753 = vld [vmem:[%s1717 + $0x8c] sm:$0xf]
      %v1754 = vld [vmem:[%s1717 + $0x90] sm:$0xf]
      %v1755 = vld [vmem:[%s1717 + $0x94] sm:$0xf]
      %v1756 = vld [vmem:[%s1717 + $0x98] sm:$0xf]
      %v1757 = vld [vmem:[%s1717 + $0x9c] sm:$0xf]
      %v1758 = vld [vmem:[%s1717 + $0xa0] sm:$0xf]
      %v1759 = vld [vmem:[%s1717 + $0xa4] sm:$0xf]
      %v1760 = vld [vmem:[%s1717 + $0xa8] sm:$0xf]
      %v1761 = vld [vmem:[%s1717 + $0xac] sm:$0xf]
      %v1762 = vld [vmem:[%s1717 + $0xb0] sm:$0xf]
      %v1763 = vld [vmem:[%s1717 + $0xb4] sm:$0xf]
      %v1764 = vld [vmem:[%s1717 + $0xb8] sm:$0xf]
      %v1765 = vld [vmem:[%s1717 + $0xbc] sm:$0xf]
      %vm1766 = vsmask.f32 256
      %v1767 = vrot.slane %v582, 7
      %v1768 = vrot.slane %v590, 7
      %v1769 = vor.u32 %v1768, %v586
      %v1770 = vsel %vm1766, %v1767, %v1769
      %v1772 = vshrl.u32 %v588, 16
      %v1774 = vrot.slane %v1772, 7
      %v1775 = vrot.slane %v834, 7
      %v1776 = vor.u32 %v1775, %v837
      %v1777 = vsel %vm1766, %v1774, %v1776
      %v1779 = vshrl.u32 %v709, 16
      %v1781 = vrot.slane %v1779, 7
      %v1782 = vrot.slane %v843, 7
      %v1783 = vor.u32 %v1782, %v846
      %v1784 = vsel %vm1766, %v1781, %v1783
      %v1785 = vrot.slane %v598, 7
      %v1786 = vor.u32 %v1785, %v594
      %v1787 = vsel %vm1766, %v1768, %v1786
      %v1788 = vrot.slane %v856, 7
      %v1789 = vor.u32 %v1788, %v859
      %v1790 = vsel %vm1766, %v1775, %v1789
      %v1791 = vrot.slane %v865, 7
      %v1792 = vor.u32 %v1791, %v868
      %v1793 = vsel %vm1766, %v1782, %v1792
      %v1794 = vrot.slane %v606, 7
      %v1795 = vor.u32 %v1794, %v602
      %v1796 = vsel %vm1766, %v1785, %v1795
      %v1797 = vrot.slane %v878, 7
      %v1798 = vor.u32 %v1797, %v881
      %v1799 = vsel %vm1766, %v1788, %v1798
      %v1800 = vrot.slane %v887, 7
      %v1801 = vor.u32 %v1800, %v890
      %v1802 = vsel %vm1766, %v1791, %v1801
      %v1803 = vrot.slane %v614, 7
      %v1804 = vor.u32 %v1803, %v610
      %v1805 = vsel %vm1766, %v1794, %v1804
      %v1806 = vrot.slane %v900, 7
      %v1807 = vor.u32 %v1806, %v903
      %v1808 = vsel %vm1766, %v1797, %v1807
      %v1809 = vrot.slane %v909, 7
      %v1810 = vor.u32 %v1809, %v912
      %v1811 = vsel %vm1766, %v1800, %v1810
      %v1812 = vrot.slane %v622, 7
      %v1813 = vor.u32 %v1812, %v618
      %v1814 = vsel %vm1766, %v1803, %v1813
      %v1815 = vrot.slane %v922, 7
      %v1816 = vor.u32 %v1815, %v925
      %v1817 = vsel %vm1766, %v1806, %v1816
      %v1818 = vrot.slane %v931, 7
      %v1819 = vor.u32 %v1818, %v934
      %v1820 = vsel %vm1766, %v1809, %v1819
      %v1821 = vrot.slane %v630, 7
      %v1822 = vor.u32 %v1821, %v626
      %v1823 = vsel %vm1766, %v1812, %v1822
      %v1824 = vrot.slane %v944, 7
      %v1825 = vor.u32 %v1824, %v947
      %v1826 = vsel %vm1766, %v1815, %v1825
      %v1827 = vrot.slane %v953, 7
      %v1828 = vor.u32 %v1827, %v956
      %v1829 = vsel %vm1766, %v1818, %v1828
      %v1830 = vrot.slane %v638, 7
      %v1831 = vor.u32 %v1830, %v634
      %v1832 = vsel %vm1766, %v1821, %v1831
      %v1833 = vrot.slane %v966, 7
      %v1834 = vor.u32 %v1833, %v969
      %v1835 = vsel %vm1766, %v1824, %v1834
      %v1836 = vrot.slane %v975, 7
      %v1837 = vor.u32 %v1836, %v978
      %v1838 = vsel %vm1766, %v1827, %v1837
      %v1839 = vrot.slane %v646, 7
      %v1840 = vor.u32 %v1839, %v642
      %v1841 = vsel %vm1766, %v1830, %v1840
      %v1842 = vrot.slane %v988, 7
      %v1843 = vor.u32 %v1842, %v991
      %v1844 = vsel %vm1766, %v1833, %v1843
      %v1845 = vrot.slane %v997, 7
      %v1846 = vor.u32 %v1845, %v1000
      %v1847 = vsel %vm1766, %v1836, %v1846
      %v1848 = vrot.slane %v654, 7
      %v1849 = vor.u32 %v1848, %v650
      %v1850 = vsel %vm1766, %v1839, %v1849
      %v1851 = vrot.slane %v1010, 7
      %v1852 = vor.u32 %v1851, %v1013
      %v1853 = vsel %vm1766, %v1842, %v1852
      %v1854 = vrot.slane %v1019, 7
      %v1855 = vor.u32 %v1854, %v1022
      %v1856 = vsel %vm1766, %v1845, %v1855
      %v1857 = vrot.slane %v662, 7
      %v1858 = vor.u32 %v1857, %v658
      %v1859 = vsel %vm1766, %v1848, %v1858
      %v1860 = vrot.slane %v1032, 7
      %v1861 = vor.u32 %v1860, %v1035
      %v1862 = vsel %vm1766, %v1851, %v1861
      %v1863 = vrot.slane %v1041, 7
      %v1864 = vor.u32 %v1863, %v1044
      %v1865 = vsel %vm1766, %v1854, %v1864
      %v1866 = vrot.slane %v670, 7
      %v1867 = vor.u32 %v1866, %v666
      %v1868 = vsel %vm1766, %v1857, %v1867
      %v1869 = vrot.slane %v1054, 7
      %v1870 = vor.u32 %v1869, %v1057
      %v1871 = vsel %vm1766, %v1860, %v1870
      %v1872 = vrot.slane %v1063, 7
      %v1873 = vor.u32 %v1872, %v1066
      %v1874 = vsel %vm1766, %v1863, %v1873
      %v1875 = vrot.slane %v678, 7
      %v1876 = vor.u32 %v1875, %v674
      %v1877 = vsel %vm1766, %v1866, %v1876
      %v1878 = vrot.slane %v1076, 7
      %v1879 = vor.u32 %v1878, %v1079
      %v1880 = vsel %vm1766, %v1869, %v1879
      %v1881 = vrot.slane %v1085, 7
      %v1882 = vor.u32 %v1881, %v1088
      %v1883 = vsel %vm1766, %v1872, %v1882
      %v1884 = vrot.slane %v686, 7
      %v1885 = vor.u32 %v1884, %v682
      %v1886 = vsel %vm1766, %v1875, %v1885
      %v1887 = vrot.slane %v1098, 7
      %v1888 = vor.u32 %v1887, %v1101
      %v1889 = vsel %vm1766, %v1878, %v1888
      %v1890 = vrot.slane %v1107, 7
      %v1891 = vor.u32 %v1890, %v1110
      %v1892 = vsel %vm1766, %v1881, %v1891
      %v1893 = vrot.slane %v694, 7
      %v1894 = vor.u32 %v1893, %v690
      %v1895 = vsel %vm1766, %v1884, %v1894
      %v1896 = vrot.slane %v1120, 7
      %v1897 = vor.u32 %v1896, %v1123
      %v1898 = vsel %vm1766, %v1887, %v1897
      %v1899 = vrot.slane %v1129, 7
      %v1900 = vor.u32 %v1899, %v1132
      %v1901 = vsel %vm1766, %v1890, %v1900
      %v1902 = vrot.slane %v702, 7
      %v1903 = vor.u32 %v1902, %v698
      %v1904 = vsel %vm1766, %v1893, %v1903
      %v1906 = vshrl.u32 %v1709, 16
      %v1908 = vrot.slane %v1906, 7
      %v1909 = vshll.u32 %v1709, 16
      %v1911 = vor.u32 %v1908, %v1909
      %v1912 = vsel %vm1766, %v1896, %v1911
      %v1914 = vshrl.u32 %v1714, 16
      %v1916 = vrot.slane %v1914, 7
      %v1917 = vshll.u32 %v1714, 16
      %v1919 = vor.u32 %v1916, %v1917
      %v1920 = vsel %vm1766, %v1899, %v1919
      %v1921 = vrot.slane %v1710, 7
      %v1922 = vor.u32 %v1921, %v1706
      %v1923 = vsel %vm1766, %v1902, %v1922
      %v1925 = vshrl.u32 %v1712, 16
      %v1927 = vrot.slane %v1925, 7
      %v1928 = vshll.u32 %v1712, 16
      %v1930 = vor.u32 %v1927, %v1928
      %v1931 = vsel %vm1766, %v1908, %v1930
      %v1933 = vshrl.u32 %v1716, 16
      %v1935 = vrot.slane %v1933, 7
      %v1936 = vshll.u32 %v1716, 16
      %v1938 = vor.u32 %v1935, %v1936
      %v1939 = vsel %vm1766, %v1916, %v1938
      %v2036 = vunpack.c.l.b16 %v1718
      %v2037 = vunpack.c.l.b16 %v1719
      %v2038 = vunpack.c.l.b16 %v1720
      %v2039 = vunpack.c.l.b16 %v1721
      %v2040 = vunpack.c.l.b16 %v1722
      %v2041 = vunpack.c.l.b16 %v1723
      %v2042 = vunpack.c.l.b16 %v1724
      %v2043 = vunpack.c.l.b16 %v1725
      %v2044 = vunpack.c.l.b16 %v1726
      %v2045 = vunpack.c.l.b16 %v1727
      %v2046 = vunpack.c.l.b16 %v1728
      %v2047 = vunpack.c.l.b16 %v1729
      %v2048 = vunpack.c.l.b16 %v1730
      %v2049 = vunpack.c.l.b16 %v1731
      %v2050 = vunpack.c.l.b16 %v1732
      %v2051 = vunpack.c.l.b16 %v1733
      %v2052 = vunpack.c.l.b16 %v1734
      %v2053 = vunpack.c.l.b16 %v1735
      %v2054 = vunpack.c.l.b16 %v1736
      %v2055 = vunpack.c.l.b16 %v1737
      %v2056 = vunpack.c.l.b16 %v1738
      %v2057 = vunpack.c.l.b16 %v1739
      %v2058 = vunpack.c.l.b16 %v1740
      %v2059 = vunpack.c.l.b16 %v1741
      %v2060 = vunpack.c.l.b16 %v1742
      %v2061 = vunpack.c.l.b16 %v1743
      %v2062 = vunpack.c.l.b16 %v1744
      %v2063 = vunpack.c.l.b16 %v1745
      %v2064 = vunpack.c.l.b16 %v1746
      %v2065 = vunpack.c.l.b16 %v1747
      %v2066 = vunpack.c.l.b16 %v1748
      %v2067 = vunpack.c.l.b16 %v1749
      %v2068 = vunpack.c.l.b16 %v1750
      %v2069 = vunpack.c.l.b16 %v1751
      %v2070 = vunpack.c.l.b16 %v1752
      %v2071 = vunpack.c.l.b16 %v1753
      %v2072 = vunpack.c.l.b16 %v1754
      %v2073 = vunpack.c.l.b16 %v1755
      %v2074 = vunpack.c.l.b16 %v1756
      %v2075 = vunpack.c.l.b16 %v1757
      %v2076 = vunpack.c.l.b16 %v1758
      %v2077 = vunpack.c.l.b16 %v1759
      %v2078 = vunpack.c.l.b16 %v1760
      %v2079 = vunpack.c.l.b16 %v1761
      %v2080 = vunpack.c.l.b16 %v1762
      %v2081 = vunpack.c.l.b16 %v1763
      %v2082 = vunpack.c.l.b16 %v1764
      %v2083 = vunpack.c.l.b16 %v1765
      %v2084 = vpack.c.b16 %v2037, %v2036
      %v2085 = vpack.c.b16 %v2039, %v2038
      %v2086 = vpack.c.b16 %v2041, %v2040
      %v2087 = vpack.c.b16 %v2043, %v2042
      %v2088 = vpack.c.b16 %v2045, %v2044
      %v2089 = vpack.c.b16 %v2047, %v2046
      %v2090 = vpack.c.b16 %v2049, %v2048
      %v2091 = vpack.c.b16 %v2051, %v2050
      %v2092 = vpack.c.b16 %v2053, %v2052
      %v2093 = vpack.c.b16 %v2055, %v2054
      %v2094 = vpack.c.b16 %v2057, %v2056
      %v2095 = vpack.c.b16 %v2059, %v2058
      %v2096 = vpack.c.b16 %v2061, %v2060
      %v2097 = vpack.c.b16 %v2063, %v2062
      %v2098 = vpack.c.b16 %v2065, %v2064
      %v2099 = vpack.c.b16 %v2067, %v2066
      %v2100 = vpack.c.b16 %v2069, %v2068
      %v2101 = vpack.c.b16 %v2071, %v2070
      %v2102 = vpack.c.b16 %v2073, %v2072
      %v2103 = vpack.c.b16 %v2075, %v2074
      %v2104 = vpack.c.b16 %v2077, %v2076
      %v2105 = vpack.c.b16 %v2079, %v2078
      %v2106 = vpack.c.b16 %v2081, %v2080
      %v2107 = vpack.c.b16 %v2083, %v2082
      %2132 = vmatprep.subr.bf16.mxu0 0
      %2133 = vmatpush1.bf16.msra.mxu0 %v2084
      %2134 = vmatprep.subr.bf16.mxu0 0
      %2135 = vmatpush1.bf16.msra.mxu0 %v2085
      %2136 = vmatprep.subr.bf16.mxu0 0
      %2137 = vmatpush1.bf16.msra.mxu0 %v2086
      %2138 = vmatprep.subr.bf16.mxu0 0
      %2139 = vmatpush1.bf16.msra.mxu0 %v2087
      %2140 = vmatprep.subr.bf16.mxu0 0
      %2141 = vmatpush1.bf16.msra.mxu0 %v2088
      %2142 = vmatprep.subr.bf16.mxu0 0
      %2143 = vmatpush1.bf16.msra.mxu0 %v2089
      %2144 = vmatprep.subr.bf16.mxu0 0
      %2145 = vmatpush1.bf16.msra.mxu0 %v2090
      %2146 = vmatprep.subr.bf16.mxu0 0
      %2147 = vmatpush1.bf16.msra.mxu0 %v2091
      %2148 = vmatprep.subr.bf16.mxu0 0
      %2149 = vmatpush1.bf16.msra.mxu0 %v2092
      %2150 = vmatprep.subr.bf16.mxu0 0
      %2151 = vmatpush1.bf16.msra.mxu0 %v2093
      %2152 = vmatprep.subr.bf16.mxu0 0
      %2153 = vmatpush1.bf16.msra.mxu0 %v2094
      %2154 = vmatprep.subr.bf16.mxu0 0
      %2155 = vmatpush1.bf16.msra.mxu0 %v2095
      %2156 = vmatprep.subr.bf16.mxu0 0
      %2157 = vmatpush1.bf16.msra.mxu0 %v2096
      %2158 = vmatprep.subr.bf16.mxu0 0
      %2159 = vmatpush1.bf16.msra.mxu0 %v2097
      %2160 = vmatprep.subr.bf16.mxu0 0
      %2161 = vmatpush1.bf16.msra.mxu0 %v2098
      %2162 = vmatprep.subr.bf16.mxu0 0
      %2163 = vmatpush1.bf16.msra.mxu0 %v2099
      %2164 = vmatprep.mubr.bf16.mxu0 %v1777
      %2165 = vmatmul.mubr.bf16.gmra.mrb[0].mxu0 %v1770
      %v2166 = vpop.f32.mrb[0].mxu0
      %v2167 = vadd.f32 0.0, %v2166
      %v2168 = vpop.f32.mrb[0].mxu0
      %v2169 = vpop.f32.mrb[0].mxu0
      %v2170 = vadd.f32 0.0, %v2169
      %v2171 = vpop.f32.mrb[0].mxu0
      %2172 = vmatprep.mubr.bf16.mxu0 %v1790
      %2173 = vmatmul.mubr.bf16.gmra.mrb[0].mxu0 %v1787
      %v2174 = vpop.f32.mrb[0].mxu0
      %v2175 = vadd.f32 0.0, %v2174
      %v2176 = vpop.f32.mrb[0].mxu0
      %v2177 = vpop.f32.mrb[0].mxu0
      %v2178 = vadd.f32 0.0, %v2177
      %v2179 = vpop.f32.mrb[0].mxu0
      %2180 = vmatprep.mubr.bf16.mxu0 %v1799
      %2181 = vmatmul.mubr.bf16.gmra.mrb[0].mxu0 %v1796
      %v2182 = vpop.f32.mrb[0].mxu0
      %v2183 = vadd.f32 0.0, %v2182
      %v2184 = vpop.f32.mrb[0].mxu0
      %v2185 = vpop.f32.mrb[0].mxu0
      %v2186 = vadd.f32 0.0, %v2185
      %v2187 = vpop.f32.mrb[0].mxu0
      %2188 = vmatprep.mubr.bf16.mxu0 %v1808
      %2189 = vmatmul.mubr.bf16.gmra.mrb[0].mxu0 %v1805
      %v2190 = vpop.f32.mrb[0].mxu0
      %v2191 = vadd.f32 0.0, %v2190
      %v2192 = vpop.f32.mrb[0].mxu0
      %v2193 = vpop.f32.mrb[0].mxu0
      %v2194 = vadd.f32 0.0, %v2193
      %v2195 = vpop.f32.mrb[0].mxu0
      %2196 = vmatprep.mubr.bf16.mxu0 %v1817
      %2197 = vmatmul.mubr.bf16.gmra.mrb[0].mxu0 %v1814
      %v2198 = vpop.f32.mrb[0].mxu0
      %v2199 = vadd.f32 0.0, %v2198
      %v2200 = vpop.f32.mrb[0].mxu0
      %v2201 = vpop.f32.mrb[0].mxu0
      %v2202 = vadd.f32 0.0, %v2201
      %v2203 = vpop.f32.mrb[0].mxu0
      %2204 = vmatprep.mubr.bf16.mxu0 %v1826
      %2205 = vmatmul.mubr.bf16.gmra.mrb[0].mxu0 %v1823
      %v2206 = vpop.f32.mrb[0].mxu0
      %v2207 = vadd.f32 0.0, %v2206
      %v2208 = vpop.f32.mrb[0].mxu0
      %v2209 = vpop.f32.mrb[0].mxu0
      %v2210 = vadd.f32 0.0, %v2209
      %v2211 = vpop.f32.mrb[0].mxu0
      %2212 = vmatprep.mubr.bf16.mxu0 %v1835
      %2213 = vmatmul.mubr.bf16.gmra.mrb[0].mxu0 %v1832
      %v2214 = vpop.f32.mrb[0].mxu0
      %v2215 = vadd.f32 0.0, %v2214
      %v2216 = vpop.f32.mrb[0].mxu0
      %v2217 = vpop.f32.mrb[0].mxu0
      %v2218 = vadd.f32 0.0, %v2217
      %v2219 = vpop.f32.mrb[0].mxu0
      %2220 = vmatprep.mubr.bf16.mxu0 %v1844
      %2221 = vmatmul.mubr.bf16.gmra.mrb[0].mxu0 %v1841
      %v2222 = vpop.f32.mrb[0].mxu0
      %v2223 = vadd.f32 0.0, %v2222
      %v2224 = vpop.f32.mrb[0].mxu0
      %v2225 = vpop.f32.mrb[0].mxu0
      %v2226 = vadd.f32 0.0, %v2225
      %v2227 = vpop.f32.mrb[0].mxu0
      %2228 = vmatprep.mubr.bf16.mxu0 %v1853
      %2229 = vmatmul.mubr.bf16.gmra.mrb[0].mxu0 %v1850
      %v2230 = vpop.f32.mrb[0].mxu0
      %v2231 = vadd.f32 0.0, %v2230
      %v2232 = vpop.f32.mrb[0].mxu0
      %v2233 = vpop.f32.mrb[0].mxu0
      %v2234 = vadd.f32 0.0, %v2233
      %v2235 = vpop.f32.mrb[0].mxu0
      %2236 = vmatprep.mubr.bf16.mxu0 %v1862
      %2237 = vmatmul.mubr.bf16.gmra.mrb[0].mxu0 %v1859
      %v2238 = vpop.f32.mrb[0].mxu0
      %v2239 = vadd.f32 0.0, %v2238
      %v2240 = vpop.f32.mrb[0].mxu0
      %v2241 = vpop.f32.mrb[0].mxu0
      %v2242 = vadd.f32 0.0, %v2241
      %v2243 = vpop.f32.mrb[0].mxu0
      %2244 = vmatprep.mubr.bf16.mxu0 %v1871
      %2245 = vmatmul.mubr.bf16.gmra.mrb[0].mxu0 %v1868
      %v2246 = vpop.f32.mrb[0].mxu0
      %v2247 = vadd.f32 0.0, %v2246
      %v2248 = vpop.f32.mrb[0].mxu0
      %v2249 = vpop.f32.mrb[0].mxu0
      %v2250 = vadd.f32 0.0, %v2249
      %v2251 = vpop.f32.mrb[0].mxu0
      %2252 = vmatprep.mubr.bf16.mxu0 %v1880
      %2253 = vmatmul.mubr.bf16.gmra.mrb[0].mxu0 %v1877
      %v2254 = vpop.f32.mrb[0].mxu0
      %v2255 = vadd.f32 0.0, %v2254
      %v2256 = vpop.f32.mrb[0].mxu0
      %v2257 = vpop.f32.mrb[0].mxu0
      %v2258 = vadd.f32 0.0, %v2257
      %v2259 = vpop.f32.mrb[0].mxu0
      %2260 = vmatprep.mubr.bf16.mxu0 %v1889
      %2261 = vmatmul.mubr.bf16.gmra.mrb[0].mxu0 %v1886
      %v2262 = vpop.f32.mrb[0].mxu0
      %v2263 = vadd.f32 0.0, %v2262
      %v2264 = vpop.f32.mrb[0].mxu0
      %v2265 = vpop.f32.mrb[0].mxu0
      %v2266 = vadd.f32 0.0, %v2265
      %v2267 = vpop.f32.mrb[0].mxu0
      %2268 = vmatprep.mubr.bf16.mxu0 %v1898
      %2269 = vmatmul.mubr.bf16.gmra.mrb[0].mxu0 %v1895
      %v2270 = vpop.f32.mrb[0].mxu0
      %v2271 = vadd.f32 0.0, %v2270
      %v2272 = vpop.f32.mrb[0].mxu0
      %v2273 = vpop.f32.mrb[0].mxu0
      %v2274 = vadd.f32 0.0, %v2273
      %v2275 = vpop.f32.mrb[0].mxu0
      %2276 = vmatprep.mubr.bf16.mxu0 %v1912
      %2277 = vmatmul.mubr.bf16.gmra.mrb[0].mxu0 %v1904
      %v2278 = vpop.f32.mrb[0].mxu0
      %v2279 = vadd.f32 0.0, %v2278
      %v2280 = vpop.f32.mrb[0].mxu0
      %v2281 = vpop.f32.mrb[0].mxu0
      %v2282 = vadd.f32 0.0, %v2281
      %v2283 = vpop.f32.mrb[0].mxu0
      %2284 = vmatprep.mubr.bf16.mxu0 %v1931
      %2285 = vmatmul.mubr.bf16.gmra.mrb[0].mxu0 %v1923
      %v2286 = vpop.f32.mrb[0].mxu0
      %v2287 = vadd.f32 0.0, %v2286
      %v2288 = vpop.f32.mrb[0].mxu0
      %v2289 = vpop.f32.mrb[0].mxu0
      %v2290 = vadd.f32 0.0, %v2289
      %v2291 = vpop.f32.mrb[0].mxu0
      %2292 = vdwg.mxu0
      %2293 = vmatprep.subr.bf16.mxu0 0
      %2294 = vmatpush1.bf16.msra.mxu0 %v2100
      %2295 = vmatprep.subr.bf16.mxu0 0
      %2296 = vmatpush1.bf16.msra.mxu0 %v2101
      %2297 = vmatprep.subr.bf16.mxu0 0
      %2298 = vmatpush1.bf16.msra.mxu0 %v2102
      %2299 = vmatprep.subr.bf16.mxu0 0
      %2300 = vmatpush1.bf16.msra.mxu0 %v2103
      %2301 = vmatprep.subr.bf16.mxu0 0
      %2302 = vmatpush1.bf16.msra.mxu0 %v2104
      %2303 = vmatprep.subr.bf16.mxu0 0
      %2304 = vmatpush1.bf16.msra.mxu0 %v2105
      %2305 = vmatprep.subr.bf16.mxu0 0
      %2306 = vmatpush1.bf16.msra.mxu0 %v2106
      %2307 = vmatprep.subr.bf16.mxu0 0
      %2308 = vmatpush1.bf16.msra.mxu0 %v2107
      %2309 = vmatprep.subr.bf16.mxu0 0
      %2310 = vmatpush1.bf16.msra.mxu0 0
      %2311 = vmatprep.subr.bf16.mxu0 0
      %2312 = vmatpush1.bf16.msra.mxu0 0
      %2313 = vmatprep.subr.bf16.mxu0 0
      %2314 = vmatpush1.bf16.msra.mxu0 0
      %2315 = vmatprep.subr.bf16.mxu0 0
      %2316 = vmatpush1.bf16.msra.mxu0 0
      %2317 = vmatprep.subr.bf16.mxu0 0
      %2318 = vmatpush1.bf16.msra.mxu0 0
      %2319 = vmatprep.subr.bf16.mxu0 0
      %2320 = vmatpush1.bf16.msra.mxu0 0
      %2321 = vmatprep.subr.bf16.mxu0 0
      %2322 = vmatpush1.bf16.msra.mxu0 0
      %2323 = vmatprep.subr.bf16.mxu0 0
      %2324 = vmatpush1.bf16.msra.mxu0 0
      %2325 = vmatprep.mubr.bf16.mxu0 0
      %2326 = vmatmul.mubr.bf16.gmra.mrb[0].mxu0 %v1784
      %v2327 = vpop.f32.mrb[0].mxu0
      %v2328 = vadd.f32 %v2167, %v2327
      %v2329 = vpop.f32.mrb[0].mxu0
      %v2330 = vpop.f32.mrb[0].mxu0
      %v2331 = vadd.f32 %v2170, %v2330
      %v2332 = vpop.f32.mrb[0].mxu0
      %2333 = vmatprep.mubr.bf16.mxu0 0
      %2334 = vmatmul.mubr.bf16.gmra.mrb[0].mxu0 %v1793
      %v2335 = vpop.f32.mrb[0].mxu0
      %v2336 = vadd.f32 %v2175, %v2335
      %v2337 = vpop.f32.mrb[0].mxu0
      %v2338 = vpop.f32.mrb[0].mxu0
      %v2339 = vadd.f32 %v2178, %v2338
      %v2340 = vpop.f32.mrb[0].mxu0
      %2341 = vmatprep.mubr.bf16.mxu0 0
      %2342 = vmatmul.mubr.bf16.gmra.mrb[0].mxu0 %v1802
      %v2343 = vpop.f32.mrb[0].mxu0
      %v2344 = vadd.f32 %v2183, %v2343
      %v2345 = vpop.f32.mrb[0].mxu0
      %v2346 = vpop.f32.mrb[0].mxu0
      %v2347 = vadd.f32 %v2186, %v2346
      %v2348 = vpop.f32.mrb[0].mxu0
      %2349 = vmatprep.mubr.bf16.mxu0 0
      %2350 = vmatmul.mubr.bf16.gmra.mrb[0].mxu0 %v1811
      %v2351 = vpop.f32.mrb[0].mxu0
      %v2352 = vadd.f32 %v2191, %v2351
      %v2353 = vpop.f32.mrb[0].mxu0
      %v2354 = vpop.f32.mrb[0].mxu0
      %v2355 = vadd.f32 %v2194, %v2354
      %v2356 = vpop.f32.mrb[0].mxu0
      %2357 = vmatprep.mubr.bf16.mxu0 0
      %2358 = vmatmul.mubr.bf16.gmra.mrb[0].mxu0 %v1820
      %v2359 = vpop.f32.mrb[0].mxu0
      %v2360 = vadd.f32 %v2199, %v2359
      %v2361 = vpop.f32.mrb[0].mxu0
      %v2362 = vpop.f32.mrb[0].mxu0
      %v2363 = vadd.f32 %v2202, %v2362
      %v2364 = vpop.f32.mrb[0].mxu0
      %2365 = vmatprep.mubr.bf16.mxu0 0
      %2366 = vmatmul.mubr.bf16.gmra.mrb[0].mxu0 %v1829
      %v2367 = vpop.f32.mrb[0].mxu0
      %v2368 = vadd.f32 %v2207, %v2367
      %v2369 = vpop.f32.mrb[0].mxu0
      %v2370 = vpop.f32.mrb[0].mxu0
      %v2371 = vadd.f32 %v2210, %v2370
      %v2372 = vpop.f32.mrb[0].mxu0
      %2373 = vmatprep.mubr.bf16.mxu0 0
      %2374 = vmatmul.mubr.bf16.gmra.mrb[0].mxu0 %v1838
      %v2375 = vpop.f32.mrb[0].mxu0
      %v2376 = vadd.f32 %v2215, %v2375
      %v2377 = vpop.f32.mrb[0].mxu0
      %v2378 = vpop.f32.mrb[0].mxu0
      %v2379 = vadd.f32 %v2218, %v2378
      %v2380 = vpop.f32.mrb[0].mxu0
      %2381 = vmatprep.mubr.bf16.mxu0 0
      %2382 = vmatmul.mubr.bf16.gmra.mrb[0].mxu0 %v1847
      %v2383 = vpop.f32.mrb[0].mxu0
      %v2384 = vadd.f32 %v2223, %v2383
      %v2385 = vpop.f32.mrb[0].mxu0
      %v2386 = vpop.f32.mrb[0].mxu0
      %v2387 = vadd.f32 %v2226, %v2386
      %v2388 = vpop.f32.mrb[0].mxu0
      %2389 = vmatprep.mubr.bf16.mxu0 0
      %2390 = vmatmul.mubr.bf16.gmra.mrb[0].mxu0 %v1856
      %v2391 = vpop.f32.mrb[0].mxu0
      %v2392 = vadd.f32 %v2231, %v2391
      %v2393 = vpop.f32.mrb[0].mxu0
      %v2394 = vpop.f32.mrb[0].mxu0
      %v2395 = vadd.f32 %v2234, %v2394
      %v2396 = vpop.f32.mrb[0].mxu0
      %2397 = vmatprep.mubr.bf16.mxu0 0
      %2398 = vmatmul.mubr.bf16.gmra.mrb[0].mxu0 %v1865
      %v2399 = vpop.f32.mrb[0].mxu0
      %v2400 = vadd.f32 %v2239, %v2399
      %v2401 = vpop.f32.mrb[0].mxu0
      %v2402 = vpop.f32.mrb[0].mxu0
      %v2403 = vadd.f32 %v2242, %v2402
      %v2404 = vpop.f32.mrb[0].mxu0
      %2405 = vmatprep.mubr.bf16.mxu0 0
      %2406 = vmatmul.mubr.bf16.gmra.mrb[0].mxu0 %v1874
      %v2407 = vpop.f32.mrb[0].mxu0
      %v2408 = vadd.f32 %v2247, %v2407
      %v2409 = vpop.f32.mrb[0].mxu0
      %v2410 = vpop.f32.mrb[0].mxu0
      %v2411 = vadd.f32 %v2250, %v2410
      %v2412 = vpop.f32.mrb[0].mxu0
      %2413 = vmatprep.mubr.bf16.mxu0 0
      %2414 = vmatmul.mubr.bf16.gmra.mrb[0].mxu0 %v1883
      %v2415 = vpop.f32.mrb[0].mxu0
      %v2416 = vadd.f32 %v2255, %v2415
      %v2417 = vpop.f32.mrb[0].mxu0
      %v2418 = vpop.f32.mrb[0].mxu0
      %v2419 = vadd.f32 %v2258, %v2418
      %v2420 = vpop.f32.mrb[0].mxu0
      %2421 = vmatprep.mubr.bf16.mxu0 0
      %2422 = vmatmul.mubr.bf16.gmra.mrb[0].mxu0 %v1892
      %v2423 = vpop.f32.mrb[0].mxu0
      %v2424 = vadd.f32 %v2263, %v2423
      %v2425 = vpop.f32.mrb[0].mxu0
      %v2426 = vpop.f32.mrb[0].mxu0
      %v2427 = vadd.f32 %v2266, %v2426
      %v2428 = vpop.f32.mrb[0].mxu0
      %2429 = vmatprep.mubr.bf16.mxu0 0
      %2430 = vmatmul.mubr.bf16.gmra.mrb[0].mxu0 %v1901
      %v2431 = vpop.f32.mrb[0].mxu0
      %v2432 = vadd.f32 %v2271, %v2431
      %v2433 = vpop.f32.mrb[0].mxu0
      %v2434 = vpop.f32.mrb[0].mxu0
      %v2435 = vadd.f32 %v2274, %v2434
      %v2436 = vpop.f32.mrb[0].mxu0
      %2437 = vmatprep.mubr.bf16.mxu0 0
      %2438 = vmatmul.mubr.bf16.gmra.mrb[0].mxu0 %v1920
      %v2439 = vpop.f32.mrb[0].mxu0
      %v2440 = vadd.f32 %v2279, %v2439
      %v2441 = vpop.f32.mrb[0].mxu0
      %v2442 = vpop.f32.mrb[0].mxu0
      %v2443 = vadd.f32 %v2282, %v2442
      %v2444 = vpop.f32.mrb[0].mxu0
      %2445 = vmatprep.mubr.bf16.mxu0 0
      %2446 = vmatmul.mubr.bf16.gmra.mrb[0].mxu0 %v1939
      %v2447 = vpop.f32.mrb[0].mxu0
      %v2448 = vadd.f32 %v2287, %v2447
      %v2449 = vpop.f32.mrb[0].mxu0
      %v2450 = vpop.f32.mrb[0].mxu0
      %v2451 = vadd.f32 %v2290, %v2450
      %v2452 = vpop.f32.mrb[0].mxu0
      %2453 = vdwg.mxu0
      %v2454 = vld [vmem:[#allocation2] sm:$0xff]
      %v2455 = vld [vmem:[#allocation2 + $0x8] sm:$0xff]
      %v2456 = vld [vmem:[#allocation2 + $0x10] sm:$0xff]
      %v2457 = vld [vmem:[#allocation2 + $0x18] sm:$0xff]
      %v2458 = vld [vmem:[#allocation2 + $0x20] sm:$0xff]
      %v2459 = vld [vmem:[#allocation2 + $0x28] sm:$0xff]
      %v2460 = vld [vmem:[#allocation2 + $0x30] sm:$0xff]
      %v2461 = vld [vmem:[#allocation2 + $0x38] sm:$0xff]
      %v2462 = vld [vmem:[#allocation2 + $0x40] sm:$0xff]
      %v2463 = vld [vmem:[#allocation2 + $0x48] sm:$0xff]
      %v2464 = vld [vmem:[#allocation2 + $0x50] sm:$0xff]
      %v2465 = vld [vmem:[#allocation2 + $0x58] sm:$0xff]
      %v2466 = vld [vmem:[#allocation2 + $0x60] sm:$0xff]
      %v2467 = vld [vmem:[#allocation2 + $0x68] sm:$0xff]
      %v2468 = vld [vmem:[#allocation2 + $0x70] sm:$0xff]
      %v2469 = vld [vmem:[#allocation2 + $0x78] sm:$0xff]
      %v2470 = vld [vmem:[#allocation2 + $0x80] sm:$0xff]
      %v2471 = vld [vmem:[#allocation2 + $0x88] sm:$0xff]
      %v2472 = vld [vmem:[#allocation2 + $0x90] sm:$0xff]
      %v2473 = vld [vmem:[#allocation2 + $0x98] sm:$0xff]
      %v2474 = vld [vmem:[#allocation2 + $0xa0] sm:$0xff]
      %v2475 = vld [vmem:[#allocation2 + $0xa8] sm:$0xff]
      %v2476 = vld [vmem:[#allocation2 + $0xb0] sm:$0xff]
      %v2477 = vld [vmem:[#allocation2 + $0xb8] sm:$0xff]
      %v2478 = vld [vmem:[#allocation2 + $0xc0] sm:$0xff]
      %v2479 = vld [vmem:[#allocation2 + $0xc8] sm:$0xff]
      %v2480 = vld [vmem:[#allocation2 + $0xd0] sm:$0xff]
      %v2481 = vld [vmem:[#allocation2 + $0xd8] sm:$0xff]
      %v2482 = vld [vmem:[#allocation2 + $0xe0] sm:$0xff]
      %v2483 = vld [vmem:[#allocation2 + $0xe8] sm:$0xff]
      %v2484 = vld [vmem:[#allocation2 + $0xf0] sm:$0xff]
      %v2485 = vld [vmem:[#allocation2 + $0xf8] sm:$0xff]
      %v2486 = vadd.f32 %v2454, %v2328
      %v2487 = vadd.f32 %v2455, %v2331
      %v2488 = vadd.f32 %v2456, %v2336
      %v2489 = vadd.f32 %v2457, %v2339
      %v2490 = vadd.f32 %v2458, %v2344
      %v2491 = vadd.f32 %v2459, %v2347
      %v2492 = vadd.f32 %v2460, %v2352
      %v2493 = vadd.f32 %v2461, %v2355
      %v2494 = vadd.f32 %v2462, %v2360
      %v2495 = vadd.f32 %v2463, %v2363
      %v2496 = vadd.f32 %v2464, %v2368
      %v2497 = vadd.f32 %v2465, %v2371
      %v2498 = vadd.f32 %v2466, %v2376
      %v2499 = vadd.f32 %v2467, %v2379
      %v2500 = vadd.f32 %v2468, %v2384
      %v2501 = vadd.f32 %v2469, %v2387
      %v2502 = vadd.f32 %v2470, %v2392
      %v2503 = vadd.f32 %v2471, %v2395
      %v2504 = vadd.f32 %v2472, %v2400
      %v2505 = vadd.f32 %v2473, %v2403
      %v2506 = vadd.f32 %v2474, %v2408
      %v2507 = vadd.f32 %v2475, %v2411
      %v2508 = vadd.f32 %v2476, %v2416
      %v2509 = vadd.f32 %v2477, %v2419
      %v2510 = vadd.f32 %v2478, %v2424
      %v2511 = vadd.f32 %v2479, %v2427
      %v2512 = vadd.f32 %v2480, %v2432
      %v2513 = vadd.f32 %v2481, %v2435
      %v2514 = vadd.f32 %v2482, %v2440
      %v2515 = vadd.f32 %v2483, %v2443
      %v2516 = vadd.f32 %v2484, %v2448
      %v2517 = vadd.f32 %v2485, %v2451
      %2518 = vst [vmem:[#allocation2] sm:$0xff] %v2486
      %2519 = vst [vmem:[#allocation2 + $0x8] sm:$0xff] %v2487
      %2520 = vst [vmem:[#allocation2 + $0x10] sm:$0xff] %v2488
      %2521 = vst [vmem:[#allocation2 + $0x18] sm:$0xff] %v2489
      %2522 = vst [vmem:[#allocation2 + $0x20] sm:$0xff] %v2490
      %2523 = vst [vmem:[#allocation2 + $0x28] sm:$0xff] %v2491
      %2524 = vst [vmem:[#allocation2 + $0x30] sm:$0xff] %v2492
      %2525 = vst [vmem:[#allocation2 + $0x38] sm:$0xff] %v2493
      %2526 = vst [vmem:[#allocation2 + $0x40] sm:$0xff] %v2494
      %2527 = vst [vmem:[#allocation2 + $0x48] sm:$0xff] %v2495
      %2528 = vst [vmem:[#allocation2 + $0x50] sm:$0xff] %v2496
      %2529 = vst [vmem:[#allocation2 + $0x58] sm:$0xff] %v2497
      %2530 = vst [vmem:[#allocation2 + $0x60] sm:$0xff] %v2498
      %2531 = vst [vmem:[#allocation2 + $0x68] sm:$0xff] %v2499
      %2532 = vst [vmem:[#allocation2 + $0x70] sm:$0xff] %v2500
      %2533 = vst [vmem:[#allocation2 + $0x78] sm:$0xff] %v2501
      %2534 = vst [vmem:[#allocation2 + $0x80] sm:$0xff] %v2502
      %2535 = vst [vmem:[#allocation2 + $0x88] sm:$0xff] %v2503
      %2536 = vst [vmem:[#allocation2 + $0x90] sm:$0xff] %v2504
      %2537 = vst [vmem:[#allocation2 + $0x98] sm:$0xff] %v2505
      %2538 = vst [vmem:[#allocation2 + $0xa0] sm:$0xff] %v2506
      %2539 = vst [vmem:[#allocation2 + $0xa8] sm:$0xff] %v2507
      %2540 = vst [vmem:[#allocation2 + $0xb0] sm:$0xff] %v2508
      %2541 = vst [vmem:[#allocation2 + $0xb8] sm:$0xff] %v2509
      %2542 = vst [vmem:[#allocation2 + $0xc0] sm:$0xff] %v2510
      %2543 = vst [vmem:[#allocation2 + $0xc8] sm:$0xff] %v2511
      %2544 = vst [vmem:[#allocation2 + $0xd0] sm:$0xff] %v2512
      %2545 = vst [vmem:[#allocation2 + $0xd8] sm:$0xff] %v2513
      %2546 = vst [vmem:[#allocation2 + $0xe0] sm:$0xff] %v2514
      %2547 = vst [vmem:[#allocation2 + $0xe8] sm:$0xff] %v2515
      %2548 = vst [vmem:[#allocation2 + $0xf0] sm:$0xff] %v2516
      %2549 = vst [vmem:[#allocation2 + $0xf8] sm:$0xff] %v2517
      %v2551 = vshll.u32 %v567, 16
      %v2553 = vrot.slane %v2551, 1
      %v2554 = vsel %vm569, %v1712, %v2553
      %v2555 = vshrl.u32 %v567, 16
      %v2557 = vor.u32 %v2555, %v2553
      %v2559 = vshll.u32 %v568, 16
      %v2561 = vrot.slane %v2559, 1
      %v2562 = vsel %vm569, %v2557, %v2561
      %v2563 = vshrl.u32 %v568, 16
      %v2565 = vor.u32 %v2563, %v2561
      %v2566 = vrot.slane %v568, 1
      %v2567 = vsel %vm705, %v1715, %v2566
      %s2568 = scalar_lea.vmem %s409, 384
      %v2569 = vld [vmem:[%s2568] sm:$0xf]
      %v2570 = vld [vmem:[%s2568 + $0x4] sm:$0xf]
      %v2571 = vld [vmem:[%s2568 + $0x8] sm:$0xf]
      %v2572 = vld [vmem:[%s2568 + $0xc] sm:$0xf]
      %v2573 = vld [vmem:[%s2568 + $0x10] sm:$0xf]
      %v2574 = vld [vmem:[%s2568 + $0x14] sm:$0xf]
      %v2575 = vld [vmem:[%s2568 + $0x18] sm:$0xf]
      %v2576 = vld [vmem:[%s2568 + $0x1c] sm:$0xf]
      %v2577 = vld [vmem:[%s2568 + $0x20] sm:$0xf]
      %v2578 = vld [vmem:[%s2568 + $0x24] sm:$0xf]
      %v2579 = vld [vmem:[%s2568 + $0x28] sm:$0xf]
      %v2580 = vld [vmem:[%s2568 + $0x2c] sm:$0xf]
      %v2581 = vld [vmem:[%s2568 + $0x30] sm:$0xf]
      %v2582 = vld [vmem:[%s2568 + $0x34] sm:$0xf]
      %v2583 = vld [vmem:[%s2568 + $0x38] sm:$0xf]
      %v2584 = vld [vmem:[%s2568 + $0x3c] sm:$0xf]
      %v2585 = vld [vmem:[%s2568 + $0x40] sm:$0xf]
      %v2586 = vld [vmem:[%s2568 + $0x44] sm:$0xf]
      %v2587 = vld [vmem:[%s2568 + $0x48] sm:$0xf]
      %v2588 = vld [vmem:[%s2568 + $0x4c] sm:$0xf]
      %v2589 = vld [vmem:[%s2568 + $0x50] sm:$0xf]
      %v2590 = vld [vmem:[%s2568 + $0x54] sm:$0xf]
      %v2591 = vld [vmem:[%s2568 + $0x58] sm:$0xf]
      %v2592 = vld [vmem:[%s2568 + $0x5c] sm:$0xf]
      %v2593 = vld [vmem:[%s2568 + $0x60] sm:$0xf]
      %v2594 = vld [vmem:[%s2568 + $0x64] sm:$0xf]
      %v2595 = vld [vmem:[%s2568 + $0x68] sm:$0xf]
      %v2596 = vld [vmem:[%s2568 + $0x6c] sm:$0xf]
      %v2597 = vld [vmem:[%s2568 + $0x70] sm:$0xf]
      %v2598 = vld [vmem:[%s2568 + $0x74] sm:$0xf]
      %v2599 = vld [vmem:[%s2568 + $0x78] sm:$0xf]
      %v2600 = vld [vmem:[%s2568 + $0x7c] sm:$0xf]
      %v2601 = vld [vmem:[%s2568 + $0x80] sm:$0xf]
      %v2602 = vld [vmem:[%s2568 + $0x84] sm:$0xf]
      %v2603 = vld [vmem:[%s2568 + $0x88] sm:$0xf]
      %v2604 = vld [vmem:[%s2568 + $0x8c] sm:$0xf]
      %v2605 = vld [vmem:[%s2568 + $0x90] sm:$0xf]
      %v2606 = vld [vmem:[%s2568 + $0x94] sm:$0xf]
      %v2607 = vld [vmem:[%s2568 + $0x98] sm:$0xf]
      %v2608 = vld [vmem:[%s2568 + $0x9c] sm:$0xf]
      %v2609 = vld [vmem:[%s2568 + $0xa0] sm:$0xf]
      %v2610 = vld [vmem:[%s2568 + $0xa4] sm:$0xf]
      %v2611 = vld [vmem:[%s2568 + $0xa8] sm:$0xf]
      %v2612 = vld [vmem:[%s2568 + $0xac] sm:$0xf]
      %v2613 = vld [vmem:[%s2568 + $0xb0] sm:$0xf]
      %v2614 = vld [vmem:[%s2568 + $0xb4] sm:$0xf]
      %v2615 = vld [vmem:[%s2568 + $0xb8] sm:$0xf]
      %v2616 = vld [vmem:[%s2568 + $0xbc] sm:$0xf]
      %v2617 = vrot.slane %v1906, 3
      %v2618 = vrot.slane %v1909, 4
      %v2619 = vor.u32 %v2617, %v2618
      %v2620 = vsel %vm787, %v1126, %v2619
      %v2621 = vrot.slane %v1914, 3
      %v2622 = vrot.slane %v1917, 4
      %v2623 = vor.u32 %v2621, %v2622
      %v2624 = vsel %vm787, %v1135, %v2623
      %v2625 = vrot.slane %v1710, 3
      %v2626 = vrot.slane %v1706, 4
      %v2627 = vor.u32 %v2625, %v2626
      %v2628 = vsel %vm787, %v1139, %v2627
      %v2630 = vshrl.u32 %v2554, 16
      %v2632 = vrot.slane %v2630, 3
      %v2633 = vshll.u32 %v2554, 16
      %v2635 = vrot.slane %v2633, 4
      %v2636 = vor.u32 %v2632, %v2635
      %v2637 = vsel %vm787, %v2619, %v2636
      %v2638 = vrot.slane %v1933, 3
      %v2639 = vrot.slane %v1936, 4
      %v2640 = vor.u32 %v2638, %v2639
      %v2641 = vsel %vm787, %v2623, %v2640
      %v2642 = vrot.slane %v2555, 3
      %v2643 = vrot.slane %v2551, 4
      %v2644 = vor.u32 %v2642, %v2643
      %v2645 = vsel %vm787, %v2627, %v2644
      %v2647 = vshrl.u32 %v2562, 16
      %v2649 = vrot.slane %v2647, 3
      %v2650 = vshll.u32 %v2562, 16
      %v2652 = vrot.slane %v2650, 4
      %v2653 = vor.u32 %v2649, %v2652
      %v2654 = vsel %vm787, %v2636, %v2653
      %v2656 = vshrl.u32 %v2567, 16
      %v2658 = vrot.slane %v2656, 3
      %v2659 = vshll.u32 %v2567, 16
      %v2661 = vrot.slane %v2659, 4
      %v2662 = vor.u32 %v2658, %v2661
      %v2663 = vsel %vm787, %v2640, %v2662
      %v2664 = vrot.slane %v2563, 3
      %v2665 = vrot.slane %v2559, 4
      %v2666 = vor.u32 %v2664, %v2665
      %v2667 = vsel %vm787, %v2644, %v2666
      %v2669 = vshrl.u32 %v2565, 16
      %v2671 = vrot.slane %v2669, 3
      %v2672 = vshll.u32 %v2565, 16
      %v2674 = vrot.slane %v2672, 4
      %v2675 = vor.u32 %v2671, %v2674
      %v2676 = vsel %vm787, %v2653, %v2675
      %v2678 = vshrl.u32 %v2566, 16
      %v2680 = vrot.slane %v2678, 3
      %v2681 = vshll.u32 %v2566, 16
      %v2683 = vrot.slane %v2681, 4
      %v2684 = vor.u32 %v2680, %v2683
      %v2685 = vsel %vm787, %v2662, %v2684
      %v2745 = vunpack.c.l.b16 %v2569
      %v2746 = vunpack.c.l.b16 %v2570
      %v2747 = vunpack.c.l.b16 %v2571
      %v2748 = vunpack.c.l.b16 %v2572
      %v2749 = vunpack.c.l.b16 %v2573
      %v2750 = vunpack.c.l.b16 %v2574
      %v2751 = vunpack.c.l.b16 %v2575
      %v2752 = vunpack.c.l.b16 %v2576
      %v2753 = vunpack.c.l.b16 %v2577
      %v2754 = vunpack.c.l.b16 %v2578
      %v2755 = vunpack.c.l.b16 %v2579
      %v2756 = vunpack.c.l.b16 %v2580
      %v2757 = vunpack.c.l.b16 %v2581
      %v2758 = vunpack.c.l.b16 %v2582
      %v2759 = vunpack.c.l.b16 %v2583
      %v2760 = vunpack.c.l.b16 %v2584
      %v2761 = vunpack.c.l.b16 %v2585
      %v2762 = vunpack.c.l.b16 %v2586
      %v2763 = vunpack.c.l.b16 %v2587
      %v2764 = vunpack.c.l.b16 %v2588
      %v2765 = vunpack.c.l.b16 %v2589
      %v2766 = vunpack.c.l.b16 %v2590
      %v2767 = vunpack.c.l.b16 %v2591
      %v2768 = vunpack.c.l.b16 %v2592
      %v2769 = vunpack.c.l.b16 %v2593
      %v2770 = vunpack.c.l.b16 %v2594
      %v2771 = vunpack.c.l.b16 %v2595
      %v2772 = vunpack.c.l.b16 %v2596
      %v2773 = vunpack.c.l.b16 %v2597
      %v2774 = vunpack.c.l.b16 %v2598
      %v2775 = vunpack.c.l.b16 %v2599
      %v2776 = vunpack.c.l.b16 %v2600
      %v2777 = vunpack.c.l.b16 %v2601
      %v2778 = vunpack.c.l.b16 %v2602
      %v2779 = vunpack.c.l.b16 %v2603
      %v2780 = vunpack.c.l.b16 %v2604
      %v2781 = vunpack.c.l.b16 %v2605
      %v2782 = vunpack.c.l.b16 %v2606
      %v2783 = vunpack.c.l.b16 %v2607
      %v2784 = vunpack.c.l.b16 %v2608
      %v2785 = vunpack.c.l.b16 %v2609
      %v2786 = vunpack.c.l.b16 %v2610
      %v2787 = vunpack.c.l.b16 %v2611
      %v2788 = vunpack.c.l.b16 %v2612
      %v2789 = vunpack.c.l.b16 %v2613
      %v2790 = vunpack.c.l.b16 %v2614
      %v2791 = vunpack.c.l.b16 %v2615
      %v2792 = vunpack.c.l.b16 %v2616
      %v2793 = vpack.c.b16 %v2746, %v2745
      %v2794 = vpack.c.b16 %v2748, %v2747
      %v2795 = vpack.c.b16 %v2750, %v2749
      %v2796 = vpack.c.b16 %v2752, %v2751
      %v2797 = vpack.c.b16 %v2754, %v2753
      %v2798 = vpack.c.b16 %v2756, %v2755
      %v2799 = vpack.c.b16 %v2758, %v2757
      %v2800 = vpack.c.b16 %v2760, %v2759
      %v2801 = vpack.c.b16 %v2762, %v2761
      %v2802 = vpack.c.b16 %v2764, %v2763
      %v2803 = vpack.c.b16 %v2766, %v2765
      %v2804 = vpack.c.b16 %v2768, %v2767
      %v2805 = vpack.c.b16 %v2770, %v2769
      %v2806 = vpack.c.b16 %v2772, %v2771
      %v2807 = vpack.c.b16 %v2774, %v2773
      %v2808 = vpack.c.b16 %v2776, %v2775
      %v2809 = vpack.c.b16 %v2778, %v2777
      %v2810 = vpack.c.b16 %v2780, %v2779
      %v2811 = vpack.c.b16 %v2782, %v2781
      %v2812 = vpack.c.b16 %v2784, %v2783
      %v2813 = vpack.c.b16 %v2786, %v2785
      %v2814 = vpack.c.b16 %v2788, %v2787
      %v2815 = vpack.c.b16 %v2790, %v2789
      %v2816 = vpack.c.b16 %v2792, %v2791
      %2841 = vmatprep.subr.bf16.mxu0 0
      %2842 = vmatpush1.bf16.msra.mxu0 %v2793
      %2843 = vmatprep.subr.bf16.mxu0 0
      %2844 = vmatpush1.bf16.msra.mxu0 %v2794
      %2845 = vmatprep.subr.bf16.mxu0 0
      %2846 = vmatpush1.bf16.msra.mxu0 %v2795
      %2847 = vmatprep.subr.bf16.mxu0 0
      %2848 = vmatpush1.bf16.msra.mxu0 %v2796
      %2849 = vmatprep.subr.bf16.mxu0 0
      %2850 = vmatpush1.bf16.msra.mxu0 %v2797
      %2851 = vmatprep.subr.bf16.mxu0 0
      %2852 = vmatpush1.bf16.msra.mxu0 %v2798
      %2853 = vmatprep.subr.bf16.mxu0 0
      %2854 = vmatpush1.bf16.msra.mxu0 %v2799
      %2855 = vmatprep.subr.bf16.mxu0 0
      %2856 = vmatpush1.bf16.msra.mxu0 %v2800
      %2857 = vmatprep.subr.bf16.mxu0 0
      %2858 = vmatpush1.bf16.msra.mxu0 %v2801
      %2859 = vmatprep.subr.bf16.mxu0 0
      %2860 = vmatpush1.bf16.msra.mxu0 %v2802
      %2861 = vmatprep.subr.bf16.mxu0 0
      %2862 = vmatpush1.bf16.msra.mxu0 %v2803
      %2863 = vmatprep.subr.bf16.mxu0 0
      %2864 = vmatpush1.bf16.msra.mxu0 %v2804
      %2865 = vmatprep.subr.bf16.mxu0 0
      %2866 = vmatpush1.bf16.msra.mxu0 %v2805
      %2867 = vmatprep.subr.bf16.mxu0 0
      %2868 = vmatpush1.bf16.msra.mxu0 %v2806
      %2869 = vmatprep.subr.bf16.mxu0 0
      %2870 = vmatpush1.bf16.msra.mxu0 %v2807
      %2871 = vmatprep.subr.bf16.mxu0 0
      %2872 = vmatpush1.bf16.msra.mxu0 %v2808
      %2873 = vmatprep.mubr.bf16.mxu0 %v885
      %2874 = vmatmul.mubr.bf16.gmra.mrb[0].mxu0 %v876
      %v2875 = vpop.f32.mrb[0].mxu0
      %v2876 = vadd.f32 0.0, %v2875
      %v2877 = vpop.f32.mrb[0].mxu0
      %v2878 = vpop.f32.mrb[0].mxu0
      %v2879 = vadd.f32 0.0, %v2878
      %v2880 = vpop.f32.mrb[0].mxu0
      %2881 = vmatprep.mubr.bf16.mxu0 %v907
      %2882 = vmatmul.mubr.bf16.gmra.mrb[0].mxu0 %v898
      %v2883 = vpop.f32.mrb[0].mxu0
      %v2884 = vadd.f32 0.0, %v2883
      %v2885 = vpop.f32.mrb[0].mxu0
      %v2886 = vpop.f32.mrb[0].mxu0
      %v2887 = vadd.f32 0.0, %v2886
      %v2888 = vpop.f32.mrb[0].mxu0
      %2889 = vmatprep.mubr.bf16.mxu0 %v929
      %2890 = vmatmul.mubr.bf16.gmra.mrb[0].mxu0 %v920
      %v2891 = vpop.f32.mrb[0].mxu0
      %v2892 = vadd.f32 0.0, %v2891
      %v2893 = vpop.f32.mrb[0].mxu0
      %v2894 = vpop.f32.mrb[0].mxu0
      %v2895 = vadd.f32 0.0, %v2894
      %v2896 = vpop.f32.mrb[0].mxu0
      %2897 = vmatprep.mubr.bf16.mxu0 %v951
      %2898 = vmatmul.mubr.bf16.gmra.mrb[0].mxu0 %v942
      %v2899 = vpop.f32.mrb[0].mxu0
      %v2900 = vadd.f32 0.0, %v2899
      %v2901 = vpop.f32.mrb[0].mxu0
      %v2902 = vpop.f32.mrb[0].mxu0
      %v2903 = vadd.f32 0.0, %v2902
      %v2904 = vpop.f32.mrb[0].mxu0
      %2905 = vmatprep.mubr.bf16.mxu0 %v973
      %2906 = vmatmul.mubr.bf16.gmra.mrb[0].mxu0 %v964
      %v2907 = vpop.f32.mrb[0].mxu0
      %v2908 = vadd.f32 0.0, %v2907
      %v2909 = vpop.f32.mrb[0].mxu0
      %v2910 = vpop.f32.mrb[0].mxu0
      %v2911 = vadd.f32 0.0, %v2910
      %v2912 = vpop.f32.mrb[0].mxu0
      %2913 = vmatprep.mubr.bf16.mxu0 %v995
      %2914 = vmatmul.mubr.bf16.gmra.mrb[0].mxu0 %v986
      %v2915 = vpop.f32.mrb[0].mxu0
      %v2916 = vadd.f32 0.0, %v2915
      %v2917 = vpop.f32.mrb[0].mxu0
      %v2918 = vpop.f32.mrb[0].mxu0
      %v2919 = vadd.f32 0.0, %v2918
      %v2920 = vpop.f32.mrb[0].mxu0
      %2921 = vmatprep.mubr.bf16.mxu0 %v1017
      %2922 = vmatmul.mubr.bf16.gmra.mrb[0].mxu0 %v1008
      %v2923 = vpop.f32.mrb[0].mxu0
      %v2924 = vadd.f32 0.0, %v2923
      %v2925 = vpop.f32.mrb[0].mxu0
      %v2926 = vpop.f32.mrb[0].mxu0
      %v2927 = vadd.f32 0.0, %v2926
      %v2928 = vpop.f32.mrb[0].mxu0
      %2929 = vmatprep.mubr.bf16.mxu0 %v1039
      %2930 = vmatmul.mubr.bf16.gmra.mrb[0].mxu0 %v1030
      %v2931 = vpop.f32.mrb[0].mxu0
      %v2932 = vadd.f32 0.0, %v2931
      %v2933 = vpop.f32.mrb[0].mxu0
      %v2934 = vpop.f32.mrb[0].mxu0
      %v2935 = vadd.f32 0.0, %v2934
      %v2936 = vpop.f32.mrb[0].mxu0
      %2937 = vmatprep.mubr.bf16.mxu0 %v1061
      %2938 = vmatmul.mubr.bf16.gmra.mrb[0].mxu0 %v1052
      %v2939 = vpop.f32.mrb[0].mxu0
      %v2940 = vadd.f32 0.0, %v2939
      %v2941 = vpop.f32.mrb[0].mxu0
      %v2942 = vpop.f32.mrb[0].mxu0
      %v2943 = vadd.f32 0.0, %v2942
      %v2944 = vpop.f32.mrb[0].mxu0
      %2945 = vmatprep.mubr.bf16.mxu0 %v1083
      %2946 = vmatmul.mubr.bf16.gmra.mrb[0].mxu0 %v1074
      %v2947 = vpop.f32.mrb[0].mxu0
      %v2948 = vadd.f32 0.0, %v2947
      %v2949 = vpop.f32.mrb[0].mxu0
      %v2950 = vpop.f32.mrb[0].mxu0
      %v2951 = vadd.f32 0.0, %v2950
      %v2952 = vpop.f32.mrb[0].mxu0
      %2953 = vmatprep.mubr.bf16.mxu0 %v1105
      %2954 = vmatmul.mubr.bf16.gmra.mrb[0].mxu0 %v1096
      %v2955 = vpop.f32.mrb[0].mxu0
      %v2956 = vadd.f32 0.0, %v2955
      %v2957 = vpop.f32.mrb[0].mxu0
      %v2958 = vpop.f32.mrb[0].mxu0
      %v2959 = vadd.f32 0.0, %v2958
      %v2960 = vpop.f32.mrb[0].mxu0
      %2961 = vmatprep.mubr.bf16.mxu0 %v1127
      %2962 = vmatmul.mubr.bf16.gmra.mrb[0].mxu0 %v1118
      %v2963 = vpop.f32.mrb[0].mxu0
      %v2964 = vadd.f32 0.0, %v2963
      %v2965 = vpop.f32.mrb[0].mxu0
      %v2966 = vpop.f32.mrb[0].mxu0
      %v2967 = vadd.f32 0.0, %v2966
      %v2968 = vpop.f32.mrb[0].mxu0
      %2969 = vmatprep.mubr.bf16.mxu0 %v2620
      %2970 = vmatmul.mubr.bf16.gmra.mrb[0].mxu0 %v1140
      %v2971 = vpop.f32.mrb[0].mxu0
      %v2972 = vadd.f32 0.0, %v2971
      %v2973 = vpop.f32.mrb[0].mxu0
      %v2974 = vpop.f32.mrb[0].mxu0
      %v2975 = vadd.f32 0.0, %v2974
      %v2976 = vpop.f32.mrb[0].mxu0
      %2977 = vmatprep.mubr.bf16.mxu0 %v2637
      %2978 = vmatmul.mubr.bf16.gmra.mrb[0].mxu0 %v2628
      %v2979 = vpop.f32.mrb[0].mxu0
      %v2980 = vadd.f32 0.0, %v2979
      %v2981 = vpop.f32.mrb[0].mxu0
      %v2982 = vpop.f32.mrb[0].mxu0
      %v2983 = vadd.f32 0.0, %v2982
      %v2984 = vpop.f32.mrb[0].mxu0
      %2985 = vmatprep.mubr.bf16.mxu0 %v2654
      %2986 = vmatmul.mubr.bf16.gmra.mrb[0].mxu0 %v2645
      %v2987 = vpop.f32.mrb[0].mxu0
      %v2988 = vadd.f32 0.0, %v2987
      %v2989 = vpop.f32.mrb[0].mxu0
      %v2990 = vpop.f32.mrb[0].mxu0
      %v2991 = vadd.f32 0.0, %v2990
      %v2992 = vpop.f32.mrb[0].mxu0
      %2993 = vmatprep.mubr.bf16.mxu0 %v2676
      %2994 = vmatmul.mubr.bf16.gmra.mrb[0].mxu0 %v2667
      %v2995 = vpop.f32.mrb[0].mxu0
      %v2996 = vadd.f32 0.0, %v2995
      %v2997 = vpop.f32.mrb[0].mxu0
      %v2998 = vpop.f32.mrb[0].mxu0
      %v2999 = vadd.f32 0.0, %v2998
      %v3000 = vpop.f32.mrb[0].mxu0
      %3001 = vdwg.mxu0
      %3002 = vmatprep.subr.bf16.mxu0 0
      %3003 = vmatpush1.bf16.msra.mxu0 %v2809
      %3004 = vmatprep.subr.bf16.mxu0 0
      %3005 = vmatpush1.bf16.msra.mxu0 %v2810
      %3006 = vmatprep.subr.bf16.mxu0 0
      %3007 = vmatpush1.bf16.msra.mxu0 %v2811
      %3008 = vmatprep.subr.bf16.mxu0 0
      %3009 = vmatpush1.bf16.msra.mxu0 %v2812
      %3010 = vmatprep.subr.bf16.mxu0 0
      %3011 = vmatpush1.bf16.msra.mxu0 %v2813
      %3012 = vmatprep.subr.bf16.mxu0 0
      %3013 = vmatpush1.bf16.msra.mxu0 %v2814
      %3014 = vmatprep.subr.bf16.mxu0 0
      %3015 = vmatpush1.bf16.msra.mxu0 %v2815
      %3016 = vmatprep.subr.bf16.mxu0 0
      %3017 = vmatpush1.bf16.msra.mxu0 %v2816
      %3018 = vmatprep.subr.bf16.mxu0 0
      %3019 = vmatpush1.bf16.msra.mxu0 0
      %3020 = vmatprep.subr.bf16.mxu0 0
      %3021 = vmatpush1.bf16.msra.mxu0 0
      %3022 = vmatprep.subr.bf16.mxu0 0
      %3023 = vmatpush1.bf16.msra.mxu0 0
      %3024 = vmatprep.subr.bf16.mxu0 0
      %3025 = vmatpush1.bf16.msra.mxu0 0
      %3026 = vmatprep.subr.bf16.mxu0 0
      %3027 = vmatpush1.bf16.msra.mxu0 0
      %3028 = vmatprep.subr.bf16.mxu0 0
      %3029 = vmatpush1.bf16.msra.mxu0 0
      %3030 = vmatprep.subr.bf16.mxu0 0
      %3031 = vmatpush1.bf16.msra.mxu0 0
      %3032 = vmatprep.subr.bf16.mxu0 0
      %3033 = vmatpush1.bf16.msra.mxu0 0
      %3034 = vmatprep.mubr.bf16.mxu0 0
      %3035 = vmatmul.mubr.bf16.gmra.mrb[0].mxu0 %v894
      %v3036 = vpop.f32.mrb[0].mxu0
      %v3037 = vadd.f32 %v2876, %v3036
      %v3038 = vpop.f32.mrb[0].mxu0
      %v3039 = vpop.f32.mrb[0].mxu0
      %v3040 = vadd.f32 %v2879, %v3039
      %v3041 = vpop.f32.mrb[0].mxu0
      %3042 = vmatprep.mubr.bf16.mxu0 0
      %3043 = vmatmul.mubr.bf16.gmra.mrb[0].mxu0 %v916
      %v3044 = vpop.f32.mrb[0].mxu0
      %v3045 = vadd.f32 %v2884, %v3044
      %v3046 = vpop.f32.mrb[0].mxu0
      %v3047 = vpop.f32.mrb[0].mxu0
      %v3048 = vadd.f32 %v2887, %v3047
      %v3049 = vpop.f32.mrb[0].mxu0
      %3050 = vmatprep.mubr.bf16.mxu0 0
      %3051 = vmatmul.mubr.bf16.gmra.mrb[0].mxu0 %v938
      %v3052 = vpop.f32.mrb[0].mxu0
      %v3053 = vadd.f32 %v2892, %v3052
      %v3054 = vpop.f32.mrb[0].mxu0
      %v3055 = vpop.f32.mrb[0].mxu0
      %v3056 = vadd.f32 %v2895, %v3055
      %v3057 = vpop.f32.mrb[0].mxu0
      %3058 = vmatprep.mubr.bf16.mxu0 0
      %3059 = vmatmul.mubr.bf16.gmra.mrb[0].mxu0 %v960
      %v3060 = vpop.f32.mrb[0].mxu0
      %v3061 = vadd.f32 %v2900, %v3060
      %v3062 = vpop.f32.mrb[0].mxu0
      %v3063 = vpop.f32.mrb[0].mxu0
      %v3064 = vadd.f32 %v2903, %v3063
      %v3065 = vpop.f32.mrb[0].mxu0
      %3066 = vmatprep.mubr.bf16.mxu0 0
      %3067 = vmatmul.mubr.bf16.gmra.mrb[0].mxu0 %v982
      %v3068 = vpop.f32.mrb[0].mxu0
      %v3069 = vadd.f32 %v2908, %v3068
      %v3070 = vpop.f32.mrb[0].mxu0
      %v3071 = vpop.f32.mrb[0].mxu0
      %v3072 = vadd.f32 %v2911, %v3071
      %v3073 = vpop.f32.mrb[0].mxu0
      %3074 = vmatprep.mubr.bf16.mxu0 0
      %3075 = vmatmul.mubr.bf16.gmra.mrb[0].mxu0 %v1004
      %v3076 = vpop.f32.mrb[0].mxu0
      %v3077 = vadd.f32 %v2916, %v3076
      %v3078 = vpop.f32.mrb[0].mxu0
      %v3079 = vpop.f32.mrb[0].mxu0
      %v3080 = vadd.f32 %v2919, %v3079
      %v3081 = vpop.f32.mrb[0].mxu0
      %3082 = vmatprep.mubr.bf16.mxu0 0
      %3083 = vmatmul.mubr.bf16.gmra.mrb[0].mxu0 %v1026
      %v3084 = vpop.f32.mrb[0].mxu0
      %v3085 = vadd.f32 %v2924, %v3084
      %v3086 = vpop.f32.mrb[0].mxu0
      %v3087 = vpop.f32.mrb[0].mxu0
      %v3088 = vadd.f32 %v2927, %v3087
      %v3089 = vpop.f32.mrb[0].mxu0
      %3090 = vmatprep.mubr.bf16.mxu0 0
      %3091 = vmatmul.mubr.bf16.gmra.mrb[0].mxu0 %v1048
      %v3092 = vpop.f32.mrb[0].mxu0
      %v3093 = vadd.f32 %v2932, %v3092
      %v3094 = vpop.f32.mrb[0].mxu0
      %v3095 = vpop.f32.mrb[0].mxu0
      %v3096 = vadd.f32 %v2935, %v3095
      %v3097 = vpop.f32.mrb[0].mxu0
      %3098 = vmatprep.mubr.bf16.mxu0 0
      %3099 = vmatmul.mubr.bf16.gmra.mrb[0].mxu0 %v1070
      %v3100 = vpop.f32.mrb[0].mxu0
      %v3101 = vadd.f32 %v2940, %v3100
      %v3102 = vpop.f32.mrb[0].mxu0
      %v3103 = vpop.f32.mrb[0].mxu0
      %v3104 = vadd.f32 %v2943, %v3103
      %v3105 = vpop.f32.mrb[0].mxu0
      %3106 = vmatprep.mubr.bf16.mxu0 0
      %3107 = vmatmul.mubr.bf16.gmra.mrb[0].mxu0 %v1092
      %v3108 = vpop.f32.mrb[0].mxu0
      %v3109 = vadd.f32 %v2948, %v3108
      %v3110 = vpop.f32.mrb[0].mxu0
      %v3111 = vpop.f32.mrb[0].mxu0
      %v3112 = vadd.f32 %v2951, %v3111
      %v3113 = vpop.f32.mrb[0].mxu0
      %3114 = vmatprep.mubr.bf16.mxu0 0
      %3115 = vmatmul.mubr.bf16.gmra.mrb[0].mxu0 %v1114
      %v3116 = vpop.f32.mrb[0].mxu0
      %v3117 = vadd.f32 %v2956, %v3116
      %v3118 = vpop.f32.mrb[0].mxu0
      %v3119 = vpop.f32.mrb[0].mxu0
      %v3120 = vadd.f32 %v2959, %v3119
      %v3121 = vpop.f32.mrb[0].mxu0
      %3122 = vmatprep.mubr.bf16.mxu0 0
      %3123 = vmatmul.mubr.bf16.gmra.mrb[0].mxu0 %v1136
      %v3124 = vpop.f32.mrb[0].mxu0
      %v3125 = vadd.f32 %v2964, %v3124
      %v3126 = vpop.f32.mrb[0].mxu0
      %v3127 = vpop.f32.mrb[0].mxu0
      %v3128 = vadd.f32 %v2967, %v3127
      %v3129 = vpop.f32.mrb[0].mxu0
      %3130 = vmatprep.mubr.bf16.mxu0 0
      %3131 = vmatmul.mubr.bf16.gmra.mrb[0].mxu0 %v2624
      %v3132 = vpop.f32.mrb[0].mxu0
      %v3133 = vadd.f32 %v2972, %v3132
      %v3134 = vpop.f32.mrb[0].mxu0
      %v3135 = vpop.f32.mrb[0].mxu0
      %v3136 = vadd.f32 %v2975, %v3135
      %v3137 = vpop.f32.mrb[0].mxu0
      %3138 = vmatprep.mubr.bf16.mxu0 0
      %3139 = vmatmul.mubr.bf16.gmra.mrb[0].mxu0 %v2641
      %v3140 = vpop.f32.mrb[0].mxu0
      %v3141 = vadd.f32 %v2980, %v3140
      %v3142 = vpop.f32.mrb[0].mxu0
      %v3143 = vpop.f32.mrb[0].mxu0
      %v3144 = vadd.f32 %v2983, %v3143
      %v3145 = vpop.f32.mrb[0].mxu0
      %3146 = vmatprep.mubr.bf16.mxu0 0
      %3147 = vmatmul.mubr.bf16.gmra.mrb[0].mxu0 %v2663
      %v3148 = vpop.f32.mrb[0].mxu0
      %v3149 = vadd.f32 %v2988, %v3148
      %v3150 = vpop.f32.mrb[0].mxu0
      %v3151 = vpop.f32.mrb[0].mxu0
      %v3152 = vadd.f32 %v2991, %v3151
      %v3153 = vpop.f32.mrb[0].mxu0
      %3154 = vmatprep.mubr.bf16.mxu0 0
      %3155 = vmatmul.mubr.bf16.gmra.mrb[0].mxu0 %v2685
      %v3156 = vpop.f32.mrb[0].mxu0
      %v3157 = vadd.f32 %v2996, %v3156
      %v3158 = vpop.f32.mrb[0].mxu0
      %v3159 = vpop.f32.mrb[0].mxu0
      %v3160 = vadd.f32 %v2999, %v3159
      %v3161 = vpop.f32.mrb[0].mxu0
      %3162 = vdwg.mxu0
      %v3163 = vld [vmem:[#allocation2] sm:$0xff]
      %v3164 = vld [vmem:[#allocation2 + $0x8] sm:$0xff]
      %v3165 = vld [vmem:[#allocation2 + $0x10] sm:$0xff]
      %v3166 = vld [vmem:[#allocation2 + $0x18] sm:$0xff]
      %v3167 = vld [vmem:[#allocation2 + $0x20] sm:$0xff]
      %v3168 = vld [vmem:[#allocation2 + $0x28] sm:$0xff]
      %v3169 = vld [vmem:[#allocation2 + $0x30] sm:$0xff]
      %v3170 = vld [vmem:[#allocation2 + $0x38] sm:$0xff]
      %v3171 = vld [vmem:[#allocation2 + $0x40] sm:$0xff]
      %v3172 = vld [vmem:[#allocation2 + $0x48] sm:$0xff]
      %v3173 = vld [vmem:[#allocation2 + $0x50] sm:$0xff]
      %v3174 = vld [vmem:[#allocation2 + $0x58] sm:$0xff]
      %v3175 = vld [vmem:[#allocation2 + $0x60] sm:$0xff]
      %v3176 = vld [vmem:[#allocation2 + $0x68] sm:$0xff]
      %v3177 = vld [vmem:[#allocation2 + $0x70] sm:$0xff]
      %v3178 = vld [vmem:[#allocation2 + $0x78] sm:$0xff]
      %v3179 = vld [vmem:[#allocation2 + $0x80] sm:$0xff]
      %v3180 = vld [vmem:[#allocation2 + $0x88] sm:$0xff]
      %v3181 = vld [vmem:[#allocation2 + $0x90] sm:$0xff]
      %v3182 = vld [vmem:[#allocation2 + $0x98] sm:$0xff]
      %v3183 = vld [vmem:[#allocation2 + $0xa0] sm:$0xff]
      %v3184 = vld [vmem:[#allocation2 + $0xa8] sm:$0xff]
      %v3185 = vld [vmem:[#allocation2 + $0xb0] sm:$0xff]
      %v3186 = vld [vmem:[#allocation2 + $0xb8] sm:$0xff]
      %v3187 = vld [vmem:[#allocation2 + $0xc0] sm:$0xff]
      %v3188 = vld [vmem:[#allocation2 + $0xc8] sm:$0xff]
      %v3189 = vld [vmem:[#allocation2 + $0xd0] sm:$0xff]
      %v3190 = vld [vmem:[#allocation2 + $0xd8] sm:$0xff]
      %v3191 = vld [vmem:[#allocation2 + $0xe0] sm:$0xff]
      %v3192 = vld [vmem:[#allocation2 + $0xe8] sm:$0xff]
      %v3193 = vld [vmem:[#allocation2 + $0xf0] sm:$0xff]
      %v3194 = vld [vmem:[#allocation2 + $0xf8] sm:$0xff]
      %v3195 = vadd.f32 %v3163, %v3037
      %v3196 = vadd.f32 %v3164, %v3040
      %v3197 = vadd.f32 %v3165, %v3045
      %v3198 = vadd.f32 %v3166, %v3048
      %v3199 = vadd.f32 %v3167, %v3053
      %v3200 = vadd.f32 %v3168, %v3056
      %v3201 = vadd.f32 %v3169, %v3061
      %v3202 = vadd.f32 %v3170, %v3064
      %v3203 = vadd.f32 %v3171, %v3069
      %v3204 = vadd.f32 %v3172, %v3072
      %v3205 = vadd.f32 %v3173, %v3077
      %v3206 = vadd.f32 %v3174, %v3080
      %v3207 = vadd.f32 %v3175, %v3085
      %v3208 = vadd.f32 %v3176, %v3088
      %v3209 = vadd.f32 %v3177, %v3093
      %v3210 = vadd.f32 %v3178, %v3096
      %v3211 = vadd.f32 %v3179, %v3101
      %v3212 = vadd.f32 %v3180, %v3104
      %v3213 = vadd.f32 %v3181, %v3109
      %v3214 = vadd.f32 %v3182, %v3112
      %v3215 = vadd.f32 %v3183, %v3117
      %v3216 = vadd.f32 %v3184, %v3120
      %v3217 = vadd.f32 %v3185, %v3125
      %v3218 = vadd.f32 %v3186, %v3128
      %v3219 = vadd.f32 %v3187, %v3133
      %v3220 = vadd.f32 %v3188, %v3136
      %v3221 = vadd.f32 %v3189, %v3141
      %v3222 = vadd.f32 %v3190, %v3144
      %v3223 = vadd.f32 %v3191, %v3149
      %v3224 = vadd.f32 %v3192, %v3152
      %v3225 = vadd.f32 %v3193, %v3157
      %v3226 = vadd.f32 %v3194, %v3160
      %3227 = vst [vmem:[#allocation2] sm:$0xff] %v3195
      %3228 = vst [vmem:[#allocation2 + $0x8] sm:$0xff] %v3196
      %3229 = vst [vmem:[#allocation2 + $0x10] sm:$0xff] %v3197
      %3230 = vst [vmem:[#allocation2 + $0x18] sm:$0xff] %v3198
      %3231 = vst [vmem:[#allocation2 + $0x20] sm:$0xff] %v3199
      %3232 = vst [vmem:[#allocation2 + $0x28] sm:$0xff] %v3200
      %3233 = vst [vmem:[#allocation2 + $0x30] sm:$0xff] %v3201
      %3234 = vst [vmem:[#allocation2 + $0x38] sm:$0xff] %v3202
      %3235 = vst [vmem:[#allocation2 + $0x40] sm:$0xff] %v3203
      %3236 = vst [vmem:[#allocation2 + $0x48] sm:$0xff] %v3204
      %3237 = vst [vmem:[#allocation2 + $0x50] sm:$0xff] %v3205
      %3238 = vst [vmem:[#allocation2 + $0x58] sm:$0xff] %v3206
      %3239 = vst [vmem:[#allocation2 + $0x60] sm:$0xff] %v3207
      %3240 = vst [vmem:[#allocation2 + $0x68] sm:$0xff] %v3208
      %3241 = vst [vmem:[#allocation2 + $0x70] sm:$0xff] %v3209
      %3242 = vst [vmem:[#allocation2 + $0x78] sm:$0xff] %v3210
      %3243 = vst [vmem:[#allocation2 + $0x80] sm:$0xff] %v3211
      %3244 = vst [vmem:[#allocation2 + $0x88] sm:$0xff] %v3212
      %3245 = vst [vmem:[#allocation2 + $0x90] sm:$0xff] %v3213
      %3246 = vst [vmem:[#allocation2 + $0x98] sm:$0xff] %v3214
      %3247 = vst [vmem:[#allocation2 + $0xa0] sm:$0xff] %v3215
      %3248 = vst [vmem:[#allocation2 + $0xa8] sm:$0xff] %v3216
      %3249 = vst [vmem:[#allocation2 + $0xb0] sm:$0xff] %v3217
      %3250 = vst [vmem:[#allocation2 + $0xb8] sm:$0xff] %v3218
      %3251 = vst [vmem:[#allocation2 + $0xc0] sm:$0xff] %v3219
      %3252 = vst [vmem:[#allocation2 + $0xc8] sm:$0xff] %v3220
      %3253 = vst [vmem:[#allocation2 + $0xd0] sm:$0xff] %v3221
      %3254 = vst [vmem:[#allocation2 + $0xd8] sm:$0xff] %v3222
      %3255 = vst [vmem:[#allocation2 + $0xe0] sm:$0xff] %v3223
      %3256 = vst [vmem:[#allocation2 + $0xe8] sm:$0xff] %v3224
      %3257 = vst [vmem:[#allocation2 + $0xf0] sm:$0xff] %v3225
      %3258 = vst [vmem:[#allocation2 + $0xf8] sm:$0xff] %v3226
      %v3259 = vld [vmem:[#allocation2] sm:$0xff]
      %v3260 = vld [vmem:[#allocation2 + $0x8] sm:$0xff]
      %v3261 = vld [vmem:[#allocation2 + $0x10] sm:$0xff]
      %v3262 = vld [vmem:[#allocation2 + $0x18] sm:$0xff]
      %v3263 = vld [vmem:[#allocation2 + $0x20] sm:$0xff]
      %v3264 = vld [vmem:[#allocation2 + $0x28] sm:$0xff]
      %v3265 = vld [vmem:[#allocation2 + $0x30] sm:$0xff]
      %v3266 = vld [vmem:[#allocation2 + $0x38] sm:$0xff]
      %v3267 = vld [vmem:[#allocation2 + $0x40] sm:$0xff]
      %v3268 = vld [vmem:[#allocation2 + $0x48] sm:$0xff]
      %v3269 = vld [vmem:[#allocation2 + $0x50] sm:$0xff]
      %v3270 = vld [vmem:[#allocation2 + $0x58] sm:$0xff]
      %v3271 = vld [vmem:[#allocation2 + $0x60] sm:$0xff]
      %v3272 = vld [vmem:[#allocation2 + $0x68] sm:$0xff]
      %v3273 = vld [vmem:[#allocation2 + $0x70] sm:$0xff]
      %v3274 = vld [vmem:[#allocation2 + $0x78] sm:$0xff]
      %v3275 = vld [vmem:[#allocation2 + $0x80] sm:$0xff]
      %v3276 = vld [vmem:[#allocation2 + $0x88] sm:$0xff]
      %v3277 = vld [vmem:[#allocation2 + $0x90] sm:$0xff]
      %v3278 = vld [vmem:[#allocation2 + $0x98] sm:$0xff]
      %v3279 = vld [vmem:[#allocation2 + $0xa0] sm:$0xff]
      %v3280 = vld [vmem:[#allocation2 + $0xa8] sm:$0xff]
      %v3281 = vld [vmem:[#allocation2 + $0xb0] sm:$0xff]
      %v3282 = vld [vmem:[#allocation2 + $0xb8] sm:$0xff]
      %v3283 = vld [vmem:[#allocation2 + $0xc0] sm:$0xff]
      %v3284 = vld [vmem:[#allocation2 + $0xc8] sm:$0xff]
      %v3285 = vld [vmem:[#allocation2 + $0xd0] sm:$0xff]
      %v3286 = vld [vmem:[#allocation2 + $0xd8] sm:$0xff]
      %v3287 = vld [vmem:[#allocation2 + $0xe0] sm:$0xff]
      %v3288 = vld [vmem:[#allocation2 + $0xe8] sm:$0xff]
      %v3289 = vld [vmem:[#allocation2 + $0xf0] sm:$0xff]
      %v3290 = vld [vmem:[#allocation2 + $0xf8] sm:$0xff]
      %v3291 = vld [vmem:[%s412] sm:$0x1]
      %v3293 = vlaneseq
      %v3294 = vshrl.u32 %v3293, 7
      %v3295 = vsub.s32 0, %v3294
      %v3296 = vrot.slane %v3291, %v3295
      %v3298 = vadd.f32 %v3259, %v3296
      %v3299 = vadd.f32 %v3260, %v3296
      %v3300 = vadd.f32 %v3261, %v3296
      %v3301 = vadd.f32 %v3262, %v3296
      %v3302 = vadd.f32 %v3263, %v3296
      %v3303 = vadd.f32 %v3264, %v3296
      %v3304 = vadd.f32 %v3265, %v3296
      %v3305 = vadd.f32 %v3266, %v3296
      %v3306 = vadd.f32 %v3267, %v3296
      %v3307 = vadd.f32 %v3268, %v3296
      %v3308 = vadd.f32 %v3269, %v3296
      %v3309 = vadd.f32 %v3270, %v3296
      %v3310 = vadd.f32 %v3271, %v3296
      %v3311 = vadd.f32 %v3272, %v3296
      %v3312 = vadd.f32 %v3273, %v3296
      %v3313 = vadd.f32 %v3274, %v3296
      %v3314 = vadd.f32 %v3275, %v3296
      %v3315 = vadd.f32 %v3276, %v3296
      %v3316 = vadd.f32 %v3277, %v3296
      %v3317 = vadd.f32 %v3278, %v3296
      %v3318 = vadd.f32 %v3279, %v3296
      %v3319 = vadd.f32 %v3280, %v3296
      %v3320 = vadd.f32 %v3281, %v3296
      %v3321 = vadd.f32 %v3282, %v3296
      %v3322 = vadd.f32 %v3283, %v3296
      %v3323 = vadd.f32 %v3284, %v3296
      %v3324 = vadd.f32 %v3285, %v3296
      %v3325 = vadd.f32 %v3286, %v3296
      %v3326 = vadd.f32 %v3287, %v3296
      %v3327 = vadd.f32 %v3288, %v3296
      %v3328 = vadd.f32 %v3289, %v3296
      %v3329 = vadd.f32 %v3290, %v3296
      %v3330 = vmax.f32 %v3298, 0.0
      %v3331 = vmax.f32 %v3299, 0.0
      %v3332 = vmax.f32 %v3300, 0.0
      %v3333 = vmax.f32 %v3301, 0.0
      %v3334 = vmax.f32 %v3302, 0.0
      %v3335 = vmax.f32 %v3303, 0.0
      %v3336 = vmax.f32 %v3304, 0.0
      %v3337 = vmax.f32 %v3305, 0.0
      %v3338 = vmax.f32 %v3306, 0.0
      %v3339 = vmax.f32 %v3307, 0.0
      %v3340 = vmax.f32 %v3308, 0.0
      %v3341 = vmax.f32 %v3309, 0.0
      %v3342 = vmax.f32 %v3310, 0.0
      %v3343 = vmax.f32 %v3311, 0.0
      %v3344 = vmax.f32 %v3312, 0.0
      %v3345 = vmax.f32 %v3313, 0.0
      %v3346 = vmax.f32 %v3314, 0.0
      %v3347 = vmax.f32 %v3315, 0.0
      %v3348 = vmax.f32 %v3316, 0.0
      %v3349 = vmax.f32 %v3317, 0.0
      %v3350 = vmax.f32 %v3318, 0.0
      %v3351 = vmax.f32 %v3319, 0.0
      %v3352 = vmax.f32 %v3320, 0.0
      %v3353 = vmax.f32 %v3321, 0.0
      %v3354 = vmax.f32 %v3322, 0.0
      %v3355 = vmax.f32 %v3323, 0.0
      %v3356 = vmax.f32 %v3324, 0.0
      %v3357 = vmax.f32 %v3325, 0.0
      %v3358 = vmax.f32 %v3326, 0.0
      %v3359 = vmax.f32 %v3327, 0.0
      %v3360 = vmax.f32 %v3328, 0.0
      %v3361 = vmax.f32 %v3329, 0.0
      %v3362 = vld [vmem:[%s417] sm:$0xff]
      %v3363 = vld [vmem:[%s417 + $0x8] sm:$0xff]
      %v3364 = vld [vmem:[%s417 + $0x10] sm:$0xff]
      %v3365 = vld [vmem:[%s417 + $0x18] sm:$0xff]
      %v3366 = vld [vmem:[%s417 + $0x20] sm:$0xff]
      %v3367 = vld [vmem:[%s417 + $0x28] sm:$0xff]
      %v3368 = vld [vmem:[%s417 + $0x30] sm:$0xff]
      %v3369 = vld [vmem:[%s417 + $0x38] sm:$0xff]
      %v3370 = vld [vmem:[%s417 + $0x40] sm:$0xff]
      %v3371 = vld [vmem:[%s417 + $0x48] sm:$0xff]
      %v3372 = vld [vmem:[%s417 + $0x50] sm:$0xff]
      %v3373 = vld [vmem:[%s417 + $0x58] sm:$0xff]
      %v3374 = vld [vmem:[%s417 + $0x60] sm:$0xff]
      %v3375 = vld [vmem:[%s417 + $0x68] sm:$0xff]
      %v3376 = vld [vmem:[%s417 + $0x70] sm:$0xff]
      %v3377 = vld [vmem:[%s417 + $0x78] sm:$0xff]
      %v3378 = vld [vmem:[%s417 + $0x80] sm:$0xff]
      %v3379 = vld [vmem:[%s417 + $0x88] sm:$0xff]
      %v3380 = vld [vmem:[%s417 + $0x90] sm:$0xff]
      %v3381 = vld [vmem:[%s417 + $0x98] sm:$0xff]
      %v3382 = vld [vmem:[%s417 + $0xa0] sm:$0xff]
      %v3383 = vld [vmem:[%s417 + $0xa8] sm:$0xff]
      %v3384 = vld [vmem:[%s417 + $0xb0] sm:$0xff]
      %v3385 = vld [vmem:[%s417 + $0xb8] sm:$0xff]
      %v3386 = vld [vmem:[%s417 + $0xc0] sm:$0xff]
      %v3387 = vld [vmem:[%s417 + $0xc8] sm:$0xff]
      %v3388 = vld [vmem:[%s417 + $0xd0] sm:$0xff]
      %v3389 = vld [vmem:[%s417 + $0xd8] sm:$0xff]
      %v3390 = vld [vmem:[%s417 + $0xe0] sm:$0xff]
      %v3391 = vld [vmem:[%s417 + $0xe8] sm:$0xff]
      %v3392 = vld [vmem:[%s417 + $0xf0] sm:$0xff]
      %v3393 = vld [vmem:[%s417 + $0xf8] sm:$0xff]
      %vm3394 = vcmp.gt.f32.partialorder %v3362, 0.0
      %vm3395 = vcmp.gt.f32.partialorder %v3363, 0.0
      %vm3396 = vcmp.gt.f32.partialorder %v3364, 0.0
      %vm3397 = vcmp.gt.f32.partialorder %v3365, 0.0
      %vm3398 = vcmp.gt.f32.partialorder %v3366, 0.0
      %vm3399 = vcmp.gt.f32.partialorder %v3367, 0.0
      %vm3400 = vcmp.gt.f32.partialorder %v3368, 0.0
      %vm3401 = vcmp.gt.f32.partialorder %v3369, 0.0
      %vm3402 = vcmp.gt.f32.partialorder %v3370, 0.0
      %vm3403 = vcmp.gt.f32.partialorder %v3371, 0.0
      %vm3404 = vcmp.gt.f32.partialorder %v3372, 0.0
      %vm3405 = vcmp.gt.f32.partialorder %v3373, 0.0
      %vm3406 = vcmp.gt.f32.partialorder %v3374, 0.0
      %vm3407 = vcmp.gt.f32.partialorder %v3375, 0.0
      %vm3408 = vcmp.gt.f32.partialorder %v3376, 0.0
      %vm3409 = vcmp.gt.f32.partialorder %v3377, 0.0
      %vm3410 = vcmp.gt.f32.partialorder %v3378, 0.0
      %vm3411 = vcmp.gt.f32.partialorder %v3379, 0.0
      %vm3412 = vcmp.gt.f32.partialorder %v3380, 0.0
      %vm3413 = vcmp.gt.f32.partialorder %v3381, 0.0
      %vm3414 = vcmp.gt.f32.partialorder %v3382, 0.0
      %vm3415 = vcmp.gt.f32.partialorder %v3383, 0.0
      %vm3416 = vcmp.gt.f32.partialorder %v3384, 0.0
      %vm3417 = vcmp.gt.f32.partialorder %v3385, 0.0
      %vm3418 = vcmp.gt.f32.partialorder %v3386, 0.0
      %vm3419 = vcmp.gt.f32.partialorder %v3387, 0.0
      %vm3420 = vcmp.gt.f32.partialorder %v3388, 0.0
      %vm3421 = vcmp.gt.f32.partialorder %v3389, 0.0
      %vm3422 = vcmp.gt.f32.partialorder %v3390, 0.0
      %vm3423 = vcmp.gt.f32.partialorder %v3391, 0.0
      %vm3424 = vcmp.gt.f32.partialorder %v3392, 0.0
      %vm3425 = vcmp.gt.f32.partialorder %v3393, 0.0
      %v3426 = vsel %vm3394, 1, 0
      %v3427 = vsel %vm3395, 1, 0
      %v3428 = vsel %vm3396, 1, 0
      %v3429 = vsel %vm3397, 1, 0
      %v3430 = vsel %vm3398, 1, 0
      %v3431 = vsel %vm3399, 1, 0
      %v3432 = vsel %vm3400, 1, 0
      %v3433 = vsel %vm3401, 1, 0
      %v3434 = vsel %vm3402, 1, 0
      %v3435 = vsel %vm3403, 1, 0
      %v3436 = vsel %vm3404, 1, 0
      %v3437 = vsel %vm3405, 1, 0
      %v3438 = vsel %vm3406, 1, 0
      %v3439 = vsel %vm3407, 1, 0
      %v3440 = vsel %vm3408, 1, 0
      %v3441 = vsel %vm3409, 1, 0
      %v3442 = vsel %vm3410, 1, 0
      %v3443 = vsel %vm3411, 1, 0
      %v3444 = vsel %vm3412, 1, 0
      %v3445 = vsel %vm3413, 1, 0
      %v3446 = vsel %vm3414, 1, 0
      %v3447 = vsel %vm3415, 1, 0
      %v3448 = vsel %vm3416, 1, 0
      %v3449 = vsel %vm3417, 1, 0
      %v3450 = vsel %vm3418, 1, 0
      %v3451 = vsel %vm3419, 1, 0
      %v3452 = vsel %vm3420, 1, 0
      %v3453 = vsel %vm3421, 1, 0
      %v3454 = vsel %vm3422, 1, 0
      %v3455 = vsel %vm3423, 1, 0
      %v3456 = vsel %vm3424, 1, 0
      %v3457 = vsel %vm3425, 1, 0
      %3458 = vset.pattern.permute.xlu0 0
      %3459 = vperm.xlu0 %3458, %v3426
      %v3460 = vpop.permute.xlu0 %3459
      %3461 = vset.pattern.permute.xlu0 0
      %3462 = vperm.xlu0 %3461, %v3427
      %v3463 = vpop.permute.xlu0 %3462
      %3464 = vset.pattern.permute.xlu0 0
      %3465 = vperm.xlu0 %3464, %v3428
      %v3466 = vpop.permute.xlu0 %3465
      %3467 = vset.pattern.permute.xlu0 0
      %3468 = vperm.xlu0 %3467, %v3429
      %v3469 = vpop.permute.xlu0 %3468
      %3470 = vset.pattern.permute.xlu0 0
      %3471 = vperm.xlu0 %3470, %v3430
      %v3472 = vpop.permute.xlu0 %3471
      %3473 = vset.pattern.permute.xlu0 0
      %3474 = vperm.xlu0 %3473, %v3431
      %v3475 = vpop.permute.xlu0 %3474
      %3476 = vset.pattern.permute.xlu0 0
      %3477 = vperm.xlu0 %3476, %v3432
      %v3478 = vpop.permute.xlu0 %3477
      %3479 = vset.pattern.permute.xlu0 0
      %3480 = vperm.xlu0 %3479, %v3433
      %v3481 = vpop.permute.xlu0 %3480
      %3482 = vset.pattern.permute.xlu0 0
      %3483 = vperm.xlu0 %3482, %v3434
      %v3484 = vpop.permute.xlu0 %3483
      %3485 = vset.pattern.permute.xlu0 0
      %3486 = vperm.xlu0 %3485, %v3435
      %v3487 = vpop.permute.xlu0 %3486
      %3488 = vset.pattern.permute.xlu0 0
      %3489 = vperm.xlu0 %3488, %v3436
      %v3490 = vpop.permute.xlu0 %3489
      %3491 = vset.pattern.permute.xlu0 0
      %3492 = vperm.xlu0 %3491, %v3437
      %v3493 = vpop.permute.xlu0 %3492
      %3494 = vset.pattern.permute.xlu0 0
      %3495 = vperm.xlu0 %3494, %v3438
      %v3496 = vpop.permute.xlu0 %3495
      %3497 = vset.pattern.permute.xlu0 0
      %3498 = vperm.xlu0 %3497, %v3439
      %v3499 = vpop.permute.xlu0 %3498
      %3500 = vset.pattern.permute.xlu0 0
      %3501 = vperm.xlu0 %3500, %v3440
      %v3502 = vpop.permute.xlu0 %3501
      %3503 = vset.pattern.permute.xlu0 0
      %3504 = vperm.xlu0 %3503, %v3441
      %v3505 = vpop.permute.xlu0 %3504
      %3506 = vset.pattern.permute.xlu0 0
      %3507 = vperm.xlu0 %3506, %v3442
      %v3508 = vpop.permute.xlu0 %3507
      %3509 = vset.pattern.permute.xlu0 0
      %3510 = vperm.xlu0 %3509, %v3443
      %v3511 = vpop.permute.xlu0 %3510
      %3512 = vset.pattern.permute.xlu0 0
      %3513 = vperm.xlu0 %3512, %v3444
      %v3514 = vpop.permute.xlu0 %3513
      %3515 = vset.pattern.permute.xlu0 0
      %3516 = vperm.xlu0 %3515, %v3445
      %v3517 = vpop.permute.xlu0 %3516
      %3518 = vset.pattern.permute.xlu0 0
      %3519 = vperm.xlu0 %3518, %v3446
      %v3520 = vpop.permute.xlu0 %3519
      %3521 = vset.pattern.permute.xlu0 0
      %3522 = vperm.xlu0 %3521, %v3447
      %v3523 = vpop.permute.xlu0 %3522
      %3524 = vset.pattern.permute.xlu0 0
      %3525 = vperm.xlu0 %3524, %v3448
      %v3526 = vpop.permute.xlu0 %3525
      %3527 = vset.pattern.permute.xlu0 0
      %3528 = vperm.xlu0 %3527, %v3449
      %v3529 = vpop.permute.xlu0 %3528
      %3530 = vset.pattern.permute.xlu0 0
      %3531 = vperm.xlu0 %3530, %v3450
      %v3532 = vpop.permute.xlu0 %3531
      %3533 = vset.pattern.permute.xlu0 0
      %3534 = vperm.xlu0 %3533, %v3451
      %v3535 = vpop.permute.xlu0 %3534
      %3536 = vset.pattern.permute.xlu0 0
      %3537 = vperm.xlu0 %3536, %v3452
      %v3538 = vpop.permute.xlu0 %3537
      %3539 = vset.pattern.permute.xlu0 0
      %3540 = vperm.xlu0 %3539, %v3453
      %v3541 = vpop.permute.xlu0 %3540
      %3542 = vset.pattern.permute.xlu0 0
      %3543 = vperm.xlu0 %3542, %v3454
      %v3544 = vpop.permute.xlu0 %3543
      %3545 = vset.pattern.permute.xlu0 0
      %3546 = vperm.xlu0 %3545, %v3455
      %v3547 = vpop.permute.xlu0 %3546
      %3548 = vset.pattern.permute.xlu0 0
      %3549 = vperm.xlu0 %3548, %v3456
      %v3550 = vpop.permute.xlu0 %3549
      %3551 = vset.pattern.permute.xlu0 0
      %3552 = vperm.xlu0 %3551, %v3457
      %v3553 = vpop.permute.xlu0 %3552
      %vm3554 = vcmp.eq.s32.totalorder %v3460, 1
      %vm3555 = vcmp.eq.s32.totalorder %v3463, 1
      %vm3556 = vcmp.eq.s32.totalorder %v3466, 1
      %vm3557 = vcmp.eq.s32.totalorder %v3469, 1
      %vm3558 = vcmp.eq.s32.totalorder %v3472, 1
      %vm3559 = vcmp.eq.s32.totalorder %v3475, 1
      %vm3560 = vcmp.eq.s32.totalorder %v3478, 1
      %vm3561 = vcmp.eq.s32.totalorder %v3481, 1
      %vm3562 = vcmp.eq.s32.totalorder %v3484, 1
      %vm3563 = vcmp.eq.s32.totalorder %v3487, 1
      %vm3564 = vcmp.eq.s32.totalorder %v3490, 1
      %vm3565 = vcmp.eq.s32.totalorder %v3493, 1
      %vm3566 = vcmp.eq.s32.totalorder %v3496, 1
      %vm3567 = vcmp.eq.s32.totalorder %v3499, 1
      %vm3568 = vcmp.eq.s32.totalorder %v3502, 1
      %vm3569 = vcmp.eq.s32.totalorder %v3505, 1
      %vm3570 = vcmp.eq.s32.totalorder %v3508, 1
      %vm3571 = vcmp.eq.s32.totalorder %v3511, 1
      %vm3572 = vcmp.eq.s32.totalorder %v3514, 1
      %vm3573 = vcmp.eq.s32.totalorder %v3517, 1
      %vm3574 = vcmp.eq.s32.totalorder %v3520, 1
      %vm3575 = vcmp.eq.s32.totalorder %v3523, 1
      %vm3576 = vcmp.eq.s32.totalorder %v3526, 1
      %vm3577 = vcmp.eq.s32.totalorder %v3529, 1
      %vm3578 = vcmp.eq.s32.totalorder %v3532, 1
      %vm3579 = vcmp.eq.s32.totalorder %v3535, 1
      %vm3580 = vcmp.eq.s32.totalorder %v3538, 1
      %vm3581 = vcmp.eq.s32.totalorder %v3541, 1
      %vm3582 = vcmp.eq.s32.totalorder %v3544, 1
      %vm3583 = vcmp.eq.s32.totalorder %v3547, 1
      %vm3584 = vcmp.eq.s32.totalorder %v3550, 1
      %vm3585 = vcmp.eq.s32.totalorder %v3553, 1
      %v3586 = vsel %vm3554, %v3330, 0.0
      %v3587 = vsel %vm3555, %v3331, 0.0
      %v3588 = vsel %vm3556, %v3332, 0.0
      %v3589 = vsel %vm3557, %v3333, 0.0
      %v3590 = vsel %vm3558, %v3334, 0.0
      %v3591 = vsel %vm3559, %v3335, 0.0
      %v3592 = vsel %vm3560, %v3336, 0.0
      %v3593 = vsel %vm3561, %v3337, 0.0
      %v3594 = vsel %vm3562, %v3338, 0.0
      %v3595 = vsel %vm3563, %v3339, 0.0
      %v3596 = vsel %vm3564, %v3340, 0.0
      %v3597 = vsel %vm3565, %v3341, 0.0
      %v3598 = vsel %vm3566, %v3342, 0.0
      %v3599 = vsel %vm3567, %v3343, 0.0
      %v3600 = vsel %vm3568, %v3344, 0.0
      %v3601 = vsel %vm3569, %v3345, 0.0
      %v3602 = vsel %vm3570, %v3346, 0.0
      %v3603 = vsel %vm3571, %v3347, 0.0
      %v3604 = vsel %vm3572, %v3348, 0.0
      %v3605 = vsel %vm3573, %v3349, 0.0
      %v3606 = vsel %vm3574, %v3350, 0.0
      %v3607 = vsel %vm3575, %v3351, 0.0
      %v3608 = vsel %vm3576, %v3352, 0.0
      %v3609 = vsel %vm3577, %v3353, 0.0
      %v3610 = vsel %vm3578, %v3354, 0.0
      %v3611 = vsel %vm3579, %v3355, 0.0
      %v3612 = vsel %vm3580, %v3356, 0.0
      %v3613 = vsel %vm3581, %v3357, 0.0
      %v3614 = vsel %vm3582, %v3358, 0.0
      %v3615 = vsel %vm3583, %v3359, 0.0
      %v3616 = vsel %vm3584, %v3360, 0.0
      %v3617 = vsel %vm3585, %v3361, 0.0
      %3618 = vst [vmem:[%s426] sm:$0xff] %v3586
      %3619 = vst [vmem:[%s426 + $0x8] sm:$0xff] %v3587
      %3620 = vst [vmem:[%s426 + $0x10] sm:$0xff] %v3588
      %3621 = vst [vmem:[%s426 + $0x18] sm:$0xff] %v3589
      %3622 = vst [vmem:[%s426 + $0x20] sm:$0xff] %v3590
      %3623 = vst [vmem:[%s426 + $0x28] sm:$0xff] %v3591
      %3624 = vst [vmem:[%s426 + $0x30] sm:$0xff] %v3592
      %3625 = vst [vmem:[%s426 + $0x38] sm:$0xff] %v3593
      %3626 = vst [vmem:[%s426 + $0x40] sm:$0xff] %v3594
      %3627 = vst [vmem:[%s426 + $0x48] sm:$0xff] %v3595
      %3628 = vst [vmem:[%s426 + $0x50] sm:$0xff] %v3596
      %3629 = vst [vmem:[%s426 + $0x58] sm:$0xff] %v3597
      %3630 = vst [vmem:[%s426 + $0x60] sm:$0xff] %v3598
      %3631 = vst [vmem:[%s426 + $0x68] sm:$0xff] %v3599
      %3632 = vst [vmem:[%s426 + $0x70] sm:$0xff] %v3600
      %3633 = vst [vmem:[%s426 + $0x78] sm:$0xff] %v3601
      %3634 = vst [vmem:[%s426 + $0x80] sm:$0xff] %v3602
      %3635 = vst [vmem:[%s426 + $0x88] sm:$0xff] %v3603
      %3636 = vst [vmem:[%s426 + $0x90] sm:$0xff] %v3604
      %3637 = vst [vmem:[%s426 + $0x98] sm:$0xff] %v3605
      %3638 = vst [vmem:[%s426 + $0xa0] sm:$0xff] %v3606
      %3639 = vst [vmem:[%s426 + $0xa8] sm:$0xff] %v3607
      %3640 = vst [vmem:[%s426 + $0xb0] sm:$0xff] %v3608
      %3641 = vst [vmem:[%s426 + $0xb8] sm:$0xff] %v3609
      %3642 = vst [vmem:[%s426 + $0xc0] sm:$0xff] %v3610
      %3643 = vst [vmem:[%s426 + $0xc8] sm:$0xff] %v3611
      %3644 = vst [vmem:[%s426 + $0xd0] sm:$0xff] %v3612
      %3645 = vst [vmem:[%s426 + $0xd8] sm:$0xff] %v3613
      %3646 = vst [vmem:[%s426 + $0xe0] sm:$0xff] %v3614
      %3647 = vst [vmem:[%s426 + $0xe8] sm:$0xff] %v3615
      %3648 = vst [vmem:[%s426 + $0xf0] sm:$0xff] %v3616
      %3649 = vst [vmem:[%s426 + $0xf8] sm:$0xff] %v3617
      %s3650 = smul.u32 32, %s22
      %p3651 = scmp.lt.s32.totalorder %s3650, 127
      %s3652 = scalar_select %p3651, %s3650, 127
      %p3653 = scmp.lt.s32.totalorder %s21, 0
      %s3654 = scalar_select %p3653, %s21, 0
      %s3655 = sadd.s32 %s3654, %s3652
      %s3656 = smul.addr %s3655, 8
      %s3657 = scalar_lea.vmem %s6, %s3656
      // Predicated region
      $region45: #{unet_up_forward.5} parent=43 // pred_check
        %p3658 = pneg %p221
      $region46: #{unet_up_forward.5} parent=43 // pred_check_branch
        %3660 = sbr.rel (%p3658) target = $region48
      $region47: #{unet_up_forward.5} parent=43 // pred_region
        %s3661 = smul.u32 32, %s22
      $region48: #{unet_up_forward.5} parent=43 // pred_fallthru
        _
    $region44: #{unet_up_forward.5} parent=5 // pred_fallthru
      _
    %p3662 = scmp.le.s32.totalorder 2, %s12
    // Predicated region
    $region49: #{unet_up_forward.5} parent=5 // pred_check
      %p3663 = pneg %p3662
    $region50: #{unet_up_forward.5} parent=5 // pred_check_branch
      %3665 = sbr.rel (%p3663) target = $region52
    $region51: #{unet_up_forward.5} parent=5 // pred_region
      %s3666 = ssub.s32 %s12, 2
      // Predicated region
      $region53: #{unet_up_forward.5} parent=51 // pred_check
        %p3667 = pneg %p227
      $region54: #{unet_up_forward.5} parent=51 // pred_check_branch
        %3669 = sbr.rel (%p3667) target = $region56
      $region55: #{unet_up_forward.5} parent=51 // pred_region
        %s3670 = smul.u32 32, %s24
        %p3671 = scmp.lt.s32.totalorder %s3670, 127
        %s3672 = scalar_select %p3671, %s3670, 127
        %p3673 = scmp.lt.s32.totalorder %s23, 0
        %s3674 = scalar_select %p3673, %s23, 0
        %s3675 = sadd.s32 %s3674, %s3672
        %s3676 = smul.addr %s3675, 8
        %s3677 = scalar_lea.vmem %s6, %s3676
      $region56: #{unet_up_forward.5} parent=51 // pred_fallthru
        _
    $region52: #{unet_up_forward.5} parent=5 // pred_fallthru
      _
  $region6: #{unet_up_forward.5} parent=0 // loop_footer
    %s16 = sadd.s32 1, %s12
  $region7: #{unet_up_forward.5} parent=0 // loop_footer_branch
    %11 = sbr.rel target = $region3
  $region8: #{unet_up_forward.5} parent=0 // loop_exit
    _

// kernel: unet_up_forward.4
$region0: #{unet_up_forward.4}
  #allocation0 [shape = 'u32[]', space=smem, size = 0x4, offset = 0x4, fixed_abs, tag = 'smem constant byte address 0x4 - core index']
  #allocation1 [shape = 'u32[144,128]{1,0:T(1,128)}', space=vmem, size = 0x12000, scoped, tag = 'internal scratch']
  #allocation2 [shape = 'f32[256,128]{1,0:T(8,128)}', space=vmem, size = 0x20000, scoped, tag = 'scratch operand']
  %s0 = inlined_call_operand.vmem [shape: bf16[1024,128], index: 0, kind: input, shape index: {}, may-alias: {0,1,2}]
  %s1 = inlined_call_operand.vmem [shape: bf16[1024,128], index: 1, kind: input, shape index: {}, may-alias: {0,1,2}]
  %s2 = inlined_call_operand.vmem [shape: bf16[1024,128], index: 2, kind: input, shape index: {}, may-alias: {0,1,2}]
  %s3 = inlined_call_operand.vmem [shape: bf16[1024,128], index: 3, kind: input, shape index: {}, may-alias: {3,4,5}]
  %s4 = inlined_call_operand.vmem [shape: bf16[1024,128], index: 4, kind: input, shape index: {}, may-alias: {3,4,5}]
  %s5 = inlined_call_operand.vmem [shape: bf16[1024,128], index: 5, kind: input, shape index: {}, may-alias: {3,4,5}]
  %s6 = inlined_call_operand.vmem [shape: bf16[3,384,128], index: 6, kind: input, shape index: {}]
  %s7 = inlined_call_operand.vmem [shape: bf16[3,384,128], index: 7, kind: input, shape index: {}]
  %s8 = inlined_call_operand.vmem [shape: f32[1,128], index: 8, kind: input, shape index: {}]
  %s9 = inlined_call_operand.vmem [shape: f32[1024,1], index: 9, kind: input, shape index: {}]
  %s10 = inlined_call_operand.vmem [shape: bf16[1024,128], index: 10, kind: output, shape index: {}]
  %s11 = sld [smem:[#allocation0]]
  $region73: #{unet_up_forward.4} parent=0
    _
  %s13 = ssub.s32 1, %s11
  %s14 = scalar_select 0, %s13, %s11
  loop: start=0, step=1, limit=6
  $region2: #{unet_up_forward.4} parent=0 // loop_pre_header
    _
  $region3: #{unet_up_forward.4} parent=0 // loop_header
    %s16 = sphi 0, %s20
    %p17 = scmp.ge.s32.totalorder %s16, 6
    %s23 = sphi 0, %s35
    %s24 = sphi 0, %s31
    %s25 = sphi 0, %s23
    %s26 = sphi 0, %s24
    %s27 = sphi 0, %s25
    %s28 = sphi 0, %s26
    %s46 = sphi 0, %s48
    %s49 = sphi 0, %s46
    %s50 = sphi 0, %s49
    %s66 = sphi 0, %s50
    %s72 = sphi 0, %s74
    %s75 = sphi 0, %s72
    %s76 = sphi 0, %s75
    %s92 = sphi 0, %s76
    %s106 = sphi 0, %s108
    %s109 = sphi 0, %s106
    %s110 = sphi 0, %s109
    %s126 = sphi 0, %s110
    %s140 = sphi 0, %s142
    %s143 = sphi 0, %s140
    %s144 = sphi 0, %s143
    %s160 = sphi 0, %s144
    %s166 = sphi 0, %s168
    %s169 = sphi 0, %s166
    %s170 = sphi 0, %s169
    %s186 = sphi 0, %s170
    %s200 = sphi 0, %s202
    %s203 = sphi 0, %s200
    %s204 = sphi 0, %s203
    %s220 = sphi 0, %s204
    %s226 = sphi 0, %s228
    %s229 = sphi 0, %s226
    %s230 = sphi 0, %s229
    %s246 = sphi 0, %s230
    %s252 = sphi 0, %s254
    %s255 = sphi 0, %s252
    %s256 = sphi 0, %s255
    %s272 = sphi 0, %s256
    %s278 = sphi 0, %s280
    %s281 = sphi 0, %s278
    %s282 = sphi 0, %s281
    %s298 = sphi 0, %s282
    %s304 = sphi 0, %s306
    %s307 = sphi 0, %s304
    %s308 = sphi 0, %s307
    %s324 = sphi 0, %s308
    %s332 = sphi 0, %s334
    %s335 = sphi 0, %s332
    %s336 = sphi 0, %s335
    %s352 = sphi 0, %s336
  $region4: #{unet_up_forward.4} parent=0 // loop_header_branch
    %19 = sbr.rel (%p17) target = $region8
  $region5: #{unet_up_forward.4} parent=0 // loop_body
    %s21 = ssub.s32 %s16, 1
    %s22 = ssub.s32 %s16, 2
    %s29 = sadd.s32 1, %s24
    %p30 = scmp.ge.s32.totalorder %s29, 4
    %s31 = scalar_select %p30, 0, %s29
    %s32 = sadd.s32 1, %s23
    %s33 = scalar_select %p30, %s32, %s23
    %p34 = scmp.ge.s32.totalorder %s33, 1
    %s35 = scalar_select %p34, 0, %s33
    %s36 = smul.u32 %s24, 8
    %s37 = ssub.s32 %s36, 1
    %p38 = scmp.gt.s32.totalorder %s37, 0
    %s39 = scalar_select %p38, %s37, 0
    %s40 = smul.u32 %s31, 8
    %s41 = ssub.s32 %s40, 1
    %p42 = scmp.gt.s32.totalorder %s41, 0
    %s43 = scalar_select %p42, %s41, 0
    %s44 = ssub.s32 %s39, %s43
    %p45 = scmp.eq.s32.totalorder %s44, 0
    %s47 = sadd.s32 %s46, 1
    %s48 = scalar_select %p45, %s46, %s47
    %p51 = pneg %p45
    %p52 = scmp.eq.s32.totalorder %s16, 3
    %p53 = por %p51, %p52
    %p54 = scmp.ne.s32.totalorder %s46, %s49
    %p55 = scmp.eq.s32.totalorder %s16, 0
    %p56 = por %p54, %p55
    %p57 = scmp.ne.s32.totalorder %s46, %s49
    %p58 = scmp.eq.s32.totalorder %s21, 3
    %p59 = por %p57, %p58
    %p60 = scmp.ne.s32.totalorder %s49, %s50
    %p61 = scmp.eq.s32.totalorder %s21, 0
    %p62 = por %p60, %p61
    %p63 = scmp.ne.s32.totalorder %s49, %s50
    %p64 = scmp.eq.s32.totalorder %s22, 3
    %p65 = por %p63, %p64
    %p67 = scmp.ne.s32.totalorder %s50, %s66
    %p68 = scmp.eq.s32.totalorder %s22, 0
    %p69 = por %p67, %p68
    %s70 = ssub.s32 %s24, %s31
    %p71 = scmp.eq.s32.totalorder %s70, 0
    %s73 = sadd.s32 %s72, 1
    %s74 = scalar_select %p71, %s72, %s73
    %p77 = pneg %p71
    %p78 = scmp.eq.s32.totalorder %s16, 3
    %p79 = por %p77, %p78
    %p80 = scmp.ne.s32.totalorder %s72, %s75
    %p81 = scmp.eq.s32.totalorder %s16, 0
    %p82 = por %p80, %p81
    %p83 = scmp.ne.s32.totalorder %s72, %s75
    %p84 = scmp.eq.s32.totalorder %s21, 3
    %p85 = por %p83, %p84
    %p86 = scmp.ne.s32.totalorder %s75, %s76
    %p87 = scmp.eq.s32.totalorder %s21, 0
    %p88 = por %p86, %p87
    %p89 = scmp.ne.s32.totalorder %s75, %s76
    %p90 = scmp.eq.s32.totalorder %s22, 3
    %p91 = por %p89, %p90
    %p93 = scmp.ne.s32.totalorder %s76, %s92
    %p94 = scmp.eq.s32.totalorder %s22, 0
    %p95 = por %p93, %p94
    %s96 = sadd.s32 %s24, 1
    %s97 = smul.u32 %s96, 8
    %p98 = scmp.lt.s32.totalorder %s97, 31
    %s99 = scalar_select %p98, %s97, 31
    %s100 = sadd.s32 %s31, 1
    %s101 = smul.u32 %s100, 8
    %p102 = scmp.lt.s32.totalorder %s101, 31
    %s103 = scalar_select %p102, %s101, 31
    %s104 = ssub.s32 %s99, %s103
    %p105 = scmp.eq.s32.totalorder %s104, 0
    %s107 = sadd.s32 %s106, 1
    %s108 = scalar_select %p105, %s106, %s107
    %p111 = pneg %p105
    %p112 = scmp.eq.s32.totalorder %s16, 3
    %p113 = por %p111, %p112
    %p114 = scmp.ne.s32.totalorder %s106, %s109
    %p115 = scmp.eq.s32.totalorder %s16, 0
    %p116 = por %p114, %p115
    %p117 = scmp.ne.s32.totalorder %s106, %s109
    %p118 = scmp.eq.s32.totalorder %s21, 3
    %p119 = por %p117, %p118
    %p120 = scmp.ne.s32.totalorder %s109, %s110
    %p121 = scmp.eq.s32.totalorder %s21, 0
    %p122 = por %p120, %p121
    %p123 = scmp.ne.s32.totalorder %s109, %s110
    %p124 = scmp.eq.s32.totalorder %s22, 3
    %p125 = por %p123, %p124
    %p127 = scmp.ne.s32.totalorder %s110, %s126
    %p128 = scmp.eq.s32.totalorder %s22, 0
    %p129 = por %p127, %p128
    %s130 = smul.u32 %s24, 8
    %s131 = ssub.s32 %s130, 1
    %p132 = scmp.gt.s32.totalorder %s131, 0
    %s133 = scalar_select %p132, %s131, 0
    %s134 = smul.u32 %s31, 8
    %s135 = ssub.s32 %s134, 1
    %p136 = scmp.gt.s32.totalorder %s135, 0
    %s137 = scalar_select %p136, %s135, 0
    %s138 = ssub.s32 %s133, %s137
    %p139 = scmp.eq.s32.totalorder %s138, 0
    %s141 = sadd.s32 %s140, 1
    %s142 = scalar_select %p139, %s140, %s141
    %p145 = pneg %p139
    %p146 = scmp.eq.s32.totalorder %s16, 3
    %p147 = por %p145, %p146
    %p148 = scmp.ne.s32.totalorder %s140, %s143
    %p149 = scmp.eq.s32.totalorder %s16, 0
    %p150 = por %p148, %p149
    %p151 = scmp.ne.s32.totalorder %s140, %s143
    %p152 = scmp.eq.s32.totalorder %s21, 3
    %p153 = por %p151, %p152
    %p154 = scmp.ne.s32.totalorder %s143, %s144
    %p155 = scmp.eq.s32.totalorder %s21, 0
    %p156 = por %p154, %p155
    %p157 = scmp.ne.s32.totalorder %s143, %s144
    %p158 = scmp.eq.s32.totalorder %s22, 3
    %p159 = por %p157, %p158
    %p161 = scmp.ne.s32.totalorder %s144, %s160
    %p162 = scmp.eq.s32.totalorder %s22, 0
    %p163 = por %p161, %p162
    %s164 = ssub.s32 %s24, %s31
    %p165 = scmp.eq.s32.totalorder %s164, 0
    %s167 = sadd.s32 %s166, 1
    %s168 = scalar_select %p165, %s166, %s167
    %p171 = pneg %p165
    %p172 = scmp.eq.s32.totalorder %s16, 3
    %p173 = por %p171, %p172
    %p174 = scmp.ne.s32.totalorder %s166, %s169
    %p175 = scmp.eq.s32.totalorder %s16, 0
    %p176 = por %p174, %p175
    %p177 = scmp.ne.s32.totalorder %s166, %s169
    %p178 = scmp.eq.s32.totalorder %s21, 3
    %p179 = por %p177, %p178
    %p180 = scmp.ne.s32.totalorder %s169, %s170
    %p181 = scmp.eq.s32.totalorder %s21, 0
    %p182 = por %p180, %p181
    %p183 = scmp.ne.s32.totalorder %s169, %s170
    %p184 = scmp.eq.s32.totalorder %s22, 3
    %p185 = por %p183, %p184
    %p187 = scmp.ne.s32.totalorder %s170, %s186
    %p188 = scmp.eq.s32.totalorder %s22, 0
    %p189 = por %p187, %p188
    %s190 = sadd.s32 %s24, 1
    %s191 = smul.u32 %s190, 8
    %p192 = scmp.lt.s32.totalorder %s191, 31
    %s193 = scalar_select %p192, %s191, 31
    %s194 = sadd.s32 %s31, 1
    %s195 = smul.u32 %s194, 8
    %p196 = scmp.lt.s32.totalorder %s195, 31
    %s197 = scalar_select %p196, %s195, 31
    %s198 = ssub.s32 %s193, %s197
    %p199 = scmp.eq.s32.totalorder %s198, 0
    %s201 = sadd.s32 %s200, 1
    %s202 = scalar_select %p199, %s200, %s201
    %p205 = pneg %p199
    %p206 = scmp.eq.s32.totalorder %s16, 3
    %p207 = por %p205, %p206
    %p208 = scmp.ne.s32.totalorder %s200, %s203
    %p209 = scmp.eq.s32.totalorder %s16, 0
    %p210 = por %p208, %p209
    %p211 = scmp.ne.s32.totalorder %s200, %s203
    %p212 = scmp.eq.s32.totalorder %s21, 3
    %p213 = por %p211, %p212
    %p214 = scmp.ne.s32.totalorder %s203, %s204
    %p215 = scmp.eq.s32.totalorder %s21, 0
    %p216 = por %p214, %p215
    %p217 = scmp.ne.s32.totalorder %s203, %s204
    %p218 = scmp.eq.s32.totalorder %s22, 3
    %p219 = por %p217, %p218
    %p221 = scmp.ne.s32.totalorder %s204, %s220
    %p222 = scmp.eq.s32.totalorder %s22, 0
    %p223 = por %p221, %p222
    %s224 = ssub.s32 %s23, %s35
    %p225 = scmp.eq.s32.totalorder %s224, 0
    %s227 = sadd.s32 %s226, 1
    %s228 = scalar_select %p225, %s226, %s227
    %p231 = pneg %p225
    %p232 = scmp.eq.s32.totalorder %s16, 3
    %p233 = por %p231, %p232
    %p234 = scmp.ne.s32.totalorder %s226, %s229
    %p235 = scmp.eq.s32.totalorder %s16, 0
    %p236 = por %p234, %p235
    %p237 = scmp.ne.s32.totalorder %s226, %s229
    %p238 = scmp.eq.s32.totalorder %s21, 3
    %p239 = por %p237, %p238
    %p240 = scmp.ne.s32.totalorder %s229, %s230
    %p241 = scmp.eq.s32.totalorder %s21, 0
    %p242 = por %p240, %p241
    %p243 = scmp.ne.s32.totalorder %s229, %s230
    %p244 = scmp.eq.s32.totalorder %s22, 3
    %p245 = por %p243, %p244
    %p247 = scmp.ne.s32.totalorder %s230, %s246
    %p248 = scmp.eq.s32.totalorder %s22, 0
    %p249 = por %p247, %p248
    %s250 = ssub.s32 %s23, %s35
    %p251 = scmp.eq.s32.totalorder %s250, 0
    %s253 = sadd.s32 %s252, 1
    %s254 = scalar_select %p251, %s252, %s253
    %p257 = pneg %p251
    %p258 = scmp.eq.s32.totalorder %s16, 3
    %p259 = por %p257, %p258
    %p260 = scmp.ne.s32.totalorder %s252, %s255
    %p261 = scmp.eq.s32.totalorder %s16, 0
    %p262 = por %p260, %p261
    %p263 = scmp.ne.s32.totalorder %s252, %s255
    %p264 = scmp.eq.s32.totalorder %s21, 3
    %p265 = por %p263, %p264
    %p266 = scmp.ne.s32.totalorder %s255, %s256
    %p267 = scmp.eq.s32.totalorder %s21, 0
    %p268 = por %p266, %p267
    %p269 = scmp.ne.s32.totalorder %s255, %s256
    %p270 = scmp.eq.s32.totalorder %s22, 3
    %p271 = por %p269, %p270
    %p273 = scmp.ne.s32.totalorder %s256, %s272
    %p274 = scmp.eq.s32.totalorder %s22, 0
    %p275 = por %p273, %p274
    %s276 = ssub.s32 %s23, %s35
    %p277 = scmp.eq.s32.totalorder %s276, 0
    %s279 = sadd.s32 %s278, 1
    %s280 = scalar_select %p277, %s278, %s279
    %p283 = pneg %p277
    %p284 = scmp.eq.s32.totalorder %s16, 3
    %p285 = por %p283, %p284
    %p286 = scmp.ne.s32.totalorder %s278, %s281
    %p287 = scmp.eq.s32.totalorder %s16, 0
    %p288 = por %p286, %p287
    %p289 = scmp.ne.s32.totalorder %s278, %s281
    %p290 = scmp.eq.s32.totalorder %s21, 3
    %p291 = por %p289, %p290
    %p292 = scmp.ne.s32.totalorder %s281, %s282
    %p293 = scmp.eq.s32.totalorder %s21, 0
    %p294 = por %p292, %p293
    %p295 = scmp.ne.s32.totalorder %s281, %s282
    %p296 = scmp.eq.s32.totalorder %s22, 3
    %p297 = por %p295, %p296
    %p299 = scmp.ne.s32.totalorder %s282, %s298
    %p300 = scmp.eq.s32.totalorder %s22, 0
    %p301 = por %p299, %p300
    %s302 = ssub.s32 %s24, %s31
    %p303 = scmp.eq.s32.totalorder %s302, 0
    %s305 = sadd.s32 %s304, 1
    %s306 = scalar_select %p303, %s304, %s305
    %p309 = pneg %p303
    %p310 = scmp.eq.s32.totalorder %s16, 3
    %p311 = por %p309, %p310
    %p312 = scmp.ne.s32.totalorder %s304, %s307
    %p313 = scmp.eq.s32.totalorder %s16, 0
    %p314 = por %p312, %p313
    %p315 = scmp.ne.s32.totalorder %s304, %s307
    %p316 = scmp.eq.s32.totalorder %s21, 3
    %p317 = por %p315, %p316
    %p318 = scmp.ne.s32.totalorder %s307, %s308
    %p319 = scmp.eq.s32.totalorder %s21, 0
    %p320 = por %p318, %p319
    %p321 = scmp.ne.s32.totalorder %s307, %s308
    %p322 = scmp.eq.s32.totalorder %s22, 3
    %p323 = por %p321, %p322
    %p325 = scmp.ne.s32.totalorder %s308, %s324
    %p326 = scmp.eq.s32.totalorder %s22, 0
    %p327 = por %p325, %p326
    %s328 = ssub.s32 %s24, %s31
    %s329 = ssub.s32 %s23, %s35
    %s330 = sor.u32 %s328, %s329
    %p331 = scmp.eq.s32.totalorder %s330, 0
    %s333 = sadd.s32 %s332, 1
    %s334 = scalar_select %p331, %s332, %s333
    %p337 = pneg %p331
    %p338 = scmp.eq.s32.totalorder %s16, 3
    %p339 = por %p337, %p338
    %p340 = scmp.ne.s32.totalorder %s332, %s335
    %p341 = scmp.eq.s32.totalorder %s16, 0
    %p342 = por %p340, %p341
    %p343 = scmp.ne.s32.totalorder %s332, %s335
    %p344 = scmp.eq.s32.totalorder %s21, 3
    %p345 = por %p343, %p344
    %p346 = scmp.ne.s32.totalorder %s335, %s336
    %p347 = scmp.eq.s32.totalorder %s21, 0
    %p348 = por %p346, %p347
    %p349 = scmp.ne.s32.totalorder %s335, %s336
    %p350 = scmp.eq.s32.totalorder %s22, 3
    %p351 = por %p349, %p350
    %p353 = scmp.ne.s32.totalorder %s336, %s352
    %p354 = scmp.eq.s32.totalorder %s22, 0
    %p355 = por %p353, %p354
    %p356 = scmp.le.s32.totalorder 1, %s16
    %p357 = scmp.lt.s32.totalorder %s16, 5
    %p358 = pnand %p356, %p357
    %p359 = pneg %p358
    // Predicated region
    $region9: #{unet_up_forward.4} parent=5 // pred_check
      _
    $region10: #{unet_up_forward.4} parent=5 // pred_check_branch
      %361 = sbr.rel (%p358) target = $region12
    $region11: #{unet_up_forward.4} parent=5 // pred_region
      %s362 = ssub.s32 %s16, 1
      // Predicated region
      $region13: #{unet_up_forward.4} parent=11 // pred_check
        %p363 = pneg %p242
      $region14: #{unet_up_forward.4} parent=11 // pred_check_branch
        %365 = sbr.rel (%p363) target = $region16
      $region15: #{unet_up_forward.4} parent=11 // pred_region
        %p366 = scmp.lt.s32.totalorder %s25, 0
        %s367 = scalar_select %p366, %s25, 0
        %s368 = smul.addr %s367, 4
        %s369 = scalar_lea.vmem %s6, %s368
      $region16: #{unet_up_forward.4} parent=11 // pred_fallthru
        _
      // Predicated region
      $region17: #{unet_up_forward.4} parent=11 // pred_check
        %p370 = pneg %p268
      $region18: #{unet_up_forward.4} parent=11 // pred_check_branch
        %372 = sbr.rel (%p370) target = $region20
      $region19: #{unet_up_forward.4} parent=11 // pred_region
        %p373 = scmp.lt.s32.totalorder %s25, 0
        %s374 = scalar_select %p373, %s25, 0
        %s375 = smul.addr %s374, 4
        %s376 = scalar_lea.vmem %s7, %s375
      $region20: #{unet_up_forward.4} parent=11 // pred_fallthru
        _
      // Predicated region
      $region21: #{unet_up_forward.4} parent=11 // pred_check
        %p377 = pneg %p294
      $region22: #{unet_up_forward.4} parent=11 // pred_check_branch
        %379 = sbr.rel (%p377) target = $region24
      $region23: #{unet_up_forward.4} parent=11 // pred_region
        %p380 = scmp.lt.s32.totalorder %s25, 0
        %s381 = scalar_select %p380, %s25, 0
        %s382 = scalar_lea.vmem %s8, %s381
      $region24: #{unet_up_forward.4} parent=11 // pred_fallthru
        _
    $region12: #{unet_up_forward.4} parent=5 // pred_fallthru
      _
    %p383 = scmp.lt.s32.totalorder %s16, 4
    // Predicated region
    $region25: #{unet_up_forward.4} parent=5 // pred_check
      %p384 = pneg %p383
    $region26: #{unet_up_forward.4} parent=5 // pred_check_branch
      %386 = sbr.rel (%p384) target = $region28
    $region27: #{unet_up_forward.4} parent=5 // pred_region
      // Predicated region
      $region29: #{unet_up_forward.4} parent=27 // pred_check
        %p387 = pneg %p56
      $region30: #{unet_up_forward.4} parent=27 // pred_check_branch
        %389 = sbr.rel (%p387) target = $region32
      $region31: #{unet_up_forward.4} parent=27 // pred_region
        %s390 = smul.u32 %s24, 8
        %s391 = ssub.s32 %s390, 1
        %p392 = scmp.gt.s32.totalorder %s391, 0
        %s393 = scalar_select %p392, %s391, 0
        %s394 = smul.u32 4, %s393
        %p395 = scmp.lt.s32.totalorder %s394, 127
        %s396 = scalar_select %p395, %s394, 127
        %s397 = smul.addr %s396, 4
        %s398 = scalar_lea.vmem %s0, %s397
        %s399 = smul.u32 %s24, 8
        %s400 = ssub.s32 %s399, 1
        %p401 = scmp.gt.s32.totalorder %s400, 0
        %s402 = scalar_select %p401, %s400, 0
        %s403 = smul.u32 4, %s402
      $region32: #{unet_up_forward.4} parent=27 // pred_fallthru
        _
      // Predicated region
      $region33: #{unet_up_forward.4} parent=27 // pred_check
        %p404 = pneg %p82
      $region34: #{unet_up_forward.4} parent=27 // pred_check_branch
        %406 = sbr.rel (%p404) target = $region36
      $region35: #{unet_up_forward.4} parent=27 // pred_region
        %s407 = smul.u32 32, %s24
        %p408 = scmp.lt.s32.totalorder %s407, 127
        %s409 = scalar_select %p408, %s407, 127
        %s410 = smul.addr %s409, 4
        %s411 = scalar_lea.vmem %s1, %s410
        %s412 = smul.u32 32, %s24
      $region36: #{unet_up_forward.4} parent=27 // pred_fallthru
        _
      // Predicated region
      $region37: #{unet_up_forward.4} parent=27 // pred_check
        %p413 = pneg %p116
      $region38: #{unet_up_forward.4} parent=27 // pred_check_branch
        %415 = sbr.rel (%p413) target = $region40
      $region39: #{unet_up_forward.4} parent=27 // pred_region
        %s416 = sadd.s32 %s24, 1
        %s417 = smul.u32 %s416, 8
        %p418 = scmp.lt.s32.totalorder %s417, 31
        %s419 = scalar_select %p418, %s417, 31
        %s420 = smul.u32 4, %s419
        %p421 = scmp.lt.s32.totalorder %s420, 127
        %s422 = scalar_select %p421, %s420, 127
        %s423 = smul.addr %s422, 4
        %s424 = scalar_lea.vmem %s2, %s423
        %s425 = sadd.s32 %s24, 1
        %s426 = smul.u32 %s425, 8
        %p427 = scmp.lt.s32.totalorder %s426, 31
        %s428 = scalar_select %p427, %s426, 31
        %s429 = smul.u32 4, %s428
      $region40: #{unet_up_forward.4} parent=27 // pred_fallthru
        _
      // Predicated region
      $region41: #{unet_up_forward.4} parent=27 // pred_check
        %p430 = pneg %p150
      $region42: #{unet_up_forward.4} parent=27 // pred_check_branch
        %432 = sbr.rel (%p430) target = $region44
      $region43: #{unet_up_forward.4} parent=27 // pred_region
        %s433 = smul.u32 %s24, 8
        %s434 = ssub.s32 %s433, 1
        %p435 = scmp.gt.s32.totalorder %s434, 0
        %s436 = scalar_select %p435, %s434, 0
        %s437 = smul.u32 4, %s436
        %p438 = scmp.lt.s32.totalorder %s437, 127
        %s439 = scalar_select %p438, %s437, 127
        %s440 = smul.addr %s439, 4
        %s441 = scalar_lea.vmem %s3, %s440
        %s442 = smul.u32 %s24, 8
        %s443 = ssub.s32 %s442, 1
        %p444 = scmp.gt.s32.totalorder %s443, 0
        %s445 = scalar_select %p444, %s443, 0
        %s446 = smul.u32 4, %s445
      $region44: #{unet_up_forward.4} parent=27 // pred_fallthru
        _
      // Predicated region
      $region45: #{unet_up_forward.4} parent=27 // pred_check
        %p447 = pneg %p176
      $region46: #{unet_up_forward.4} parent=27 // pred_check_branch
        %449 = sbr.rel (%p447) target = $region48
      $region47: #{unet_up_forward.4} parent=27 // pred_region
        %s450 = smul.u32 32, %s24
        %p451 = scmp.lt.s32.totalorder %s450, 127
        %s452 = scalar_select %p451, %s450, 127
        %s453 = smul.addr %s452, 4
        %s454 = scalar_lea.vmem %s4, %s453
        %s455 = smul.u32 32, %s24
      $region48: #{unet_up_forward.4} parent=27 // pred_fallthru
        _
      // Predicated region
      $region49: #{unet_up_forward.4} parent=27 // pred_check
        %p456 = pneg %p210
      $region50: #{unet_up_forward.4} parent=27 // pred_check_branch
        %458 = sbr.rel (%p456) target = $region52
      $region51: #{unet_up_forward.4} parent=27 // pred_region
        %s459 = sadd.s32 %s24, 1
        %s460 = smul.u32 %s459, 8
        %p461 = scmp.lt.s32.totalorder %s460, 31
        %s462 = scalar_select %p461, %s460, 31
        %s463 = smul.u32 4, %s462
        %p464 = scmp.lt.s32.totalorder %s463, 127
        %s465 = scalar_select %p464, %s463, 127
        %s466 = smul.addr %s465, 4
        %s467 = scalar_lea.vmem %s5, %s466
        %s468 = sadd.s32 %s24, 1
        %s469 = smul.u32 %s468, 8
        %p470 = scmp.lt.s32.totalorder %s469, 31
        %s471 = scalar_select %p470, %s469, 31
        %s472 = smul.u32 4, %s471
      $region52: #{unet_up_forward.4} parent=27 // pred_fallthru
        _
      // Predicated region
      $region53: #{unet_up_forward.4} parent=27 // pred_check
        %p473 = pneg %p314
      $region54: #{unet_up_forward.4} parent=27 // pred_check_branch
        %475 = sbr.rel (%p473) target = $region56
      $region55: #{unet_up_forward.4} parent=27 // pred_region
        %s476 = smul.u32 32, %s24
        %p477 = scmp.lt.s32.totalorder %s476, 127
        %s478 = scalar_select %p477, %s476, 127
        %s479 = smul.addr %s478, 8
        %s480 = scalar_lea.vmem %s9, %s479
        %s481 = smul.u32 32, %s24
      $region56: #{unet_up_forward.4} parent=27 // pred_fallthru
        _
    $region28: #{unet_up_forward.4} parent=5 // pred_fallthru
      _
    %p482 = scmp.le.s32.totalorder 1, %s16
    %p483 = scmp.lt.s32.totalorder %s16, 5
    %p484 = pnand %p482, %p483
    %p485 = pneg %p484
    // Predicated region
    $region57: #{unet_up_forward.4} parent=5 // pred_check
      _
    $region58: #{unet_up_forward.4} parent=5 // pred_check_branch
      %487 = sbr.rel (%p484) target = $region60
    $region59: #{unet_up_forward.4} parent=5 // pred_region
      %s488 = ssub.s32 %s16, 1
      %s489 = smul.u32 %s26, 8
      %s490 = ssub.s32 %s489, 1
      %p491 = scmp.gt.s32.totalorder %s490, 0
      %s492 = scalar_select %p491, %s490, 0
      %s493 = smul.u32 4, %s492
      %p494 = scmp.lt.s32.totalorder %s493, 127
      %s495 = scalar_select %p494, %s493, 127
      %s496 = smul.addr %s495, 4
      %s497 = scalar_lea.vmem %s0, %s496
      %p498 = pneg %p62
      %p499 = pneg %p59
      %s500 = smul.u32 32, %s26
      %p501 = scmp.lt.s32.totalorder %s500, 127
      %s502 = scalar_select %p501, %s500, 127
      %s503 = smul.addr %s502, 4
      %s504 = scalar_lea.vmem %s1, %s503
      %p505 = pneg %p88
      %p506 = pneg %p85
      %s507 = sadd.s32 %s26, 1
      %s508 = smul.u32 %s507, 8
      %p509 = scmp.lt.s32.totalorder %s508, 31
      %s510 = scalar_select %p509, %s508, 31
      %s511 = smul.u32 4, %s510
      %p512 = scmp.lt.s32.totalorder %s511, 127
      %s513 = scalar_select %p512, %s511, 127
      %s514 = smul.addr %s513, 4
      %s515 = scalar_lea.vmem %s2, %s514
      %p516 = pneg %p122
      %p517 = pneg %p119
      %s518 = smul.u32 %s26, 8
      %s519 = ssub.s32 %s518, 1
      %p520 = scmp.gt.s32.totalorder %s519, 0
      %s521 = scalar_select %p520, %s519, 0
      %s522 = smul.u32 4, %s521
      %p523 = scmp.lt.s32.totalorder %s522, 127
      %s524 = scalar_select %p523, %s522, 127
      %s525 = smul.addr %s524, 4
      %s526 = scalar_lea.vmem %s3, %s525
      %p527 = pneg %p156
      %p528 = pneg %p153
      %s529 = smul.u32 32, %s26
      %p530 = scmp.lt.s32.totalorder %s529, 127
      %s531 = scalar_select %p530, %s529, 127
      %s532 = smul.addr %s531, 4
      %s533 = scalar_lea.vmem %s4, %s532
      %p534 = pneg %p182
      %p535 = pneg %p179
      %s536 = sadd.s32 %s26, 1
      %s537 = smul.u32 %s536, 8
      %p538 = scmp.lt.s32.totalorder %s537, 31
      %s539 = scalar_select %p538, %s537, 31
      %s540 = smul.u32 4, %s539
      %p541 = scmp.lt.s32.totalorder %s540, 127
      %s542 = scalar_select %p541, %s540, 127
      %s543 = smul.addr %s542, 4
      %s544 = scalar_lea.vmem %s5, %s543
      %p545 = pneg %p216
      %p546 = pneg %p213
      %p547 = scmp.lt.s32.totalorder %s25, 0
      %s548 = scalar_select %p547, %s25, 0
      %s549 = smul.addr %s548, 4
      %s550 = scalar_lea.vmem %s6, %s549
      %p551 = pneg %p242
      %p552 = pneg %p239
      %p553 = scmp.lt.s32.totalorder %s25, 0
      %s554 = scalar_select %p553, %s25, 0
      %s555 = smul.addr %s554, 4
      %s556 = scalar_lea.vmem %s7, %s555
      %p557 = pneg %p268
      %p558 = pneg %p265
      %p559 = scmp.lt.s32.totalorder %s25, 0
      %s560 = scalar_select %p559, %s25, 0
      %s561 = scalar_lea.vmem %s8, %s560
      %p562 = pneg %p294
      %p563 = pneg %p291
      %s564 = smul.u32 32, %s26
      %p565 = scmp.lt.s32.totalorder %s564, 127
      %s566 = scalar_select %p565, %s564, 127
      %s567 = smul.addr %s566, 8
      %s568 = scalar_lea.vmem %s9, %s567
      %p569 = pneg %p320
      %p570 = pneg %p317
      %p571 = pneg %p348
      %p572 = pneg %p345
      %s573 = smul.u32 32, %s26
      %p574 = scmp.lt.s32.totalorder %s573, 127
      %s575 = scalar_select %p574, %s573, 127
      %p576 = scmp.lt.s32.totalorder %s25, 0
      %s577 = scalar_select %p576, %s25, 0
      %s578 = sadd.s32 %s577, %s575
      %s579 = smul.addr %s578, 4
      %s580 = scalar_lea.vmem %s10, %s579
      %s581 = smul.u32 %s26, 8
      %s582 = ssub.s32 %s581, 1
      %p583 = scmp.gt.s32.totalorder %s582, 0
      %s584 = scalar_select %p583, %s582, 0
      %s585 = smul.u32 4, %s584
      %p586 = scmp.lt.s32.totalorder %s585, 127
      %s587 = scalar_select %p586, %s585, 127
      %s588 = smul.addr %s587, 4
      %s589 = scalar_lea.vmem %s0, %s588
      %s590 = smul.u32 %s26, 8
      %s591 = ssub.s32 %s590, 1
      %p592 = scmp.gt.s32.totalorder %s591, 0
      %s593 = scalar_select %p592, %s591, 0
      %s594 = smul.u32 4, %s593
      %s595 = smul.u32 32, %s26
      %p596 = scmp.lt.s32.totalorder %s595, 127
      %s597 = scalar_select %p596, %s595, 127
      %s598 = smul.addr %s597, 4
      %s599 = scalar_lea.vmem %s1, %s598
      %s600 = smul.u32 32, %s26
      %s601 = sadd.s32 %s26, 1
      %s602 = smul.u32 %s601, 8
      %p603 = scmp.lt.s32.totalorder %s602, 31
      %s604 = scalar_select %p603, %s602, 31
      %s605 = smul.u32 4, %s604
      %p606 = scmp.lt.s32.totalorder %s605, 127
      %s607 = scalar_select %p606, %s605, 127
      %s608 = smul.addr %s607, 4
      %s609 = scalar_lea.vmem %s2, %s608
      %s610 = sadd.s32 %s26, 1
      %s611 = smul.u32 %s610, 8
      %p612 = scmp.lt.s32.totalorder %s611, 31
      %s613 = scalar_select %p612, %s611, 31
      %s614 = smul.u32 4, %s613
      %s615 = smul.u32 %s26, 8
      %s616 = ssub.s32 %s615, 1
      %p617 = scmp.gt.s32.totalorder %s616, 0
      %s618 = scalar_select %p617, %s616, 0
      %s619 = smul.u32 4, %s618
      %p620 = scmp.lt.s32.totalorder %s619, 127
      %s621 = scalar_select %p620, %s619, 127
      %s622 = smul.addr %s621, 4
      %s623 = scalar_lea.vmem %s3, %s622
      %s624 = smul.u32 %s26, 8
      %s625 = ssub.s32 %s624, 1
      %p626 = scmp.gt.s32.totalorder %s625, 0
      %s627 = scalar_select %p626, %s625, 0
      %s628 = smul.u32 4, %s627
      %s629 = smul.u32 32, %s26
      %p630 = scmp.lt.s32.totalorder %s629, 127
      %s631 = scalar_select %p630, %s629, 127
      %s632 = smul.addr %s631, 4
      %s633 = scalar_lea.vmem %s4, %s632
      %s634 = smul.u32 32, %s26
      %s635 = sadd.s32 %s26, 1
      %s636 = smul.u32 %s635, 8
      %p637 = scmp.lt.s32.totalorder %s636, 31
      %s638 = scalar_select %p637, %s636, 31
      %s639 = smul.u32 4, %s638
      %p640 = scmp.lt.s32.totalorder %s639, 127
      %s641 = scalar_select %p640, %s639, 127
      %s642 = smul.addr %s641, 4
      %s643 = scalar_lea.vmem %s5, %s642
      %s644 = sadd.s32 %s26, 1
      %s645 = smul.u32 %s644, 8
      %p646 = scmp.lt.s32.totalorder %s645, 31
      %s647 = scalar_select %p646, %s645, 31
      %s648 = smul.u32 4, %s647
      %p649 = scmp.lt.s32.totalorder %s25, 0
      %s650 = scalar_select %p649, %s25, 0
      %s651 = smul.addr %s650, 4
      %s652 = scalar_lea.vmem %s6, %s651
      %p653 = scmp.lt.s32.totalorder %s25, 0
      %s654 = scalar_select %p653, %s25, 0
      %s655 = smul.addr %s654, 4
      %s656 = scalar_lea.vmem %s7, %s655
      %p657 = scmp.lt.s32.totalorder %s25, 0
      %s658 = scalar_select %p657, %s25, 0
      %s659 = scalar_lea.vmem %s8, %s658
      %s660 = smul.u32 32, %s26
      %p661 = scmp.lt.s32.totalorder %s660, 127
      %s662 = scalar_select %p661, %s660, 127
      %s663 = smul.addr %s662, 8
      %s664 = scalar_lea.vmem %s9, %s663
      %s665 = smul.u32 32, %s26
      %s666 = smul.u32 32, %s26
      %p667 = scmp.lt.s32.totalorder %s666, 127
      %s668 = scalar_select %p667, %s666, 127
      %p669 = scmp.lt.s32.totalorder %s25, 0
      %s670 = scalar_select %p669, %s25, 0
      %s671 = sadd.s32 %s670, %s668
      %s672 = smul.addr %s671, 4
      %s673 = scalar_lea.vmem %s10, %s672
      %s674 = smul.u32 32, %s26
      %v676 = vld [vmem:[%s589] sm:$0xf]
      %v677 = vld [vmem:[%s589 + $0x4] sm:$0xf]
      %v678 = vld [vmem:[%s589 + $0x8] sm:$0xf]
      %v679 = vld [vmem:[%s589 + $0xc] sm:$0xf]
      %v680 = vld [vmem:[%s599] sm:$0xf]
      %v681 = vld [vmem:[%s599 + $0x4] sm:$0xf]
      %v682 = vld [vmem:[%s599 + $0x8] sm:$0xf]
      %v683 = vld [vmem:[%s599 + $0xc] sm:$0xf]
      %v684 = vld [vmem:[%s599 + $0x10] sm:$0xf]
      %v685 = vld [vmem:[%s599 + $0x14] sm:$0xf]
      %v686 = vld [vmem:[%s599 + $0x18] sm:$0xf]
      %v687 = vld [vmem:[%s599 + $0x1c] sm:$0xf]
      %v688 = vld [vmem:[%s599 + $0x20] sm:$0xf]
      %v689 = vld [vmem:[%s599 + $0x24] sm:$0xf]
      %v690 = vld [vmem:[%s599 + $0x28] sm:$0xf]
      %v691 = vld [vmem:[%s599 + $0x2c] sm:$0xf]
      %v692 = vld [vmem:[%s599 + $0x30] sm:$0xf]
      %v693 = vld [vmem:[%s599 + $0x34] sm:$0xf]
      %v694 = vld [vmem:[%s599 + $0x38] sm:$0xf]
      %v695 = vld [vmem:[%s599 + $0x3c] sm:$0xf]
      %v696 = vld [vmem:[%s599 + $0x40] sm:$0xf]
      %v697 = vld [vmem:[%s599 + $0x44] sm:$0xf]
      %v698 = vld [vmem:[%s599 + $0x48] sm:$0xf]
      %v699 = vld [vmem:[%s599 + $0x4c] sm:$0xf]
      %v700 = vld [vmem:[%s599 + $0x50] sm:$0xf]
      %v701 = vld [vmem:[%s599 + $0x54] sm:$0xf]
      %v702 = vld [vmem:[%s599 + $0x58] sm:$0xf]
      %v703 = vld [vmem:[%s599 + $0x5c] sm:$0xf]
      %v704 = vld [vmem:[%s599 + $0x60] sm:$0xf]
      %v705 = vld [vmem:[%s599 + $0x64] sm:$0xf]
      %v706 = vld [vmem:[%s599 + $0x68] sm:$0xf]
      %v707 = vld [vmem:[%s599 + $0x6c] sm:$0xf]
      %v708 = vld [vmem:[%s599 + $0x70] sm:$0xf]
      %v709 = vld [vmem:[%s599 + $0x74] sm:$0xf]
      %v710 = vld [vmem:[%s599 + $0x78] sm:$0xf]
      %v711 = vld [vmem:[%s599 + $0x7c] sm:$0xf]
      %v712 = vld [vmem:[%s609] sm:$0xf]
      %v713 = vld [vmem:[%s609 + $0x4] sm:$0xf]
      %v714 = vld [vmem:[%s609 + $0x8] sm:$0xf]
      %v715 = vld [vmem:[%s609 + $0xc] sm:$0xf]
      %v720 = vunpack.c.l.b16 %v676
      %v721 = vunpack.c.l.b16 %v677
      %v722 = vunpack.c.l.b16 %v678
      %v723 = vunpack.c.l.b16 %v679
      %v724 = vpack.c.b16 %v721, %v720
      %v725 = vpack.c.b16 %v723, %v722
      %v758 = vunpack.c.l.b16 %v680
      %v759 = vunpack.c.l.b16 %v681
      %v760 = vunpack.c.l.b16 %v682
      %v761 = vunpack.c.l.b16 %v683
      %v762 = vunpack.c.l.b16 %v684
      %v763 = vunpack.c.l.b16 %v685
      %v764 = vunpack.c.l.b16 %v686
      %v765 = vunpack.c.l.b16 %v687
      %v766 = vunpack.c.l.b16 %v688
      %v767 = vunpack.c.l.b16 %v689
      %v768 = vunpack.c.l.b16 %v690
      %v769 = vunpack.c.l.b16 %v691
      %v770 = vunpack.c.l.b16 %v692
      %v771 = vunpack.c.l.b16 %v693
      %v772 = vunpack.c.l.b16 %v694
      %v773 = vunpack.c.l.b16 %v695
      %v774 = vunpack.c.l.b16 %v696
      %v775 = vunpack.c.l.b16 %v697
      %v776 = vunpack.c.l.b16 %v698
      %v777 = vunpack.c.l.b16 %v699
      %v778 = vunpack.c.l.b16 %v700
      %v779 = vunpack.c.l.b16 %v701
      %v780 = vunpack.c.l.b16 %v702
      %v781 = vunpack.c.l.b16 %v703
      %v782 = vunpack.c.l.b16 %v704
      %v783 = vunpack.c.l.b16 %v705
      %v784 = vunpack.c.l.b16 %v706
      %v785 = vunpack.c.l.b16 %v707
      %v786 = vunpack.c.l.b16 %v708
      %v787 = vunpack.c.l.b16 %v709
      %v788 = vunpack.c.l.b16 %v710
      %v789 = vunpack.c.l.b16 %v711
      %v790 = vpack.c.b16 %v759, %v758
      %v791 = vpack.c.b16 %v761, %v760
      %v792 = vpack.c.b16 %v763, %v762
      %v793 = vpack.c.b16 %v765, %v764
      %v794 = vpack.c.b16 %v767, %v766
      %v795 = vpack.c.b16 %v769, %v768
      %v796 = vpack.c.b16 %v771, %v770
      %v797 = vpack.c.b16 %v773, %v772
      %v798 = vpack.c.b16 %v775, %v774
      %v799 = vpack.c.b16 %v777, %v776
      %v800 = vpack.c.b16 %v779, %v778
      %v801 = vpack.c.b16 %v781, %v780
      %v802 = vpack.c.b16 %v783, %v782
      %v803 = vpack.c.b16 %v785, %v784
      %v804 = vpack.c.b16 %v787, %v786
      %v805 = vpack.c.b16 %v789, %v788
      %v810 = vunpack.c.l.b16 %v712
      %v811 = vunpack.c.l.b16 %v713
      %v812 = vunpack.c.l.b16 %v714
      %v813 = vunpack.c.l.b16 %v715
      %v814 = vpack.c.b16 %v811, %v810
      %v815 = vpack.c.b16 %v813, %v812
      %vm816 = vsmask.f32 7424
      %v818 = vshrl.u32 %v724, 16
      %v820 = vshll.u32 %v724, 16
      %v822 = vrot.slane %v820, 1
      %v823 = vor.u32 %v818, %v822
      %v825 = vshll.u32 %v725, 16
      %v827 = vrot.slane %v825, 1
      %v828 = vsel %vm816, %v823, %v827
      %v829 = vshrl.u32 %v725, 16
      %v831 = vor.u32 %v829, %v827
      %v833 = vshll.u32 %v790, 16
      %v835 = vrot.slane %v833, 1
      %v836 = vsel %vm816, %v831, %v835
      %v837 = vshrl.u32 %v790, 16
      %v839 = vor.u32 %v837, %v835
      %v841 = vshll.u32 %v791, 16
      %v843 = vrot.slane %v841, 1
      %v844 = vsel %vm816, %v839, %v843
      %v845 = vshrl.u32 %v791, 16
      %v847 = vor.u32 %v845, %v843
      %v849 = vshll.u32 %v792, 16
      %v851 = vrot.slane %v849, 1
      %v852 = vsel %vm816, %v847, %v851
      %v853 = vshrl.u32 %v792, 16
      %v855 = vor.u32 %v853, %v851
      %v857 = vshll.u32 %v793, 16
      %v859 = vrot.slane %v857, 1
      %v860 = vsel %vm816, %v855, %v859
      %v861 = vshrl.u32 %v793, 16
      %v863 = vor.u32 %v861, %v859
      %v865 = vshll.u32 %v794, 16
      %v867 = vrot.slane %v865, 1
      %v868 = vsel %vm816, %v863, %v867
      %v869 = vshrl.u32 %v794, 16
      %v871 = vor.u32 %v869, %v867
      %v873 = vshll.u32 %v795, 16
      %v875 = vrot.slane %v873, 1
      %v876 = vsel %vm816, %v871, %v875
      %v877 = vshrl.u32 %v795, 16
      %v879 = vor.u32 %v877, %v875
      %v881 = vshll.u32 %v796, 16
      %v883 = vrot.slane %v881, 1
      %v884 = vsel %vm816, %v879, %v883
      %v885 = vshrl.u32 %v796, 16
      %v887 = vor.u32 %v885, %v883
      %v889 = vshll.u32 %v797, 16
      %v891 = vrot.slane %v889, 1
      %v892 = vsel %vm816, %v887, %v891
      %v893 = vshrl.u32 %v797, 16
      %v895 = vor.u32 %v893, %v891
      %v897 = vshll.u32 %v798, 16
      %v899 = vrot.slane %v897, 1
      %v900 = vsel %vm816, %v895, %v899
      %v901 = vshrl.u32 %v798, 16
      %v903 = vor.u32 %v901, %v899
      %v905 = vshll.u32 %v799, 16
      %v907 = vrot.slane %v905, 1
      %v908 = vsel %vm816, %v903, %v907
      %v909 = vshrl.u32 %v799, 16
      %v911 = vor.u32 %v909, %v907
      %v913 = vshll.u32 %v800, 16
      %v915 = vrot.slane %v913, 1
      %v916 = vsel %vm816, %v911, %v915
      %v917 = vshrl.u32 %v800, 16
      %v919 = vor.u32 %v917, %v915
      %v921 = vshll.u32 %v801, 16
      %v923 = vrot.slane %v921, 1
      %v924 = vsel %vm816, %v919, %v923
      %v925 = vshrl.u32 %v801, 16
      %v927 = vor.u32 %v925, %v923
      %v929 = vshll.u32 %v802, 16
      %v931 = vrot.slane %v929, 1
      %v932 = vsel %vm816, %v927, %v931
      %v933 = vshrl.u32 %v802, 16
      %v935 = vor.u32 %v933, %v931
      %v937 = vshll.u32 %v803, 16
      %v939 = vrot.slane %v937, 1
      %v940 = vsel %vm816, %v935, %v939
      %v941 = vshrl.u32 %v803, 16
      %v943 = vor.u32 %v941, %v939
      %v945 = vshll.u32 %v804, 16
      %v947 = vrot.slane %v945, 1
      %v948 = vsel %vm816, %v943, %v947
      %v949 = vshrl.u32 %v804, 16
      %v951 = vor.u32 %v949, %v947
      %vm952 = vcmask 1046528
      %v953 = vrot.slane %v724, 1
      %v954 = vrot.slane %v725, 1
      %v955 = vsel %vm952, %v953, %v954
      %v956 = vrot.slane %v790, 1
      %v957 = vsel %vm952, %v954, %v956
      %v958 = vrot.slane %v791, 1
      %v959 = vsel %vm952, %v956, %v958
      %v960 = vrot.slane %v792, 1
      %v961 = vsel %vm952, %v958, %v960
      %v962 = vrot.slane %v793, 1
      %v963 = vsel %vm952, %v960, %v962
      %v964 = vrot.slane %v794, 1
      %v965 = vsel %vm952, %v962, %v964
      %v966 = vrot.slane %v795, 1
      %v967 = vsel %vm952, %v964, %v966
      %v968 = vrot.slane %v796, 1
      %v969 = vsel %vm952, %v966, %v968
      %v970 = vrot.slane %v797, 1
      %v971 = vsel %vm952, %v968, %v970
      %v972 = vrot.slane %v798, 1
      %v973 = vsel %vm952, %v970, %v972
      %v974 = vrot.slane %v799, 1
      %v975 = vsel %vm952, %v972, %v974
      %v976 = vrot.slane %v800, 1
      %v977 = vsel %vm952, %v974, %v976
      %v978 = vrot.slane %v801, 1
      %v979 = vsel %vm952, %v976, %v978
      %v980 = vrot.slane %v802, 1
      %v981 = vsel %vm952, %v978, %v980
      %v982 = vrot.slane %v803, 1
      %v983 = vsel %vm952, %v980, %v982
      %v984 = vrot.slane %v804, 1
      %v985 = vsel %vm952, %v982, %v984
      %v986 = vld [vmem:[%s652] sm:$0xf]
      %v987 = vld [vmem:[%s652 + $0x4] sm:$0xf]
      %v988 = vld [vmem:[%s652 + $0x8] sm:$0xf]
      %v989 = vld [vmem:[%s652 + $0xc] sm:$0xf]
      %v990 = vld [vmem:[%s652 + $0x10] sm:$0xf]
      %v991 = vld [vmem:[%s652 + $0x14] sm:$0xf]
      %v992 = vld [vmem:[%s652 + $0x18] sm:$0xf]
      %v993 = vld [vmem:[%s652 + $0x1c] sm:$0xf]
      %v994 = vld [vmem:[%s652 + $0x20] sm:$0xf]
      %v995 = vld [vmem:[%s652 + $0x24] sm:$0xf]
      %v996 = vld [vmem:[%s652 + $0x28] sm:$0xf]
      %v997 = vld [vmem:[%s652 + $0x2c] sm:$0xf]
      %v998 = vld [vmem:[%s652 + $0x30] sm:$0xf]
      %v999 = vld [vmem:[%s652 + $0x34] sm:$0xf]
      %v1000 = vld [vmem:[%s652 + $0x38] sm:$0xf]
      %v1001 = vld [vmem:[%s652 + $0x3c] sm:$0xf]
      %v1002 = vld [vmem:[%s652 + $0x40] sm:$0xf]
      %v1003 = vld [vmem:[%s652 + $0x44] sm:$0xf]
      %v1004 = vld [vmem:[%s652 + $0x48] sm:$0xf]
      %v1005 = vld [vmem:[%s652 + $0x4c] sm:$0xf]
      %v1006 = vld [vmem:[%s652 + $0x50] sm:$0xf]
      %v1007 = vld [vmem:[%s652 + $0x54] sm:$0xf]
      %v1008 = vld [vmem:[%s652 + $0x58] sm:$0xf]
      %v1009 = vld [vmem:[%s652 + $0x5c] sm:$0xf]
      %v1010 = vld [vmem:[%s652 + $0x60] sm:$0xf]
      %v1011 = vld [vmem:[%s652 + $0x64] sm:$0xf]
      %v1012 = vld [vmem:[%s652 + $0x68] sm:$0xf]
      %v1013 = vld [vmem:[%s652 + $0x6c] sm:$0xf]
      %v1014 = vld [vmem:[%s652 + $0x70] sm:$0xf]
      %v1015 = vld [vmem:[%s652 + $0x74] sm:$0xf]
      %v1016 = vld [vmem:[%s652 + $0x78] sm:$0xf]
      %v1017 = vld [vmem:[%s652 + $0x7c] sm:$0xf]
      %v1018 = vld [vmem:[%s652 + $0x80] sm:$0xf]
      %v1019 = vld [vmem:[%s652 + $0x84] sm:$0xf]
      %v1020 = vld [vmem:[%s652 + $0x88] sm:$0xf]
      %v1021 = vld [vmem:[%s652 + $0x8c] sm:$0xf]
      %v1022 = vld [vmem:[%s652 + $0x90] sm:$0xf]
      %v1023 = vld [vmem:[%s652 + $0x94] sm:$0xf]
      %v1024 = vld [vmem:[%s652 + $0x98] sm:$0xf]
      %v1025 = vld [vmem:[%s652 + $0x9c] sm:$0xf]
      %v1026 = vld [vmem:[%s652 + $0xa0] sm:$0xf]
      %v1027 = vld [vmem:[%s652 + $0xa4] sm:$0xf]
      %v1028 = vld [vmem:[%s652 + $0xa8] sm:$0xf]
      %v1029 = vld [vmem:[%s652 + $0xac] sm:$0xf]
      %v1030 = vld [vmem:[%s652 + $0xb0] sm:$0xf]
      %v1031 = vld [vmem:[%s652 + $0xb4] sm:$0xf]
      %v1032 = vld [vmem:[%s652 + $0xb8] sm:$0xf]
      %v1033 = vld [vmem:[%s652 + $0xbc] sm:$0xf]
      %vm1034 = vsmask.f32 4352
      %v1035 = vrot.slane %v818, 3
      %v1036 = vrot.slane %v820, 4
      %v1037 = vor.u32 %v1035, %v1036
      %v1038 = vrot.slane %v829, 3
      %v1039 = vrot.slane %v825, 4
      %v1040 = vor.u32 %v1038, %v1039
      %v1041 = vsel %vm1034, %v1037, %v1040
      %v1043 = vshrl.u32 %v828, 16
      %v1045 = vrot.slane %v1043, 3
      %v1046 = vshll.u32 %v828, 16
      %v1048 = vrot.slane %v1046, 4
      %v1049 = vor.u32 %v1045, %v1048
      %v1051 = vshrl.u32 %v836, 16
      %v1053 = vrot.slane %v1051, 3
      %v1054 = vshll.u32 %v836, 16
      %v1056 = vrot.slane %v1054, 4
      %v1057 = vor.u32 %v1053, %v1056
      %v1058 = vsel %vm1034, %v1049, %v1057
      %v1060 = vshrl.u32 %v955, 16
      %v1062 = vrot.slane %v1060, 3
      %v1063 = vshll.u32 %v955, 16
      %v1065 = vrot.slane %v1063, 4
      %v1066 = vor.u32 %v1062, %v1065
      %v1068 = vshrl.u32 %v957, 16
      %v1070 = vrot.slane %v1068, 3
      %v1071 = vshll.u32 %v957, 16
      %v1073 = vrot.slane %v1071, 4
      %v1074 = vor.u32 %v1070, %v1073
      %v1075 = vsel %vm1034, %v1066, %v1074
      %v1076 = vrot.slane %v837, 3
      %v1077 = vrot.slane %v833, 4
      %v1078 = vor.u32 %v1076, %v1077
      %v1079 = vsel %vm1034, %v1040, %v1078
      %v1081 = vshrl.u32 %v844, 16
      %v1083 = vrot.slane %v1081, 3
      %v1084 = vshll.u32 %v844, 16
      %v1086 = vrot.slane %v1084, 4
      %v1087 = vor.u32 %v1083, %v1086
      %v1088 = vsel %vm1034, %v1057, %v1087
      %v1090 = vshrl.u32 %v959, 16
      %v1092 = vrot.slane %v1090, 3
      %v1093 = vshll.u32 %v959, 16
      %v1095 = vrot.slane %v1093, 4
      %v1096 = vor.u32 %v1092, %v1095
      %v1097 = vsel %vm1034, %v1074, %v1096
      %v1098 = vrot.slane %v845, 3
      %v1099 = vrot.slane %v841, 4
      %v1100 = vor.u32 %v1098, %v1099
      %v1101 = vsel %vm1034, %v1078, %v1100
      %v1103 = vshrl.u32 %v852, 16
      %v1105 = vrot.slane %v1103, 3
      %v1106 = vshll.u32 %v852, 16
      %v1108 = vrot.slane %v1106, 4
      %v1109 = vor.u32 %v1105, %v1108
      %v1110 = vsel %vm1034, %v1087, %v1109
      %v1112 = vshrl.u32 %v961, 16
      %v1114 = vrot.slane %v1112, 3
      %v1115 = vshll.u32 %v961, 16
      %v1117 = vrot.slane %v1115, 4
      %v1118 = vor.u32 %v1114, %v1117
      %v1119 = vsel %vm1034, %v1096, %v1118
      %v1120 = vrot.slane %v853, 3
      %v1121 = vrot.slane %v849, 4
      %v1122 = vor.u32 %v1120, %v1121
      %v1123 = vsel %vm1034, %v1100, %v1122
      %v1125 = vshrl.u32 %v860, 16
      %v1127 = vrot.slane %v1125, 3
      %v1128 = vshll.u32 %v860, 16
      %v1130 = vrot.slane %v1128, 4
      %v1131 = vor.u32 %v1127, %v1130
      %v1132 = vsel %vm1034, %v1109, %v1131
      %v1134 = vshrl.u32 %v963, 16
      %v1136 = vrot.slane %v1134, 3
      %v1137 = vshll.u32 %v963, 16
      %v1139 = vrot.slane %v1137, 4
      %v1140 = vor.u32 %v1136, %v1139
      %v1141 = vsel %vm1034, %v1118, %v1140
      %v1142 = vrot.slane %v861, 3
      %v1143 = vrot.slane %v857, 4
      %v1144 = vor.u32 %v1142, %v1143
      %v1145 = vsel %vm1034, %v1122, %v1144
      %v1147 = vshrl.u32 %v868, 16
      %v1149 = vrot.slane %v1147, 3
      %v1150 = vshll.u32 %v868, 16
      %v1152 = vrot.slane %v1150, 4
      %v1153 = vor.u32 %v1149, %v1152
      %v1154 = vsel %vm1034, %v1131, %v1153
      %v1156 = vshrl.u32 %v965, 16
      %v1158 = vrot.slane %v1156, 3
      %v1159 = vshll.u32 %v965, 16
      %v1161 = vrot.slane %v1159, 4
      %v1162 = vor.u32 %v1158, %v1161
      %v1163 = vsel %vm1034, %v1140, %v1162
      %v1164 = vrot.slane %v869, 3
      %v1165 = vrot.slane %v865, 4
      %v1166 = vor.u32 %v1164, %v1165
      %v1167 = vsel %vm1034, %v1144, %v1166
      %v1169 = vshrl.u32 %v876, 16
      %v1171 = vrot.slane %v1169, 3
      %v1172 = vshll.u32 %v876, 16
      %v1174 = vrot.slane %v1172, 4
      %v1175 = vor.u32 %v1171, %v1174
      %v1176 = vsel %vm1034, %v1153, %v1175
      %v1178 = vshrl.u32 %v967, 16
      %v1180 = vrot.slane %v1178, 3
      %v1181 = vshll.u32 %v967, 16
      %v1183 = vrot.slane %v1181, 4
      %v1184 = vor.u32 %v1180, %v1183
      %v1185 = vsel %vm1034, %v1162, %v1184
      %v1186 = vrot.slane %v877, 3
      %v1187 = vrot.slane %v873, 4
      %v1188 = vor.u32 %v1186, %v1187
      %v1189 = vsel %vm1034, %v1166, %v1188
      %v1191 = vshrl.u32 %v884, 16
      %v1193 = vrot.slane %v1191, 3
      %v1194 = vshll.u32 %v884, 16
      %v1196 = vrot.slane %v1194, 4
      %v1197 = vor.u32 %v1193, %v1196
      %v1198 = vsel %vm1034, %v1175, %v1197
      %v1200 = vshrl.u32 %v969, 16
      %v1202 = vrot.slane %v1200, 3
      %v1203 = vshll.u32 %v969, 16
      %v1205 = vrot.slane %v1203, 4
      %v1206 = vor.u32 %v1202, %v1205
      %v1207 = vsel %vm1034, %v1184, %v1206
      %v1208 = vrot.slane %v885, 3
      %v1209 = vrot.slane %v881, 4
      %v1210 = vor.u32 %v1208, %v1209
      %v1211 = vsel %vm1034, %v1188, %v1210
      %v1213 = vshrl.u32 %v892, 16
      %v1215 = vrot.slane %v1213, 3
      %v1216 = vshll.u32 %v892, 16
      %v1218 = vrot.slane %v1216, 4
      %v1219 = vor.u32 %v1215, %v1218
      %v1220 = vsel %vm1034, %v1197, %v1219
      %v1222 = vshrl.u32 %v971, 16
      %v1224 = vrot.slane %v1222, 3
      %v1225 = vshll.u32 %v971, 16
      %v1227 = vrot.slane %v1225, 4
      %v1228 = vor.u32 %v1224, %v1227
      %v1229 = vsel %vm1034, %v1206, %v1228
      %v1230 = vrot.slane %v893, 3
      %v1231 = vrot.slane %v889, 4
      %v1232 = vor.u32 %v1230, %v1231
      %v1233 = vsel %vm1034, %v1210, %v1232
      %v1235 = vshrl.u32 %v900, 16
      %v1237 = vrot.slane %v1235, 3
      %v1238 = vshll.u32 %v900, 16
      %v1240 = vrot.slane %v1238, 4
      %v1241 = vor.u32 %v1237, %v1240
      %v1242 = vsel %vm1034, %v1219, %v1241
      %v1244 = vshrl.u32 %v973, 16
      %v1246 = vrot.slane %v1244, 3
      %v1247 = vshll.u32 %v973, 16
      %v1249 = vrot.slane %v1247, 4
      %v1250 = vor.u32 %v1246, %v1249
      %v1251 = vsel %vm1034, %v1228, %v1250
      %v1252 = vrot.slane %v901, 3
      %v1253 = vrot.slane %v897, 4
      %v1254 = vor.u32 %v1252, %v1253
      %v1255 = vsel %vm1034, %v1232, %v1254
      %v1257 = vshrl.u32 %v908, 16
      %v1259 = vrot.slane %v1257, 3
      %v1260 = vshll.u32 %v908, 16
      %v1262 = vrot.slane %v1260, 4
      %v1263 = vor.u32 %v1259, %v1262
      %v1264 = vsel %vm1034, %v1241, %v1263
      %v1266 = vshrl.u32 %v975, 16
      %v1268 = vrot.slane %v1266, 3
      %v1269 = vshll.u32 %v975, 16
      %v1271 = vrot.slane %v1269, 4
      %v1272 = vor.u32 %v1268, %v1271
      %v1273 = vsel %vm1034, %v1250, %v1272
      %v1274 = vrot.slane %v909, 3
      %v1275 = vrot.slane %v905, 4
      %v1276 = vor.u32 %v1274, %v1275
      %v1277 = vsel %vm1034, %v1254, %v1276
      %v1279 = vshrl.u32 %v916, 16
      %v1281 = vrot.slane %v1279, 3
      %v1282 = vshll.u32 %v916, 16
      %v1284 = vrot.slane %v1282, 4
      %v1285 = vor.u32 %v1281, %v1284
      %v1286 = vsel %vm1034, %v1263, %v1285
      %v1288 = vshrl.u32 %v977, 16
      %v1290 = vrot.slane %v1288, 3
      %v1291 = vshll.u32 %v977, 16
      %v1293 = vrot.slane %v1291, 4
      %v1294 = vor.u32 %v1290, %v1293
      %v1295 = vsel %vm1034, %v1272, %v1294
      %v1296 = vrot.slane %v917, 3
      %v1297 = vrot.slane %v913, 4
      %v1298 = vor.u32 %v1296, %v1297
      %v1299 = vsel %vm1034, %v1276, %v1298
      %v1301 = vshrl.u32 %v924, 16
      %v1303 = vrot.slane %v1301, 3
      %v1304 = vshll.u32 %v924, 16
      %v1306 = vrot.slane %v1304, 4
      %v1307 = vor.u32 %v1303, %v1306
      %v1308 = vsel %vm1034, %v1285, %v1307
      %v1310 = vshrl.u32 %v979, 16
      %v1312 = vrot.slane %v1310, 3
      %v1313 = vshll.u32 %v979, 16
      %v1315 = vrot.slane %v1313, 4
      %v1316 = vor.u32 %v1312, %v1315
      %v1317 = vsel %vm1034, %v1294, %v1316
      %v1318 = vrot.slane %v925, 3
      %v1319 = vrot.slane %v921, 4
      %v1320 = vor.u32 %v1318, %v1319
      %v1321 = vsel %vm1034, %v1298, %v1320
      %v1323 = vshrl.u32 %v932, 16
      %v1325 = vrot.slane %v1323, 3
      %v1326 = vshll.u32 %v932, 16
      %v1328 = vrot.slane %v1326, 4
      %v1329 = vor.u32 %v1325, %v1328
      %v1330 = vsel %vm1034, %v1307, %v1329
      %v1332 = vshrl.u32 %v981, 16
      %v1334 = vrot.slane %v1332, 3
      %v1335 = vshll.u32 %v981, 16
      %v1337 = vrot.slane %v1335, 4
      %v1338 = vor.u32 %v1334, %v1337
      %v1339 = vsel %vm1034, %v1316, %v1338
      %v1340 = vrot.slane %v933, 3
      %v1341 = vrot.slane %v929, 4
      %v1342 = vor.u32 %v1340, %v1341
      %v1343 = vsel %vm1034, %v1320, %v1342
      %v1345 = vshrl.u32 %v940, 16
      %v1347 = vrot.slane %v1345, 3
      %v1348 = vshll.u32 %v940, 16
      %v1350 = vrot.slane %v1348, 4
      %v1351 = vor.u32 %v1347, %v1350
      %v1352 = vsel %vm1034, %v1329, %v1351
      %v1354 = vshrl.u32 %v983, 16
      %v1356 = vrot.slane %v1354, 3
      %v1357 = vshll.u32 %v983, 16
      %v1359 = vrot.slane %v1357, 4
      %v1360 = vor.u32 %v1356, %v1359
      %v1361 = vsel %vm1034, %v1338, %v1360
      %v1362 = vrot.slane %v941, 3
      %v1363 = vrot.slane %v937, 4
      %v1364 = vor.u32 %v1362, %v1363
      %v1365 = vsel %vm1034, %v1342, %v1364
      %v1367 = vshrl.u32 %v948, 16
      %v1369 = vrot.slane %v1367, 3
      %v1370 = vshll.u32 %v948, 16
      %v1372 = vrot.slane %v1370, 4
      %v1373 = vor.u32 %v1369, %v1372
      %v1374 = vsel %vm1034, %v1351, %v1373
      %v1376 = vshrl.u32 %v985, 16
      %v1378 = vrot.slane %v1376, 3
      %v1379 = vshll.u32 %v985, 16
      %v1381 = vrot.slane %v1379, 4
      %v1382 = vor.u32 %v1378, %v1381
      %v1383 = vsel %vm1034, %v1360, %v1382
      %v1384 = vrot.slane %v949, 3
      %v1385 = vrot.slane %v945, 4
      %v1386 = vor.u32 %v1384, %v1385
      %v1387 = vsel %vm1034, %v1364, %v1386
      %v1389 = vshrl.u32 %v951, 16
      %v1391 = vrot.slane %v1389, 3
      %v1392 = vshll.u32 %v951, 16
      %v1394 = vrot.slane %v1392, 4
      %v1395 = vor.u32 %v1391, %v1394
      %v1396 = vsel %vm1034, %v1373, %v1395
      %v1398 = vshrl.u32 %v984, 16
      %v1400 = vrot.slane %v1398, 3
      %v1401 = vshll.u32 %v984, 16
      %v1403 = vrot.slane %v1401, 4
      %v1404 = vor.u32 %v1400, %v1403
      %v1405 = vsel %vm1034, %v1382, %v1404
      %v1502 = vunpack.c.l.b16 %v986
      %v1503 = vunpack.c.l.b16 %v987
      %v1504 = vunpack.c.l.b16 %v988
      %v1505 = vunpack.c.l.b16 %v989
      %v1506 = vunpack.c.l.b16 %v990
      %v1507 = vunpack.c.l.b16 %v991
      %v1508 = vunpack.c.l.b16 %v992
      %v1509 = vunpack.c.l.b16 %v993
      %v1510 = vunpack.c.l.b16 %v994
      %v1511 = vunpack.c.l.b16 %v995
      %v1512 = vunpack.c.l.b16 %v996
      %v1513 = vunpack.c.l.b16 %v997
      %v1514 = vunpack.c.l.b16 %v998
      %v1515 = vunpack.c.l.b16 %v999
      %v1516 = vunpack.c.l.b16 %v1000
      %v1517 = vunpack.c.l.b16 %v1001
      %v1518 = vunpack.c.l.b16 %v1002
      %v1519 = vunpack.c.l.b16 %v1003
      %v1520 = vunpack.c.l.b16 %v1004
      %v1521 = vunpack.c.l.b16 %v1005
      %v1522 = vunpack.c.l.b16 %v1006
      %v1523 = vunpack.c.l.b16 %v1007
      %v1524 = vunpack.c.l.b16 %v1008
      %v1525 = vunpack.c.l.b16 %v1009
      %v1526 = vunpack.c.l.b16 %v1010
      %v1527 = vunpack.c.l.b16 %v1011
      %v1528 = vunpack.c.l.b16 %v1012
      %v1529 = vunpack.c.l.b16 %v1013
      %v1530 = vunpack.c.l.b16 %v1014
      %v1531 = vunpack.c.l.b16 %v1015
      %v1532 = vunpack.c.l.b16 %v1016
      %v1533 = vunpack.c.l.b16 %v1017
      %v1534 = vunpack.c.l.b16 %v1018
      %v1535 = vunpack.c.l.b16 %v1019
      %v1536 = vunpack.c.l.b16 %v1020
      %v1537 = vunpack.c.l.b16 %v1021
      %v1538 = vunpack.c.l.b16 %v1022
      %v1539 = vunpack.c.l.b16 %v1023
      %v1540 = vunpack.c.l.b16 %v1024
      %v1541 = vunpack.c.l.b16 %v1025
      %v1542 = vunpack.c.l.b16 %v1026
      %v1543 = vunpack.c.l.b16 %v1027
      %v1544 = vunpack.c.l.b16 %v1028
      %v1545 = vunpack.c.l.b16 %v1029
      %v1546 = vunpack.c.l.b16 %v1030
      %v1547 = vunpack.c.l.b16 %v1031
      %v1548 = vunpack.c.l.b16 %v1032
      %v1549 = vunpack.c.l.b16 %v1033
      %v1550 = vpack.c.b16 %v1503, %v1502
      %v1551 = vpack.c.b16 %v1505, %v1504
      %v1552 = vpack.c.b16 %v1507, %v1506
      %v1553 = vpack.c.b16 %v1509, %v1508
      %v1554 = vpack.c.b16 %v1511, %v1510
      %v1555 = vpack.c.b16 %v1513, %v1512
      %v1556 = vpack.c.b16 %v1515, %v1514
      %v1557 = vpack.c.b16 %v1517, %v1516
      %v1558 = vpack.c.b16 %v1519, %v1518
      %v1559 = vpack.c.b16 %v1521, %v1520
      %v1560 = vpack.c.b16 %v1523, %v1522
      %v1561 = vpack.c.b16 %v1525, %v1524
      %v1562 = vpack.c.b16 %v1527, %v1526
      %v1563 = vpack.c.b16 %v1529, %v1528
      %v1564 = vpack.c.b16 %v1531, %v1530
      %v1565 = vpack.c.b16 %v1533, %v1532
      %v1566 = vpack.c.b16 %v1535, %v1534
      %v1567 = vpack.c.b16 %v1537, %v1536
      %v1568 = vpack.c.b16 %v1539, %v1538
      %v1569 = vpack.c.b16 %v1541, %v1540
      %v1570 = vpack.c.b16 %v1543, %v1542
      %v1571 = vpack.c.b16 %v1545, %v1544
      %v1572 = vpack.c.b16 %v1547, %v1546
      %v1573 = vpack.c.b16 %v1549, %v1548
      %1598 = vmatprep.subr.bf16.mxu0 0
      %1599 = vmatpush1.bf16.msra.mxu0 %v1550
      %1600 = vmatprep.subr.bf16.mxu0 0
      %1601 = vmatpush1.bf16.msra.mxu0 %v1551
      %1602 = vmatprep.subr.bf16.mxu0 0
      %1603 = vmatpush1.bf16.msra.mxu0 %v1552
      %1604 = vmatprep.subr.bf16.mxu0 0
      %1605 = vmatpush1.bf16.msra.mxu0 %v1553
      %1606 = vmatprep.subr.bf16.mxu0 0
      %1607 = vmatpush1.bf16.msra.mxu0 %v1554
      %1608 = vmatprep.subr.bf16.mxu0 0
      %1609 = vmatpush1.bf16.msra.mxu0 %v1555
      %1610 = vmatprep.subr.bf16.mxu0 0
      %1611 = vmatpush1.bf16.msra.mxu0 %v1556
      %1612 = vmatprep.subr.bf16.mxu0 0
      %1613 = vmatpush1.bf16.msra.mxu0 %v1557
      %1614 = vmatprep.subr.bf16.mxu0 0
      %1615 = vmatpush1.bf16.msra.mxu0 %v1558
      %1616 = vmatprep.subr.bf16.mxu0 0
      %1617 = vmatpush1.bf16.msra.mxu0 %v1559
      %1618 = vmatprep.subr.bf16.mxu0 0
      %1619 = vmatpush1.bf16.msra.mxu0 %v1560
      %1620 = vmatprep.subr.bf16.mxu0 0
      %1621 = vmatpush1.bf16.msra.mxu0 %v1561
      %1622 = vmatprep.subr.bf16.mxu0 0
      %1623 = vmatpush1.bf16.msra.mxu0 %v1562
      %1624 = vmatprep.subr.bf16.mxu0 0
      %1625 = vmatpush1.bf16.msra.mxu0 %v1563
      %1626 = vmatprep.subr.bf16.mxu0 0
      %1627 = vmatpush1.bf16.msra.mxu0 %v1564
      %1628 = vmatprep.subr.bf16.mxu0 0
      %1629 = vmatpush1.bf16.msra.mxu0 %v1565
      %1630 = vmatprep.mubr.bf16.mxu0 %v1058
      %1631 = vmatmul.mubr.bf16.gmra.mrb[0].mxu0 %v1041
      %v1632 = vpop.f32.mrb[0].mxu0
      %v1633 = vadd.f32 0.0, %v1632
      %v1634 = vpop.f32.mrb[0].mxu0
      %v1635 = vpop.f32.mrb[0].mxu0
      %v1636 = vadd.f32 0.0, %v1635
      %v1637 = vpop.f32.mrb[0].mxu0
      %1638 = vmatprep.mubr.bf16.mxu0 %v1088
      %1639 = vmatmul.mubr.bf16.gmra.mrb[0].mxu0 %v1079
      %v1640 = vpop.f32.mrb[0].mxu0
      %v1641 = vadd.f32 0.0, %v1640
      %v1642 = vpop.f32.mrb[0].mxu0
      %v1643 = vpop.f32.mrb[0].mxu0
      %v1644 = vadd.f32 0.0, %v1643
      %v1645 = vpop.f32.mrb[0].mxu0
      %1646 = vmatprep.mubr.bf16.mxu0 %v1110
      %1647 = vmatmul.mubr.bf16.gmra.mrb[0].mxu0 %v1101
      %v1648 = vpop.f32.mrb[0].mxu0
      %v1649 = vadd.f32 0.0, %v1648
      %v1650 = vpop.f32.mrb[0].mxu0
      %v1651 = vpop.f32.mrb[0].mxu0
      %v1652 = vadd.f32 0.0, %v1651
      %v1653 = vpop.f32.mrb[0].mxu0
      %1654 = vmatprep.mubr.bf16.mxu0 %v1132
      %1655 = vmatmul.mubr.bf16.gmra.mrb[0].mxu0 %v1123
      %v1656 = vpop.f32.mrb[0].mxu0
      %v1657 = vadd.f32 0.0, %v1656
      %v1658 = vpop.f32.mrb[0].mxu0
      %v1659 = vpop.f32.mrb[0].mxu0
      %v1660 = vadd.f32 0.0, %v1659
      %v1661 = vpop.f32.mrb[0].mxu0
      %1662 = vmatprep.mubr.bf16.mxu0 %v1154
      %1663 = vmatmul.mubr.bf16.gmra.mrb[0].mxu0 %v1145
      %v1664 = vpop.f32.mrb[0].mxu0
      %v1665 = vadd.f32 0.0, %v1664
      %v1666 = vpop.f32.mrb[0].mxu0
      %v1667 = vpop.f32.mrb[0].mxu0
      %v1668 = vadd.f32 0.0, %v1667
      %v1669 = vpop.f32.mrb[0].mxu0
      %1670 = vmatprep.mubr.bf16.mxu0 %v1176
      %1671 = vmatmul.mubr.bf16.gmra.mrb[0].mxu0 %v1167
      %v1672 = vpop.f32.mrb[0].mxu0
      %v1673 = vadd.f32 0.0, %v1672
      %v1674 = vpop.f32.mrb[0].mxu0
      %v1675 = vpop.f32.mrb[0].mxu0
      %v1676 = vadd.f32 0.0, %v1675
      %v1677 = vpop.f32.mrb[0].mxu0
      %1678 = vmatprep.mubr.bf16.mxu0 %v1198
      %1679 = vmatmul.mubr.bf16.gmra.mrb[0].mxu0 %v1189
      %v1680 = vpop.f32.mrb[0].mxu0
      %v1681 = vadd.f32 0.0, %v1680
      %v1682 = vpop.f32.mrb[0].mxu0
      %v1683 = vpop.f32.mrb[0].mxu0
      %v1684 = vadd.f32 0.0, %v1683
      %v1685 = vpop.f32.mrb[0].mxu0
      %1686 = vmatprep.mubr.bf16.mxu0 %v1220
      %1687 = vmatmul.mubr.bf16.gmra.mrb[0].mxu0 %v1211
      %v1688 = vpop.f32.mrb[0].mxu0
      %v1689 = vadd.f32 0.0, %v1688
      %v1690 = vpop.f32.mrb[0].mxu0
      %v1691 = vpop.f32.mrb[0].mxu0
      %v1692 = vadd.f32 0.0, %v1691
      %v1693 = vpop.f32.mrb[0].mxu0
      %1694 = vmatprep.mubr.bf16.mxu0 %v1242
      %1695 = vmatmul.mubr.bf16.gmra.mrb[0].mxu0 %v1233
      %v1696 = vpop.f32.mrb[0].mxu0
      %v1697 = vadd.f32 0.0, %v1696
      %v1698 = vpop.f32.mrb[0].mxu0
      %v1699 = vpop.f32.mrb[0].mxu0
      %v1700 = vadd.f32 0.0, %v1699
      %v1701 = vpop.f32.mrb[0].mxu0
      %1702 = vmatprep.mubr.bf16.mxu0 %v1264
      %1703 = vmatmul.mubr.bf16.gmra.mrb[0].mxu0 %v1255
      %v1704 = vpop.f32.mrb[0].mxu0
      %v1705 = vadd.f32 0.0, %v1704
      %v1706 = vpop.f32.mrb[0].mxu0
      %v1707 = vpop.f32.mrb[0].mxu0
      %v1708 = vadd.f32 0.0, %v1707
      %v1709 = vpop.f32.mrb[0].mxu0
      %1710 = vmatprep.mubr.bf16.mxu0 %v1286
      %1711 = vmatmul.mubr.bf16.gmra.mrb[0].mxu0 %v1277
      %v1712 = vpop.f32.mrb[0].mxu0
      %v1713 = vadd.f32 0.0, %v1712
      %v1714 = vpop.f32.mrb[0].mxu0
      %v1715 = vpop.f32.mrb[0].mxu0
      %v1716 = vadd.f32 0.0, %v1715
      %v1717 = vpop.f32.mrb[0].mxu0
      %1718 = vmatprep.mubr.bf16.mxu0 %v1308
      %1719 = vmatmul.mubr.bf16.gmra.mrb[0].mxu0 %v1299
      %v1720 = vpop.f32.mrb[0].mxu0
      %v1721 = vadd.f32 0.0, %v1720
      %v1722 = vpop.f32.mrb[0].mxu0
      %v1723 = vpop.f32.mrb[0].mxu0
      %v1724 = vadd.f32 0.0, %v1723
      %v1725 = vpop.f32.mrb[0].mxu0
      %1726 = vmatprep.mubr.bf16.mxu0 %v1330
      %1727 = vmatmul.mubr.bf16.gmra.mrb[0].mxu0 %v1321
      %v1728 = vpop.f32.mrb[0].mxu0
      %v1729 = vadd.f32 0.0, %v1728
      %v1730 = vpop.f32.mrb[0].mxu0
      %v1731 = vpop.f32.mrb[0].mxu0
      %v1732 = vadd.f32 0.0, %v1731
      %v1733 = vpop.f32.mrb[0].mxu0
      %1734 = vmatprep.mubr.bf16.mxu0 %v1352
      %1735 = vmatmul.mubr.bf16.gmra.mrb[0].mxu0 %v1343
      %v1736 = vpop.f32.mrb[0].mxu0
      %v1737 = vadd.f32 0.0, %v1736
      %v1738 = vpop.f32.mrb[0].mxu0
      %v1739 = vpop.f32.mrb[0].mxu0
      %v1740 = vadd.f32 0.0, %v1739
      %v1741 = vpop.f32.mrb[0].mxu0
      %1742 = vmatprep.mubr.bf16.mxu0 %v1374
      %1743 = vmatmul.mubr.bf16.gmra.mrb[0].mxu0 %v1365
      %v1744 = vpop.f32.mrb[0].mxu0
      %v1745 = vadd.f32 0.0, %v1744
      %v1746 = vpop.f32.mrb[0].mxu0
      %v1747 = vpop.f32.mrb[0].mxu0
      %v1748 = vadd.f32 0.0, %v1747
      %v1749 = vpop.f32.mrb[0].mxu0
      %1750 = vmatprep.mubr.bf16.mxu0 %v1396
      %1751 = vmatmul.mubr.bf16.gmra.mrb[0].mxu0 %v1387
      %v1752 = vpop.f32.mrb[0].mxu0
      %v1753 = vadd.f32 0.0, %v1752
      %v1754 = vpop.f32.mrb[0].mxu0
      %v1755 = vpop.f32.mrb[0].mxu0
      %v1756 = vadd.f32 0.0, %v1755
      %v1757 = vpop.f32.mrb[0].mxu0
      %1758 = vdwg.mxu0
      %1759 = vmatprep.subr.bf16.mxu0 0
      %1760 = vmatpush1.bf16.msra.mxu0 %v1566
      %1761 = vmatprep.subr.bf16.mxu0 0
      %1762 = vmatpush1.bf16.msra.mxu0 %v1567
      %1763 = vmatprep.subr.bf16.mxu0 0
      %1764 = vmatpush1.bf16.msra.mxu0 %v1568
      %1765 = vmatprep.subr.bf16.mxu0 0
      %1766 = vmatpush1.bf16.msra.mxu0 %v1569
      %1767 = vmatprep.subr.bf16.mxu0 0
      %1768 = vmatpush1.bf16.msra.mxu0 %v1570
      %1769 = vmatprep.subr.bf16.mxu0 0
      %1770 = vmatpush1.bf16.msra.mxu0 %v1571
      %1771 = vmatprep.subr.bf16.mxu0 0
      %1772 = vmatpush1.bf16.msra.mxu0 %v1572
      %1773 = vmatprep.subr.bf16.mxu0 0
      %1774 = vmatpush1.bf16.msra.mxu0 %v1573
      %1775 = vmatprep.subr.bf16.mxu0 0
      %1776 = vmatpush1.bf16.msra.mxu0 0
      %1777 = vmatprep.subr.bf16.mxu0 0
      %1778 = vmatpush1.bf16.msra.mxu0 0
      %1779 = vmatprep.subr.bf16.mxu0 0
      %1780 = vmatpush1.bf16.msra.mxu0 0
      %1781 = vmatprep.subr.bf16.mxu0 0
      %1782 = vmatpush1.bf16.msra.mxu0 0
      %1783 = vmatprep.subr.bf16.mxu0 0
      %1784 = vmatpush1.bf16.msra.mxu0 0
      %1785 = vmatprep.subr.bf16.mxu0 0
      %1786 = vmatpush1.bf16.msra.mxu0 0
      %1787 = vmatprep.subr.bf16.mxu0 0
      %1788 = vmatpush1.bf16.msra.mxu0 0
      %1789 = vmatprep.subr.bf16.mxu0 0
      %1790 = vmatpush1.bf16.msra.mxu0 0
      %1791 = vmatprep.mubr.bf16.mxu0 0
      %1792 = vmatmul.mubr.bf16.gmra.mrb[0].mxu0 %v1075
      %v1793 = vpop.f32.mrb[0].mxu0
      %v1794 = vadd.f32 %v1633, %v1793
      %v1795 = vpop.f32.mrb[0].mxu0
      %v1796 = vpop.f32.mrb[0].mxu0
      %v1797 = vadd.f32 %v1636, %v1796
      %v1798 = vpop.f32.mrb[0].mxu0
      %1799 = vmatprep.mubr.bf16.mxu0 0
      %1800 = vmatmul.mubr.bf16.gmra.mrb[0].mxu0 %v1097
      %v1801 = vpop.f32.mrb[0].mxu0
      %v1802 = vadd.f32 %v1641, %v1801
      %v1803 = vpop.f32.mrb[0].mxu0
      %v1804 = vpop.f32.mrb[0].mxu0
      %v1805 = vadd.f32 %v1644, %v1804
      %v1806 = vpop.f32.mrb[0].mxu0
      %1807 = vmatprep.mubr.bf16.mxu0 0
      %1808 = vmatmul.mubr.bf16.gmra.mrb[0].mxu0 %v1119
      %v1809 = vpop.f32.mrb[0].mxu0
      %v1810 = vadd.f32 %v1649, %v1809
      %v1811 = vpop.f32.mrb[0].mxu0
      %v1812 = vpop.f32.mrb[0].mxu0
      %v1813 = vadd.f32 %v1652, %v1812
      %v1814 = vpop.f32.mrb[0].mxu0
      %1815 = vmatprep.mubr.bf16.mxu0 0
      %1816 = vmatmul.mubr.bf16.gmra.mrb[0].mxu0 %v1141
      %v1817 = vpop.f32.mrb[0].mxu0
      %v1818 = vadd.f32 %v1657, %v1817
      %v1819 = vpop.f32.mrb[0].mxu0
      %v1820 = vpop.f32.mrb[0].mxu0
      %v1821 = vadd.f32 %v1660, %v1820
      %v1822 = vpop.f32.mrb[0].mxu0
      %1823 = vmatprep.mubr.bf16.mxu0 0
      %1824 = vmatmul.mubr.bf16.gmra.mrb[0].mxu0 %v1163
      %v1825 = vpop.f32.mrb[0].mxu0
      %v1826 = vadd.f32 %v1665, %v1825
      %v1827 = vpop.f32.mrb[0].mxu0
      %v1828 = vpop.f32.mrb[0].mxu0
      %v1829 = vadd.f32 %v1668, %v1828
      %v1830 = vpop.f32.mrb[0].mxu0
      %1831 = vmatprep.mubr.bf16.mxu0 0
      %1832 = vmatmul.mubr.bf16.gmra.mrb[0].mxu0 %v1185
      %v1833 = vpop.f32.mrb[0].mxu0
      %v1834 = vadd.f32 %v1673, %v1833
      %v1835 = vpop.f32.mrb[0].mxu0
      %v1836 = vpop.f32.mrb[0].mxu0
      %v1837 = vadd.f32 %v1676, %v1836
      %v1838 = vpop.f32.mrb[0].mxu0
      %1839 = vmatprep.mubr.bf16.mxu0 0
      %1840 = vmatmul.mubr.bf16.gmra.mrb[0].mxu0 %v1207
      %v1841 = vpop.f32.mrb[0].mxu0
      %v1842 = vadd.f32 %v1681, %v1841
      %v1843 = vpop.f32.mrb[0].mxu0
      %v1844 = vpop.f32.mrb[0].mxu0
      %v1845 = vadd.f32 %v1684, %v1844
      %v1846 = vpop.f32.mrb[0].mxu0
      %1847 = vmatprep.mubr.bf16.mxu0 0
      %1848 = vmatmul.mubr.bf16.gmra.mrb[0].mxu0 %v1229
      %v1849 = vpop.f32.mrb[0].mxu0
      %v1850 = vadd.f32 %v1689, %v1849
      %v1851 = vpop.f32.mrb[0].mxu0
      %v1852 = vpop.f32.mrb[0].mxu0
      %v1853 = vadd.f32 %v1692, %v1852
      %v1854 = vpop.f32.mrb[0].mxu0
      %1855 = vmatprep.mubr.bf16.mxu0 0
      %1856 = vmatmul.mubr.bf16.gmra.mrb[0].mxu0 %v1251
      %v1857 = vpop.f32.mrb[0].mxu0
      %v1858 = vadd.f32 %v1697, %v1857
      %v1859 = vpop.f32.mrb[0].mxu0
      %v1860 = vpop.f32.mrb[0].mxu0
      %v1861 = vadd.f32 %v1700, %v1860
      %v1862 = vpop.f32.mrb[0].mxu0
      %1863 = vmatprep.mubr.bf16.mxu0 0
      %1864 = vmatmul.mubr.bf16.gmra.mrb[0].mxu0 %v1273
      %v1865 = vpop.f32.mrb[0].mxu0
      %v1866 = vadd.f32 %v1705, %v1865
      %v1867 = vpop.f32.mrb[0].mxu0
      %v1868 = vpop.f32.mrb[0].mxu0
      %v1869 = vadd.f32 %v1708, %v1868
      %v1870 = vpop.f32.mrb[0].mxu0
      %1871 = vmatprep.mubr.bf16.mxu0 0
      %1872 = vmatmul.mubr.bf16.gmra.mrb[0].mxu0 %v1295
      %v1873 = vpop.f32.mrb[0].mxu0
      %v1874 = vadd.f32 %v1713, %v1873
      %v1875 = vpop.f32.mrb[0].mxu0
      %v1876 = vpop.f32.mrb[0].mxu0
      %v1877 = vadd.f32 %v1716, %v1876
      %v1878 = vpop.f32.mrb[0].mxu0
      %1879 = vmatprep.mubr.bf16.mxu0 0
      %1880 = vmatmul.mubr.bf16.gmra.mrb[0].mxu0 %v1317
      %v1881 = vpop.f32.mrb[0].mxu0
      %v1882 = vadd.f32 %v1721, %v1881
      %v1883 = vpop.f32.mrb[0].mxu0
      %v1884 = vpop.f32.mrb[0].mxu0
      %v1885 = vadd.f32 %v1724, %v1884
      %v1886 = vpop.f32.mrb[0].mxu0
      %1887 = vmatprep.mubr.bf16.mxu0 0
      %1888 = vmatmul.mubr.bf16.gmra.mrb[0].mxu0 %v1339
      %v1889 = vpop.f32.mrb[0].mxu0
      %v1890 = vadd.f32 %v1729, %v1889
      %v1891 = vpop.f32.mrb[0].mxu0
      %v1892 = vpop.f32.mrb[0].mxu0
      %v1893 = vadd.f32 %v1732, %v1892
      %v1894 = vpop.f32.mrb[0].mxu0
      %1895 = vmatprep.mubr.bf16.mxu0 0
      %1896 = vmatmul.mubr.bf16.gmra.mrb[0].mxu0 %v1361
      %v1897 = vpop.f32.mrb[0].mxu0
      %v1898 = vadd.f32 %v1737, %v1897
      %v1899 = vpop.f32.mrb[0].mxu0
      %v1900 = vpop.f32.mrb[0].mxu0
      %v1901 = vadd.f32 %v1740, %v1900
      %v1902 = vpop.f32.mrb[0].mxu0
      %1903 = vmatprep.mubr.bf16.mxu0 0
      %1904 = vmatmul.mubr.bf16.gmra.mrb[0].mxu0 %v1383
      %v1905 = vpop.f32.mrb[0].mxu0
      %v1906 = vadd.f32 %v1745, %v1905
      %v1907 = vpop.f32.mrb[0].mxu0
      %v1908 = vpop.f32.mrb[0].mxu0
      %v1909 = vadd.f32 %v1748, %v1908
      %v1910 = vpop.f32.mrb[0].mxu0
      %1911 = vmatprep.mubr.bf16.mxu0 0
      %1912 = vmatmul.mubr.bf16.gmra.mrb[0].mxu0 %v1405
      %v1913 = vpop.f32.mrb[0].mxu0
      %v1914 = vadd.f32 %v1753, %v1913
      %v1915 = vpop.f32.mrb[0].mxu0
      %v1916 = vpop.f32.mrb[0].mxu0
      %v1917 = vadd.f32 %v1756, %v1916
      %v1918 = vpop.f32.mrb[0].mxu0
      %1919 = vdwg.mxu0
      %1920 = vst [vmem:[#allocation2] sm:$0xff] %v1794
      %1921 = vst [vmem:[#allocation2 + $0x8] sm:$0xff] %v1797
      %1922 = vst [vmem:[#allocation2 + $0x10] sm:$0xff] %v1802
      %1923 = vst [vmem:[#allocation2 + $0x18] sm:$0xff] %v1805
      %1924 = vst [vmem:[#allocation2 + $0x20] sm:$0xff] %v1810
      %1925 = vst [vmem:[#allocation2 + $0x28] sm:$0xff] %v1813
      %1926 = vst [vmem:[#allocation2 + $0x30] sm:$0xff] %v1818
      %1927 = vst [vmem:[#allocation2 + $0x38] sm:$0xff] %v1821
      %1928 = vst [vmem:[#allocation2 + $0x40] sm:$0xff] %v1826
      %1929 = vst [vmem:[#allocation2 + $0x48] sm:$0xff] %v1829
      %1930 = vst [vmem:[#allocation2 + $0x50] sm:$0xff] %v1834
      %1931 = vst [vmem:[#allocation2 + $0x58] sm:$0xff] %v1837
      %1932 = vst [vmem:[#allocation2 + $0x60] sm:$0xff] %v1842
      %1933 = vst [vmem:[#allocation2 + $0x68] sm:$0xff] %v1845
      %1934 = vst [vmem:[#allocation2 + $0x70] sm:$0xff] %v1850
      %1935 = vst [vmem:[#allocation2 + $0x78] sm:$0xff] %v1853
      %1936 = vst [vmem:[#allocation2 + $0x80] sm:$0xff] %v1858
      %1937 = vst [vmem:[#allocation2 + $0x88] sm:$0xff] %v1861
      %1938 = vst [vmem:[#allocation2 + $0x90] sm:$0xff] %v1866
      %1939 = vst [vmem:[#allocation2 + $0x98] sm:$0xff] %v1869
      %1940 = vst [vmem:[#allocation2 + $0xa0] sm:$0xff] %v1874
      %1941 = vst [vmem:[#allocation2 + $0xa8] sm:$0xff] %v1877
      %1942 = vst [vmem:[#allocation2 + $0xb0] sm:$0xff] %v1882
      %1943 = vst [vmem:[#allocation2 + $0xb8] sm:$0xff] %v1885
      %1944 = vst [vmem:[#allocation2 + $0xc0] sm:$0xff] %v1890
      %1945 = vst [vmem:[#allocation2 + $0xc8] sm:$0xff] %v1893
      %1946 = vst [vmem:[#allocation2 + $0xd0] sm:$0xff] %v1898
      %1947 = vst [vmem:[#allocation2 + $0xd8] sm:$0xff] %v1901
      %1948 = vst [vmem:[#allocation2 + $0xe0] sm:$0xff] %v1906
      %1949 = vst [vmem:[#allocation2 + $0xe8] sm:$0xff] %v1909
      %1950 = vst [vmem:[#allocation2 + $0xf0] sm:$0xff] %v1914
      %1951 = vst [vmem:[#allocation2 + $0xf8] sm:$0xff] %v1917
      %v1953 = vshll.u32 %v805, 16
      %v1955 = vrot.slane %v1953, 1
      %v1956 = vsel %vm816, %v951, %v1955
      %v1957 = vshrl.u32 %v805, 16
      %v1959 = vor.u32 %v1957, %v1955
      %v1960 = vrot.slane %v805, 1
      %v1961 = vsel %vm952, %v984, %v1960
      %v1962 = vrot.slane %v814, 1
      %v1963 = vsel %vm952, %v1960, %v1962
      %s1964 = scalar_lea.vmem %s652, 192
      %v1965 = vld [vmem:[%s1964] sm:$0xf]
      %v1966 = vld [vmem:[%s1964 + $0x4] sm:$0xf]
      %v1967 = vld [vmem:[%s1964 + $0x8] sm:$0xf]
      %v1968 = vld [vmem:[%s1964 + $0xc] sm:$0xf]
      %v1969 = vld [vmem:[%s1964 + $0x10] sm:$0xf]
      %v1970 = vld [vmem:[%s1964 + $0x14] sm:$0xf]
      %v1971 = vld [vmem:[%s1964 + $0x18] sm:$0xf]
      %v1972 = vld [vmem:[%s1964 + $0x1c] sm:$0xf]
      %v1973 = vld [vmem:[%s1964 + $0x20] sm:$0xf]
      %v1974 = vld [vmem:[%s1964 + $0x24] sm:$0xf]
      %v1975 = vld [vmem:[%s1964 + $0x28] sm:$0xf]
      %v1976 = vld [vmem:[%s1964 + $0x2c] sm:$0xf]
      %v1977 = vld [vmem:[%s1964 + $0x30] sm:$0xf]
      %v1978 = vld [vmem:[%s1964 + $0x34] sm:$0xf]
      %v1979 = vld [vmem:[%s1964 + $0x38] sm:$0xf]
      %v1980 = vld [vmem:[%s1964 + $0x3c] sm:$0xf]
      %v1981 = vld [vmem:[%s1964 + $0x40] sm:$0xf]
      %v1982 = vld [vmem:[%s1964 + $0x44] sm:$0xf]
      %v1983 = vld [vmem:[%s1964 + $0x48] sm:$0xf]
      %v1984 = vld [vmem:[%s1964 + $0x4c] sm:$0xf]
      %v1985 = vld [vmem:[%s1964 + $0x50] sm:$0xf]
      %v1986 = vld [vmem:[%s1964 + $0x54] sm:$0xf]
      %v1987 = vld [vmem:[%s1964 + $0x58] sm:$0xf]
      %v1988 = vld [vmem:[%s1964 + $0x5c] sm:$0xf]
      %v1989 = vld [vmem:[%s1964 + $0x60] sm:$0xf]
      %v1990 = vld [vmem:[%s1964 + $0x64] sm:$0xf]
      %v1991 = vld [vmem:[%s1964 + $0x68] sm:$0xf]
      %v1992 = vld [vmem:[%s1964 + $0x6c] sm:$0xf]
      %v1993 = vld [vmem:[%s1964 + $0x70] sm:$0xf]
      %v1994 = vld [vmem:[%s1964 + $0x74] sm:$0xf]
      %v1995 = vld [vmem:[%s1964 + $0x78] sm:$0xf]
      %v1996 = vld [vmem:[%s1964 + $0x7c] sm:$0xf]
      %v1997 = vld [vmem:[%s1964 + $0x80] sm:$0xf]
      %v1998 = vld [vmem:[%s1964 + $0x84] sm:$0xf]
      %v1999 = vld [vmem:[%s1964 + $0x88] sm:$0xf]
      %v2000 = vld [vmem:[%s1964 + $0x8c] sm:$0xf]
      %v2001 = vld [vmem:[%s1964 + $0x90] sm:$0xf]
      %v2002 = vld [vmem:[%s1964 + $0x94] sm:$0xf]
      %v2003 = vld [vmem:[%s1964 + $0x98] sm:$0xf]
      %v2004 = vld [vmem:[%s1964 + $0x9c] sm:$0xf]
      %v2005 = vld [vmem:[%s1964 + $0xa0] sm:$0xf]
      %v2006 = vld [vmem:[%s1964 + $0xa4] sm:$0xf]
      %v2007 = vld [vmem:[%s1964 + $0xa8] sm:$0xf]
      %v2008 = vld [vmem:[%s1964 + $0xac] sm:$0xf]
      %v2009 = vld [vmem:[%s1964 + $0xb0] sm:$0xf]
      %v2010 = vld [vmem:[%s1964 + $0xb4] sm:$0xf]
      %v2011 = vld [vmem:[%s1964 + $0xb8] sm:$0xf]
      %v2012 = vld [vmem:[%s1964 + $0xbc] sm:$0xf]
      %vm2013 = vsmask.f32 256
      %v2014 = vrot.slane %v829, 7
      %v2015 = vrot.slane %v837, 7
      %v2016 = vor.u32 %v2015, %v833
      %v2017 = vsel %vm2013, %v2014, %v2016
      %v2019 = vshrl.u32 %v835, 16
      %v2021 = vrot.slane %v2019, 7
      %v2022 = vrot.slane %v1081, 7
      %v2023 = vor.u32 %v2022, %v1084
      %v2024 = vsel %vm2013, %v2021, %v2023
      %v2026 = vshrl.u32 %v956, 16
      %v2028 = vrot.slane %v2026, 7
      %v2029 = vrot.slane %v1090, 7
      %v2030 = vor.u32 %v2029, %v1093
      %v2031 = vsel %vm2013, %v2028, %v2030
      %v2032 = vrot.slane %v845, 7
      %v2033 = vor.u32 %v2032, %v841
      %v2034 = vsel %vm2013, %v2015, %v2033
      %v2035 = vrot.slane %v1103, 7
      %v2036 = vor.u32 %v2035, %v1106
      %v2037 = vsel %vm2013, %v2022, %v2036
      %v2038 = vrot.slane %v1112, 7
      %v2039 = vor.u32 %v2038, %v1115
      %v2040 = vsel %vm2013, %v2029, %v2039
      %v2041 = vrot.slane %v853, 7
      %v2042 = vor.u32 %v2041, %v849
      %v2043 = vsel %vm2013, %v2032, %v2042
      %v2044 = vrot.slane %v1125, 7
      %v2045 = vor.u32 %v2044, %v1128
      %v2046 = vsel %vm2013, %v2035, %v2045
      %v2047 = vrot.slane %v1134, 7
      %v2048 = vor.u32 %v2047, %v1137
      %v2049 = vsel %vm2013, %v2038, %v2048
      %v2050 = vrot.slane %v861, 7
      %v2051 = vor.u32 %v2050, %v857
      %v2052 = vsel %vm2013, %v2041, %v2051
      %v2053 = vrot.slane %v1147, 7
      %v2054 = vor.u32 %v2053, %v1150
      %v2055 = vsel %vm2013, %v2044, %v2054
      %v2056 = vrot.slane %v1156, 7
      %v2057 = vor.u32 %v2056, %v1159
      %v2058 = vsel %vm2013, %v2047, %v2057
      %v2059 = vrot.slane %v869, 7
      %v2060 = vor.u32 %v2059, %v865
      %v2061 = vsel %vm2013, %v2050, %v2060
      %v2062 = vrot.slane %v1169, 7
      %v2063 = vor.u32 %v2062, %v1172
      %v2064 = vsel %vm2013, %v2053, %v2063
      %v2065 = vrot.slane %v1178, 7
      %v2066 = vor.u32 %v2065, %v1181
      %v2067 = vsel %vm2013, %v2056, %v2066
      %v2068 = vrot.slane %v877, 7
      %v2069 = vor.u32 %v2068, %v873
      %v2070 = vsel %vm2013, %v2059, %v2069
      %v2071 = vrot.slane %v1191, 7
      %v2072 = vor.u32 %v2071, %v1194
      %v2073 = vsel %vm2013, %v2062, %v2072
      %v2074 = vrot.slane %v1200, 7
      %v2075 = vor.u32 %v2074, %v1203
      %v2076 = vsel %vm2013, %v2065, %v2075
      %v2077 = vrot.slane %v885, 7
      %v2078 = vor.u32 %v2077, %v881
      %v2079 = vsel %vm2013, %v2068, %v2078
      %v2080 = vrot.slane %v1213, 7
      %v2081 = vor.u32 %v2080, %v1216
      %v2082 = vsel %vm2013, %v2071, %v2081
      %v2083 = vrot.slane %v1222, 7
      %v2084 = vor.u32 %v2083, %v1225
      %v2085 = vsel %vm2013, %v2074, %v2084
      %v2086 = vrot.slane %v893, 7
      %v2087 = vor.u32 %v2086, %v889
      %v2088 = vsel %vm2013, %v2077, %v2087
      %v2089 = vrot.slane %v1235, 7
      %v2090 = vor.u32 %v2089, %v1238
      %v2091 = vsel %vm2013, %v2080, %v2090
      %v2092 = vrot.slane %v1244, 7
      %v2093 = vor.u32 %v2092, %v1247
      %v2094 = vsel %vm2013, %v2083, %v2093
      %v2095 = vrot.slane %v901, 7
      %v2096 = vor.u32 %v2095, %v897
      %v2097 = vsel %vm2013, %v2086, %v2096
      %v2098 = vrot.slane %v1257, 7
      %v2099 = vor.u32 %v2098, %v1260
      %v2100 = vsel %vm2013, %v2089, %v2099
      %v2101 = vrot.slane %v1266, 7
      %v2102 = vor.u32 %v2101, %v1269
      %v2103 = vsel %vm2013, %v2092, %v2102
      %v2104 = vrot.slane %v909, 7
      %v2105 = vor.u32 %v2104, %v905
      %v2106 = vsel %vm2013, %v2095, %v2105
      %v2107 = vrot.slane %v1279, 7
      %v2108 = vor.u32 %v2107, %v1282
      %v2109 = vsel %vm2013, %v2098, %v2108
      %v2110 = vrot.slane %v1288, 7
      %v2111 = vor.u32 %v2110, %v1291
      %v2112 = vsel %vm2013, %v2101, %v2111
      %v2113 = vrot.slane %v917, 7
      %v2114 = vor.u32 %v2113, %v913
      %v2115 = vsel %vm2013, %v2104, %v2114
      %v2116 = vrot.slane %v1301, 7
      %v2117 = vor.u32 %v2116, %v1304
      %v2118 = vsel %vm2013, %v2107, %v2117
      %v2119 = vrot.slane %v1310, 7
      %v2120 = vor.u32 %v2119, %v1313
      %v2121 = vsel %vm2013, %v2110, %v2120
      %v2122 = vrot.slane %v925, 7
      %v2123 = vor.u32 %v2122, %v921
      %v2124 = vsel %vm2013, %v2113, %v2123
      %v2125 = vrot.slane %v1323, 7
      %v2126 = vor.u32 %v2125, %v1326
      %v2127 = vsel %vm2013, %v2116, %v2126
      %v2128 = vrot.slane %v1332, 7
      %v2129 = vor.u32 %v2128, %v1335
      %v2130 = vsel %vm2013, %v2119, %v2129
      %v2131 = vrot.slane %v933, 7
      %v2132 = vor.u32 %v2131, %v929
      %v2133 = vsel %vm2013, %v2122, %v2132
      %v2134 = vrot.slane %v1345, 7
      %v2135 = vor.u32 %v2134, %v1348
      %v2136 = vsel %vm2013, %v2125, %v2135
      %v2137 = vrot.slane %v1354, 7
      %v2138 = vor.u32 %v2137, %v1357
      %v2139 = vsel %vm2013, %v2128, %v2138
      %v2140 = vrot.slane %v941, 7
      %v2141 = vor.u32 %v2140, %v937
      %v2142 = vsel %vm2013, %v2131, %v2141
      %v2143 = vrot.slane %v1367, 7
      %v2144 = vor.u32 %v2143, %v1370
      %v2145 = vsel %vm2013, %v2134, %v2144
      %v2146 = vrot.slane %v1376, 7
      %v2147 = vor.u32 %v2146, %v1379
      %v2148 = vsel %vm2013, %v2137, %v2147
      %v2149 = vrot.slane %v949, 7
      %v2150 = vor.u32 %v2149, %v945
      %v2151 = vsel %vm2013, %v2140, %v2150
      %v2153 = vshrl.u32 %v1956, 16
      %v2155 = vrot.slane %v2153, 7
      %v2156 = vshll.u32 %v1956, 16
      %v2158 = vor.u32 %v2155, %v2156
      %v2159 = vsel %vm2013, %v2143, %v2158
      %v2161 = vshrl.u32 %v1961, 16
      %v2163 = vrot.slane %v2161, 7
      %v2164 = vshll.u32 %v1961, 16
      %v2166 = vor.u32 %v2163, %v2164
      %v2167 = vsel %vm2013, %v2146, %v2166
      %v2168 = vrot.slane %v1957, 7
      %v2169 = vor.u32 %v2168, %v1953
      %v2170 = vsel %vm2013, %v2149, %v2169
      %v2172 = vshrl.u32 %v1959, 16
      %v2174 = vrot.slane %v2172, 7
      %v2175 = vshll.u32 %v1959, 16
      %v2177 = vor.u32 %v2174, %v2175
      %v2178 = vsel %vm2013, %v2155, %v2177
      %v2180 = vshrl.u32 %v1963, 16
      %v2182 = vrot.slane %v2180, 7
      %v2183 = vshll.u32 %v1963, 16
      %v2185 = vor.u32 %v2182, %v2183
      %v2186 = vsel %vm2013, %v2163, %v2185
      %v2283 = vunpack.c.l.b16 %v1965
      %v2284 = vunpack.c.l.b16 %v1966
      %v2285 = vunpack.c.l.b16 %v1967
      %v2286 = vunpack.c.l.b16 %v1968
      %v2287 = vunpack.c.l.b16 %v1969
      %v2288 = vunpack.c.l.b16 %v1970
      %v2289 = vunpack.c.l.b16 %v1971
      %v2290 = vunpack.c.l.b16 %v1972
      %v2291 = vunpack.c.l.b16 %v1973
      %v2292 = vunpack.c.l.b16 %v1974
      %v2293 = vunpack.c.l.b16 %v1975
      %v2294 = vunpack.c.l.b16 %v1976
      %v2295 = vunpack.c.l.b16 %v1977
      %v2296 = vunpack.c.l.b16 %v1978
      %v2297 = vunpack.c.l.b16 %v1979
      %v2298 = vunpack.c.l.b16 %v1980
      %v2299 = vunpack.c.l.b16 %v1981
      %v2300 = vunpack.c.l.b16 %v1982
      %v2301 = vunpack.c.l.b16 %v1983
      %v2302 = vunpack.c.l.b16 %v1984
      %v2303 = vunpack.c.l.b16 %v1985
      %v2304 = vunpack.c.l.b16 %v1986
      %v2305 = vunpack.c.l.b16 %v1987
      %v2306 = vunpack.c.l.b16 %v1988
      %v2307 = vunpack.c.l.b16 %v1989
      %v2308 = vunpack.c.l.b16 %v1990
      %v2309 = vunpack.c.l.b16 %v1991
      %v2310 = vunpack.c.l.b16 %v1992
      %v2311 = vunpack.c.l.b16 %v1993
      %v2312 = vunpack.c.l.b16 %v1994
      %v2313 = vunpack.c.l.b16 %v1995
      %v2314 = vunpack.c.l.b16 %v1996
      %v2315 = vunpack.c.l.b16 %v1997
      %v2316 = vunpack.c.l.b16 %v1998
      %v2317 = vunpack.c.l.b16 %v1999
      %v2318 = vunpack.c.l.b16 %v2000
      %v2319 = vunpack.c.l.b16 %v2001
      %v2320 = vunpack.c.l.b16 %v2002
      %v2321 = vunpack.c.l.b16 %v2003
      %v2322 = vunpack.c.l.b16 %v2004
      %v2323 = vunpack.c.l.b16 %v2005
      %v2324 = vunpack.c.l.b16 %v2006
      %v2325 = vunpack.c.l.b16 %v2007
      %v2326 = vunpack.c.l.b16 %v2008
      %v2327 = vunpack.c.l.b16 %v2009
      %v2328 = vunpack.c.l.b16 %v2010
      %v2329 = vunpack.c.l.b16 %v2011
      %v2330 = vunpack.c.l.b16 %v2012
      %v2331 = vpack.c.b16 %v2284, %v2283
      %v2332 = vpack.c.b16 %v2286, %v2285
      %v2333 = vpack.c.b16 %v2288, %v2287
      %v2334 = vpack.c.b16 %v2290, %v2289
      %v2335 = vpack.c.b16 %v2292, %v2291
      %v2336 = vpack.c.b16 %v2294, %v2293
      %v2337 = vpack.c.b16 %v2296, %v2295
      %v2338 = vpack.c.b16 %v2298, %v2297
      %v2339 = vpack.c.b16 %v2300, %v2299
      %v2340 = vpack.c.b16 %v2302, %v2301
      %v2341 = vpack.c.b16 %v2304, %v2303
      %v2342 = vpack.c.b16 %v2306, %v2305
      %v2343 = vpack.c.b16 %v2308, %v2307
      %v2344 = vpack.c.b16 %v2310, %v2309
      %v2345 = vpack.c.b16 %v2312, %v2311
      %v2346 = vpack.c.b16 %v2314, %v2313
      %v2347 = vpack.c.b16 %v2316, %v2315
      %v2348 = vpack.c.b16 %v2318, %v2317
      %v2349 = vpack.c.b16 %v2320, %v2319
      %v2350 = vpack.c.b16 %v2322, %v2321
      %v2351 = vpack.c.b16 %v2324, %v2323
      %v2352 = vpack.c.b16 %v2326, %v2325
      %v2353 = vpack.c.b16 %v2328, %v2327
      %v2354 = vpack.c.b16 %v2330, %v2329
      %2379 = vmatprep.subr.bf16.mxu0 0
      %2380 = vmatpush1.bf16.msra.mxu0 %v2331
      %2381 = vmatprep.subr.bf16.mxu0 0
      %2382 = vmatpush1.bf16.msra.mxu0 %v2332
      %2383 = vmatprep.subr.bf16.mxu0 0
      %2384 = vmatpush1.bf16.msra.mxu0 %v2333
      %2385 = vmatprep.subr.bf16.mxu0 0
      %2386 = vmatpush1.bf16.msra.mxu0 %v2334
      %2387 = vmatprep.subr.bf16.mxu0 0
      %2388 = vmatpush1.bf16.msra.mxu0 %v2335
      %2389 = vmatprep.subr.bf16.mxu0 0
      %2390 = vmatpush1.bf16.msra.mxu0 %v2336
      %2391 = vmatprep.subr.bf16.mxu0 0
      %2392 = vmatpush1.bf16.msra.mxu0 %v2337
      %2393 = vmatprep.subr.bf16.mxu0 0
      %2394 = vmatpush1.bf16.msra.mxu0 %v2338
      %2395 = vmatprep.subr.bf16.mxu0 0
      %2396 = vmatpush1.bf16.msra.mxu0 %v2339
      %2397 = vmatprep.subr.bf16.mxu0 0
      %2398 = vmatpush1.bf16.msra.mxu0 %v2340
      %2399 = vmatprep.subr.bf16.mxu0 0
      %2400 = vmatpush1.bf16.msra.mxu0 %v2341
      %2401 = vmatprep.subr.bf16.mxu0 0
      %2402 = vmatpush1.bf16.msra.mxu0 %v2342
      %2403 = vmatprep.subr.bf16.mxu0 0
      %2404 = vmatpush1.bf16.msra.mxu0 %v2343
      %2405 = vmatprep.subr.bf16.mxu0 0
      %2406 = vmatpush1.bf16.msra.mxu0 %v2344
      %2407 = vmatprep.subr.bf16.mxu0 0
      %2408 = vmatpush1.bf16.msra.mxu0 %v2345
      %2409 = vmatprep.subr.bf16.mxu0 0
      %2410 = vmatpush1.bf16.msra.mxu0 %v2346
      %2411 = vmatprep.mubr.bf16.mxu0 %v2024
      %2412 = vmatmul.mubr.bf16.gmra.mrb[0].mxu0 %v2017
      %v2413 = vpop.f32.mrb[0].mxu0
      %v2414 = vadd.f32 0.0, %v2413
      %v2415 = vpop.f32.mrb[0].mxu0
      %v2416 = vpop.f32.mrb[0].mxu0
      %v2417 = vadd.f32 0.0, %v2416
      %v2418 = vpop.f32.mrb[0].mxu0
      %2419 = vmatprep.mubr.bf16.mxu0 %v2037
      %2420 = vmatmul.mubr.bf16.gmra.mrb[0].mxu0 %v2034
      %v2421 = vpop.f32.mrb[0].mxu0
      %v2422 = vadd.f32 0.0, %v2421
      %v2423 = vpop.f32.mrb[0].mxu0
      %v2424 = vpop.f32.mrb[0].mxu0
      %v2425 = vadd.f32 0.0, %v2424
      %v2426 = vpop.f32.mrb[0].mxu0
      %2427 = vmatprep.mubr.bf16.mxu0 %v2046
      %2428 = vmatmul.mubr.bf16.gmra.mrb[0].mxu0 %v2043
      %v2429 = vpop.f32.mrb[0].mxu0
      %v2430 = vadd.f32 0.0, %v2429
      %v2431 = vpop.f32.mrb[0].mxu0
      %v2432 = vpop.f32.mrb[0].mxu0
      %v2433 = vadd.f32 0.0, %v2432
      %v2434 = vpop.f32.mrb[0].mxu0
      %2435 = vmatprep.mubr.bf16.mxu0 %v2055
      %2436 = vmatmul.mubr.bf16.gmra.mrb[0].mxu0 %v2052
      %v2437 = vpop.f32.mrb[0].mxu0
      %v2438 = vadd.f32 0.0, %v2437
      %v2439 = vpop.f32.mrb[0].mxu0
      %v2440 = vpop.f32.mrb[0].mxu0
      %v2441 = vadd.f32 0.0, %v2440
      %v2442 = vpop.f32.mrb[0].mxu0
      %2443 = vmatprep.mubr.bf16.mxu0 %v2064
      %2444 = vmatmul.mubr.bf16.gmra.mrb[0].mxu0 %v2061
      %v2445 = vpop.f32.mrb[0].mxu0
      %v2446 = vadd.f32 0.0, %v2445
      %v2447 = vpop.f32.mrb[0].mxu0
      %v2448 = vpop.f32.mrb[0].mxu0
      %v2449 = vadd.f32 0.0, %v2448
      %v2450 = vpop.f32.mrb[0].mxu0
      %2451 = vmatprep.mubr.bf16.mxu0 %v2073
      %2452 = vmatmul.mubr.bf16.gmra.mrb[0].mxu0 %v2070
      %v2453 = vpop.f32.mrb[0].mxu0
      %v2454 = vadd.f32 0.0, %v2453
      %v2455 = vpop.f32.mrb[0].mxu0
      %v2456 = vpop.f32.mrb[0].mxu0
      %v2457 = vadd.f32 0.0, %v2456
      %v2458 = vpop.f32.mrb[0].mxu0
      %2459 = vmatprep.mubr.bf16.mxu0 %v2082
      %2460 = vmatmul.mubr.bf16.gmra.mrb[0].mxu0 %v2079
      %v2461 = vpop.f32.mrb[0].mxu0
      %v2462 = vadd.f32 0.0, %v2461
      %v2463 = vpop.f32.mrb[0].mxu0
      %v2464 = vpop.f32.mrb[0].mxu0
      %v2465 = vadd.f32 0.0, %v2464
      %v2466 = vpop.f32.mrb[0].mxu0
      %2467 = vmatprep.mubr.bf16.mxu0 %v2091
      %2468 = vmatmul.mubr.bf16.gmra.mrb[0].mxu0 %v2088
      %v2469 = vpop.f32.mrb[0].mxu0
      %v2470 = vadd.f32 0.0, %v2469
      %v2471 = vpop.f32.mrb[0].mxu0
      %v2472 = vpop.f32.mrb[0].mxu0
      %v2473 = vadd.f32 0.0, %v2472
      %v2474 = vpop.f32.mrb[0].mxu0
      %2475 = vmatprep.mubr.bf16.mxu0 %v2100
      %2476 = vmatmul.mubr.bf16.gmra.mrb[0].mxu0 %v2097
      %v2477 = vpop.f32.mrb[0].mxu0
      %v2478 = vadd.f32 0.0, %v2477
      %v2479 = vpop.f32.mrb[0].mxu0
      %v2480 = vpop.f32.mrb[0].mxu0
      %v2481 = vadd.f32 0.0, %v2480
      %v2482 = vpop.f32.mrb[0].mxu0
      %2483 = vmatprep.mubr.bf16.mxu0 %v2109
      %2484 = vmatmul.mubr.bf16.gmra.mrb[0].mxu0 %v2106
      %v2485 = vpop.f32.mrb[0].mxu0
      %v2486 = vadd.f32 0.0, %v2485
      %v2487 = vpop.f32.mrb[0].mxu0
      %v2488 = vpop.f32.mrb[0].mxu0
      %v2489 = vadd.f32 0.0, %v2488
      %v2490 = vpop.f32.mrb[0].mxu0
      %2491 = vmatprep.mubr.bf16.mxu0 %v2118
      %2492 = vmatmul.mubr.bf16.gmra.mrb[0].mxu0 %v2115
      %v2493 = vpop.f32.mrb[0].mxu0
      %v2494 = vadd.f32 0.0, %v2493
      %v2495 = vpop.f32.mrb[0].mxu0
      %v2496 = vpop.f32.mrb[0].mxu0
      %v2497 = vadd.f32 0.0, %v2496
      %v2498 = vpop.f32.mrb[0].mxu0
      %2499 = vmatprep.mubr.bf16.mxu0 %v2127
      %2500 = vmatmul.mubr.bf16.gmra.mrb[0].mxu0 %v2124
      %v2501 = vpop.f32.mrb[0].mxu0
      %v2502 = vadd.f32 0.0, %v2501
      %v2503 = vpop.f32.mrb[0].mxu0
      %v2504 = vpop.f32.mrb[0].mxu0
      %v2505 = vadd.f32 0.0, %v2504
      %v2506 = vpop.f32.mrb[0].mxu0
      %2507 = vmatprep.mubr.bf16.mxu0 %v2136
      %2508 = vmatmul.mubr.bf16.gmra.mrb[0].mxu0 %v2133
      %v2509 = vpop.f32.mrb[0].mxu0
      %v2510 = vadd.f32 0.0, %v2509
      %v2511 = vpop.f32.mrb[0].mxu0
      %v2512 = vpop.f32.mrb[0].mxu0
      %v2513 = vadd.f32 0.0, %v2512
      %v2514 = vpop.f32.mrb[0].mxu0
      %2515 = vmatprep.mubr.bf16.mxu0 %v2145
      %2516 = vmatmul.mubr.bf16.gmra.mrb[0].mxu0 %v2142
      %v2517 = vpop.f32.mrb[0].mxu0
      %v2518 = vadd.f32 0.0, %v2517
      %v2519 = vpop.f32.mrb[0].mxu0
      %v2520 = vpop.f32.mrb[0].mxu0
      %v2521 = vadd.f32 0.0, %v2520
      %v2522 = vpop.f32.mrb[0].mxu0
      %2523 = vmatprep.mubr.bf16.mxu0 %v2159
      %2524 = vmatmul.mubr.bf16.gmra.mrb[0].mxu0 %v2151
      %v2525 = vpop.f32.mrb[0].mxu0
      %v2526 = vadd.f32 0.0, %v2525
      %v2527 = vpop.f32.mrb[0].mxu0
      %v2528 = vpop.f32.mrb[0].mxu0
      %v2529 = vadd.f32 0.0, %v2528
      %v2530 = vpop.f32.mrb[0].mxu0
      %2531 = vmatprep.mubr.bf16.mxu0 %v2178
      %2532 = vmatmul.mubr.bf16.gmra.mrb[0].mxu0 %v2170
      %v2533 = vpop.f32.mrb[0].mxu0
      %v2534 = vadd.f32 0.0, %v2533
      %v2535 = vpop.f32.mrb[0].mxu0
      %v2536 = vpop.f32.mrb[0].mxu0
      %v2537 = vadd.f32 0.0, %v2536
      %v2538 = vpop.f32.mrb[0].mxu0
      %2539 = vdwg.mxu0
      %2540 = vmatprep.subr.bf16.mxu0 0
      %2541 = vmatpush1.bf16.msra.mxu0 %v2347
      %2542 = vmatprep.subr.bf16.mxu0 0
      %2543 = vmatpush1.bf16.msra.mxu0 %v2348
      %2544 = vmatprep.subr.bf16.mxu0 0
      %2545 = vmatpush1.bf16.msra.mxu0 %v2349
      %2546 = vmatprep.subr.bf16.mxu0 0
      %2547 = vmatpush1.bf16.msra.mxu0 %v2350
      %2548 = vmatprep.subr.bf16.mxu0 0
      %2549 = vmatpush1.bf16.msra.mxu0 %v2351
      %2550 = vmatprep.subr.bf16.mxu0 0
      %2551 = vmatpush1.bf16.msra.mxu0 %v2352
      %2552 = vmatprep.subr.bf16.mxu0 0
      %2553 = vmatpush1.bf16.msra.mxu0 %v2353
      %2554 = vmatprep.subr.bf16.mxu0 0
      %2555 = vmatpush1.bf16.msra.mxu0 %v2354
      %2556 = vmatprep.subr.bf16.mxu0 0
      %2557 = vmatpush1.bf16.msra.mxu0 0
      %2558 = vmatprep.subr.bf16.mxu0 0
      %2559 = vmatpush1.bf16.msra.mxu0 0
      %2560 = vmatprep.subr.bf16.mxu0 0
      %2561 = vmatpush1.bf16.msra.mxu0 0
      %2562 = vmatprep.subr.bf16.mxu0 0
      %2563 = vmatpush1.bf16.msra.mxu0 0
      %2564 = vmatprep.subr.bf16.mxu0 0
      %2565 = vmatpush1.bf16.msra.mxu0 0
      %2566 = vmatprep.subr.bf16.mxu0 0
      %2567 = vmatpush1.bf16.msra.mxu0 0
      %2568 = vmatprep.subr.bf16.mxu0 0
      %2569 = vmatpush1.bf16.msra.mxu0 0
      %2570 = vmatprep.subr.bf16.mxu0 0
      %2571 = vmatpush1.bf16.msra.mxu0 0
      %2572 = vmatprep.mubr.bf16.mxu0 0
      %2573 = vmatmul.mubr.bf16.gmra.mrb[0].mxu0 %v2031
      %v2574 = vpop.f32.mrb[0].mxu0
      %v2575 = vadd.f32 %v2414, %v2574
      %v2576 = vpop.f32.mrb[0].mxu0
      %v2577 = vpop.f32.mrb[0].mxu0
      %v2578 = vadd.f32 %v2417, %v2577
      %v2579 = vpop.f32.mrb[0].mxu0
      %2580 = vmatprep.mubr.bf16.mxu0 0
      %2581 = vmatmul.mubr.bf16.gmra.mrb[0].mxu0 %v2040
      %v2582 = vpop.f32.mrb[0].mxu0
      %v2583 = vadd.f32 %v2422, %v2582
      %v2584 = vpop.f32.mrb[0].mxu0
      %v2585 = vpop.f32.mrb[0].mxu0
      %v2586 = vadd.f32 %v2425, %v2585
      %v2587 = vpop.f32.mrb[0].mxu0
      %2588 = vmatprep.mubr.bf16.mxu0 0
      %2589 = vmatmul.mubr.bf16.gmra.mrb[0].mxu0 %v2049
      %v2590 = vpop.f32.mrb[0].mxu0
      %v2591 = vadd.f32 %v2430, %v2590
      %v2592 = vpop.f32.mrb[0].mxu0
      %v2593 = vpop.f32.mrb[0].mxu0
      %v2594 = vadd.f32 %v2433, %v2593
      %v2595 = vpop.f32.mrb[0].mxu0
      %2596 = vmatprep.mubr.bf16.mxu0 0
      %2597 = vmatmul.mubr.bf16.gmra.mrb[0].mxu0 %v2058
      %v2598 = vpop.f32.mrb[0].mxu0
      %v2599 = vadd.f32 %v2438, %v2598
      %v2600 = vpop.f32.mrb[0].mxu0
      %v2601 = vpop.f32.mrb[0].mxu0
      %v2602 = vadd.f32 %v2441, %v2601
      %v2603 = vpop.f32.mrb[0].mxu0
      %2604 = vmatprep.mubr.bf16.mxu0 0
      %2605 = vmatmul.mubr.bf16.gmra.mrb[0].mxu0 %v2067
      %v2606 = vpop.f32.mrb[0].mxu0
      %v2607 = vadd.f32 %v2446, %v2606
      %v2608 = vpop.f32.mrb[0].mxu0
      %v2609 = vpop.f32.mrb[0].mxu0
      %v2610 = vadd.f32 %v2449, %v2609
      %v2611 = vpop.f32.mrb[0].mxu0
      %2612 = vmatprep.mubr.bf16.mxu0 0
      %2613 = vmatmul.mubr.bf16.gmra.mrb[0].mxu0 %v2076
      %v2614 = vpop.f32.mrb[0].mxu0
      %v2615 = vadd.f32 %v2454, %v2614
      %v2616 = vpop.f32.mrb[0].mxu0
      %v2617 = vpop.f32.mrb[0].mxu0
      %v2618 = vadd.f32 %v2457, %v2617
      %v2619 = vpop.f32.mrb[0].mxu0
      %2620 = vmatprep.mubr.bf16.mxu0 0
      %2621 = vmatmul.mubr.bf16.gmra.mrb[0].mxu0 %v2085
      %v2622 = vpop.f32.mrb[0].mxu0
      %v2623 = vadd.f32 %v2462, %v2622
      %v2624 = vpop.f32.mrb[0].mxu0
      %v2625 = vpop.f32.mrb[0].mxu0
      %v2626 = vadd.f32 %v2465, %v2625
      %v2627 = vpop.f32.mrb[0].mxu0
      %2628 = vmatprep.mubr.bf16.mxu0 0
      %2629 = vmatmul.mubr.bf16.gmra.mrb[0].mxu0 %v2094
      %v2630 = vpop.f32.mrb[0].mxu0
      %v2631 = vadd.f32 %v2470, %v2630
      %v2632 = vpop.f32.mrb[0].mxu0
      %v2633 = vpop.f32.mrb[0].mxu0
      %v2634 = vadd.f32 %v2473, %v2633
      %v2635 = vpop.f32.mrb[0].mxu0
      %2636 = vmatprep.mubr.bf16.mxu0 0
      %2637 = vmatmul.mubr.bf16.gmra.mrb[0].mxu0 %v2103
      %v2638 = vpop.f32.mrb[0].mxu0
      %v2639 = vadd.f32 %v2478, %v2638
      %v2640 = vpop.f32.mrb[0].mxu0
      %v2641 = vpop.f32.mrb[0].mxu0
      %v2642 = vadd.f32 %v2481, %v2641
      %v2643 = vpop.f32.mrb[0].mxu0
      %2644 = vmatprep.mubr.bf16.mxu0 0
      %2645 = vmatmul.mubr.bf16.gmra.mrb[0].mxu0 %v2112
      %v2646 = vpop.f32.mrb[0].mxu0
      %v2647 = vadd.f32 %v2486, %v2646
      %v2648 = vpop.f32.mrb[0].mxu0
      %v2649 = vpop.f32.mrb[0].mxu0
      %v2650 = vadd.f32 %v2489, %v2649
      %v2651 = vpop.f32.mrb[0].mxu0
      %2652 = vmatprep.mubr.bf16.mxu0 0
      %2653 = vmatmul.mubr.bf16.gmra.mrb[0].mxu0 %v2121
      %v2654 = vpop.f32.mrb[0].mxu0
      %v2655 = vadd.f32 %v2494, %v2654
      %v2656 = vpop.f32.mrb[0].mxu0
      %v2657 = vpop.f32.mrb[0].mxu0
      %v2658 = vadd.f32 %v2497, %v2657
      %v2659 = vpop.f32.mrb[0].mxu0
      %2660 = vmatprep.mubr.bf16.mxu0 0
      %2661 = vmatmul.mubr.bf16.gmra.mrb[0].mxu0 %v2130
      %v2662 = vpop.f32.mrb[0].mxu0
      %v2663 = vadd.f32 %v2502, %v2662
      %v2664 = vpop.f32.mrb[0].mxu0
      %v2665 = vpop.f32.mrb[0].mxu0
      %v2666 = vadd.f32 %v2505, %v2665
      %v2667 = vpop.f32.mrb[0].mxu0
      %2668 = vmatprep.mubr.bf16.mxu0 0
      %2669 = vmatmul.mubr.bf16.gmra.mrb[0].mxu0 %v2139
      %v2670 = vpop.f32.mrb[0].mxu0
      %v2671 = vadd.f32 %v2510, %v2670
      %v2672 = vpop.f32.mrb[0].mxu0
      %v2673 = vpop.f32.mrb[0].mxu0
      %v2674 = vadd.f32 %v2513, %v2673
      %v2675 = vpop.f32.mrb[0].mxu0
      %2676 = vmatprep.mubr.bf16.mxu0 0
      %2677 = vmatmul.mubr.bf16.gmra.mrb[0].mxu0 %v2148
      %v2678 = vpop.f32.mrb[0].mxu0
      %v2679 = vadd.f32 %v2518, %v2678
      %v2680 = vpop.f32.mrb[0].mxu0
      %v2681 = vpop.f32.mrb[0].mxu0
      %v2682 = vadd.f32 %v2521, %v2681
      %v2683 = vpop.f32.mrb[0].mxu0
      %2684 = vmatprep.mubr.bf16.mxu0 0
      %2685 = vmatmul.mubr.bf16.gmra.mrb[0].mxu0 %v2167
      %v2686 = vpop.f32.mrb[0].mxu0
      %v2687 = vadd.f32 %v2526, %v2686
      %v2688 = vpop.f32.mrb[0].mxu0
      %v2689 = vpop.f32.mrb[0].mxu0
      %v2690 = vadd.f32 %v2529, %v2689
      %v2691 = vpop.f32.mrb[0].mxu0
      %2692 = vmatprep.mubr.bf16.mxu0 0
      %2693 = vmatmul.mubr.bf16.gmra.mrb[0].mxu0 %v2186
      %v2694 = vpop.f32.mrb[0].mxu0
      %v2695 = vadd.f32 %v2534, %v2694
      %v2696 = vpop.f32.mrb[0].mxu0
      %v2697 = vpop.f32.mrb[0].mxu0
      %v2698 = vadd.f32 %v2537, %v2697
      %v2699 = vpop.f32.mrb[0].mxu0
      %2700 = vdwg.mxu0
      %v2701 = vld [vmem:[#allocation2] sm:$0xff]
      %v2702 = vld [vmem:[#allocation2 + $0x8] sm:$0xff]
      %v2703 = vld [vmem:[#allocation2 + $0x10] sm:$0xff]
      %v2704 = vld [vmem:[#allocation2 + $0x18] sm:$0xff]
      %v2705 = vld [vmem:[#allocation2 + $0x20] sm:$0xff]
      %v2706 = vld [vmem:[#allocation2 + $0x28] sm:$0xff]
      %v2707 = vld [vmem:[#allocation2 + $0x30] sm:$0xff]
      %v2708 = vld [vmem:[#allocation2 + $0x38] sm:$0xff]
      %v2709 = vld [vmem:[#allocation2 + $0x40] sm:$0xff]
      %v2710 = vld [vmem:[#allocation2 + $0x48] sm:$0xff]
      %v2711 = vld [vmem:[#allocation2 + $0x50] sm:$0xff]
      %v2712 = vld [vmem:[#allocation2 + $0x58] sm:$0xff]
      %v2713 = vld [vmem:[#allocation2 + $0x60] sm:$0xff]
      %v2714 = vld [vmem:[#allocation2 + $0x68] sm:$0xff]
      %v2715 = vld [vmem:[#allocation2 + $0x70] sm:$0xff]
      %v2716 = vld [vmem:[#allocation2 + $0x78] sm:$0xff]
      %v2717 = vld [vmem:[#allocation2 + $0x80] sm:$0xff]
      %v2718 = vld [vmem:[#allocation2 + $0x88] sm:$0xff]
      %v2719 = vld [vmem:[#allocation2 + $0x90] sm:$0xff]
      %v2720 = vld [vmem:[#allocation2 + $0x98] sm:$0xff]
      %v2721 = vld [vmem:[#allocation2 + $0xa0] sm:$0xff]
      %v2722 = vld [vmem:[#allocation2 + $0xa8] sm:$0xff]
      %v2723 = vld [vmem:[#allocation2 + $0xb0] sm:$0xff]
      %v2724 = vld [vmem:[#allocation2 + $0xb8] sm:$0xff]
      %v2725 = vld [vmem:[#allocation2 + $0xc0] sm:$0xff]
      %v2726 = vld [vmem:[#allocation2 + $0xc8] sm:$0xff]
      %v2727 = vld [vmem:[#allocation2 + $0xd0] sm:$0xff]
      %v2728 = vld [vmem:[#allocation2 + $0xd8] sm:$0xff]
      %v2729 = vld [vmem:[#allocation2 + $0xe0] sm:$0xff]
      %v2730 = vld [vmem:[#allocation2 + $0xe8] sm:$0xff]
      %v2731 = vld [vmem:[#allocation2 + $0xf0] sm:$0xff]
      %v2732 = vld [vmem:[#allocation2 + $0xf8] sm:$0xff]
      %v2733 = vadd.f32 %v2701, %v2575
      %v2734 = vadd.f32 %v2702, %v2578
      %v2735 = vadd.f32 %v2703, %v2583
      %v2736 = vadd.f32 %v2704, %v2586
      %v2737 = vadd.f32 %v2705, %v2591
      %v2738 = vadd.f32 %v2706, %v2594
      %v2739 = vadd.f32 %v2707, %v2599
      %v2740 = vadd.f32 %v2708, %v2602
      %v2741 = vadd.f32 %v2709, %v2607
      %v2742 = vadd.f32 %v2710, %v2610
      %v2743 = vadd.f32 %v2711, %v2615
      %v2744 = vadd.f32 %v2712, %v2618
      %v2745 = vadd.f32 %v2713, %v2623
      %v2746 = vadd.f32 %v2714, %v2626
      %v2747 = vadd.f32 %v2715, %v2631
      %v2748 = vadd.f32 %v2716, %v2634
      %v2749 = vadd.f32 %v2717, %v2639
      %v2750 = vadd.f32 %v2718, %v2642
      %v2751 = vadd.f32 %v2719, %v2647
      %v2752 = vadd.f32 %v2720, %v2650
      %v2753 = vadd.f32 %v2721, %v2655
      %v2754 = vadd.f32 %v2722, %v2658
      %v2755 = vadd.f32 %v2723, %v2663
      %v2756 = vadd.f32 %v2724, %v2666
      %v2757 = vadd.f32 %v2725, %v2671
      %v2758 = vadd.f32 %v2726, %v2674
      %v2759 = vadd.f32 %v2727, %v2679
      %v2760 = vadd.f32 %v2728, %v2682
      %v2761 = vadd.f32 %v2729, %v2687
      %v2762 = vadd.f32 %v2730, %v2690
      %v2763 = vadd.f32 %v2731, %v2695
      %v2764 = vadd.f32 %v2732, %v2698
      %2765 = vst [vmem:[#allocation2] sm:$0xff] %v2733
      %2766 = vst [vmem:[#allocation2 + $0x8] sm:$0xff] %v2734
      %2767 = vst [vmem:[#allocation2 + $0x10] sm:$0xff] %v2735
      %2768 = vst [vmem:[#allocation2 + $0x18] sm:$0xff] %v2736
      %2769 = vst [vmem:[#allocation2 + $0x20] sm:$0xff] %v2737
      %2770 = vst [vmem:[#allocation2 + $0x28] sm:$0xff] %v2738
      %2771 = vst [vmem:[#allocation2 + $0x30] sm:$0xff] %v2739
      %2772 = vst [vmem:[#allocation2 + $0x38] sm:$0xff] %v2740
      %2773 = vst [vmem:[#allocation2 + $0x40] sm:$0xff] %v2741
      %2774 = vst [vmem:[#allocation2 + $0x48] sm:$0xff] %v2742
      %2775 = vst [vmem:[#allocation2 + $0x50] sm:$0xff] %v2743
      %2776 = vst [vmem:[#allocation2 + $0x58] sm:$0xff] %v2744
      %2777 = vst [vmem:[#allocation2 + $0x60] sm:$0xff] %v2745
      %2778 = vst [vmem:[#allocation2 + $0x68] sm:$0xff] %v2746
      %2779 = vst [vmem:[#allocation2 + $0x70] sm:$0xff] %v2747
      %2780 = vst [vmem:[#allocation2 + $0x78] sm:$0xff] %v2748
      %2781 = vst [vmem:[#allocation2 + $0x80] sm:$0xff] %v2749
      %2782 = vst [vmem:[#allocation2 + $0x88] sm:$0xff] %v2750
      %2783 = vst [vmem:[#allocation2 + $0x90] sm:$0xff] %v2751
      %2784 = vst [vmem:[#allocation2 + $0x98] sm:$0xff] %v2752
      %2785 = vst [vmem:[#allocation2 + $0xa0] sm:$0xff] %v2753
      %2786 = vst [vmem:[#allocation2 + $0xa8] sm:$0xff] %v2754
      %2787 = vst [vmem:[#allocation2 + $0xb0] sm:$0xff] %v2755
      %2788 = vst [vmem:[#allocation2 + $0xb8] sm:$0xff] %v2756
      %2789 = vst [vmem:[#allocation2 + $0xc0] sm:$0xff] %v2757
      %2790 = vst [vmem:[#allocation2 + $0xc8] sm:$0xff] %v2758
      %2791 = vst [vmem:[#allocation2 + $0xd0] sm:$0xff] %v2759
      %2792 = vst [vmem:[#allocation2 + $0xd8] sm:$0xff] %v2760
      %2793 = vst [vmem:[#allocation2 + $0xe0] sm:$0xff] %v2761
      %2794 = vst [vmem:[#allocation2 + $0xe8] sm:$0xff] %v2762
      %2795 = vst [vmem:[#allocation2 + $0xf0] sm:$0xff] %v2763
      %2796 = vst [vmem:[#allocation2 + $0xf8] sm:$0xff] %v2764
      %v2798 = vshll.u32 %v814, 16
      %v2800 = vrot.slane %v2798, 1
      %v2801 = vsel %vm816, %v1959, %v2800
      %v2802 = vshrl.u32 %v814, 16
      %v2804 = vor.u32 %v2802, %v2800
      %v2806 = vshll.u32 %v815, 16
      %v2808 = vrot.slane %v2806, 1
      %v2809 = vsel %vm816, %v2804, %v2808
      %v2810 = vshrl.u32 %v815, 16
      %v2812 = vor.u32 %v2810, %v2808
      %v2813 = vrot.slane %v815, 1
      %v2814 = vsel %vm952, %v1962, %v2813
      %s2815 = scalar_lea.vmem %s652, 384
      %v2816 = vld [vmem:[%s2815] sm:$0xf]
      %v2817 = vld [vmem:[%s2815 + $0x4] sm:$0xf]
      %v2818 = vld [vmem:[%s2815 + $0x8] sm:$0xf]
      %v2819 = vld [vmem:[%s2815 + $0xc] sm:$0xf]
      %v2820 = vld [vmem:[%s2815 + $0x10] sm:$0xf]
      %v2821 = vld [vmem:[%s2815 + $0x14] sm:$0xf]
      %v2822 = vld [vmem:[%s2815 + $0x18] sm:$0xf]
      %v2823 = vld [vmem:[%s2815 + $0x1c] sm:$0xf]
      %v2824 = vld [vmem:[%s2815 + $0x20] sm:$0xf]
      %v2825 = vld [vmem:[%s2815 + $0x24] sm:$0xf]
      %v2826 = vld [vmem:[%s2815 + $0x28] sm:$0xf]
      %v2827 = vld [vmem:[%s2815 + $0x2c] sm:$0xf]
      %v2828 = vld [vmem:[%s2815 + $0x30] sm:$0xf]
      %v2829 = vld [vmem:[%s2815 + $0x34] sm:$0xf]
      %v2830 = vld [vmem:[%s2815 + $0x38] sm:$0xf]
      %v2831 = vld [vmem:[%s2815 + $0x3c] sm:$0xf]
      %v2832 = vld [vmem:[%s2815 + $0x40] sm:$0xf]
      %v2833 = vld [vmem:[%s2815 + $0x44] sm:$0xf]
      %v2834 = vld [vmem:[%s2815 + $0x48] sm:$0xf]
      %v2835 = vld [vmem:[%s2815 + $0x4c] sm:$0xf]
      %v2836 = vld [vmem:[%s2815 + $0x50] sm:$0xf]
      %v2837 = vld [vmem:[%s2815 + $0x54] sm:$0xf]
      %v2838 = vld [vmem:[%s2815 + $0x58] sm:$0xf]
      %v2839 = vld [vmem:[%s2815 + $0x5c] sm:$0xf]
      %v2840 = vld [vmem:[%s2815 + $0x60] sm:$0xf]
      %v2841 = vld [vmem:[%s2815 + $0x64] sm:$0xf]
      %v2842 = vld [vmem:[%s2815 + $0x68] sm:$0xf]
      %v2843 = vld [vmem:[%s2815 + $0x6c] sm:$0xf]
      %v2844 = vld [vmem:[%s2815 + $0x70] sm:$0xf]
      %v2845 = vld [vmem:[%s2815 + $0x74] sm:$0xf]
      %v2846 = vld [vmem:[%s2815 + $0x78] sm:$0xf]
      %v2847 = vld [vmem:[%s2815 + $0x7c] sm:$0xf]
      %v2848 = vld [vmem:[%s2815 + $0x80] sm:$0xf]
      %v2849 = vld [vmem:[%s2815 + $0x84] sm:$0xf]
      %v2850 = vld [vmem:[%s2815 + $0x88] sm:$0xf]
      %v2851 = vld [vmem:[%s2815 + $0x8c] sm:$0xf]
      %v2852 = vld [vmem:[%s2815 + $0x90] sm:$0xf]
      %v2853 = vld [vmem:[%s2815 + $0x94] sm:$0xf]
      %v2854 = vld [vmem:[%s2815 + $0x98] sm:$0xf]
      %v2855 = vld [vmem:[%s2815 + $0x9c] sm:$0xf]
      %v2856 = vld [vmem:[%s2815 + $0xa0] sm:$0xf]
      %v2857 = vld [vmem:[%s2815 + $0xa4] sm:$0xf]
      %v2858 = vld [vmem:[%s2815 + $0xa8] sm:$0xf]
      %v2859 = vld [vmem:[%s2815 + $0xac] sm:$0xf]
      %v2860 = vld [vmem:[%s2815 + $0xb0] sm:$0xf]
      %v2861 = vld [vmem:[%s2815 + $0xb4] sm:$0xf]
      %v2862 = vld [vmem:[%s2815 + $0xb8] sm:$0xf]
      %v2863 = vld [vmem:[%s2815 + $0xbc] sm:$0xf]
      %v2864 = vrot.slane %v2153, 3
      %v2865 = vrot.slane %v2156, 4
      %v2866 = vor.u32 %v2864, %v2865
      %v2867 = vsel %vm1034, %v1373, %v2866
      %v2868 = vrot.slane %v2161, 3
      %v2869 = vrot.slane %v2164, 4
      %v2870 = vor.u32 %v2868, %v2869
      %v2871 = vsel %vm1034, %v1382, %v2870
      %v2872 = vrot.slane %v1957, 3
      %v2873 = vrot.slane %v1953, 4
      %v2874 = vor.u32 %v2872, %v2873
      %v2875 = vsel %vm1034, %v1386, %v2874
      %v2877 = vshrl.u32 %v2801, 16
      %v2879 = vrot.slane %v2877, 3
      %v2880 = vshll.u32 %v2801, 16
      %v2882 = vrot.slane %v2880, 4
      %v2883 = vor.u32 %v2879, %v2882
      %v2884 = vsel %vm1034, %v2866, %v2883
      %v2885 = vrot.slane %v2180, 3
      %v2886 = vrot.slane %v2183, 4
      %v2887 = vor.u32 %v2885, %v2886
      %v2888 = vsel %vm1034, %v2870, %v2887
      %v2889 = vrot.slane %v2802, 3
      %v2890 = vrot.slane %v2798, 4
      %v2891 = vor.u32 %v2889, %v2890
      %v2892 = vsel %vm1034, %v2874, %v2891
      %v2894 = vshrl.u32 %v2809, 16
      %v2896 = vrot.slane %v2894, 3
      %v2897 = vshll.u32 %v2809, 16
      %v2899 = vrot.slane %v2897, 4
      %v2900 = vor.u32 %v2896, %v2899
      %v2901 = vsel %vm1034, %v2883, %v2900
      %v2903 = vshrl.u32 %v2814, 16
      %v2905 = vrot.slane %v2903, 3
      %v2906 = vshll.u32 %v2814, 16
      %v2908 = vrot.slane %v2906, 4
      %v2909 = vor.u32 %v2905, %v2908
      %v2910 = vsel %vm1034, %v2887, %v2909
      %v2911 = vrot.slane %v2810, 3
      %v2912 = vrot.slane %v2806, 4
      %v2913 = vor.u32 %v2911, %v2912
      %v2914 = vsel %vm1034, %v2891, %v2913
      %v2916 = vshrl.u32 %v2812, 16
      %v2918 = vrot.slane %v2916, 3
      %v2919 = vshll.u32 %v2812, 16
      %v2921 = vrot.slane %v2919, 4
      %v2922 = vor.u32 %v2918, %v2921
      %v2923 = vsel %vm1034, %v2900, %v2922
      %v2925 = vshrl.u32 %v2813, 16
      %v2927 = vrot.slane %v2925, 3
      %v2928 = vshll.u32 %v2813, 16
      %v2930 = vrot.slane %v2928, 4
      %v2931 = vor.u32 %v2927, %v2930
      %v2932 = vsel %vm1034, %v2909, %v2931
      %v2992 = vunpack.c.l.b16 %v2816
      %v2993 = vunpack.c.l.b16 %v2817
      %v2994 = vunpack.c.l.b16 %v2818
      %v2995 = vunpack.c.l.b16 %v2819
      %v2996 = vunpack.c.l.b16 %v2820
      %v2997 = vunpack.c.l.b16 %v2821
      %v2998 = vunpack.c.l.b16 %v2822
      %v2999 = vunpack.c.l.b16 %v2823
      %v3000 = vunpack.c.l.b16 %v2824
      %v3001 = vunpack.c.l.b16 %v2825
      %v3002 = vunpack.c.l.b16 %v2826
      %v3003 = vunpack.c.l.b16 %v2827
      %v3004 = vunpack.c.l.b16 %v2828
      %v3005 = vunpack.c.l.b16 %v2829
      %v3006 = vunpack.c.l.b16 %v2830
      %v3007 = vunpack.c.l.b16 %v2831
      %v3008 = vunpack.c.l.b16 %v2832
      %v3009 = vunpack.c.l.b16 %v2833
      %v3010 = vunpack.c.l.b16 %v2834
      %v3011 = vunpack.c.l.b16 %v2835
      %v3012 = vunpack.c.l.b16 %v2836
      %v3013 = vunpack.c.l.b16 %v2837
      %v3014 = vunpack.c.l.b16 %v2838
      %v3015 = vunpack.c.l.b16 %v2839
      %v3016 = vunpack.c.l.b16 %v2840
      %v3017 = vunpack.c.l.b16 %v2841
      %v3018 = vunpack.c.l.b16 %v2842
      %v3019 = vunpack.c.l.b16 %v2843
      %v3020 = vunpack.c.l.b16 %v2844
      %v3021 = vunpack.c.l.b16 %v2845
      %v3022 = vunpack.c.l.b16 %v2846
      %v3023 = vunpack.c.l.b16 %v2847
      %v3024 = vunpack.c.l.b16 %v2848
      %v3025 = vunpack.c.l.b16 %v2849
      %v3026 = vunpack.c.l.b16 %v2850
      %v3027 = vunpack.c.l.b16 %v2851
      %v3028 = vunpack.c.l.b16 %v2852
      %v3029 = vunpack.c.l.b16 %v2853
      %v3030 = vunpack.c.l.b16 %v2854
      %v3031 = vunpack.c.l.b16 %v2855
      %v3032 = vunpack.c.l.b16 %v2856
      %v3033 = vunpack.c.l.b16 %v2857
      %v3034 = vunpack.c.l.b16 %v2858
      %v3035 = vunpack.c.l.b16 %v2859
      %v3036 = vunpack.c.l.b16 %v2860
      %v3037 = vunpack.c.l.b16 %v2861
      %v3038 = vunpack.c.l.b16 %v2862
      %v3039 = vunpack.c.l.b16 %v2863
      %v3040 = vpack.c.b16 %v2993, %v2992
      %v3041 = vpack.c.b16 %v2995, %v2994
      %v3042 = vpack.c.b16 %v2997, %v2996
      %v3043 = vpack.c.b16 %v2999, %v2998
      %v3044 = vpack.c.b16 %v3001, %v3000
      %v3045 = vpack.c.b16 %v3003, %v3002
      %v3046 = vpack.c.b16 %v3005, %v3004
      %v3047 = vpack.c.b16 %v3007, %v3006
      %v3048 = vpack.c.b16 %v3009, %v3008
      %v3049 = vpack.c.b16 %v3011, %v3010
      %v3050 = vpack.c.b16 %v3013, %v3012
      %v3051 = vpack.c.b16 %v3015, %v3014
      %v3052 = vpack.c.b16 %v3017, %v3016
      %v3053 = vpack.c.b16 %v3019, %v3018
      %v3054 = vpack.c.b16 %v3021, %v3020
      %v3055 = vpack.c.b16 %v3023, %v3022
      %v3056 = vpack.c.b16 %v3025, %v3024
      %v3057 = vpack.c.b16 %v3027, %v3026
      %v3058 = vpack.c.b16 %v3029, %v3028
      %v3059 = vpack.c.b16 %v3031, %v3030
      %v3060 = vpack.c.b16 %v3033, %v3032
      %v3061 = vpack.c.b16 %v3035, %v3034
      %v3062 = vpack.c.b16 %v3037, %v3036
      %v3063 = vpack.c.b16 %v3039, %v3038
      %3088 = vmatprep.subr.bf16.mxu0 0
      %3089 = vmatpush1.bf16.msra.mxu0 %v3040
      %3090 = vmatprep.subr.bf16.mxu0 0
      %3091 = vmatpush1.bf16.msra.mxu0 %v3041
      %3092 = vmatprep.subr.bf16.mxu0 0
      %3093 = vmatpush1.bf16.msra.mxu0 %v3042
      %3094 = vmatprep.subr.bf16.mxu0 0
      %3095 = vmatpush1.bf16.msra.mxu0 %v3043
      %3096 = vmatprep.subr.bf16.mxu0 0
      %3097 = vmatpush1.bf16.msra.mxu0 %v3044
      %3098 = vmatprep.subr.bf16.mxu0 0
      %3099 = vmatpush1.bf16.msra.mxu0 %v3045
      %3100 = vmatprep.subr.bf16.mxu0 0
      %3101 = vmatpush1.bf16.msra.mxu0 %v3046
      %3102 = vmatprep.subr.bf16.mxu0 0
      %3103 = vmatpush1.bf16.msra.mxu0 %v3047
      %3104 = vmatprep.subr.bf16.mxu0 0
      %3105 = vmatpush1.bf16.msra.mxu0 %v3048
      %3106 = vmatprep.subr.bf16.mxu0 0
      %3107 = vmatpush1.bf16.msra.mxu0 %v3049
      %3108 = vmatprep.subr.bf16.mxu0 0
      %3109 = vmatpush1.bf16.msra.mxu0 %v3050
      %3110 = vmatprep.subr.bf16.mxu0 0
      %3111 = vmatpush1.bf16.msra.mxu0 %v3051
      %3112 = vmatprep.subr.bf16.mxu0 0
      %3113 = vmatpush1.bf16.msra.mxu0 %v3052
      %3114 = vmatprep.subr.bf16.mxu0 0
      %3115 = vmatpush1.bf16.msra.mxu0 %v3053
      %3116 = vmatprep.subr.bf16.mxu0 0
      %3117 = vmatpush1.bf16.msra.mxu0 %v3054
      %3118 = vmatprep.subr.bf16.mxu0 0
      %3119 = vmatpush1.bf16.msra.mxu0 %v3055
      %3120 = vmatprep.mubr.bf16.mxu0 %v1132
      %3121 = vmatmul.mubr.bf16.gmra.mrb[0].mxu0 %v1123
      %v3122 = vpop.f32.mrb[0].mxu0
      %v3123 = vadd.f32 0.0, %v3122
      %v3124 = vpop.f32.mrb[0].mxu0
      %v3125 = vpop.f32.mrb[0].mxu0
      %v3126 = vadd.f32 0.0, %v3125
      %v3127 = vpop.f32.mrb[0].mxu0
      %3128 = vmatprep.mubr.bf16.mxu0 %v1154
      %3129 = vmatmul.mubr.bf16.gmra.mrb[0].mxu0 %v1145
      %v3130 = vpop.f32.mrb[0].mxu0
      %v3131 = vadd.f32 0.0, %v3130
      %v3132 = vpop.f32.mrb[0].mxu0
      %v3133 = vpop.f32.mrb[0].mxu0
      %v3134 = vadd.f32 0.0, %v3133
      %v3135 = vpop.f32.mrb[0].mxu0
      %3136 = vmatprep.mubr.bf16.mxu0 %v1176
      %3137 = vmatmul.mubr.bf16.gmra.mrb[0].mxu0 %v1167
      %v3138 = vpop.f32.mrb[0].mxu0
      %v3139 = vadd.f32 0.0, %v3138
      %v3140 = vpop.f32.mrb[0].mxu0
      %v3141 = vpop.f32.mrb[0].mxu0
      %v3142 = vadd.f32 0.0, %v3141
      %v3143 = vpop.f32.mrb[0].mxu0
      %3144 = vmatprep.mubr.bf16.mxu0 %v1198
      %3145 = vmatmul.mubr.bf16.gmra.mrb[0].mxu0 %v1189
      %v3146 = vpop.f32.mrb[0].mxu0
      %v3147 = vadd.f32 0.0, %v3146
      %v3148 = vpop.f32.mrb[0].mxu0
      %v3149 = vpop.f32.mrb[0].mxu0
      %v3150 = vadd.f32 0.0, %v3149
      %v3151 = vpop.f32.mrb[0].mxu0
      %3152 = vmatprep.mubr.bf16.mxu0 %v1220
      %3153 = vmatmul.mubr.bf16.gmra.mrb[0].mxu0 %v1211
      %v3154 = vpop.f32.mrb[0].mxu0
      %v3155 = vadd.f32 0.0, %v3154
      %v3156 = vpop.f32.mrb[0].mxu0
      %v3157 = vpop.f32.mrb[0].mxu0
      %v3158 = vadd.f32 0.0, %v3157
      %v3159 = vpop.f32.mrb[0].mxu0
      %3160 = vmatprep.mubr.bf16.mxu0 %v1242
      %3161 = vmatmul.mubr.bf16.gmra.mrb[0].mxu0 %v1233
      %v3162 = vpop.f32.mrb[0].mxu0
      %v3163 = vadd.f32 0.0, %v3162
      %v3164 = vpop.f32.mrb[0].mxu0
      %v3165 = vpop.f32.mrb[0].mxu0
      %v3166 = vadd.f32 0.0, %v3165
      %v3167 = vpop.f32.mrb[0].mxu0
      %3168 = vmatprep.mubr.bf16.mxu0 %v1264
      %3169 = vmatmul.mubr.bf16.gmra.mrb[0].mxu0 %v1255
      %v3170 = vpop.f32.mrb[0].mxu0
      %v3171 = vadd.f32 0.0, %v3170
      %v3172 = vpop.f32.mrb[0].mxu0
      %v3173 = vpop.f32.mrb[0].mxu0
      %v3174 = vadd.f32 0.0, %v3173
      %v3175 = vpop.f32.mrb[0].mxu0
      %3176 = vmatprep.mubr.bf16.mxu0 %v1286
      %3177 = vmatmul.mubr.bf16.gmra.mrb[0].mxu0 %v1277
      %v3178 = vpop.f32.mrb[0].mxu0
      %v3179 = vadd.f32 0.0, %v3178
      %v3180 = vpop.f32.mrb[0].mxu0
      %v3181 = vpop.f32.mrb[0].mxu0
      %v3182 = vadd.f32 0.0, %v3181
      %v3183 = vpop.f32.mrb[0].mxu0
      %3184 = vmatprep.mubr.bf16.mxu0 %v1308
      %3185 = vmatmul.mubr.bf16.gmra.mrb[0].mxu0 %v1299
      %v3186 = vpop.f32.mrb[0].mxu0
      %v3187 = vadd.f32 0.0, %v3186
      %v3188 = vpop.f32.mrb[0].mxu0
      %v3189 = vpop.f32.mrb[0].mxu0
      %v3190 = vadd.f32 0.0, %v3189
      %v3191 = vpop.f32.mrb[0].mxu0
      %3192 = vmatprep.mubr.bf16.mxu0 %v1330
      %3193 = vmatmul.mubr.bf16.gmra.mrb[0].mxu0 %v1321
      %v3194 = vpop.f32.mrb[0].mxu0
      %v3195 = vadd.f32 0.0, %v3194
      %v3196 = vpop.f32.mrb[0].mxu0
      %v3197 = vpop.f32.mrb[0].mxu0
      %v3198 = vadd.f32 0.0, %v3197
      %v3199 = vpop.f32.mrb[0].mxu0
      %3200 = vmatprep.mubr.bf16.mxu0 %v1352
      %3201 = vmatmul.mubr.bf16.gmra.mrb[0].mxu0 %v1343
      %v3202 = vpop.f32.mrb[0].mxu0
      %v3203 = vadd.f32 0.0, %v3202
      %v3204 = vpop.f32.mrb[0].mxu0
      %v3205 = vpop.f32.mrb[0].mxu0
      %v3206 = vadd.f32 0.0, %v3205
      %v3207 = vpop.f32.mrb[0].mxu0
      %3208 = vmatprep.mubr.bf16.mxu0 %v1374
      %3209 = vmatmul.mubr.bf16.gmra.mrb[0].mxu0 %v1365
      %v3210 = vpop.f32.mrb[0].mxu0
      %v3211 = vadd.f32 0.0, %v3210
      %v3212 = vpop.f32.mrb[0].mxu0
      %v3213 = vpop.f32.mrb[0].mxu0
      %v3214 = vadd.f32 0.0, %v3213
      %v3215 = vpop.f32.mrb[0].mxu0
      %3216 = vmatprep.mubr.bf16.mxu0 %v2867
      %3217 = vmatmul.mubr.bf16.gmra.mrb[0].mxu0 %v1387
      %v3218 = vpop.f32.mrb[0].mxu0
      %v3219 = vadd.f32 0.0, %v3218
      %v3220 = vpop.f32.mrb[0].mxu0
      %v3221 = vpop.f32.mrb[0].mxu0
      %v3222 = vadd.f32 0.0, %v3221
      %v3223 = vpop.f32.mrb[0].mxu0
      %3224 = vmatprep.mubr.bf16.mxu0 %v2884
      %3225 = vmatmul.mubr.bf16.gmra.mrb[0].mxu0 %v2875
      %v3226 = vpop.f32.mrb[0].mxu0
      %v3227 = vadd.f32 0.0, %v3226
      %v3228 = vpop.f32.mrb[0].mxu0
      %v3229 = vpop.f32.mrb[0].mxu0
      %v3230 = vadd.f32 0.0, %v3229
      %v3231 = vpop.f32.mrb[0].mxu0
      %3232 = vmatprep.mubr.bf16.mxu0 %v2901
      %3233 = vmatmul.mubr.bf16.gmra.mrb[0].mxu0 %v2892
      %v3234 = vpop.f32.mrb[0].mxu0
      %v3235 = vadd.f32 0.0, %v3234
      %v3236 = vpop.f32.mrb[0].mxu0
      %v3237 = vpop.f32.mrb[0].mxu0
      %v3238 = vadd.f32 0.0, %v3237
      %v3239 = vpop.f32.mrb[0].mxu0
      %3240 = vmatprep.mubr.bf16.mxu0 %v2923
      %3241 = vmatmul.mubr.bf16.gmra.mrb[0].mxu0 %v2914
      %v3242 = vpop.f32.mrb[0].mxu0
      %v3243 = vadd.f32 0.0, %v3242
      %v3244 = vpop.f32.mrb[0].mxu0
      %v3245 = vpop.f32.mrb[0].mxu0
      %v3246 = vadd.f32 0.0, %v3245
      %v3247 = vpop.f32.mrb[0].mxu0
      %3248 = vdwg.mxu0
      %3249 = vmatprep.subr.bf16.mxu0 0
      %3250 = vmatpush1.bf16.msra.mxu0 %v3056
      %3251 = vmatprep.subr.bf16.mxu0 0
      %3252 = vmatpush1.bf16.msra.mxu0 %v3057
      %3253 = vmatprep.subr.bf16.mxu0 0
      %3254 = vmatpush1.bf16.msra.mxu0 %v3058
      %3255 = vmatprep.subr.bf16.mxu0 0
      %3256 = vmatpush1.bf16.msra.mxu0 %v3059
      %3257 = vmatprep.subr.bf16.mxu0 0
      %3258 = vmatpush1.bf16.msra.mxu0 %v3060
      %3259 = vmatprep.subr.bf16.mxu0 0
      %3260 = vmatpush1.bf16.msra.mxu0 %v3061
      %3261 = vmatprep.subr.bf16.mxu0 0
      %3262 = vmatpush1.bf16.msra.mxu0 %v3062
      %3263 = vmatprep.subr.bf16.mxu0 0
      %3264 = vmatpush1.bf16.msra.mxu0 %v3063
      %3265 = vmatprep.subr.bf16.mxu0 0
      %3266 = vmatpush1.bf16.msra.mxu0 0
      %3267 = vmatprep.subr.bf16.mxu0 0
      %3268 = vmatpush1.bf16.msra.mxu0 0
      %3269 = vmatprep.subr.bf16.mxu0 0
      %3270 = vmatpush1.bf16.msra.mxu0 0
      %3271 = vmatprep.subr.bf16.mxu0 0
      %3272 = vmatpush1.bf16.msra.mxu0 0
      %3273 = vmatprep.subr.bf16.mxu0 0
      %3274 = vmatpush1.bf16.msra.mxu0 0
      %3275 = vmatprep.subr.bf16.mxu0 0
      %3276 = vmatpush1.bf16.msra.mxu0 0
      %3277 = vmatprep.subr.bf16.mxu0 0
      %3278 = vmatpush1.bf16.msra.mxu0 0
      %3279 = vmatprep.subr.bf16.mxu0 0
      %3280 = vmatpush1.bf16.msra.mxu0 0
      %3281 = vmatprep.mubr.bf16.mxu0 0
      %3282 = vmatmul.mubr.bf16.gmra.mrb[0].mxu0 %v1141
      %v3283 = vpop.f32.mrb[0].mxu0
      %v3284 = vadd.f32 %v3123, %v3283
      %v3285 = vpop.f32.mrb[0].mxu0
      %v3286 = vpop.f32.mrb[0].mxu0
      %v3287 = vadd.f32 %v3126, %v3286
      %v3288 = vpop.f32.mrb[0].mxu0
      %3289 = vmatprep.mubr.bf16.mxu0 0
      %3290 = vmatmul.mubr.bf16.gmra.mrb[0].mxu0 %v1163
      %v3291 = vpop.f32.mrb[0].mxu0
      %v3292 = vadd.f32 %v3131, %v3291
      %v3293 = vpop.f32.mrb[0].mxu0
      %v3294 = vpop.f32.mrb[0].mxu0
      %v3295 = vadd.f32 %v3134, %v3294
      %v3296 = vpop.f32.mrb[0].mxu0
      %3297 = vmatprep.mubr.bf16.mxu0 0
      %3298 = vmatmul.mubr.bf16.gmra.mrb[0].mxu0 %v1185
      %v3299 = vpop.f32.mrb[0].mxu0
      %v3300 = vadd.f32 %v3139, %v3299
      %v3301 = vpop.f32.mrb[0].mxu0
      %v3302 = vpop.f32.mrb[0].mxu0
      %v3303 = vadd.f32 %v3142, %v3302
      %v3304 = vpop.f32.mrb[0].mxu0
      %3305 = vmatprep.mubr.bf16.mxu0 0
      %3306 = vmatmul.mubr.bf16.gmra.mrb[0].mxu0 %v1207
      %v3307 = vpop.f32.mrb[0].mxu0
      %v3308 = vadd.f32 %v3147, %v3307
      %v3309 = vpop.f32.mrb[0].mxu0
      %v3310 = vpop.f32.mrb[0].mxu0
      %v3311 = vadd.f32 %v3150, %v3310
      %v3312 = vpop.f32.mrb[0].mxu0
      %3313 = vmatprep.mubr.bf16.mxu0 0
      %3314 = vmatmul.mubr.bf16.gmra.mrb[0].mxu0 %v1229
      %v3315 = vpop.f32.mrb[0].mxu0
      %v3316 = vadd.f32 %v3155, %v3315
      %v3317 = vpop.f32.mrb[0].mxu0
      %v3318 = vpop.f32.mrb[0].mxu0
      %v3319 = vadd.f32 %v3158, %v3318
      %v3320 = vpop.f32.mrb[0].mxu0
      %3321 = vmatprep.mubr.bf16.mxu0 0
      %3322 = vmatmul.mubr.bf16.gmra.mrb[0].mxu0 %v1251
      %v3323 = vpop.f32.mrb[0].mxu0
      %v3324 = vadd.f32 %v3163, %v3323
      %v3325 = vpop.f32.mrb[0].mxu0
      %v3326 = vpop.f32.mrb[0].mxu0
      %v3327 = vadd.f32 %v3166, %v3326
      %v3328 = vpop.f32.mrb[0].mxu0
      %3329 = vmatprep.mubr.bf16.mxu0 0
      %3330 = vmatmul.mubr.bf16.gmra.mrb[0].mxu0 %v1273
      %v3331 = vpop.f32.mrb[0].mxu0
      %v3332 = vadd.f32 %v3171, %v3331
      %v3333 = vpop.f32.mrb[0].mxu0
      %v3334 = vpop.f32.mrb[0].mxu0
      %v3335 = vadd.f32 %v3174, %v3334
      %v3336 = vpop.f32.mrb[0].mxu0
      %3337 = vmatprep.mubr.bf16.mxu0 0
      %3338 = vmatmul.mubr.bf16.gmra.mrb[0].mxu0 %v1295
      %v3339 = vpop.f32.mrb[0].mxu0
      %v3340 = vadd.f32 %v3179, %v3339
      %v3341 = vpop.f32.mrb[0].mxu0
      %v3342 = vpop.f32.mrb[0].mxu0
      %v3343 = vadd.f32 %v3182, %v3342
      %v3344 = vpop.f32.mrb[0].mxu0
      %3345 = vmatprep.mubr.bf16.mxu0 0
      %3346 = vmatmul.mubr.bf16.gmra.mrb[0].mxu0 %v1317
      %v3347 = vpop.f32.mrb[0].mxu0
      %v3348 = vadd.f32 %v3187, %v3347
      %v3349 = vpop.f32.mrb[0].mxu0
      %v3350 = vpop.f32.mrb[0].mxu0
      %v3351 = vadd.f32 %v3190, %v3350
      %v3352 = vpop.f32.mrb[0].mxu0
      %3353 = vmatprep.mubr.bf16.mxu0 0
      %3354 = vmatmul.mubr.bf16.gmra.mrb[0].mxu0 %v1339
      %v3355 = vpop.f32.mrb[0].mxu0
      %v3356 = vadd.f32 %v3195, %v3355
      %v3357 = vpop.f32.mrb[0].mxu0
      %v3358 = vpop.f32.mrb[0].mxu0
      %v3359 = vadd.f32 %v3198, %v3358
      %v3360 = vpop.f32.mrb[0].mxu0
      %3361 = vmatprep.mubr.bf16.mxu0 0
      %3362 = vmatmul.mubr.bf16.gmra.mrb[0].mxu0 %v1361
      %v3363 = vpop.f32.mrb[0].mxu0
      %v3364 = vadd.f32 %v3203, %v3363
      %v3365 = vpop.f32.mrb[0].mxu0
      %v3366 = vpop.f32.mrb[0].mxu0
      %v3367 = vadd.f32 %v3206, %v3366
      %v3368 = vpop.f32.mrb[0].mxu0
      %3369 = vmatprep.mubr.bf16.mxu0 0
      %3370 = vmatmul.mubr.bf16.gmra.mrb[0].mxu0 %v1383
      %v3371 = vpop.f32.mrb[0].mxu0
      %v3372 = vadd.f32 %v3211, %v3371
      %v3373 = vpop.f32.mrb[0].mxu0
      %v3374 = vpop.f32.mrb[0].mxu0
      %v3375 = vadd.f32 %v3214, %v3374
      %v3376 = vpop.f32.mrb[0].mxu0
      %3377 = vmatprep.mubr.bf16.mxu0 0
      %3378 = vmatmul.mubr.bf16.gmra.mrb[0].mxu0 %v2871
      %v3379 = vpop.f32.mrb[0].mxu0
      %v3380 = vadd.f32 %v3219, %v3379
      %v3381 = vpop.f32.mrb[0].mxu0
      %v3382 = vpop.f32.mrb[0].mxu0
      %v3383 = vadd.f32 %v3222, %v3382
      %v3384 = vpop.f32.mrb[0].mxu0
      %3385 = vmatprep.mubr.bf16.mxu0 0
      %3386 = vmatmul.mubr.bf16.gmra.mrb[0].mxu0 %v2888
      %v3387 = vpop.f32.mrb[0].mxu0
      %v3388 = vadd.f32 %v3227, %v3387
      %v3389 = vpop.f32.mrb[0].mxu0
      %v3390 = vpop.f32.mrb[0].mxu0
      %v3391 = vadd.f32 %v3230, %v3390
      %v3392 = vpop.f32.mrb[0].mxu0
      %3393 = vmatprep.mubr.bf16.mxu0 0
      %3394 = vmatmul.mubr.bf16.gmra.mrb[0].mxu0 %v2910
      %v3395 = vpop.f32.mrb[0].mxu0
      %v3396 = vadd.f32 %v3235, %v3395
      %v3397 = vpop.f32.mrb[0].mxu0
      %v3398 = vpop.f32.mrb[0].mxu0
      %v3399 = vadd.f32 %v3238, %v3398
      %v3400 = vpop.f32.mrb[0].mxu0
      %3401 = vmatprep.mubr.bf16.mxu0 0
      %3402 = vmatmul.mubr.bf16.gmra.mrb[0].mxu0 %v2932
      %v3403 = vpop.f32.mrb[0].mxu0
      %v3404 = vadd.f32 %v3243, %v3403
      %v3405 = vpop.f32.mrb[0].mxu0
      %v3406 = vpop.f32.mrb[0].mxu0
      %v3407 = vadd.f32 %v3246, %v3406
      %v3408 = vpop.f32.mrb[0].mxu0
      %3409 = vdwg.mxu0
      %v3410 = vld [vmem:[#allocation2] sm:$0xff]
      %v3411 = vld [vmem:[#allocation2 + $0x8] sm:$0xff]
      %v3412 = vld [vmem:[#allocation2 + $0x10] sm:$0xff]
      %v3413 = vld [vmem:[#allocation2 + $0x18] sm:$0xff]
      %v3414 = vld [vmem:[#allocation2 + $0x20] sm:$0xff]
      %v3415 = vld [vmem:[#allocation2 + $0x28] sm:$0xff]
      %v3416 = vld [vmem:[#allocation2 + $0x30] sm:$0xff]
      %v3417 = vld [vmem:[#allocation2 + $0x38] sm:$0xff]
      %v3418 = vld [vmem:[#allocation2 + $0x40] sm:$0xff]
      %v3419 = vld [vmem:[#allocation2 + $0x48] sm:$0xff]
      %v3420 = vld [vmem:[#allocation2 + $0x50] sm:$0xff]
      %v3421 = vld [vmem:[#allocation2 + $0x58] sm:$0xff]
      %v3422 = vld [vmem:[#allocation2 + $0x60] sm:$0xff]
      %v3423 = vld [vmem:[#allocation2 + $0x68] sm:$0xff]
      %v3424 = vld [vmem:[#allocation2 + $0x70] sm:$0xff]
      %v3425 = vld [vmem:[#allocation2 + $0x78] sm:$0xff]
      %v3426 = vld [vmem:[#allocation2 + $0x80] sm:$0xff]
      %v3427 = vld [vmem:[#allocation2 + $0x88] sm:$0xff]
      %v3428 = vld [vmem:[#allocation2 + $0x90] sm:$0xff]
      %v3429 = vld [vmem:[#allocation2 + $0x98] sm:$0xff]
      %v3430 = vld [vmem:[#allocation2 + $0xa0] sm:$0xff]
      %v3431 = vld [vmem:[#allocation2 + $0xa8] sm:$0xff]
      %v3432 = vld [vmem:[#allocation2 + $0xb0] sm:$0xff]
      %v3433 = vld [vmem:[#allocation2 + $0xb8] sm:$0xff]
      %v3434 = vld [vmem:[#allocation2 + $0xc0] sm:$0xff]
      %v3435 = vld [vmem:[#allocation2 + $0xc8] sm:$0xff]
      %v3436 = vld [vmem:[#allocation2 + $0xd0] sm:$0xff]
      %v3437 = vld [vmem:[#allocation2 + $0xd8] sm:$0xff]
      %v3438 = vld [vmem:[#allocation2 + $0xe0] sm:$0xff]
      %v3439 = vld [vmem:[#allocation2 + $0xe8] sm:$0xff]
      %v3440 = vld [vmem:[#allocation2 + $0xf0] sm:$0xff]
      %v3441 = vld [vmem:[#allocation2 + $0xf8] sm:$0xff]
      %v3442 = vadd.f32 %v3410, %v3284
      %v3443 = vadd.f32 %v3411, %v3287
      %v3444 = vadd.f32 %v3412, %v3292
      %v3445 = vadd.f32 %v3413, %v3295
      %v3446 = vadd.f32 %v3414, %v3300
      %v3447 = vadd.f32 %v3415, %v3303
      %v3448 = vadd.f32 %v3416, %v3308
      %v3449 = vadd.f32 %v3417, %v3311
      %v3450 = vadd.f32 %v3418, %v3316
      %v3451 = vadd.f32 %v3419, %v3319
      %v3452 = vadd.f32 %v3420, %v3324
      %v3453 = vadd.f32 %v3421, %v3327
      %v3454 = vadd.f32 %v3422, %v3332
      %v3455 = vadd.f32 %v3423, %v3335
      %v3456 = vadd.f32 %v3424, %v3340
      %v3457 = vadd.f32 %v3425, %v3343
      %v3458 = vadd.f32 %v3426, %v3348
      %v3459 = vadd.f32 %v3427, %v3351
      %v3460 = vadd.f32 %v3428, %v3356
      %v3461 = vadd.f32 %v3429, %v3359
      %v3462 = vadd.f32 %v3430, %v3364
      %v3463 = vadd.f32 %v3431, %v3367
      %v3464 = vadd.f32 %v3432, %v3372
      %v3465 = vadd.f32 %v3433, %v3375
      %v3466 = vadd.f32 %v3434, %v3380
      %v3467 = vadd.f32 %v3435, %v3383
      %v3468 = vadd.f32 %v3436, %v3388
      %v3469 = vadd.f32 %v3437, %v3391
      %v3470 = vadd.f32 %v3438, %v3396
      %v3471 = vadd.f32 %v3439, %v3399
      %v3472 = vadd.f32 %v3440, %v3404
      %v3473 = vadd.f32 %v3441, %v3407
      %3474 = vst [vmem:[#allocation2] sm:$0xff] %v3442
      %3475 = vst [vmem:[#allocation2 + $0x8] sm:$0xff] %v3443
      %3476 = vst [vmem:[#allocation2 + $0x10] sm:$0xff] %v3444
      %3477 = vst [vmem:[#allocation2 + $0x18] sm:$0xff] %v3445
      %3478 = vst [vmem:[#allocation2 + $0x20] sm:$0xff] %v3446
      %3479 = vst [vmem:[#allocation2 + $0x28] sm:$0xff] %v3447
      %3480 = vst [vmem:[#allocation2 + $0x30] sm:$0xff] %v3448
      %3481 = vst [vmem:[#allocation2 + $0x38] sm:$0xff] %v3449
      %3482 = vst [vmem:[#allocation2 + $0x40] sm:$0xff] %v3450
      %3483 = vst [vmem:[#allocation2 + $0x48] sm:$0xff] %v3451
      %3484 = vst [vmem:[#allocation2 + $0x50] sm:$0xff] %v3452
      %3485 = vst [vmem:[#allocation2 + $0x58] sm:$0xff] %v3453
      %3486 = vst [vmem:[#allocation2 + $0x60] sm:$0xff] %v3454
      %3487 = vst [vmem:[#allocation2 + $0x68] sm:$0xff] %v3455
      %3488 = vst [vmem:[#allocation2 + $0x70] sm:$0xff] %v3456
      %3489 = vst [vmem:[#allocation2 + $0x78] sm:$0xff] %v3457
      %3490 = vst [vmem:[#allocation2 + $0x80] sm:$0xff] %v3458
      %3491 = vst [vmem:[#allocation2 + $0x88] sm:$0xff] %v3459
      %3492 = vst [vmem:[#allocation2 + $0x90] sm:$0xff] %v3460
      %3493 = vst [vmem:[#allocation2 + $0x98] sm:$0xff] %v3461
      %3494 = vst [vmem:[#allocation2 + $0xa0] sm:$0xff] %v3462
      %3495 = vst [vmem:[#allocation2 + $0xa8] sm:$0xff] %v3463
      %3496 = vst [vmem:[#allocation2 + $0xb0] sm:$0xff] %v3464
      %3497 = vst [vmem:[#allocation2 + $0xb8] sm:$0xff] %v3465
      %3498 = vst [vmem:[#allocation2 + $0xc0] sm:$0xff] %v3466
      %3499 = vst [vmem:[#allocation2 + $0xc8] sm:$0xff] %v3467
      %3500 = vst [vmem:[#allocation2 + $0xd0] sm:$0xff] %v3468
      %3501 = vst [vmem:[#allocation2 + $0xd8] sm:$0xff] %v3469
      %3502 = vst [vmem:[#allocation2 + $0xe0] sm:$0xff] %v3470
      %3503 = vst [vmem:[#allocation2 + $0xe8] sm:$0xff] %v3471
      %3504 = vst [vmem:[#allocation2 + $0xf0] sm:$0xff] %v3472
      %3505 = vst [vmem:[#allocation2 + $0xf8] sm:$0xff] %v3473
      %v3506 = vld [vmem:[%s623] sm:$0xf]
      %v3507 = vld [vmem:[%s623 + $0x4] sm:$0xf]
      %v3508 = vld [vmem:[%s623 + $0x8] sm:$0xf]
      %v3509 = vld [vmem:[%s623 + $0xc] sm:$0xf]
      %v3510 = vld [vmem:[%s633] sm:$0xf]
      %v3511 = vld [vmem:[%s633 + $0x4] sm:$0xf]
      %v3512 = vld [vmem:[%s633 + $0x8] sm:$0xf]
      %v3513 = vld [vmem:[%s633 + $0xc] sm:$0xf]
      %v3514 = vld [vmem:[%s633 + $0x10] sm:$0xf]
      %v3515 = vld [vmem:[%s633 + $0x14] sm:$0xf]
      %v3516 = vld [vmem:[%s633 + $0x18] sm:$0xf]
      %v3517 = vld [vmem:[%s633 + $0x1c] sm:$0xf]
      %v3518 = vld [vmem:[%s633 + $0x20] sm:$0xf]
      %v3519 = vld [vmem:[%s633 + $0x24] sm:$0xf]
      %v3520 = vld [vmem:[%s633 + $0x28] sm:$0xf]
      %v3521 = vld [vmem:[%s633 + $0x2c] sm:$0xf]
      %v3522 = vld [vmem:[%s633 + $0x30] sm:$0xf]
      %v3523 = vld [vmem:[%s633 + $0x34] sm:$0xf]
      %v3524 = vld [vmem:[%s633 + $0x38] sm:$0xf]
      %v3525 = vld [vmem:[%s633 + $0x3c] sm:$0xf]
      %v3526 = vld [vmem:[%s633 + $0x40] sm:$0xf]
      %v3527 = vld [vmem:[%s633 + $0x44] sm:$0xf]
      %v3528 = vld [vmem:[%s633 + $0x48] sm:$0xf]
      %v3529 = vld [vmem:[%s633 + $0x4c] sm:$0xf]
      %v3530 = vld [vmem:[%s633 + $0x50] sm:$0xf]
      %v3531 = vld [vmem:[%s633 + $0x54] sm:$0xf]
      %v3532 = vld [vmem:[%s633 + $0x58] sm:$0xf]
      %v3533 = vld [vmem:[%s633 + $0x5c] sm:$0xf]
      %v3534 = vld [vmem:[%s633 + $0x60] sm:$0xf]
      %v3535 = vld [vmem:[%s633 + $0x64] sm:$0xf]
      %v3536 = vld [vmem:[%s633 + $0x68] sm:$0xf]
      %v3537 = vld [vmem:[%s633 + $0x6c] sm:$0xf]
      %v3538 = vld [vmem:[%s633 + $0x70] sm:$0xf]
      %v3539 = vld [vmem:[%s633 + $0x74] sm:$0xf]
      %v3540 = vld [vmem:[%s633 + $0x78] sm:$0xf]
      %v3541 = vld [vmem:[%s633 + $0x7c] sm:$0xf]
      %v3542 = vld [vmem:[%s643] sm:$0xf]
      %v3543 = vld [vmem:[%s643 + $0x4] sm:$0xf]
      %v3544 = vld [vmem:[%s643 + $0x8] sm:$0xf]
      %v3545 = vld [vmem:[%s643 + $0xc] sm:$0xf]
      %v3550 = vunpack.c.l.b16 %v3506
      %v3551 = vunpack.c.l.b16 %v3507
      %v3552 = vunpack.c.l.b16 %v3508
      %v3553 = vunpack.c.l.b16 %v3509
      %v3554 = vpack.c.b16 %v3551, %v3550
      %v3555 = vpack.c.b16 %v3553, %v3552
      %v3588 = vunpack.c.l.b16 %v3510
      %v3589 = vunpack.c.l.b16 %v3511
      %v3590 = vunpack.c.l.b16 %v3512
      %v3591 = vunpack.c.l.b16 %v3513
      %v3592 = vunpack.c.l.b16 %v3514
      %v3593 = vunpack.c.l.b16 %v3515
      %v3594 = vunpack.c.l.b16 %v3516
      %v3595 = vunpack.c.l.b16 %v3517
      %v3596 = vunpack.c.l.b16 %v3518
      %v3597 = vunpack.c.l.b16 %v3519
      %v3598 = vunpack.c.l.b16 %v3520
      %v3599 = vunpack.c.l.b16 %v3521
      %v3600 = vunpack.c.l.b16 %v3522
      %v3601 = vunpack.c.l.b16 %v3523
      %v3602 = vunpack.c.l.b16 %v3524
      %v3603 = vunpack.c.l.b16 %v3525
      %v3604 = vunpack.c.l.b16 %v3526
      %v3605 = vunpack.c.l.b16 %v3527
      %v3606 = vunpack.c.l.b16 %v3528
      %v3607 = vunpack.c.l.b16 %v3529
      %v3608 = vunpack.c.l.b16 %v3530
      %v3609 = vunpack.c.l.b16 %v3531
      %v3610 = vunpack.c.l.b16 %v3532
      %v3611 = vunpack.c.l.b16 %v3533
      %v3612 = vunpack.c.l.b16 %v3534
      %v3613 = vunpack.c.l.b16 %v3535
      %v3614 = vunpack.c.l.b16 %v3536
      %v3615 = vunpack.c.l.b16 %v3537
      %v3616 = vunpack.c.l.b16 %v3538
      %v3617 = vunpack.c.l.b16 %v3539
      %v3618 = vunpack.c.l.b16 %v3540
      %v3619 = vunpack.c.l.b16 %v3541
      %v3620 = vpack.c.b16 %v3589, %v3588
      %v3621 = vpack.c.b16 %v3591, %v3590
      %v3622 = vpack.c.b16 %v3593, %v3592
      %v3623 = vpack.c.b16 %v3595, %v3594
      %v3624 = vpack.c.b16 %v3597, %v3596
      %v3625 = vpack.c.b16 %v3599, %v3598
      %v3626 = vpack.c.b16 %v3601, %v3600
      %v3627 = vpack.c.b16 %v3603, %v3602
      %v3628 = vpack.c.b16 %v3605, %v3604
      %v3629 = vpack.c.b16 %v3607, %v3606
      %v3630 = vpack.c.b16 %v3609, %v3608
      %v3631 = vpack.c.b16 %v3611, %v3610
      %v3632 = vpack.c.b16 %v3613, %v3612
      %v3633 = vpack.c.b16 %v3615, %v3614
      %v3634 = vpack.c.b16 %v3617, %v3616
      %v3635 = vpack.c.b16 %v3619, %v3618
      %v3640 = vunpack.c.l.b16 %v3542
      %v3641 = vunpack.c.l.b16 %v3543
      %v3642 = vunpack.c.l.b16 %v3544
      %v3643 = vunpack.c.l.b16 %v3545
      %v3644 = vpack.c.b16 %v3641, %v3640
      %v3645 = vpack.c.b16 %v3643, %v3642
      %v3647 = vshrl.u32 %v3554, 16
      %v3649 = vshll.u32 %v3554, 16
      %v3651 = vrot.slane %v3649, 1
      %v3652 = vor.u32 %v3647, %v3651
      %v3654 = vshll.u32 %v3555, 16
      %v3656 = vrot.slane %v3654, 1
      %v3657 = vsel %vm816, %v3652, %v3656
      %v3658 = vshrl.u32 %v3555, 16
      %v3660 = vor.u32 %v3658, %v3656
      %v3662 = vshll.u32 %v3620, 16
      %v3664 = vrot.slane %v3662, 1
      %v3665 = vsel %vm816, %v3660, %v3664
      %v3666 = vshrl.u32 %v3620, 16
      %v3668 = vor.u32 %v3666, %v3664
      %v3670 = vshll.u32 %v3621, 16
      %v3672 = vrot.slane %v3670, 1
      %v3673 = vsel %vm816, %v3668, %v3672
      %v3674 = vshrl.u32 %v3621, 16
      %v3676 = vor.u32 %v3674, %v3672
      %v3678 = vshll.u32 %v3622, 16
      %v3680 = vrot.slane %v3678, 1
      %v3681 = vsel %vm816, %v3676, %v3680
      %v3682 = vshrl.u32 %v3622, 16
      %v3684 = vor.u32 %v3682, %v3680
      %v3686 = vshll.u32 %v3623, 16
      %v3688 = vrot.slane %v3686, 1
      %v3689 = vsel %vm816, %v3684, %v3688
      %v3690 = vshrl.u32 %v3623, 16
      %v3692 = vor.u32 %v3690, %v3688
      %v3694 = vshll.u32 %v3624, 16
      %v3696 = vrot.slane %v3694, 1
      %v3697 = vsel %vm816, %v3692, %v3696
      %v3698 = vshrl.u32 %v3624, 16
      %v3700 = vor.u32 %v3698, %v3696
      %v3702 = vshll.u32 %v3625, 16
      %v3704 = vrot.slane %v3702, 1
      %v3705 = vsel %vm816, %v3700, %v3704
      %v3706 = vshrl.u32 %v3625, 16
      %v3708 = vor.u32 %v3706, %v3704
      %v3710 = vshll.u32 %v3626, 16
      %v3712 = vrot.slane %v3710, 1
      %v3713 = vsel %vm816, %v3708, %v3712
      %v3714 = vshrl.u32 %v3626, 16
      %v3716 = vor.u32 %v3714, %v3712
      %v3718 = vshll.u32 %v3627, 16
      %v3720 = vrot.slane %v3718, 1
      %v3721 = vsel %vm816, %v3716, %v3720
      %v3722 = vshrl.u32 %v3627, 16
      %v3724 = vor.u32 %v3722, %v3720
      %v3726 = vshll.u32 %v3628, 16
      %v3728 = vrot.slane %v3726, 1
      %v3729 = vsel %vm816, %v3724, %v3728
      %v3730 = vshrl.u32 %v3628, 16
      %v3732 = vor.u32 %v3730, %v3728
      %v3734 = vshll.u32 %v3629, 16
      %v3736 = vrot.slane %v3734, 1
      %v3737 = vsel %vm816, %v3732, %v3736
      %v3738 = vshrl.u32 %v3629, 16
      %v3740 = vor.u32 %v3738, %v3736
      %v3742 = vshll.u32 %v3630, 16
      %v3744 = vrot.slane %v3742, 1
      %v3745 = vsel %vm816, %v3740, %v3744
      %v3746 = vshrl.u32 %v3630, 16
      %v3748 = vor.u32 %v3746, %v3744
      %v3750 = vshll.u32 %v3631, 16
      %v3752 = vrot.slane %v3750, 1
      %v3753 = vsel %vm816, %v3748, %v3752
      %v3754 = vshrl.u32 %v3631, 16
      %v3756 = vor.u32 %v3754, %v3752
      %v3758 = vshll.u32 %v3632, 16
      %v3760 = vrot.slane %v3758, 1
      %v3761 = vsel %vm816, %v3756, %v3760
      %v3762 = vshrl.u32 %v3632, 16
      %v3764 = vor.u32 %v3762, %v3760
      %v3766 = vshll.u32 %v3633, 16
      %v3768 = vrot.slane %v3766, 1
      %v3769 = vsel %vm816, %v3764, %v3768
      %v3770 = vshrl.u32 %v3633, 16
      %v3772 = vor.u32 %v3770, %v3768
      %v3774 = vshll.u32 %v3634, 16
      %v3776 = vrot.slane %v3774, 1
      %v3777 = vsel %vm816, %v3772, %v3776
      %v3778 = vshrl.u32 %v3634, 16
      %v3780 = vor.u32 %v3778, %v3776
      %v3781 = vrot.slane %v3554, 1
      %v3782 = vrot.slane %v3555, 1
      %v3783 = vsel %vm952, %v3781, %v3782
      %v3784 = vrot.slane %v3620, 1
      %v3785 = vsel %vm952, %v3782, %v3784
      %v3786 = vrot.slane %v3621, 1
      %v3787 = vsel %vm952, %v3784, %v3786
      %v3788 = vrot.slane %v3622, 1
      %v3789 = vsel %vm952, %v3786, %v3788
      %v3790 = vrot.slane %v3623, 1
      %v3791 = vsel %vm952, %v3788, %v3790
      %v3792 = vrot.slane %v3624, 1
      %v3793 = vsel %vm952, %v3790, %v3792
      %v3794 = vrot.slane %v3625, 1
      %v3795 = vsel %vm952, %v3792, %v3794
      %v3796 = vrot.slane %v3626, 1
      %v3797 = vsel %vm952, %v3794, %v3796
      %v3798 = vrot.slane %v3627, 1
      %v3799 = vsel %vm952, %v3796, %v3798
      %v3800 = vrot.slane %v3628, 1
      %v3801 = vsel %vm952, %v3798, %v3800
      %v3802 = vrot.slane %v3629, 1
      %v3803 = vsel %vm952, %v3800, %v3802
      %v3804 = vrot.slane %v3630, 1
      %v3805 = vsel %vm952, %v3802, %v3804
      %v3806 = vrot.slane %v3631, 1
      %v3807 = vsel %vm952, %v3804, %v3806
      %v3808 = vrot.slane %v3632, 1
      %v3809 = vsel %vm952, %v3806, %v3808
      %v3810 = vrot.slane %v3633, 1
      %v3811 = vsel %vm952, %v3808, %v3810
      %v3812 = vrot.slane %v3634, 1
      %v3813 = vsel %vm952, %v3810, %v3812
      %v3814 = vld [vmem:[%s656] sm:$0xf]
      %v3815 = vld [vmem:[%s656 + $0x4] sm:$0xf]
      %v3816 = vld [vmem:[%s656 + $0x8] sm:$0xf]
      %v3817 = vld [vmem:[%s656 + $0xc] sm:$0xf]
      %v3818 = vld [vmem:[%s656 + $0x10] sm:$0xf]
      %v3819 = vld [vmem:[%s656 + $0x14] sm:$0xf]
      %v3820 = vld [vmem:[%s656 + $0x18] sm:$0xf]
      %v3821 = vld [vmem:[%s656 + $0x1c] sm:$0xf]
      %v3822 = vld [vmem:[%s656 + $0x20] sm:$0xf]
      %v3823 = vld [vmem:[%s656 + $0x24] sm:$0xf]
      %v3824 = vld [vmem:[%s656 + $0x28] sm:$0xf]
      %v3825 = vld [vmem:[%s656 + $0x2c] sm:$0xf]
      %v3826 = vld [vmem:[%s656 + $0x30] sm:$0xf]
      %v3827 = vld [vmem:[%s656 + $0x34] sm:$0xf]
      %v3828 = vld [vmem:[%s656 + $0x38] sm:$0xf]
      %v3829 = vld [vmem:[%s656 + $0x3c] sm:$0xf]
      %v3830 = vld [vmem:[%s656 + $0x40] sm:$0xf]
      %v3831 = vld [vmem:[%s656 + $0x44] sm:$0xf]
      %v3832 = vld [vmem:[%s656 + $0x48] sm:$0xf]
      %v3833 = vld [vmem:[%s656 + $0x4c] sm:$0xf]
      %v3834 = vld [vmem:[%s656 + $0x50] sm:$0xf]
      %v3835 = vld [vmem:[%s656 + $0x54] sm:$0xf]
      %v3836 = vld [vmem:[%s656 + $0x58] sm:$0xf]
      %v3837 = vld [vmem:[%s656 + $0x5c] sm:$0xf]
      %v3838 = vld [vmem:[%s656 + $0x60] sm:$0xf]
      %v3839 = vld [vmem:[%s656 + $0x64] sm:$0xf]
      %v3840 = vld [vmem:[%s656 + $0x68] sm:$0xf]
      %v3841 = vld [vmem:[%s656 + $0x6c] sm:$0xf]
      %v3842 = vld [vmem:[%s656 + $0x70] sm:$0xf]
      %v3843 = vld [vmem:[%s656 + $0x74] sm:$0xf]
      %v3844 = vld [vmem:[%s656 + $0x78] sm:$0xf]
      %v3845 = vld [vmem:[%s656 + $0x7c] sm:$0xf]
      %v3846 = vld [vmem:[%s656 + $0x80] sm:$0xf]
      %v3847 = vld [vmem:[%s656 + $0x84] sm:$0xf]
      %v3848 = vld [vmem:[%s656 + $0x88] sm:$0xf]
      %v3849 = vld [vmem:[%s656 + $0x8c] sm:$0xf]
      %v3850 = vld [vmem:[%s656 + $0x90] sm:$0xf]
      %v3851 = vld [vmem:[%s656 + $0x94] sm:$0xf]
      %v3852 = vld [vmem:[%s656 + $0x98] sm:$0xf]
      %v3853 = vld [vmem:[%s656 + $0x9c] sm:$0xf]
      %v3854 = vld [vmem:[%s656 + $0xa0] sm:$0xf]
      %v3855 = vld [vmem:[%s656 + $0xa4] sm:$0xf]
      %v3856 = vld [vmem:[%s656 + $0xa8] sm:$0xf]
      %v3857 = vld [vmem:[%s656 + $0xac] sm:$0xf]
      %v3858 = vld [vmem:[%s656 + $0xb0] sm:$0xf]
      %v3859 = vld [vmem:[%s656 + $0xb4] sm:$0xf]
      %v3860 = vld [vmem:[%s656 + $0xb8] sm:$0xf]
      %v3861 = vld [vmem:[%s656 + $0xbc] sm:$0xf]
      %v3862 = vrot.slane %v3647, 3
      %v3863 = vrot.slane %v3649, 4
      %v3864 = vor.u32 %v3862, %v3863
      %v3865 = vrot.slane %v3658, 3
      %v3866 = vrot.slane %v3654, 4
      %v3867 = vor.u32 %v3865, %v3866
      %v3868 = vsel %vm1034, %v3864, %v3867
      %v3870 = vshrl.u32 %v3657, 16
      %v3872 = vrot.slane %v3870, 3
      %v3873 = vshll.u32 %v3657, 16
      %v3875 = vrot.slane %v3873, 4
      %v3876 = vor.u32 %v3872, %v3875
      %v3878 = vshrl.u32 %v3665, 16
      %v3880 = vrot.slane %v3878, 3
      %v3881 = vshll.u32 %v3665, 16
      %v3883 = vrot.slane %v3881, 4
      %v3884 = vor.u32 %v3880, %v3883
      %v3885 = vsel %vm1034, %v3876, %v3884
      %v3887 = vshrl.u32 %v3783, 16
      %v3889 = vrot.slane %v3887, 3
      %v3890 = vshll.u32 %v3783, 16
      %v3892 = vrot.slane %v3890, 4
      %v3893 = vor.u32 %v3889, %v3892
      %v3895 = vshrl.u32 %v3785, 16
      %v3897 = vrot.slane %v3895, 3
      %v3898 = vshll.u32 %v3785, 16
      %v3900 = vrot.slane %v3898, 4
      %v3901 = vor.u32 %v3897, %v3900
      %v3902 = vsel %vm1034, %v3893, %v3901
      %v3903 = vrot.slane %v3666, 3
      %v3904 = vrot.slane %v3662, 4
      %v3905 = vor.u32 %v3903, %v3904
      %v3906 = vsel %vm1034, %v3867, %v3905
      %v3908 = vshrl.u32 %v3673, 16
      %v3910 = vrot.slane %v3908, 3
      %v3911 = vshll.u32 %v3673, 16
      %v3913 = vrot.slane %v3911, 4
      %v3914 = vor.u32 %v3910, %v3913
      %v3915 = vsel %vm1034, %v3884, %v3914
      %v3917 = vshrl.u32 %v3787, 16
      %v3919 = vrot.slane %v3917, 3
      %v3920 = vshll.u32 %v3787, 16
      %v3922 = vrot.slane %v3920, 4
      %v3923 = vor.u32 %v3919, %v3922
      %v3924 = vsel %vm1034, %v3901, %v3923
      %v3925 = vrot.slane %v3674, 3
      %v3926 = vrot.slane %v3670, 4
      %v3927 = vor.u32 %v3925, %v3926
      %v3928 = vsel %vm1034, %v3905, %v3927
      %v3930 = vshrl.u32 %v3681, 16
      %v3932 = vrot.slane %v3930, 3
      %v3933 = vshll.u32 %v3681, 16
      %v3935 = vrot.slane %v3933, 4
      %v3936 = vor.u32 %v3932, %v3935
      %v3937 = vsel %vm1034, %v3914, %v3936
      %v3939 = vshrl.u32 %v3789, 16
      %v3941 = vrot.slane %v3939, 3
      %v3942 = vshll.u32 %v3789, 16
      %v3944 = vrot.slane %v3942, 4
      %v3945 = vor.u32 %v3941, %v3944
      %v3946 = vsel %vm1034, %v3923, %v3945
      %v3947 = vrot.slane %v3682, 3
      %v3948 = vrot.slane %v3678, 4
      %v3949 = vor.u32 %v3947, %v3948
      %v3950 = vsel %vm1034, %v3927, %v3949
      %v3952 = vshrl.u32 %v3689, 16
      %v3954 = vrot.slane %v3952, 3
      %v3955 = vshll.u32 %v3689, 16
      %v3957 = vrot.slane %v3955, 4
      %v3958 = vor.u32 %v3954, %v3957
      %v3959 = vsel %vm1034, %v3936, %v3958
      %v3961 = vshrl.u32 %v3791, 16
      %v3963 = vrot.slane %v3961, 3
      %v3964 = vshll.u32 %v3791, 16
      %v3966 = vrot.slane %v3964, 4
      %v3967 = vor.u32 %v3963, %v3966
      %v3968 = vsel %vm1034, %v3945, %v3967
      %v3969 = vrot.slane %v3690, 3
      %v3970 = vrot.slane %v3686, 4
      %v3971 = vor.u32 %v3969, %v3970
      %v3972 = vsel %vm1034, %v3949, %v3971
      %v3974 = vshrl.u32 %v3697, 16
      %v3976 = vrot.slane %v3974, 3
      %v3977 = vshll.u32 %v3697, 16
      %v3979 = vrot.slane %v3977, 4
      %v3980 = vor.u32 %v3976, %v3979
      %v3981 = vsel %vm1034, %v3958, %v3980
      %v3983 = vshrl.u32 %v3793, 16
      %v3985 = vrot.slane %v3983, 3
      %v3986 = vshll.u32 %v3793, 16
      %v3988 = vrot.slane %v3986, 4
      %v3989 = vor.u32 %v3985, %v3988
      %v3990 = vsel %vm1034, %v3967, %v3989
      %v3991 = vrot.slane %v3698, 3
      %v3992 = vrot.slane %v3694, 4
      %v3993 = vor.u32 %v3991, %v3992
      %v3994 = vsel %vm1034, %v3971, %v3993
      %v3996 = vshrl.u32 %v3705, 16
      %v3998 = vrot.slane %v3996, 3
      %v3999 = vshll.u32 %v3705, 16
      %v4001 = vrot.slane %v3999, 4
      %v4002 = vor.u32 %v3998, %v4001
      %v4003 = vsel %vm1034, %v3980, %v4002
      %v4005 = vshrl.u32 %v3795, 16
      %v4007 = vrot.slane %v4005, 3
      %v4008 = vshll.u32 %v3795, 16
      %v4010 = vrot.slane %v4008, 4
      %v4011 = vor.u32 %v4007, %v4010
      %v4012 = vsel %vm1034, %v3989, %v4011
      %v4013 = vrot.slane %v3706, 3
      %v4014 = vrot.slane %v3702, 4
      %v4015 = vor.u32 %v4013, %v4014
      %v4016 = vsel %vm1034, %v3993, %v4015
      %v4018 = vshrl.u32 %v3713, 16
      %v4020 = vrot.slane %v4018, 3
      %v4021 = vshll.u32 %v3713, 16
      %v4023 = vrot.slane %v4021, 4
      %v4024 = vor.u32 %v4020, %v4023
      %v4025 = vsel %vm1034, %v4002, %v4024
      %v4027 = vshrl.u32 %v3797, 16
      %v4029 = vrot.slane %v4027, 3
      %v4030 = vshll.u32 %v3797, 16
      %v4032 = vrot.slane %v4030, 4
      %v4033 = vor.u32 %v4029, %v4032
      %v4034 = vsel %vm1034, %v4011, %v4033
      %v4035 = vrot.slane %v3714, 3
      %v4036 = vrot.slane %v3710, 4
      %v4037 = vor.u32 %v4035, %v4036
      %v4038 = vsel %vm1034, %v4015, %v4037
      %v4040 = vshrl.u32 %v3721, 16
      %v4042 = vrot.slane %v4040, 3
      %v4043 = vshll.u32 %v3721, 16
      %v4045 = vrot.slane %v4043, 4
      %v4046 = vor.u32 %v4042, %v4045
      %v4047 = vsel %vm1034, %v4024, %v4046
      %v4049 = vshrl.u32 %v3799, 16
      %v4051 = vrot.slane %v4049, 3
      %v4052 = vshll.u32 %v3799, 16
      %v4054 = vrot.slane %v4052, 4
      %v4055 = vor.u32 %v4051, %v4054
      %v4056 = vsel %vm1034, %v4033, %v4055
      %v4057 = vrot.slane %v3722, 3
      %v4058 = vrot.slane %v3718, 4
      %v4059 = vor.u32 %v4057, %v4058
      %v4060 = vsel %vm1034, %v4037, %v4059
      %v4062 = vshrl.u32 %v3729, 16
      %v4064 = vrot.slane %v4062, 3
      %v4065 = vshll.u32 %v3729, 16
      %v4067 = vrot.slane %v4065, 4
      %v4068 = vor.u32 %v4064, %v4067
      %v4069 = vsel %vm1034, %v4046, %v4068
      %v4071 = vshrl.u32 %v3801, 16
      %v4073 = vrot.slane %v4071, 3
      %v4074 = vshll.u32 %v3801, 16
      %v4076 = vrot.slane %v4074, 4
      %v4077 = vor.u32 %v4073, %v4076
      %v4078 = vsel %vm1034, %v4055, %v4077
      %v4079 = vrot.slane %v3730, 3
      %v4080 = vrot.slane %v3726, 4
      %v4081 = vor.u32 %v4079, %v4080
      %v4082 = vsel %vm1034, %v4059, %v4081
      %v4084 = vshrl.u32 %v3737, 16
      %v4086 = vrot.slane %v4084, 3
      %v4087 = vshll.u32 %v3737, 16
      %v4089 = vrot.slane %v4087, 4
      %v4090 = vor.u32 %v4086, %v4089
      %v4091 = vsel %vm1034, %v4068, %v4090
      %v4093 = vshrl.u32 %v3803, 16
      %v4095 = vrot.slane %v4093, 3
      %v4096 = vshll.u32 %v3803, 16
      %v4098 = vrot.slane %v4096, 4
      %v4099 = vor.u32 %v4095, %v4098
      %v4100 = vsel %vm1034, %v4077, %v4099
      %v4101 = vrot.slane %v3738, 3
      %v4102 = vrot.slane %v3734, 4
      %v4103 = vor.u32 %v4101, %v4102
      %v4104 = vsel %vm1034, %v4081, %v4103
      %v4106 = vshrl.u32 %v3745, 16
      %v4108 = vrot.slane %v4106, 3
      %v4109 = vshll.u32 %v3745, 16
      %v4111 = vrot.slane %v4109, 4
      %v4112 = vor.u32 %v4108, %v4111
      %v4113 = vsel %vm1034, %v4090, %v4112
      %v4115 = vshrl.u32 %v3805, 16
      %v4117 = vrot.slane %v4115, 3
      %v4118 = vshll.u32 %v3805, 16
      %v4120 = vrot.slane %v4118, 4
      %v4121 = vor.u32 %v4117, %v4120
      %v4122 = vsel %vm1034, %v4099, %v4121
      %v4123 = vrot.slane %v3746, 3
      %v4124 = vrot.slane %v3742, 4
      %v4125 = vor.u32 %v4123, %v4124
      %v4126 = vsel %vm1034, %v4103, %v4125
      %v4128 = vshrl.u32 %v3753, 16
      %v4130 = vrot.slane %v4128, 3
      %v4131 = vshll.u32 %v3753, 16
      %v4133 = vrot.slane %v4131, 4
      %v4134 = vor.u32 %v4130, %v4133
      %v4135 = vsel %vm1034, %v4112, %v4134
      %v4137 = vshrl.u32 %v3807, 16
      %v4139 = vrot.slane %v4137, 3
      %v4140 = vshll.u32 %v3807, 16
      %v4142 = vrot.slane %v4140, 4
      %v4143 = vor.u32 %v4139, %v4142
      %v4144 = vsel %vm1034, %v4121, %v4143
      %v4145 = vrot.slane %v3754, 3
      %v4146 = vrot.slane %v3750, 4
      %v4147 = vor.u32 %v4145, %v4146
      %v4148 = vsel %vm1034, %v4125, %v4147
      %v4150 = vshrl.u32 %v3761, 16
      %v4152 = vrot.slane %v4150, 3
      %v4153 = vshll.u32 %v3761, 16
      %v4155 = vrot.slane %v4153, 4
      %v4156 = vor.u32 %v4152, %v4155
      %v4157 = vsel %vm1034, %v4134, %v4156
      %v4159 = vshrl.u32 %v3809, 16
      %v4161 = vrot.slane %v4159, 3
      %v4162 = vshll.u32 %v3809, 16
      %v4164 = vrot.slane %v4162, 4
      %v4165 = vor.u32 %v4161, %v4164
      %v4166 = vsel %vm1034, %v4143, %v4165
      %v4167 = vrot.slane %v3762, 3
      %v4168 = vrot.slane %v3758, 4
      %v4169 = vor.u32 %v4167, %v4168
      %v4170 = vsel %vm1034, %v4147, %v4169
      %v4172 = vshrl.u32 %v3769, 16
      %v4174 = vrot.slane %v4172, 3
      %v4175 = vshll.u32 %v3769, 16
      %v4177 = vrot.slane %v4175, 4
      %v4178 = vor.u32 %v4174, %v4177
      %v4179 = vsel %vm1034, %v4156, %v4178
      %v4181 = vshrl.u32 %v3811, 16
      %v4183 = vrot.slane %v4181, 3
      %v4184 = vshll.u32 %v3811, 16
      %v4186 = vrot.slane %v4184, 4
      %v4187 = vor.u32 %v4183, %v4186
      %v4188 = vsel %vm1034, %v4165, %v4187
      %v4189 = vrot.slane %v3770, 3
      %v4190 = vrot.slane %v3766, 4
      %v4191 = vor.u32 %v4189, %v4190
      %v4192 = vsel %vm1034, %v4169, %v4191
      %v4194 = vshrl.u32 %v3777, 16
      %v4196 = vrot.slane %v4194, 3
      %v4197 = vshll.u32 %v3777, 16
      %v4199 = vrot.slane %v4197, 4
      %v4200 = vor.u32 %v4196, %v4199
      %v4201 = vsel %vm1034, %v4178, %v4200
      %v4203 = vshrl.u32 %v3813, 16
      %v4205 = vrot.slane %v4203, 3
      %v4206 = vshll.u32 %v3813, 16
      %v4208 = vrot.slane %v4206, 4
      %v4209 = vor.u32 %v4205, %v4208
      %v4210 = vsel %vm1034, %v4187, %v4209
      %v4211 = vrot.slane %v3778, 3
      %v4212 = vrot.slane %v3774, 4
      %v4213 = vor.u32 %v4211, %v4212
      %v4214 = vsel %vm1034, %v4191, %v4213
      %v4216 = vshrl.u32 %v3780, 16
      %v4218 = vrot.slane %v4216, 3
      %v4219 = vshll.u32 %v3780, 16
      %v4221 = vrot.slane %v4219, 4
      %v4222 = vor.u32 %v4218, %v4221
      %v4223 = vsel %vm1034, %v4200, %v4222
      %v4225 = vshrl.u32 %v3812, 16
      %v4227 = vrot.slane %v4225, 3
      %v4228 = vshll.u32 %v3812, 16
      %v4230 = vrot.slane %v4228, 4
      %v4231 = vor.u32 %v4227, %v4230
      %v4232 = vsel %vm1034, %v4209, %v4231
      %v4329 = vunpack.c.l.b16 %v3814
      %v4330 = vunpack.c.l.b16 %v3815
      %v4331 = vunpack.c.l.b16 %v3816
      %v4332 = vunpack.c.l.b16 %v3817
      %v4333 = vunpack.c.l.b16 %v3818
      %v4334 = vunpack.c.l.b16 %v3819
      %v4335 = vunpack.c.l.b16 %v3820
      %v4336 = vunpack.c.l.b16 %v3821
      %v4337 = vunpack.c.l.b16 %v3822
      %v4338 = vunpack.c.l.b16 %v3823
      %v4339 = vunpack.c.l.b16 %v3824
      %v4340 = vunpack.c.l.b16 %v3825
      %v4341 = vunpack.c.l.b16 %v3826
      %v4342 = vunpack.c.l.b16 %v3827
      %v4343 = vunpack.c.l.b16 %v3828
      %v4344 = vunpack.c.l.b16 %v3829
      %v4345 = vunpack.c.l.b16 %v3830
      %v4346 = vunpack.c.l.b16 %v3831
      %v4347 = vunpack.c.l.b16 %v3832
      %v4348 = vunpack.c.l.b16 %v3833
      %v4349 = vunpack.c.l.b16 %v3834
      %v4350 = vunpack.c.l.b16 %v3835
      %v4351 = vunpack.c.l.b16 %v3836
      %v4352 = vunpack.c.l.b16 %v3837
      %v4353 = vunpack.c.l.b16 %v3838
      %v4354 = vunpack.c.l.b16 %v3839
      %v4355 = vunpack.c.l.b16 %v3840
      %v4356 = vunpack.c.l.b16 %v3841
      %v4357 = vunpack.c.l.b16 %v3842
      %v4358 = vunpack.c.l.b16 %v3843
      %v4359 = vunpack.c.l.b16 %v3844
      %v4360 = vunpack.c.l.b16 %v3845
      %v4361 = vunpack.c.l.b16 %v3846
      %v4362 = vunpack.c.l.b16 %v3847
      %v4363 = vunpack.c.l.b16 %v3848
      %v4364 = vunpack.c.l.b16 %v3849
      %v4365 = vunpack.c.l.b16 %v3850
      %v4366 = vunpack.c.l.b16 %v3851
      %v4367 = vunpack.c.l.b16 %v3852
      %v4368 = vunpack.c.l.b16 %v3853
      %v4369 = vunpack.c.l.b16 %v3854
      %v4370 = vunpack.c.l.b16 %v3855
      %v4371 = vunpack.c.l.b16 %v3856
      %v4372 = vunpack.c.l.b16 %v3857
      %v4373 = vunpack.c.l.b16 %v3858
      %v4374 = vunpack.c.l.b16 %v3859
      %v4375 = vunpack.c.l.b16 %v3860
      %v4376 = vunpack.c.l.b16 %v3861
      %v4377 = vpack.c.b16 %v4330, %v4329
      %v4378 = vpack.c.b16 %v4332, %v4331
      %v4379 = vpack.c.b16 %v4334, %v4333
      %v4380 = vpack.c.b16 %v4336, %v4335
      %v4381 = vpack.c.b16 %v4338, %v4337
      %v4382 = vpack.c.b16 %v4340, %v4339
      %v4383 = vpack.c.b16 %v4342, %v4341
      %v4384 = vpack.c.b16 %v4344, %v4343
      %v4385 = vpack.c.b16 %v4346, %v4345
      %v4386 = vpack.c.b16 %v4348, %v4347
      %v4387 = vpack.c.b16 %v4350, %v4349
      %v4388 = vpack.c.b16 %v4352, %v4351
      %v4389 = vpack.c.b16 %v4354, %v4353
      %v4390 = vpack.c.b16 %v4356, %v4355
      %v4391 = vpack.c.b16 %v4358, %v4357
      %v4392 = vpack.c.b16 %v4360, %v4359
      %v4393 = vpack.c.b16 %v4362, %v4361
      %v4394 = vpack.c.b16 %v4364, %v4363
      %v4395 = vpack.c.b16 %v4366, %v4365
      %v4396 = vpack.c.b16 %v4368, %v4367
      %v4397 = vpack.c.b16 %v4370, %v4369
      %v4398 = vpack.c.b16 %v4372, %v4371
      %v4399 = vpack.c.b16 %v4374, %v4373
      %v4400 = vpack.c.b16 %v4376, %v4375
      %4425 = vmatprep.subr.bf16.mxu0 0
      %4426 = vmatpush1.bf16.msra.mxu0 %v4377
      %4427 = vmatprep.subr.bf16.mxu0 0
      %4428 = vmatpush1.bf16.msra.mxu0 %v4378
      %4429 = vmatprep.subr.bf16.mxu0 0
      %4430 = vmatpush1.bf16.msra.mxu0 %v4379
      %4431 = vmatprep.subr.bf16.mxu0 0
      %4432 = vmatpush1.bf16.msra.mxu0 %v4380
      %4433 = vmatprep.subr.bf16.mxu0 0
      %4434 = vmatpush1.bf16.msra.mxu0 %v4381
      %4435 = vmatprep.subr.bf16.mxu0 0
      %4436 = vmatpush1.bf16.msra.mxu0 %v4382
      %4437 = vmatprep.subr.bf16.mxu0 0
      %4438 = vmatpush1.bf16.msra.mxu0 %v4383
      %4439 = vmatprep.subr.bf16.mxu0 0
      %4440 = vmatpush1.bf16.msra.mxu0 %v4384
      %4441 = vmatprep.subr.bf16.mxu0 0
      %4442 = vmatpush1.bf16.msra.mxu0 %v4385
      %4443 = vmatprep.subr.bf16.mxu0 0
      %4444 = vmatpush1.bf16.msra.mxu0 %v4386
      %4445 = vmatprep.subr.bf16.mxu0 0
      %4446 = vmatpush1.bf16.msra.mxu0 %v4387
      %4447 = vmatprep.subr.bf16.mxu0 0
      %4448 = vmatpush1.bf16.msra.mxu0 %v4388
      %4449 = vmatprep.subr.bf16.mxu0 0
      %4450 = vmatpush1.bf16.msra.mxu0 %v4389
      %4451 = vmatprep.subr.bf16.mxu0 0
      %4452 = vmatpush1.bf16.msra.mxu0 %v4390
      %4453 = vmatprep.subr.bf16.mxu0 0
      %4454 = vmatpush1.bf16.msra.mxu0 %v4391
      %4455 = vmatprep.subr.bf16.mxu0 0
      %4456 = vmatpush1.bf16.msra.mxu0 %v4392
      %4457 = vmatprep.mubr.bf16.mxu0 %v3885
      %4458 = vmatmul.mubr.bf16.gmra.mrb[0].mxu0 %v3868
      %v4459 = vpop.f32.mrb[0].mxu0
      %v4460 = vadd.f32 0.0, %v4459
      %v4461 = vpop.f32.mrb[0].mxu0
      %v4462 = vpop.f32.mrb[0].mxu0
      %v4463 = vadd.f32 0.0, %v4462
      %v4464 = vpop.f32.mrb[0].mxu0
      %4465 = vmatprep.mubr.bf16.mxu0 %v3915
      %4466 = vmatmul.mubr.bf16.gmra.mrb[0].mxu0 %v3906
      %v4467 = vpop.f32.mrb[0].mxu0
      %v4468 = vadd.f32 0.0, %v4467
      %v4469 = vpop.f32.mrb[0].mxu0
      %v4470 = vpop.f32.mrb[0].mxu0
      %v4471 = vadd.f32 0.0, %v4470
      %v4472 = vpop.f32.mrb[0].mxu0
      %4473 = vmatprep.mubr.bf16.mxu0 %v3937
      %4474 = vmatmul.mubr.bf16.gmra.mrb[0].mxu0 %v3928
      %v4475 = vpop.f32.mrb[0].mxu0
      %v4476 = vadd.f32 0.0, %v4475
      %v4477 = vpop.f32.mrb[0].mxu0
      %v4478 = vpop.f32.mrb[0].mxu0
      %v4479 = vadd.f32 0.0, %v4478
      %v4480 = vpop.f32.mrb[0].mxu0
      %4481 = vmatprep.mubr.bf16.mxu0 %v3959
      %4482 = vmatmul.mubr.bf16.gmra.mrb[0].mxu0 %v3950
      %v4483 = vpop.f32.mrb[0].mxu0
      %v4484 = vadd.f32 0.0, %v4483
      %v4485 = vpop.f32.mrb[0].mxu0
      %v4486 = vpop.f32.mrb[0].mxu0
      %v4487 = vadd.f32 0.0, %v4486
      %v4488 = vpop.f32.mrb[0].mxu0
      %4489 = vmatprep.mubr.bf16.mxu0 %v3981
      %4490 = vmatmul.mubr.bf16.gmra.mrb[0].mxu0 %v3972
      %v4491 = vpop.f32.mrb[0].mxu0
      %v4492 = vadd.f32 0.0, %v4491
      %v4493 = vpop.f32.mrb[0].mxu0
      %v4494 = vpop.f32.mrb[0].mxu0
      %v4495 = vadd.f32 0.0, %v4494
      %v4496 = vpop.f32.mrb[0].mxu0
      %4497 = vmatprep.mubr.bf16.mxu0 %v4003
      %4498 = vmatmul.mubr.bf16.gmra.mrb[0].mxu0 %v3994
      %v4499 = vpop.f32.mrb[0].mxu0
      %v4500 = vadd.f32 0.0, %v4499
      %v4501 = vpop.f32.mrb[0].mxu0
      %v4502 = vpop.f32.mrb[0].mxu0
      %v4503 = vadd.f32 0.0, %v4502
      %v4504 = vpop.f32.mrb[0].mxu0
      %4505 = vmatprep.mubr.bf16.mxu0 %v4025
      %4506 = vmatmul.mubr.bf16.gmra.mrb[0].mxu0 %v4016
      %v4507 = vpop.f32.mrb[0].mxu0
      %v4508 = vadd.f32 0.0, %v4507
      %v4509 = vpop.f32.mrb[0].mxu0
      %v4510 = vpop.f32.mrb[0].mxu0
      %v4511 = vadd.f32 0.0, %v4510
      %v4512 = vpop.f32.mrb[0].mxu0
      %4513 = vmatprep.mubr.bf16.mxu0 %v4047
      %4514 = vmatmul.mubr.bf16.gmra.mrb[0].mxu0 %v4038
      %v4515 = vpop.f32.mrb[0].mxu0
      %v4516 = vadd.f32 0.0, %v4515
      %v4517 = vpop.f32.mrb[0].mxu0
      %v4518 = vpop.f32.mrb[0].mxu0
      %v4519 = vadd.f32 0.0, %v4518
      %v4520 = vpop.f32.mrb[0].mxu0
      %4521 = vmatprep.mubr.bf16.mxu0 %v4069
      %4522 = vmatmul.mubr.bf16.gmra.mrb[0].mxu0 %v4060
      %v4523 = vpop.f32.mrb[0].mxu0
      %v4524 = vadd.f32 0.0, %v4523
      %v4525 = vpop.f32.mrb[0].mxu0
      %v4526 = vpop.f32.mrb[0].mxu0
      %v4527 = vadd.f32 0.0, %v4526
      %v4528 = vpop.f32.mrb[0].mxu0
      %4529 = vmatprep.mubr.bf16.mxu0 %v4091
      %4530 = vmatmul.mubr.bf16.gmra.mrb[0].mxu0 %v4082
      %v4531 = vpop.f32.mrb[0].mxu0
      %v4532 = vadd.f32 0.0, %v4531
      %v4533 = vpop.f32.mrb[0].mxu0
      %v4534 = vpop.f32.mrb[0].mxu0
      %v4535 = vadd.f32 0.0, %v4534
      %v4536 = vpop.f32.mrb[0].mxu0
      %4537 = vmatprep.mubr.bf16.mxu0 %v4113
      %4538 = vmatmul.mubr.bf16.gmra.mrb[0].mxu0 %v4104
      %v4539 = vpop.f32.mrb[0].mxu0
      %v4540 = vadd.f32 0.0, %v4539
      %v4541 = vpop.f32.mrb[0].mxu0
      %v4542 = vpop.f32.mrb[0].mxu0
      %v4543 = vadd.f32 0.0, %v4542
      %v4544 = vpop.f32.mrb[0].mxu0
      %4545 = vmatprep.mubr.bf16.mxu0 %v4135
      %4546 = vmatmul.mubr.bf16.gmra.mrb[0].mxu0 %v4126
      %v4547 = vpop.f32.mrb[0].mxu0
      %v4548 = vadd.f32 0.0, %v4547
      %v4549 = vpop.f32.mrb[0].mxu0
      %v4550 = vpop.f32.mrb[0].mxu0
      %v4551 = vadd.f32 0.0, %v4550
      %v4552 = vpop.f32.mrb[0].mxu0
      %4553 = vmatprep.mubr.bf16.mxu0 %v4157
      %4554 = vmatmul.mubr.bf16.gmra.mrb[0].mxu0 %v4148
      %v4555 = vpop.f32.mrb[0].mxu0
      %v4556 = vadd.f32 0.0, %v4555
      %v4557 = vpop.f32.mrb[0].mxu0
      %v4558 = vpop.f32.mrb[0].mxu0
      %v4559 = vadd.f32 0.0, %v4558
      %v4560 = vpop.f32.mrb[0].mxu0
      %4561 = vmatprep.mubr.bf16.mxu0 %v4179
      %4562 = vmatmul.mubr.bf16.gmra.mrb[0].mxu0 %v4170
      %v4563 = vpop.f32.mrb[0].mxu0
      %v4564 = vadd.f32 0.0, %v4563
      %v4565 = vpop.f32.mrb[0].mxu0
      %v4566 = vpop.f32.mrb[0].mxu0
      %v4567 = vadd.f32 0.0, %v4566
      %v4568 = vpop.f32.mrb[0].mxu0
      %4569 = vmatprep.mubr.bf16.mxu0 %v4201
      %4570 = vmatmul.mubr.bf16.gmra.mrb[0].mxu0 %v4192
      %v4571 = vpop.f32.mrb[0].mxu0
      %v4572 = vadd.f32 0.0, %v4571
      %v4573 = vpop.f32.mrb[0].mxu0
      %v4574 = vpop.f32.mrb[0].mxu0
      %v4575 = vadd.f32 0.0, %v4574
      %v4576 = vpop.f32.mrb[0].mxu0
      %4577 = vmatprep.mubr.bf16.mxu0 %v4223
      %4578 = vmatmul.mubr.bf16.gmra.mrb[0].mxu0 %v4214
      %v4579 = vpop.f32.mrb[0].mxu0
      %v4580 = vadd.f32 0.0, %v4579
      %v4581 = vpop.f32.mrb[0].mxu0
      %v4582 = vpop.f32.mrb[0].mxu0
      %v4583 = vadd.f32 0.0, %v4582
      %v4584 = vpop.f32.mrb[0].mxu0
      %4585 = vdwg.mxu0
      %4586 = vmatprep.subr.bf16.mxu0 0
      %4587 = vmatpush1.bf16.msra.mxu0 %v4393
      %4588 = vmatprep.subr.bf16.mxu0 0
      %4589 = vmatpush1.bf16.msra.mxu0 %v4394
      %4590 = vmatprep.subr.bf16.mxu0 0
      %4591 = vmatpush1.bf16.msra.mxu0 %v4395
      %4592 = vmatprep.subr.bf16.mxu0 0
      %4593 = vmatpush1.bf16.msra.mxu0 %v4396
      %4594 = vmatprep.subr.bf16.mxu0 0
      %4595 = vmatpush1.bf16.msra.mxu0 %v4397
      %4596 = vmatprep.subr.bf16.mxu0 0
      %4597 = vmatpush1.bf16.msra.mxu0 %v4398
      %4598 = vmatprep.subr.bf16.mxu0 0
      %4599 = vmatpush1.bf16.msra.mxu0 %v4399
      %4600 = vmatprep.subr.bf16.mxu0 0
      %4601 = vmatpush1.bf16.msra.mxu0 %v4400
      %4602 = vmatprep.subr.bf16.mxu0 0
      %4603 = vmatpush1.bf16.msra.mxu0 0
      %4604 = vmatprep.subr.bf16.mxu0 0
      %4605 = vmatpush1.bf16.msra.mxu0 0
      %4606 = vmatprep.subr.bf16.mxu0 0
      %4607 = vmatpush1.bf16.msra.mxu0 0
      %4608 = vmatprep.subr.bf16.mxu0 0
      %4609 = vmatpush1.bf16.msra.mxu0 0
      %4610 = vmatprep.subr.bf16.mxu0 0
      %4611 = vmatpush1.bf16.msra.mxu0 0
      %4612 = vmatprep.subr.bf16.mxu0 0
      %4613 = vmatpush1.bf16.msra.mxu0 0
      %4614 = vmatprep.subr.bf16.mxu0 0
      %4615 = vmatpush1.bf16.msra.mxu0 0
      %4616 = vmatprep.subr.bf16.mxu0 0
      %4617 = vmatpush1.bf16.msra.mxu0 0
      %4618 = vmatprep.mubr.bf16.mxu0 0
      %4619 = vmatmul.mubr.bf16.gmra.mrb[0].mxu0 %v3902
      %v4620 = vpop.f32.mrb[0].mxu0
      %v4621 = vadd.f32 %v4460, %v4620
      %v4622 = vpop.f32.mrb[0].mxu0
      %v4623 = vpop.f32.mrb[0].mxu0
      %v4624 = vadd.f32 %v4463, %v4623
      %v4625 = vpop.f32.mrb[0].mxu0
      %4626 = vmatprep.mubr.bf16.mxu0 0
      %4627 = vmatmul.mubr.bf16.gmra.mrb[0].mxu0 %v3924
      %v4628 = vpop.f32.mrb[0].mxu0
      %v4629 = vadd.f32 %v4468, %v4628
      %v4630 = vpop.f32.mrb[0].mxu0
      %v4631 = vpop.f32.mrb[0].mxu0
      %v4632 = vadd.f32 %v4471, %v4631
      %v4633 = vpop.f32.mrb[0].mxu0
      %4634 = vmatprep.mubr.bf16.mxu0 0
      %4635 = vmatmul.mubr.bf16.gmra.mrb[0].mxu0 %v3946
      %v4636 = vpop.f32.mrb[0].mxu0
      %v4637 = vadd.f32 %v4476, %v4636
      %v4638 = vpop.f32.mrb[0].mxu0
      %v4639 = vpop.f32.mrb[0].mxu0
      %v4640 = vadd.f32 %v4479, %v4639
      %v4641 = vpop.f32.mrb[0].mxu0
      %4642 = vmatprep.mubr.bf16.mxu0 0
      %4643 = vmatmul.mubr.bf16.gmra.mrb[0].mxu0 %v3968
      %v4644 = vpop.f32.mrb[0].mxu0
      %v4645 = vadd.f32 %v4484, %v4644
      %v4646 = vpop.f32.mrb[0].mxu0
      %v4647 = vpop.f32.mrb[0].mxu0
      %v4648 = vadd.f32 %v4487, %v4647
      %v4649 = vpop.f32.mrb[0].mxu0
      %4650 = vmatprep.mubr.bf16.mxu0 0
      %4651 = vmatmul.mubr.bf16.gmra.mrb[0].mxu0 %v3990
      %v4652 = vpop.f32.mrb[0].mxu0
      %v4653 = vadd.f32 %v4492, %v4652
      %v4654 = vpop.f32.mrb[0].mxu0
      %v4655 = vpop.f32.mrb[0].mxu0
      %v4656 = vadd.f32 %v4495, %v4655
      %v4657 = vpop.f32.mrb[0].mxu0
      %4658 = vmatprep.mubr.bf16.mxu0 0
      %4659 = vmatmul.mubr.bf16.gmra.mrb[0].mxu0 %v4012
      %v4660 = vpop.f32.mrb[0].mxu0
      %v4661 = vadd.f32 %v4500, %v4660
      %v4662 = vpop.f32.mrb[0].mxu0
      %v4663 = vpop.f32.mrb[0].mxu0
      %v4664 = vadd.f32 %v4503, %v4663
      %v4665 = vpop.f32.mrb[0].mxu0
      %4666 = vmatprep.mubr.bf16.mxu0 0
      %4667 = vmatmul.mubr.bf16.gmra.mrb[0].mxu0 %v4034
      %v4668 = vpop.f32.mrb[0].mxu0
      %v4669 = vadd.f32 %v4508, %v4668
      %v4670 = vpop.f32.mrb[0].mxu0
      %v4671 = vpop.f32.mrb[0].mxu0
      %v4672 = vadd.f32 %v4511, %v4671
      %v4673 = vpop.f32.mrb[0].mxu0
      %4674 = vmatprep.mubr.bf16.mxu0 0
      %4675 = vmatmul.mubr.bf16.gmra.mrb[0].mxu0 %v4056
      %v4676 = vpop.f32.mrb[0].mxu0
      %v4677 = vadd.f32 %v4516, %v4676
      %v4678 = vpop.f32.mrb[0].mxu0
      %v4679 = vpop.f32.mrb[0].mxu0
      %v4680 = vadd.f32 %v4519, %v4679
      %v4681 = vpop.f32.mrb[0].mxu0
      %4682 = vmatprep.mubr.bf16.mxu0 0
      %4683 = vmatmul.mubr.bf16.gmra.mrb[0].mxu0 %v4078
      %v4684 = vpop.f32.mrb[0].mxu0
      %v4685 = vadd.f32 %v4524, %v4684
      %v4686 = vpop.f32.mrb[0].mxu0
      %v4687 = vpop.f32.mrb[0].mxu0
      %v4688 = vadd.f32 %v4527, %v4687
      %v4689 = vpop.f32.mrb[0].mxu0
      %4690 = vmatprep.mubr.bf16.mxu0 0
      %4691 = vmatmul.mubr.bf16.gmra.mrb[0].mxu0 %v4100
      %v4692 = vpop.f32.mrb[0].mxu0
      %v4693 = vadd.f32 %v4532, %v4692
      %v4694 = vpop.f32.mrb[0].mxu0
      %v4695 = vpop.f32.mrb[0].mxu0
      %v4696 = vadd.f32 %v4535, %v4695
      %v4697 = vpop.f32.mrb[0].mxu0
      %4698 = vmatprep.mubr.bf16.mxu0 0
      %4699 = vmatmul.mubr.bf16.gmra.mrb[0].mxu0 %v4122
      %v4700 = vpop.f32.mrb[0].mxu0
      %v4701 = vadd.f32 %v4540, %v4700
      %v4702 = vpop.f32.mrb[0].mxu0
      %v4703 = vpop.f32.mrb[0].mxu0
      %v4704 = vadd.f32 %v4543, %v4703
      %v4705 = vpop.f32.mrb[0].mxu0
      %4706 = vmatprep.mubr.bf16.mxu0 0
      %4707 = vmatmul.mubr.bf16.gmra.mrb[0].mxu0 %v4144
      %v4708 = vpop.f32.mrb[0].mxu0
      %v4709 = vadd.f32 %v4548, %v4708
      %v4710 = vpop.f32.mrb[0].mxu0
      %v4711 = vpop.f32.mrb[0].mxu0
      %v4712 = vadd.f32 %v4551, %v4711
      %v4713 = vpop.f32.mrb[0].mxu0
      %4714 = vmatprep.mubr.bf16.mxu0 0
      %4715 = vmatmul.mubr.bf16.gmra.mrb[0].mxu0 %v4166
      %v4716 = vpop.f32.mrb[0].mxu0
      %v4717 = vadd.f32 %v4556, %v4716
      %v4718 = vpop.f32.mrb[0].mxu0
      %v4719 = vpop.f32.mrb[0].mxu0
      %v4720 = vadd.f32 %v4559, %v4719
      %v4721 = vpop.f32.mrb[0].mxu0
      %4722 = vmatprep.mubr.bf16.mxu0 0
      %4723 = vmatmul.mubr.bf16.gmra.mrb[0].mxu0 %v4188
      %v4724 = vpop.f32.mrb[0].mxu0
      %v4725 = vadd.f32 %v4564, %v4724
      %v4726 = vpop.f32.mrb[0].mxu0
      %v4727 = vpop.f32.mrb[0].mxu0
      %v4728 = vadd.f32 %v4567, %v4727
      %v4729 = vpop.f32.mrb[0].mxu0
      %4730 = vmatprep.mubr.bf16.mxu0 0
      %4731 = vmatmul.mubr.bf16.gmra.mrb[0].mxu0 %v4210
      %v4732 = vpop.f32.mrb[0].mxu0
      %v4733 = vadd.f32 %v4572, %v4732
      %v4734 = vpop.f32.mrb[0].mxu0
      %v4735 = vpop.f32.mrb[0].mxu0
      %v4736 = vadd.f32 %v4575, %v4735
      %v4737 = vpop.f32.mrb[0].mxu0
      %4738 = vmatprep.mubr.bf16.mxu0 0
      %4739 = vmatmul.mubr.bf16.gmra.mrb[0].mxu0 %v4232
      %v4740 = vpop.f32.mrb[0].mxu0
      %v4741 = vadd.f32 %v4580, %v4740
      %v4742 = vpop.f32.mrb[0].mxu0
      %v4743 = vpop.f32.mrb[0].mxu0
      %v4744 = vadd.f32 %v4583, %v4743
      %v4745 = vpop.f32.mrb[0].mxu0
      %4746 = vdwg.mxu0
      %v4747 = vld [vmem:[#allocation2] sm:$0xff]
      %v4748 = vld [vmem:[#allocation2 + $0x8] sm:$0xff]
      %v4749 = vld [vmem:[#allocation2 + $0x10] sm:$0xff]
      %v4750 = vld [vmem:[#allocation2 + $0x18] sm:$0xff]
      %v4751 = vld [vmem:[#allocation2 + $0x20] sm:$0xff]
      %v4752 = vld [vmem:[#allocation2 + $0x28] sm:$0xff]
      %v4753 = vld [vmem:[#allocation2 + $0x30] sm:$0xff]
      %v4754 = vld [vmem:[#allocation2 + $0x38] sm:$0xff]
      %v4755 = vld [vmem:[#allocation2 + $0x40] sm:$0xff]
      %v4756 = vld [vmem:[#allocation2 + $0x48] sm:$0xff]
      %v4757 = vld [vmem:[#allocation2 + $0x50] sm:$0xff]
      %v4758 = vld [vmem:[#allocation2 + $0x58] sm:$0xff]
      %v4759 = vld [vmem:[#allocation2 + $0x60] sm:$0xff]
      %v4760 = vld [vmem:[#allocation2 + $0x68] sm:$0xff]
      %v4761 = vld [vmem:[#allocation2 + $0x70] sm:$0xff]
      %v4762 = vld [vmem:[#allocation2 + $0x78] sm:$0xff]
      %v4763 = vld [vmem:[#allocation2 + $0x80] sm:$0xff]
      %v4764 = vld [vmem:[#allocation2 + $0x88] sm:$0xff]
      %v4765 = vld [vmem:[#allocation2 + $0x90] sm:$0xff]
      %v4766 = vld [vmem:[#allocation2 + $0x98] sm:$0xff]
      %v4767 = vld [vmem:[#allocation2 + $0xa0] sm:$0xff]
      %v4768 = vld [vmem:[#allocation2 + $0xa8] sm:$0xff]
      %v4769 = vld [vmem:[#allocation2 + $0xb0] sm:$0xff]
      %v4770 = vld [vmem:[#allocation2 + $0xb8] sm:$0xff]
      %v4771 = vld [vmem:[#allocation2 + $0xc0] sm:$0xff]
      %v4772 = vld [vmem:[#allocation2 + $0xc8] sm:$0xff]
      %v4773 = vld [vmem:[#allocation2 + $0xd0] sm:$0xff]
      %v4774 = vld [vmem:[#allocation2 + $0xd8] sm:$0xff]
      %v4775 = vld [vmem:[#allocation2 + $0xe0] sm:$0xff]
      %v4776 = vld [vmem:[#allocation2 + $0xe8] sm:$0xff]
      %v4777 = vld [vmem:[#allocation2 + $0xf0] sm:$0xff]
      %v4778 = vld [vmem:[#allocation2 + $0xf8] sm:$0xff]
      %v4779 = vadd.f32 %v4747, %v4621
      %v4780 = vadd.f32 %v4748, %v4624
      %v4781 = vadd.f32 %v4749, %v4629
      %v4782 = vadd.f32 %v4750, %v4632
      %v4783 = vadd.f32 %v4751, %v4637
      %v4784 = vadd.f32 %v4752, %v4640
      %v4785 = vadd.f32 %v4753, %v4645
      %v4786 = vadd.f32 %v4754, %v4648
      %v4787 = vadd.f32 %v4755, %v4653
      %v4788 = vadd.f32 %v4756, %v4656
      %v4789 = vadd.f32 %v4757, %v4661
      %v4790 = vadd.f32 %v4758, %v4664
      %v4791 = vadd.f32 %v4759, %v4669
      %v4792 = vadd.f32 %v4760, %v4672
      %v4793 = vadd.f32 %v4761, %v4677
      %v4794 = vadd.f32 %v4762, %v4680
      %v4795 = vadd.f32 %v4763, %v4685
      %v4796 = vadd.f32 %v4764, %v4688
      %v4797 = vadd.f32 %v4765, %v4693
      %v4798 = vadd.f32 %v4766, %v4696
      %v4799 = vadd.f32 %v4767, %v4701
      %v4800 = vadd.f32 %v4768, %v4704
      %v4801 = vadd.f32 %v4769, %v4709
      %v4802 = vadd.f32 %v4770, %v4712
      %v4803 = vadd.f32 %v4771, %v4717
      %v4804 = vadd.f32 %v4772, %v4720
      %v4805 = vadd.f32 %v4773, %v4725
      %v4806 = vadd.f32 %v4774, %v4728
      %v4807 = vadd.f32 %v4775, %v4733
      %v4808 = vadd.f32 %v4776, %v4736
      %v4809 = vadd.f32 %v4777, %v4741
      %v4810 = vadd.f32 %v4778, %v4744
      %4811 = vst [vmem:[#allocation2] sm:$0xff] %v4779
      %4812 = vst [vmem:[#allocation2 + $0x8] sm:$0xff] %v4780
      %4813 = vst [vmem:[#allocation2 + $0x10] sm:$0xff] %v4781
      %4814 = vst [vmem:[#allocation2 + $0x18] sm:$0xff] %v4782
      %4815 = vst [vmem:[#allocation2 + $0x20] sm:$0xff] %v4783
      %4816 = vst [vmem:[#allocation2 + $0x28] sm:$0xff] %v4784
      %4817 = vst [vmem:[#allocation2 + $0x30] sm:$0xff] %v4785
      %4818 = vst [vmem:[#allocation2 + $0x38] sm:$0xff] %v4786
      %4819 = vst [vmem:[#allocation2 + $0x40] sm:$0xff] %v4787
      %4820 = vst [vmem:[#allocation2 + $0x48] sm:$0xff] %v4788
      %4821 = vst [vmem:[#allocation2 + $0x50] sm:$0xff] %v4789
      %4822 = vst [vmem:[#allocation2 + $0x58] sm:$0xff] %v4790
      %4823 = vst [vmem:[#allocation2 + $0x60] sm:$0xff] %v4791
      %4824 = vst [vmem:[#allocation2 + $0x68] sm:$0xff] %v4792
      %4825 = vst [vmem:[#allocation2 + $0x70] sm:$0xff] %v4793
      %4826 = vst [vmem:[#allocation2 + $0x78] sm:$0xff] %v4794
      %4827 = vst [vmem:[#allocation2 + $0x80] sm:$0xff] %v4795
      %4828 = vst [vmem:[#allocation2 + $0x88] sm:$0xff] %v4796
      %4829 = vst [vmem:[#allocation2 + $0x90] sm:$0xff] %v4797
      %4830 = vst [vmem:[#allocation2 + $0x98] sm:$0xff] %v4798
      %4831 = vst [vmem:[#allocation2 + $0xa0] sm:$0xff] %v4799
      %4832 = vst [vmem:[#allocation2 + $0xa8] sm:$0xff] %v4800
      %4833 = vst [vmem:[#allocation2 + $0xb0] sm:$0xff] %v4801
      %4834 = vst [vmem:[#allocation2 + $0xb8] sm:$0xff] %v4802
      %4835 = vst [vmem:[#allocation2 + $0xc0] sm:$0xff] %v4803
      %4836 = vst [vmem:[#allocation2 + $0xc8] sm:$0xff] %v4804
      %4837 = vst [vmem:[#allocation2 + $0xd0] sm:$0xff] %v4805
      %4838 = vst [vmem:[#allocation2 + $0xd8] sm:$0xff] %v4806
      %4839 = vst [vmem:[#allocation2 + $0xe0] sm:$0xff] %v4807
      %4840 = vst [vmem:[#allocation2 + $0xe8] sm:$0xff] %v4808
      %4841 = vst [vmem:[#allocation2 + $0xf0] sm:$0xff] %v4809
      %4842 = vst [vmem:[#allocation2 + $0xf8] sm:$0xff] %v4810
      %v4844 = vshll.u32 %v3635, 16
      %v4846 = vrot.slane %v4844, 1
      %v4847 = vsel %vm816, %v3780, %v4846
      %v4848 = vshrl.u32 %v3635, 16
      %v4850 = vor.u32 %v4848, %v4846
      %v4851 = vrot.slane %v3635, 1
      %v4852 = vsel %vm952, %v3812, %v4851
      %v4853 = vrot.slane %v3644, 1
      %v4854 = vsel %vm952, %v4851, %v4853
      %s4855 = scalar_lea.vmem %s656, 192
      %v4856 = vld [vmem:[%s4855] sm:$0xf]
      %v4857 = vld [vmem:[%s4855 + $0x4] sm:$0xf]
      %v4858 = vld [vmem:[%s4855 + $0x8] sm:$0xf]
      %v4859 = vld [vmem:[%s4855 + $0xc] sm:$0xf]
      %v4860 = vld [vmem:[%s4855 + $0x10] sm:$0xf]
      %v4861 = vld [vmem:[%s4855 + $0x14] sm:$0xf]
      %v4862 = vld [vmem:[%s4855 + $0x18] sm:$0xf]
      %v4863 = vld [vmem:[%s4855 + $0x1c] sm:$0xf]
      %v4864 = vld [vmem:[%s4855 + $0x20] sm:$0xf]
      %v4865 = vld [vmem:[%s4855 + $0x24] sm:$0xf]
      %v4866 = vld [vmem:[%s4855 + $0x28] sm:$0xf]
      %v4867 = vld [vmem:[%s4855 + $0x2c] sm:$0xf]
      %v4868 = vld [vmem:[%s4855 + $0x30] sm:$0xf]
      %v4869 = vld [vmem:[%s4855 + $0x34] sm:$0xf]
      %v4870 = vld [vmem:[%s4855 + $0x38] sm:$0xf]
      %v4871 = vld [vmem:[%s4855 + $0x3c] sm:$0xf]
      %v4872 = vld [vmem:[%s4855 + $0x40] sm:$0xf]
      %v4873 = vld [vmem:[%s4855 + $0x44] sm:$0xf]
      %v4874 = vld [vmem:[%s4855 + $0x48] sm:$0xf]
      %v4875 = vld [vmem:[%s4855 + $0x4c] sm:$0xf]
      %v4876 = vld [vmem:[%s4855 + $0x50] sm:$0xf]
      %v4877 = vld [vmem:[%s4855 + $0x54] sm:$0xf]
      %v4878 = vld [vmem:[%s4855 + $0x58] sm:$0xf]
      %v4879 = vld [vmem:[%s4855 + $0x5c] sm:$0xf]
      %v4880 = vld [vmem:[%s4855 + $0x60] sm:$0xf]
      %v4881 = vld [vmem:[%s4855 + $0x64] sm:$0xf]
      %v4882 = vld [vmem:[%s4855 + $0x68] sm:$0xf]
      %v4883 = vld [vmem:[%s4855 + $0x6c] sm:$0xf]
      %v4884 = vld [vmem:[%s4855 + $0x70] sm:$0xf]
      %v4885 = vld [vmem:[%s4855 + $0x74] sm:$0xf]
      %v4886 = vld [vmem:[%s4855 + $0x78] sm:$0xf]
      %v4887 = vld [vmem:[%s4855 + $0x7c] sm:$0xf]
      %v4888 = vld [vmem:[%s4855 + $0x80] sm:$0xf]
      %v4889 = vld [vmem:[%s4855 + $0x84] sm:$0xf]
      %v4890 = vld [vmem:[%s4855 + $0x88] sm:$0xf]
      %v4891 = vld [vmem:[%s4855 + $0x8c] sm:$0xf]
      %v4892 = vld [vmem:[%s4855 + $0x90] sm:$0xf]
      %v4893 = vld [vmem:[%s4855 + $0x94] sm:$0xf]
      %v4894 = vld [vmem:[%s4855 + $0x98] sm:$0xf]
      %v4895 = vld [vmem:[%s4855 + $0x9c] sm:$0xf]
      %v4896 = vld [vmem:[%s4855 + $0xa0] sm:$0xf]
      %v4897 = vld [vmem:[%s4855 + $0xa4] sm:$0xf]
      %v4898 = vld [vmem:[%s4855 + $0xa8] sm:$0xf]
      %v4899 = vld [vmem:[%s4855 + $0xac] sm:$0xf]
      %v4900 = vld [vmem:[%s4855 + $0xb0] sm:$0xf]
      %v4901 = vld [vmem:[%s4855 + $0xb4] sm:$0xf]
      %v4902 = vld [vmem:[%s4855 + $0xb8] sm:$0xf]
      %v4903 = vld [vmem:[%s4855 + $0xbc] sm:$0xf]
      %v4904 = vrot.slane %v3658, 7
      %v4905 = vrot.slane %v3666, 7
      %v4906 = vor.u32 %v4905, %v3662
      %v4907 = vsel %vm2013, %v4904, %v4906
      %v4909 = vshrl.u32 %v3664, 16
      %v4911 = vrot.slane %v4909, 7
      %v4912 = vrot.slane %v3908, 7
      %v4913 = vor.u32 %v4912, %v3911
      %v4914 = vsel %vm2013, %v4911, %v4913
      %v4916 = vshrl.u32 %v3784, 16
      %v4918 = vrot.slane %v4916, 7
      %v4919 = vrot.slane %v3917, 7
      %v4920 = vor.u32 %v4919, %v3920
      %v4921 = vsel %vm2013, %v4918, %v4920
      %v4922 = vrot.slane %v3674, 7
      %v4923 = vor.u32 %v4922, %v3670
      %v4924 = vsel %vm2013, %v4905, %v4923
      %v4925 = vrot.slane %v3930, 7
      %v4926 = vor.u32 %v4925, %v3933
      %v4927 = vsel %vm2013, %v4912, %v4926
      %v4928 = vrot.slane %v3939, 7
      %v4929 = vor.u32 %v4928, %v3942
      %v4930 = vsel %vm2013, %v4919, %v4929
      %v4931 = vrot.slane %v3682, 7
      %v4932 = vor.u32 %v4931, %v3678
      %v4933 = vsel %vm2013, %v4922, %v4932
      %v4934 = vrot.slane %v3952, 7
      %v4935 = vor.u32 %v4934, %v3955
      %v4936 = vsel %vm2013, %v4925, %v4935
      %v4937 = vrot.slane %v3961, 7
      %v4938 = vor.u32 %v4937, %v3964
      %v4939 = vsel %vm2013, %v4928, %v4938
      %v4940 = vrot.slane %v3690, 7
      %v4941 = vor.u32 %v4940, %v3686
      %v4942 = vsel %vm2013, %v4931, %v4941
      %v4943 = vrot.slane %v3974, 7
      %v4944 = vor.u32 %v4943, %v3977
      %v4945 = vsel %vm2013, %v4934, %v4944
      %v4946 = vrot.slane %v3983, 7
      %v4947 = vor.u32 %v4946, %v3986
      %v4948 = vsel %vm2013, %v4937, %v4947
      %v4949 = vrot.slane %v3698, 7
      %v4950 = vor.u32 %v4949, %v3694
      %v4951 = vsel %vm2013, %v4940, %v4950
      %v4952 = vrot.slane %v3996, 7
      %v4953 = vor.u32 %v4952, %v3999
      %v4954 = vsel %vm2013, %v4943, %v4953
      %v4955 = vrot.slane %v4005, 7
      %v4956 = vor.u32 %v4955, %v4008
      %v4957 = vsel %vm2013, %v4946, %v4956
      %v4958 = vrot.slane %v3706, 7
      %v4959 = vor.u32 %v4958, %v3702
      %v4960 = vsel %vm2013, %v4949, %v4959
      %v4961 = vrot.slane %v4018, 7
      %v4962 = vor.u32 %v4961, %v4021
      %v4963 = vsel %vm2013, %v4952, %v4962
      %v4964 = vrot.slane %v4027, 7
      %v4965 = vor.u32 %v4964, %v4030
      %v4966 = vsel %vm2013, %v4955, %v4965
      %v4967 = vrot.slane %v3714, 7
      %v4968 = vor.u32 %v4967, %v3710
      %v4969 = vsel %vm2013, %v4958, %v4968
      %v4970 = vrot.slane %v4040, 7
      %v4971 = vor.u32 %v4970, %v4043
      %v4972 = vsel %vm2013, %v4961, %v4971
      %v4973 = vrot.slane %v4049, 7
      %v4974 = vor.u32 %v4973, %v4052
      %v4975 = vsel %vm2013, %v4964, %v4974
      %v4976 = vrot.slane %v3722, 7
      %v4977 = vor.u32 %v4976, %v3718
      %v4978 = vsel %vm2013, %v4967, %v4977
      %v4979 = vrot.slane %v4062, 7
      %v4980 = vor.u32 %v4979, %v4065
      %v4981 = vsel %vm2013, %v4970, %v4980
      %v4982 = vrot.slane %v4071, 7
      %v4983 = vor.u32 %v4982, %v4074
      %v4984 = vsel %vm2013, %v4973, %v4983
      %v4985 = vrot.slane %v3730, 7
      %v4986 = vor.u32 %v4985, %v3726
      %v4987 = vsel %vm2013, %v4976, %v4986
      %v4988 = vrot.slane %v4084, 7
      %v4989 = vor.u32 %v4988, %v4087
      %v4990 = vsel %vm2013, %v4979, %v4989
      %v4991 = vrot.slane %v4093, 7
      %v4992 = vor.u32 %v4991, %v4096
      %v4993 = vsel %vm2013, %v4982, %v4992
      %v4994 = vrot.slane %v3738, 7
      %v4995 = vor.u32 %v4994, %v3734
      %v4996 = vsel %vm2013, %v4985, %v4995
      %v4997 = vrot.slane %v4106, 7
      %v4998 = vor.u32 %v4997, %v4109
      %v4999 = vsel %vm2013, %v4988, %v4998
      %v5000 = vrot.slane %v4115, 7
      %v5001 = vor.u32 %v5000, %v4118
      %v5002 = vsel %vm2013, %v4991, %v5001
      %v5003 = vrot.slane %v3746, 7
      %v5004 = vor.u32 %v5003, %v3742
      %v5005 = vsel %vm2013, %v4994, %v5004
      %v5006 = vrot.slane %v4128, 7
      %v5007 = vor.u32 %v5006, %v4131
      %v5008 = vsel %vm2013, %v4997, %v5007
      %v5009 = vrot.slane %v4137, 7
      %v5010 = vor.u32 %v5009, %v4140
      %v5011 = vsel %vm2013, %v5000, %v5010
      %v5012 = vrot.slane %v3754, 7
      %v5013 = vor.u32 %v5012, %v3750
      %v5014 = vsel %vm2013, %v5003, %v5013
      %v5015 = vrot.slane %v4150, 7
      %v5016 = vor.u32 %v5015, %v4153
      %v5017 = vsel %vm2013, %v5006, %v5016
      %v5018 = vrot.slane %v4159, 7
      %v5019 = vor.u32 %v5018, %v4162
      %v5020 = vsel %vm2013, %v5009, %v5019
      %v5021 = vrot.slane %v3762, 7
      %v5022 = vor.u32 %v5021, %v3758
      %v5023 = vsel %vm2013, %v5012, %v5022
      %v5024 = vrot.slane %v4172, 7
      %v5025 = vor.u32 %v5024, %v4175
      %v5026 = vsel %vm2013, %v5015, %v5025
      %v5027 = vrot.slane %v4181, 7
      %v5028 = vor.u32 %v5027, %v4184
      %v5029 = vsel %vm2013, %v5018, %v5028
      %v5030 = vrot.slane %v3770, 7
      %v5031 = vor.u32 %v5030, %v3766
      %v5032 = vsel %vm2013, %v5021, %v5031
      %v5033 = vrot.slane %v4194, 7
      %v5034 = vor.u32 %v5033, %v4197
      %v5035 = vsel %vm2013, %v5024, %v5034
      %v5036 = vrot.slane %v4203, 7
      %v5037 = vor.u32 %v5036, %v4206
      %v5038 = vsel %vm2013, %v5027, %v5037
      %v5039 = vrot.slane %v3778, 7
      %v5040 = vor.u32 %v5039, %v3774
      %v5041 = vsel %vm2013, %v5030, %v5040
      %v5043 = vshrl.u32 %v4847, 16
      %v5045 = vrot.slane %v5043, 7
      %v5046 = vshll.u32 %v4847, 16
      %v5048 = vor.u32 %v5045, %v5046
      %v5049 = vsel %vm2013, %v5033, %v5048
      %v5051 = vshrl.u32 %v4852, 16
      %v5053 = vrot.slane %v5051, 7
      %v5054 = vshll.u32 %v4852, 16
      %v5056 = vor.u32 %v5053, %v5054
      %v5057 = vsel %vm2013, %v5036, %v5056
      %v5058 = vrot.slane %v4848, 7
      %v5059 = vor.u32 %v5058, %v4844
      %v5060 = vsel %vm2013, %v5039, %v5059
      %v5062 = vshrl.u32 %v4850, 16
      %v5064 = vrot.slane %v5062, 7
      %v5065 = vshll.u32 %v4850, 16
      %v5067 = vor.u32 %v5064, %v5065
      %v5068 = vsel %vm2013, %v5045, %v5067
      %v5070 = vshrl.u32 %v4854, 16
      %v5072 = vrot.slane %v5070, 7
      %v5073 = vshll.u32 %v4854, 16
      %v5075 = vor.u32 %v5072, %v5073
      %v5076 = vsel %vm2013, %v5053, %v5075
      %v5173 = vunpack.c.l.b16 %v4856
      %v5174 = vunpack.c.l.b16 %v4857
      %v5175 = vunpack.c.l.b16 %v4858
      %v5176 = vunpack.c.l.b16 %v4859
      %v5177 = vunpack.c.l.b16 %v4860
      %v5178 = vunpack.c.l.b16 %v4861
      %v5179 = vunpack.c.l.b16 %v4862
      %v5180 = vunpack.c.l.b16 %v4863
      %v5181 = vunpack.c.l.b16 %v4864
      %v5182 = vunpack.c.l.b16 %v4865
      %v5183 = vunpack.c.l.b16 %v4866
      %v5184 = vunpack.c.l.b16 %v4867
      %v5185 = vunpack.c.l.b16 %v4868
      %v5186 = vunpack.c.l.b16 %v4869
      %v5187 = vunpack.c.l.b16 %v4870
      %v5188 = vunpack.c.l.b16 %v4871
      %v5189 = vunpack.c.l.b16 %v4872
      %v5190 = vunpack.c.l.b16 %v4873
      %v5191 = vunpack.c.l.b16 %v4874
      %v5192 = vunpack.c.l.b16 %v4875
      %v5193 = vunpack.c.l.b16 %v4876
      %v5194 = vunpack.c.l.b16 %v4877
      %v5195 = vunpack.c.l.b16 %v4878
      %v5196 = vunpack.c.l.b16 %v4879
      %v5197 = vunpack.c.l.b16 %v4880
      %v5198 = vunpack.c.l.b16 %v4881
      %v5199 = vunpack.c.l.b16 %v4882
      %v5200 = vunpack.c.l.b16 %v4883
      %v5201 = vunpack.c.l.b16 %v4884
      %v5202 = vunpack.c.l.b16 %v4885
      %v5203 = vunpack.c.l.b16 %v4886
      %v5204 = vunpack.c.l.b16 %v4887
      %v5205 = vunpack.c.l.b16 %v4888
      %v5206 = vunpack.c.l.b16 %v4889
      %v5207 = vunpack.c.l.b16 %v4890
      %v5208 = vunpack.c.l.b16 %v4891
      %v5209 = vunpack.c.l.b16 %v4892
      %v5210 = vunpack.c.l.b16 %v4893
      %v5211 = vunpack.c.l.b16 %v4894
      %v5212 = vunpack.c.l.b16 %v4895
      %v5213 = vunpack.c.l.b16 %v4896
      %v5214 = vunpack.c.l.b16 %v4897
      %v5215 = vunpack.c.l.b16 %v4898
      %v5216 = vunpack.c.l.b16 %v4899
      %v5217 = vunpack.c.l.b16 %v4900
      %v5218 = vunpack.c.l.b16 %v4901
      %v5219 = vunpack.c.l.b16 %v4902
      %v5220 = vunpack.c.l.b16 %v4903
      %v5221 = vpack.c.b16 %v5174, %v5173
      %v5222 = vpack.c.b16 %v5176, %v5175
      %v5223 = vpack.c.b16 %v5178, %v5177
      %v5224 = vpack.c.b16 %v5180, %v5179
      %v5225 = vpack.c.b16 %v5182, %v5181
      %v5226 = vpack.c.b16 %v5184, %v5183
      %v5227 = vpack.c.b16 %v5186, %v5185
      %v5228 = vpack.c.b16 %v5188, %v5187
      %v5229 = vpack.c.b16 %v5190, %v5189
      %v5230 = vpack.c.b16 %v5192, %v5191
      %v5231 = vpack.c.b16 %v5194, %v5193
      %v5232 = vpack.c.b16 %v5196, %v5195
      %v5233 = vpack.c.b16 %v5198, %v5197
      %v5234 = vpack.c.b16 %v5200, %v5199
      %v5235 = vpack.c.b16 %v5202, %v5201
      %v5236 = vpack.c.b16 %v5204, %v5203
      %v5237 = vpack.c.b16 %v5206, %v5205
      %v5238 = vpack.c.b16 %v5208, %v5207
      %v5239 = vpack.c.b16 %v5210, %v5209
      %v5240 = vpack.c.b16 %v5212, %v5211
      %v5241 = vpack.c.b16 %v5214, %v5213
      %v5242 = vpack.c.b16 %v5216, %v5215
      %v5243 = vpack.c.b16 %v5218, %v5217
      %v5244 = vpack.c.b16 %v5220, %v5219
      %5269 = vmatprep.subr.bf16.mxu0 0
      %5270 = vmatpush1.bf16.msra.mxu0 %v5221
      %5271 = vmatprep.subr.bf16.mxu0 0
      %5272 = vmatpush1.bf16.msra.mxu0 %v5222
      %5273 = vmatprep.subr.bf16.mxu0 0
      %5274 = vmatpush1.bf16.msra.mxu0 %v5223
      %5275 = vmatprep.subr.bf16.mxu0 0
      %5276 = vmatpush1.bf16.msra.mxu0 %v5224
      %5277 = vmatprep.subr.bf16.mxu0 0
      %5278 = vmatpush1.bf16.msra.mxu0 %v5225
      %5279 = vmatprep.subr.bf16.mxu0 0
      %5280 = vmatpush1.bf16.msra.mxu0 %v5226
      %5281 = vmatprep.subr.bf16.mxu0 0
      %5282 = vmatpush1.bf16.msra.mxu0 %v5227
      %5283 = vmatprep.subr.bf16.mxu0 0
      %5284 = vmatpush1.bf16.msra.mxu0 %v5228
      %5285 = vmatprep.subr.bf16.mxu0 0
      %5286 = vmatpush1.bf16.msra.mxu0 %v5229
      %5287 = vmatprep.subr.bf16.mxu0 0
      %5288 = vmatpush1.bf16.msra.mxu0 %v5230
      %5289 = vmatprep.subr.bf16.mxu0 0
      %5290 = vmatpush1.bf16.msra.mxu0 %v5231
      %5291 = vmatprep.subr.bf16.mxu0 0
      %5292 = vmatpush1.bf16.msra.mxu0 %v5232
      %5293 = vmatprep.subr.bf16.mxu0 0
      %5294 = vmatpush1.bf16.msra.mxu0 %v5233
      %5295 = vmatprep.subr.bf16.mxu0 0
      %5296 = vmatpush1.bf16.msra.mxu0 %v5234
      %5297 = vmatprep.subr.bf16.mxu0 0
      %5298 = vmatpush1.bf16.msra.mxu0 %v5235
      %5299 = vmatprep.subr.bf16.mxu0 0
      %5300 = vmatpush1.bf16.msra.mxu0 %v5236
      %5301 = vmatprep.mubr.bf16.mxu0 %v4914
      %5302 = vmatmul.mubr.bf16.gmra.mrb[0].mxu0 %v4907
      %v5303 = vpop.f32.mrb[0].mxu0
      %v5304 = vadd.f32 0.0, %v5303
      %v5305 = vpop.f32.mrb[0].mxu0
      %v5306 = vpop.f32.mrb[0].mxu0
      %v5307 = vadd.f32 0.0, %v5306
      %v5308 = vpop.f32.mrb[0].mxu0
      %5309 = vmatprep.mubr.bf16.mxu0 %v4927
      %5310 = vmatmul.mubr.bf16.gmra.mrb[0].mxu0 %v4924
      %v5311 = vpop.f32.mrb[0].mxu0
      %v5312 = vadd.f32 0.0, %v5311
      %v5313 = vpop.f32.mrb[0].mxu0
      %v5314 = vpop.f32.mrb[0].mxu0
      %v5315 = vadd.f32 0.0, %v5314
      %v5316 = vpop.f32.mrb[0].mxu0
      %5317 = vmatprep.mubr.bf16.mxu0 %v4936
      %5318 = vmatmul.mubr.bf16.gmra.mrb[0].mxu0 %v4933
      %v5319 = vpop.f32.mrb[0].mxu0
      %v5320 = vadd.f32 0.0, %v5319
      %v5321 = vpop.f32.mrb[0].mxu0
      %v5322 = vpop.f32.mrb[0].mxu0
      %v5323 = vadd.f32 0.0, %v5322
      %v5324 = vpop.f32.mrb[0].mxu0
      %5325 = vmatprep.mubr.bf16.mxu0 %v4945
      %5326 = vmatmul.mubr.bf16.gmra.mrb[0].mxu0 %v4942
      %v5327 = vpop.f32.mrb[0].mxu0
      %v5328 = vadd.f32 0.0, %v5327
      %v5329 = vpop.f32.mrb[0].mxu0
      %v5330 = vpop.f32.mrb[0].mxu0
      %v5331 = vadd.f32 0.0, %v5330
      %v5332 = vpop.f32.mrb[0].mxu0
      %5333 = vmatprep.mubr.bf16.mxu0 %v4954
      %5334 = vmatmul.mubr.bf16.gmra.mrb[0].mxu0 %v4951
      %v5335 = vpop.f32.mrb[0].mxu0
      %v5336 = vadd.f32 0.0, %v5335
      %v5337 = vpop.f32.mrb[0].mxu0
      %v5338 = vpop.f32.mrb[0].mxu0
      %v5339 = vadd.f32 0.0, %v5338
      %v5340 = vpop.f32.mrb[0].mxu0
      %5341 = vmatprep.mubr.bf16.mxu0 %v4963
      %5342 = vmatmul.mubr.bf16.gmra.mrb[0].mxu0 %v4960
      %v5343 = vpop.f32.mrb[0].mxu0
      %v5344 = vadd.f32 0.0, %v5343
      %v5345 = vpop.f32.mrb[0].mxu0
      %v5346 = vpop.f32.mrb[0].mxu0
      %v5347 = vadd.f32 0.0, %v5346
      %v5348 = vpop.f32.mrb[0].mxu0
      %5349 = vmatprep.mubr.bf16.mxu0 %v4972
      %5350 = vmatmul.mubr.bf16.gmra.mrb[0].mxu0 %v4969
      %v5351 = vpop.f32.mrb[0].mxu0
      %v5352 = vadd.f32 0.0, %v5351
      %v5353 = vpop.f32.mrb[0].mxu0
      %v5354 = vpop.f32.mrb[0].mxu0
      %v5355 = vadd.f32 0.0, %v5354
      %v5356 = vpop.f32.mrb[0].mxu0
      %5357 = vmatprep.mubr.bf16.mxu0 %v4981
      %5358 = vmatmul.mubr.bf16.gmra.mrb[0].mxu0 %v4978
      %v5359 = vpop.f32.mrb[0].mxu0
      %v5360 = vadd.f32 0.0, %v5359
      %v5361 = vpop.f32.mrb[0].mxu0
      %v5362 = vpop.f32.mrb[0].mxu0
      %v5363 = vadd.f32 0.0, %v5362
      %v5364 = vpop.f32.mrb[0].mxu0
      %5365 = vmatprep.mubr.bf16.mxu0 %v4990
      %5366 = vmatmul.mubr.bf16.gmra.mrb[0].mxu0 %v4987
      %v5367 = vpop.f32.mrb[0].mxu0
      %v5368 = vadd.f32 0.0, %v5367
      %v5369 = vpop.f32.mrb[0].mxu0
      %v5370 = vpop.f32.mrb[0].mxu0
      %v5371 = vadd.f32 0.0, %v5370
      %v5372 = vpop.f32.mrb[0].mxu0
      %5373 = vmatprep.mubr.bf16.mxu0 %v4999
      %5374 = vmatmul.mubr.bf16.gmra.mrb[0].mxu0 %v4996
      %v5375 = vpop.f32.mrb[0].mxu0
      %v5376 = vadd.f32 0.0, %v5375
      %v5377 = vpop.f32.mrb[0].mxu0
      %v5378 = vpop.f32.mrb[0].mxu0
      %v5379 = vadd.f32 0.0, %v5378
      %v5380 = vpop.f32.mrb[0].mxu0
      %5381 = vmatprep.mubr.bf16.mxu0 %v5008
      %5382 = vmatmul.mubr.bf16.gmra.mrb[0].mxu0 %v5005
      %v5383 = vpop.f32.mrb[0].mxu0
      %v5384 = vadd.f32 0.0, %v5383
      %v5385 = vpop.f32.mrb[0].mxu0
      %v5386 = vpop.f32.mrb[0].mxu0
      %v5387 = vadd.f32 0.0, %v5386
      %v5388 = vpop.f32.mrb[0].mxu0
      %5389 = vmatprep.mubr.bf16.mxu0 %v5017
      %5390 = vmatmul.mubr.bf16.gmra.mrb[0].mxu0 %v5014
      %v5391 = vpop.f32.mrb[0].mxu0
      %v5392 = vadd.f32 0.0, %v5391
      %v5393 = vpop.f32.mrb[0].mxu0
      %v5394 = vpop.f32.mrb[0].mxu0
      %v5395 = vadd.f32 0.0, %v5394
      %v5396 = vpop.f32.mrb[0].mxu0
      %5397 = vmatprep.mubr.bf16.mxu0 %v5026
      %5398 = vmatmul.mubr.bf16.gmra.mrb[0].mxu0 %v5023
      %v5399 = vpop.f32.mrb[0].mxu0
      %v5400 = vadd.f32 0.0, %v5399
      %v5401 = vpop.f32.mrb[0].mxu0
      %v5402 = vpop.f32.mrb[0].mxu0
      %v5403 = vadd.f32 0.0, %v5402
      %v5404 = vpop.f32.mrb[0].mxu0
      %5405 = vmatprep.mubr.bf16.mxu0 %v5035
      %5406 = vmatmul.mubr.bf16.gmra.mrb[0].mxu0 %v5032
      %v5407 = vpop.f32.mrb[0].mxu0
      %v5408 = vadd.f32 0.0, %v5407
      %v5409 = vpop.f32.mrb[0].mxu0
      %v5410 = vpop.f32.mrb[0].mxu0
      %v5411 = vadd.f32 0.0, %v5410
      %v5412 = vpop.f32.mrb[0].mxu0
      %5413 = vmatprep.mubr.bf16.mxu0 %v5049
      %5414 = vmatmul.mubr.bf16.gmra.mrb[0].mxu0 %v5041
      %v5415 = vpop.f32.mrb[0].mxu0
      %v5416 = vadd.f32 0.0, %v5415
      %v5417 = vpop.f32.mrb[0].mxu0
      %v5418 = vpop.f32.mrb[0].mxu0
      %v5419 = vadd.f32 0.0, %v5418
      %v5420 = vpop.f32.mrb[0].mxu0
      %5421 = vmatprep.mubr.bf16.mxu0 %v5068
      %5422 = vmatmul.mubr.bf16.gmra.mrb[0].mxu0 %v5060
      %v5423 = vpop.f32.mrb[0].mxu0
      %v5424 = vadd.f32 0.0, %v5423
      %v5425 = vpop.f32.mrb[0].mxu0
      %v5426 = vpop.f32.mrb[0].mxu0
      %v5427 = vadd.f32 0.0, %v5426
      %v5428 = vpop.f32.mrb[0].mxu0
      %5429 = vdwg.mxu0
      %5430 = vmatprep.subr.bf16.mxu0 0
      %5431 = vmatpush1.bf16.msra.mxu0 %v5237
      %5432 = vmatprep.subr.bf16.mxu0 0
      %5433 = vmatpush1.bf16.msra.mxu0 %v5238
      %5434 = vmatprep.subr.bf16.mxu0 0
      %5435 = vmatpush1.bf16.msra.mxu0 %v5239
      %5436 = vmatprep.subr.bf16.mxu0 0
      %5437 = vmatpush1.bf16.msra.mxu0 %v5240
      %5438 = vmatprep.subr.bf16.mxu0 0
      %5439 = vmatpush1.bf16.msra.mxu0 %v5241
      %5440 = vmatprep.subr.bf16.mxu0 0
      %5441 = vmatpush1.bf16.msra.mxu0 %v5242
      %5442 = vmatprep.subr.bf16.mxu0 0
      %5443 = vmatpush1.bf16.msra.mxu0 %v5243
      %5444 = vmatprep.subr.bf16.mxu0 0
      %5445 = vmatpush1.bf16.msra.mxu0 %v5244
      %5446 = vmatprep.subr.bf16.mxu0 0
      %5447 = vmatpush1.bf16.msra.mxu0 0
      %5448 = vmatprep.subr.bf16.mxu0 0
      %5449 = vmatpush1.bf16.msra.mxu0 0
      %5450 = vmatprep.subr.bf16.mxu0 0
      %5451 = vmatpush1.bf16.msra.mxu0 0
      %5452 = vmatprep.subr.bf16.mxu0 0
      %5453 = vmatpush1.bf16.msra.mxu0 0
      %5454 = vmatprep.subr.bf16.mxu0 0
      %5455 = vmatpush1.bf16.msra.mxu0 0
      %5456 = vmatprep.subr.bf16.mxu0 0
      %5457 = vmatpush1.bf16.msra.mxu0 0
      %5458 = vmatprep.subr.bf16.mxu0 0
      %5459 = vmatpush1.bf16.msra.mxu0 0
      %5460 = vmatprep.subr.bf16.mxu0 0
      %5461 = vmatpush1.bf16.msra.mxu0 0
      %5462 = vmatprep.mubr.bf16.mxu0 0
      %5463 = vmatmul.mubr.bf16.gmra.mrb[0].mxu0 %v4921
      %v5464 = vpop.f32.mrb[0].mxu0
      %v5465 = vadd.f32 %v5304, %v5464
      %v5466 = vpop.f32.mrb[0].mxu0
      %v5467 = vpop.f32.mrb[0].mxu0
      %v5468 = vadd.f32 %v5307, %v5467
      %v5469 = vpop.f32.mrb[0].mxu0
      %5470 = vmatprep.mubr.bf16.mxu0 0
      %5471 = vmatmul.mubr.bf16.gmra.mrb[0].mxu0 %v4930
      %v5472 = vpop.f32.mrb[0].mxu0
      %v5473 = vadd.f32 %v5312, %v5472
      %v5474 = vpop.f32.mrb[0].mxu0
      %v5475 = vpop.f32.mrb[0].mxu0
      %v5476 = vadd.f32 %v5315, %v5475
      %v5477 = vpop.f32.mrb[0].mxu0
      %5478 = vmatprep.mubr.bf16.mxu0 0
      %5479 = vmatmul.mubr.bf16.gmra.mrb[0].mxu0 %v4939
      %v5480 = vpop.f32.mrb[0].mxu0
      %v5481 = vadd.f32 %v5320, %v5480
      %v5482 = vpop.f32.mrb[0].mxu0
      %v5483 = vpop.f32.mrb[0].mxu0
      %v5484 = vadd.f32 %v5323, %v5483
      %v5485 = vpop.f32.mrb[0].mxu0
      %5486 = vmatprep.mubr.bf16.mxu0 0
      %5487 = vmatmul.mubr.bf16.gmra.mrb[0].mxu0 %v4948
      %v5488 = vpop.f32.mrb[0].mxu0
      %v5489 = vadd.f32 %v5328, %v5488
      %v5490 = vpop.f32.mrb[0].mxu0
      %v5491 = vpop.f32.mrb[0].mxu0
      %v5492 = vadd.f32 %v5331, %v5491
      %v5493 = vpop.f32.mrb[0].mxu0
      %5494 = vmatprep.mubr.bf16.mxu0 0
      %5495 = vmatmul.mubr.bf16.gmra.mrb[0].mxu0 %v4957
      %v5496 = vpop.f32.mrb[0].mxu0
      %v5497 = vadd.f32 %v5336, %v5496
      %v5498 = vpop.f32.mrb[0].mxu0
      %v5499 = vpop.f32.mrb[0].mxu0
      %v5500 = vadd.f32 %v5339, %v5499
      %v5501 = vpop.f32.mrb[0].mxu0
      %5502 = vmatprep.mubr.bf16.mxu0 0
      %5503 = vmatmul.mubr.bf16.gmra.mrb[0].mxu0 %v4966
      %v5504 = vpop.f32.mrb[0].mxu0
      %v5505 = vadd.f32 %v5344, %v5504
      %v5506 = vpop.f32.mrb[0].mxu0
      %v5507 = vpop.f32.mrb[0].mxu0
      %v5508 = vadd.f32 %v5347, %v5507
      %v5509 = vpop.f32.mrb[0].mxu0
      %5510 = vmatprep.mubr.bf16.mxu0 0
      %5511 = vmatmul.mubr.bf16.gmra.mrb[0].mxu0 %v4975
      %v5512 = vpop.f32.mrb[0].mxu0
      %v5513 = vadd.f32 %v5352, %v5512
      %v5514 = vpop.f32.mrb[0].mxu0
      %v5515 = vpop.f32.mrb[0].mxu0
      %v5516 = vadd.f32 %v5355, %v5515
      %v5517 = vpop.f32.mrb[0].mxu0
      %5518 = vmatprep.mubr.bf16.mxu0 0
      %5519 = vmatmul.mubr.bf16.gmra.mrb[0].mxu0 %v4984
      %v5520 = vpop.f32.mrb[0].mxu0
      %v5521 = vadd.f32 %v5360, %v5520
      %v5522 = vpop.f32.mrb[0].mxu0
      %v5523 = vpop.f32.mrb[0].mxu0
      %v5524 = vadd.f32 %v5363, %v5523
      %v5525 = vpop.f32.mrb[0].mxu0
      %5526 = vmatprep.mubr.bf16.mxu0 0
      %5527 = vmatmul.mubr.bf16.gmra.mrb[0].mxu0 %v4993
      %v5528 = vpop.f32.mrb[0].mxu0
      %v5529 = vadd.f32 %v5368, %v5528
      %v5530 = vpop.f32.mrb[0].mxu0
      %v5531 = vpop.f32.mrb[0].mxu0
      %v5532 = vadd.f32 %v5371, %v5531
      %v5533 = vpop.f32.mrb[0].mxu0
      %5534 = vmatprep.mubr.bf16.mxu0 0
      %5535 = vmatmul.mubr.bf16.gmra.mrb[0].mxu0 %v5002
      %v5536 = vpop.f32.mrb[0].mxu0
      %v5537 = vadd.f32 %v5376, %v5536
      %v5538 = vpop.f32.mrb[0].mxu0
      %v5539 = vpop.f32.mrb[0].mxu0
      %v5540 = vadd.f32 %v5379, %v5539
      %v5541 = vpop.f32.mrb[0].mxu0
      %5542 = vmatprep.mubr.bf16.mxu0 0
      %5543 = vmatmul.mubr.bf16.gmra.mrb[0].mxu0 %v5011
      %v5544 = vpop.f32.mrb[0].mxu0
      %v5545 = vadd.f32 %v5384, %v5544
      %v5546 = vpop.f32.mrb[0].mxu0
      %v5547 = vpop.f32.mrb[0].mxu0
      %v5548 = vadd.f32 %v5387, %v5547
      %v5549 = vpop.f32.mrb[0].mxu0
      %5550 = vmatprep.mubr.bf16.mxu0 0
      %5551 = vmatmul.mubr.bf16.gmra.mrb[0].mxu0 %v5020
      %v5552 = vpop.f32.mrb[0].mxu0
      %v5553 = vadd.f32 %v5392, %v5552
      %v5554 = vpop.f32.mrb[0].mxu0
      %v5555 = vpop.f32.mrb[0].mxu0
      %v5556 = vadd.f32 %v5395, %v5555
      %v5557 = vpop.f32.mrb[0].mxu0
      %5558 = vmatprep.mubr.bf16.mxu0 0
      %5559 = vmatmul.mubr.bf16.gmra.mrb[0].mxu0 %v5029
      %v5560 = vpop.f32.mrb[0].mxu0
      %v5561 = vadd.f32 %v5400, %v5560
      %v5562 = vpop.f32.mrb[0].mxu0
      %v5563 = vpop.f32.mrb[0].mxu0
      %v5564 = vadd.f32 %v5403, %v5563
      %v5565 = vpop.f32.mrb[0].mxu0
      %5566 = vmatprep.mubr.bf16.mxu0 0
      %5567 = vmatmul.mubr.bf16.gmra.mrb[0].mxu0 %v5038
      %v5568 = vpop.f32.mrb[0].mxu0
      %v5569 = vadd.f32 %v5408, %v5568
      %v5570 = vpop.f32.mrb[0].mxu0
      %v5571 = vpop.f32.mrb[0].mxu0
      %v5572 = vadd.f32 %v5411, %v5571
      %v5573 = vpop.f32.mrb[0].mxu0
      %5574 = vmatprep.mubr.bf16.mxu0 0
      %5575 = vmatmul.mubr.bf16.gmra.mrb[0].mxu0 %v5057
      %v5576 = vpop.f32.mrb[0].mxu0
      %v5577 = vadd.f32 %v5416, %v5576
      %v5578 = vpop.f32.mrb[0].mxu0
      %v5579 = vpop.f32.mrb[0].mxu0
      %v5580 = vadd.f32 %v5419, %v5579
      %v5581 = vpop.f32.mrb[0].mxu0
      %5582 = vmatprep.mubr.bf16.mxu0 0
      %5583 = vmatmul.mubr.bf16.gmra.mrb[0].mxu0 %v5076
      %v5584 = vpop.f32.mrb[0].mxu0
      %v5585 = vadd.f32 %v5424, %v5584
      %v5586 = vpop.f32.mrb[0].mxu0
      %v5587 = vpop.f32.mrb[0].mxu0
      %v5588 = vadd.f32 %v5427, %v5587
      %v5589 = vpop.f32.mrb[0].mxu0
      %5590 = vdwg.mxu0
      %v5591 = vld [vmem:[#allocation2] sm:$0xff]
      %v5592 = vld [vmem:[#allocation2 + $0x8] sm:$0xff]
      %v5593 = vld [vmem:[#allocation2 + $0x10] sm:$0xff]
      %v5594 = vld [vmem:[#allocation2 + $0x18] sm:$0xff]
      %v5595 = vld [vmem:[#allocation2 + $0x20] sm:$0xff]
      %v5596 = vld [vmem:[#allocation2 + $0x28] sm:$0xff]
      %v5597 = vld [vmem:[#allocation2 + $0x30] sm:$0xff]
      %v5598 = vld [vmem:[#allocation2 + $0x38] sm:$0xff]
      %v5599 = vld [vmem:[#allocation2 + $0x40] sm:$0xff]
      %v5600 = vld [vmem:[#allocation2 + $0x48] sm:$0xff]
      %v5601 = vld [vmem:[#allocation2 + $0x50] sm:$0xff]
      %v5602 = vld [vmem:[#allocation2 + $0x58] sm:$0xff]
      %v5603 = vld [vmem:[#allocation2 + $0x60] sm:$0xff]
      %v5604 = vld [vmem:[#allocation2 + $0x68] sm:$0xff]
      %v5605 = vld [vmem:[#allocation2 + $0x70] sm:$0xff]
      %v5606 = vld [vmem:[#allocation2 + $0x78] sm:$0xff]
      %v5607 = vld [vmem:[#allocation2 + $0x80] sm:$0xff]
      %v5608 = vld [vmem:[#allocation2 + $0x88] sm:$0xff]
      %v5609 = vld [vmem:[#allocation2 + $0x90] sm:$0xff]
      %v5610 = vld [vmem:[#allocation2 + $0x98] sm:$0xff]
      %v5611 = vld [vmem:[#allocation2 + $0xa0] sm:$0xff]
      %v5612 = vld [vmem:[#allocation2 + $0xa8] sm:$0xff]
      %v5613 = vld [vmem:[#allocation2 + $0xb0] sm:$0xff]
      %v5614 = vld [vmem:[#allocation2 + $0xb8] sm:$0xff]
      %v5615 = vld [vmem:[#allocation2 + $0xc0] sm:$0xff]
      %v5616 = vld [vmem:[#allocation2 + $0xc8] sm:$0xff]
      %v5617 = vld [vmem:[#allocation2 + $0xd0] sm:$0xff]
      %v5618 = vld [vmem:[#allocation2 + $0xd8] sm:$0xff]
      %v5619 = vld [vmem:[#allocation2 + $0xe0] sm:$0xff]
      %v5620 = vld [vmem:[#allocation2 + $0xe8] sm:$0xff]
      %v5621 = vld [vmem:[#allocation2 + $0xf0] sm:$0xff]
      %v5622 = vld [vmem:[#allocation2 + $0xf8] sm:$0xff]
      %v5623 = vadd.f32 %v5591, %v5465
      %v5624 = vadd.f32 %v5592, %v5468
      %v5625 = vadd.f32 %v5593, %v5473
      %v5626 = vadd.f32 %v5594, %v5476
      %v5627 = vadd.f32 %v5595, %v5481
      %v5628 = vadd.f32 %v5596, %v5484
      %v5629 = vadd.f32 %v5597, %v5489
      %v5630 = vadd.f32 %v5598, %v5492
      %v5631 = vadd.f32 %v5599, %v5497
      %v5632 = vadd.f32 %v5600, %v5500
      %v5633 = vadd.f32 %v5601, %v5505
      %v5634 = vadd.f32 %v5602, %v5508
      %v5635 = vadd.f32 %v5603, %v5513
      %v5636 = vadd.f32 %v5604, %v5516
      %v5637 = vadd.f32 %v5605, %v5521
      %v5638 = vadd.f32 %v5606, %v5524
      %v5639 = vadd.f32 %v5607, %v5529
      %v5640 = vadd.f32 %v5608, %v5532
      %v5641 = vadd.f32 %v5609, %v5537
      %v5642 = vadd.f32 %v5610, %v5540
      %v5643 = vadd.f32 %v5611, %v5545
      %v5644 = vadd.f32 %v5612, %v5548
      %v5645 = vadd.f32 %v5613, %v5553
      %v5646 = vadd.f32 %v5614, %v5556
      %v5647 = vadd.f32 %v5615, %v5561
      %v5648 = vadd.f32 %v5616, %v5564
      %v5649 = vadd.f32 %v5617, %v5569
      %v5650 = vadd.f32 %v5618, %v5572
      %v5651 = vadd.f32 %v5619, %v5577
      %v5652 = vadd.f32 %v5620, %v5580
      %v5653 = vadd.f32 %v5621, %v5585
      %v5654 = vadd.f32 %v5622, %v5588
      %5655 = vst [vmem:[#allocation2] sm:$0xff] %v5623
      %5656 = vst [vmem:[#allocation2 + $0x8] sm:$0xff] %v5624
      %5657 = vst [vmem:[#allocation2 + $0x10] sm:$0xff] %v5625
      %5658 = vst [vmem:[#allocation2 + $0x18] sm:$0xff] %v5626
      %5659 = vst [vmem:[#allocation2 + $0x20] sm:$0xff] %v5627
      %5660 = vst [vmem:[#allocation2 + $0x28] sm:$0xff] %v5628
      %5661 = vst [vmem:[#allocation2 + $0x30] sm:$0xff] %v5629
      %5662 = vst [vmem:[#allocation2 + $0x38] sm:$0xff] %v5630
      %5663 = vst [vmem:[#allocation2 + $0x40] sm:$0xff] %v5631
      %5664 = vst [vmem:[#allocation2 + $0x48] sm:$0xff] %v5632
      %5665 = vst [vmem:[#allocation2 + $0x50] sm:$0xff] %v5633
      %5666 = vst [vmem:[#allocation2 + $0x58] sm:$0xff] %v5634
      %5667 = vst [vmem:[#allocation2 + $0x60] sm:$0xff] %v5635
      %5668 = vst [vmem:[#allocation2 + $0x68] sm:$0xff] %v5636
      %5669 = vst [vmem:[#allocation2 + $0x70] sm:$0xff] %v5637
      %5670 = vst [vmem:[#allocation2 + $0x78] sm:$0xff] %v5638
      %5671 = vst [vmem:[#allocation2 + $0x80] sm:$0xff] %v5639
      %5672 = vst [vmem:[#allocation2 + $0x88] sm:$0xff] %v5640
      %5673 = vst [vmem:[#allocation2 + $0x90] sm:$0xff] %v5641
      %5674 = vst [vmem:[#allocation2 + $0x98] sm:$0xff] %v5642
      %5675 = vst [vmem:[#allocation2 + $0xa0] sm:$0xff] %v5643
      %5676 = vst [vmem:[#allocation2 + $0xa8] sm:$0xff] %v5644
      %5677 = vst [vmem:[#allocation2 + $0xb0] sm:$0xff] %v5645
      %5678 = vst [vmem:[#allocation2 + $0xb8] sm:$0xff] %v5646
      %5679 = vst [vmem:[#allocation2 + $0xc0] sm:$0xff] %v5647
      %5680 = vst [vmem:[#allocation2 + $0xc8] sm:$0xff] %v5648
      %5681 = vst [vmem:[#allocation2 + $0xd0] sm:$0xff] %v5649
      %5682 = vst [vmem:[#allocation2 + $0xd8] sm:$0xff] %v5650
      %5683 = vst [vmem:[#allocation2 + $0xe0] sm:$0xff] %v5651
      %5684 = vst [vmem:[#allocation2 + $0xe8] sm:$0xff] %v5652
      %5685 = vst [vmem:[#allocation2 + $0xf0] sm:$0xff] %v5653
      %5686 = vst [vmem:[#allocation2 + $0xf8] sm:$0xff] %v5654
      %v5688 = vshll.u32 %v3644, 16
      %v5690 = vrot.slane %v5688, 1
      %v5691 = vsel %vm816, %v4850, %v5690
      %v5692 = vshrl.u32 %v3644, 16
      %v5694 = vor.u32 %v5692, %v5690
      %v5696 = vshll.u32 %v3645, 16
      %v5698 = vrot.slane %v5696, 1
      %v5699 = vsel %vm816, %v5694, %v5698
      %v5700 = vshrl.u32 %v3645, 16
      %v5702 = vor.u32 %v5700, %v5698
      %v5703 = vrot.slane %v3645, 1
      %v5704 = vsel %vm952, %v4853, %v5703
      %s5705 = scalar_lea.vmem %s656, 384
      %v5706 = vld [vmem:[%s5705] sm:$0xf]
      %v5707 = vld [vmem:[%s5705 + $0x4] sm:$0xf]
      %v5708 = vld [vmem:[%s5705 + $0x8] sm:$0xf]
      %v5709 = vld [vmem:[%s5705 + $0xc] sm:$0xf]
      %v5710 = vld [vmem:[%s5705 + $0x10] sm:$0xf]
      %v5711 = vld [vmem:[%s5705 + $0x14] sm:$0xf]
      %v5712 = vld [vmem:[%s5705 + $0x18] sm:$0xf]
      %v5713 = vld [vmem:[%s5705 + $0x1c] sm:$0xf]
      %v5714 = vld [vmem:[%s5705 + $0x20] sm:$0xf]
      %v5715 = vld [vmem:[%s5705 + $0x24] sm:$0xf]
      %v5716 = vld [vmem:[%s5705 + $0x28] sm:$0xf]
      %v5717 = vld [vmem:[%s5705 + $0x2c] sm:$0xf]
      %v5718 = vld [vmem:[%s5705 + $0x30] sm:$0xf]
      %v5719 = vld [vmem:[%s5705 + $0x34] sm:$0xf]
      %v5720 = vld [vmem:[%s5705 + $0x38] sm:$0xf]
      %v5721 = vld [vmem:[%s5705 + $0x3c] sm:$0xf]
      %v5722 = vld [vmem:[%s5705 + $0x40] sm:$0xf]
      %v5723 = vld [vmem:[%s5705 + $0x44] sm:$0xf]
      %v5724 = vld [vmem:[%s5705 + $0x48] sm:$0xf]
      %v5725 = vld [vmem:[%s5705 + $0x4c] sm:$0xf]
      %v5726 = vld [vmem:[%s5705 + $0x50] sm:$0xf]
      %v5727 = vld [vmem:[%s5705 + $0x54] sm:$0xf]
      %v5728 = vld [vmem:[%s5705 + $0x58] sm:$0xf]
      %v5729 = vld [vmem:[%s5705 + $0x5c] sm:$0xf]
      %v5730 = vld [vmem:[%s5705 + $0x60] sm:$0xf]
      %v5731 = vld [vmem:[%s5705 + $0x64] sm:$0xf]
      %v5732 = vld [vmem:[%s5705 + $0x68] sm:$0xf]
      %v5733 = vld [vmem:[%s5705 + $0x6c] sm:$0xf]
      %v5734 = vld [vmem:[%s5705 + $0x70] sm:$0xf]
      %v5735 = vld [vmem:[%s5705 + $0x74] sm:$0xf]
      %v5736 = vld [vmem:[%s5705 + $0x78] sm:$0xf]
      %v5737 = vld [vmem:[%s5705 + $0x7c] sm:$0xf]
      %v5738 = vld [vmem:[%s5705 + $0x80] sm:$0xf]
      %v5739 = vld [vmem:[%s5705 + $0x84] sm:$0xf]
      %v5740 = vld [vmem:[%s5705 + $0x88] sm:$0xf]
      %v5741 = vld [vmem:[%s5705 + $0x8c] sm:$0xf]
      %v5742 = vld [vmem:[%s5705 + $0x90] sm:$0xf]
      %v5743 = vld [vmem:[%s5705 + $0x94] sm:$0xf]
      %v5744 = vld [vmem:[%s5705 + $0x98] sm:$0xf]
      %v5745 = vld [vmem:[%s5705 + $0x9c] sm:$0xf]
      %v5746 = vld [vmem:[%s5705 + $0xa0] sm:$0xf]
      %v5747 = vld [vmem:[%s5705 + $0xa4] sm:$0xf]
      %v5748 = vld [vmem:[%s5705 + $0xa8] sm:$0xf]
      %v5749 = vld [vmem:[%s5705 + $0xac] sm:$0xf]
      %v5750 = vld [vmem:[%s5705 + $0xb0] sm:$0xf]
      %v5751 = vld [vmem:[%s5705 + $0xb4] sm:$0xf]
      %v5752 = vld [vmem:[%s5705 + $0xb8] sm:$0xf]
      %v5753 = vld [vmem:[%s5705 + $0xbc] sm:$0xf]
      %v5754 = vrot.slane %v5043, 3
      %v5755 = vrot.slane %v5046, 4
      %v5756 = vor.u32 %v5754, %v5755
      %v5757 = vsel %vm1034, %v4200, %v5756
      %v5758 = vrot.slane %v5051, 3
      %v5759 = vrot.slane %v5054, 4
      %v5760 = vor.u32 %v5758, %v5759
      %v5761 = vsel %vm1034, %v4209, %v5760
      %v5762 = vrot.slane %v4848, 3
      %v5763 = vrot.slane %v4844, 4
      %v5764 = vor.u32 %v5762, %v5763
      %v5765 = vsel %vm1034, %v4213, %v5764
      %v5767 = vshrl.u32 %v5691, 16
      %v5769 = vrot.slane %v5767, 3
      %v5770 = vshll.u32 %v5691, 16
      %v5772 = vrot.slane %v5770, 4
      %v5773 = vor.u32 %v5769, %v5772
      %v5774 = vsel %vm1034, %v5756, %v5773
      %v5775 = vrot.slane %v5070, 3
      %v5776 = vrot.slane %v5073, 4
      %v5777 = vor.u32 %v5775, %v5776
      %v5778 = vsel %vm1034, %v5760, %v5777
      %v5779 = vrot.slane %v5692, 3
      %v5780 = vrot.slane %v5688, 4
      %v5781 = vor.u32 %v5779, %v5780
      %v5782 = vsel %vm1034, %v5764, %v5781
      %v5784 = vshrl.u32 %v5699, 16
      %v5786 = vrot.slane %v5784, 3
      %v5787 = vshll.u32 %v5699, 16
      %v5789 = vrot.slane %v5787, 4
      %v5790 = vor.u32 %v5786, %v5789
      %v5791 = vsel %vm1034, %v5773, %v5790
      %v5793 = vshrl.u32 %v5704, 16
      %v5795 = vrot.slane %v5793, 3
      %v5796 = vshll.u32 %v5704, 16
      %v5798 = vrot.slane %v5796, 4
      %v5799 = vor.u32 %v5795, %v5798
      %v5800 = vsel %vm1034, %v5777, %v5799
      %v5801 = vrot.slane %v5700, 3
      %v5802 = vrot.slane %v5696, 4
      %v5803 = vor.u32 %v5801, %v5802
      %v5804 = vsel %vm1034, %v5781, %v5803
      %v5806 = vshrl.u32 %v5702, 16
      %v5808 = vrot.slane %v5806, 3
      %v5809 = vshll.u32 %v5702, 16
      %v5811 = vrot.slane %v5809, 4
      %v5812 = vor.u32 %v5808, %v5811
      %v5813 = vsel %vm1034, %v5790, %v5812
      %v5815 = vshrl.u32 %v5703, 16
      %v5817 = vrot.slane %v5815, 3
      %v5818 = vshll.u32 %v5703, 16
      %v5820 = vrot.slane %v5818, 4
      %v5821 = vor.u32 %v5817, %v5820
      %v5822 = vsel %vm1034, %v5799, %v5821
      %v5882 = vunpack.c.l.b16 %v5706
      %v5883 = vunpack.c.l.b16 %v5707
      %v5884 = vunpack.c.l.b16 %v5708
      %v5885 = vunpack.c.l.b16 %v5709
      %v5886 = vunpack.c.l.b16 %v5710
      %v5887 = vunpack.c.l.b16 %v5711
      %v5888 = vunpack.c.l.b16 %v5712
      %v5889 = vunpack.c.l.b16 %v5713
      %v5890 = vunpack.c.l.b16 %v5714
      %v5891 = vunpack.c.l.b16 %v5715
      %v5892 = vunpack.c.l.b16 %v5716
      %v5893 = vunpack.c.l.b16 %v5717
      %v5894 = vunpack.c.l.b16 %v5718
      %v5895 = vunpack.c.l.b16 %v5719
      %v5896 = vunpack.c.l.b16 %v5720
      %v5897 = vunpack.c.l.b16 %v5721
      %v5898 = vunpack.c.l.b16 %v5722
      %v5899 = vunpack.c.l.b16 %v5723
      %v5900 = vunpack.c.l.b16 %v5724
      %v5901 = vunpack.c.l.b16 %v5725
      %v5902 = vunpack.c.l.b16 %v5726
      %v5903 = vunpack.c.l.b16 %v5727
      %v5904 = vunpack.c.l.b16 %v5728
      %v5905 = vunpack.c.l.b16 %v5729
      %v5906 = vunpack.c.l.b16 %v5730
      %v5907 = vunpack.c.l.b16 %v5731
      %v5908 = vunpack.c.l.b16 %v5732
      %v5909 = vunpack.c.l.b16 %v5733
      %v5910 = vunpack.c.l.b16 %v5734
      %v5911 = vunpack.c.l.b16 %v5735
      %v5912 = vunpack.c.l.b16 %v5736
      %v5913 = vunpack.c.l.b16 %v5737
      %v5914 = vunpack.c.l.b16 %v5738
      %v5915 = vunpack.c.l.b16 %v5739
      %v5916 = vunpack.c.l.b16 %v5740
      %v5917 = vunpack.c.l.b16 %v5741
      %v5918 = vunpack.c.l.b16 %v5742
      %v5919 = vunpack.c.l.b16 %v5743
      %v5920 = vunpack.c.l.b16 %v5744
      %v5921 = vunpack.c.l.b16 %v5745
      %v5922 = vunpack.c.l.b16 %v5746
      %v5923 = vunpack.c.l.b16 %v5747
      %v5924 = vunpack.c.l.b16 %v5748
      %v5925 = vunpack.c.l.b16 %v5749
      %v5926 = vunpack.c.l.b16 %v5750
      %v5927 = vunpack.c.l.b16 %v5751
      %v5928 = vunpack.c.l.b16 %v5752
      %v5929 = vunpack.c.l.b16 %v5753
      %v5930 = vpack.c.b16 %v5883, %v5882
      %v5931 = vpack.c.b16 %v5885, %v5884
      %v5932 = vpack.c.b16 %v5887, %v5886
      %v5933 = vpack.c.b16 %v5889, %v5888
      %v5934 = vpack.c.b16 %v5891, %v5890
      %v5935 = vpack.c.b16 %v5893, %v5892
      %v5936 = vpack.c.b16 %v5895, %v5894
      %v5937 = vpack.c.b16 %v5897, %v5896
      %v5938 = vpack.c.b16 %v5899, %v5898
      %v5939 = vpack.c.b16 %v5901, %v5900
      %v5940 = vpack.c.b16 %v5903, %v5902
      %v5941 = vpack.c.b16 %v5905, %v5904
      %v5942 = vpack.c.b16 %v5907, %v5906
      %v5943 = vpack.c.b16 %v5909, %v5908
      %v5944 = vpack.c.b16 %v5911, %v5910
      %v5945 = vpack.c.b16 %v5913, %v5912
      %v5946 = vpack.c.b16 %v5915, %v5914
      %v5947 = vpack.c.b16 %v5917, %v5916
      %v5948 = vpack.c.b16 %v5919, %v5918
      %v5949 = vpack.c.b16 %v5921, %v5920
      %v5950 = vpack.c.b16 %v5923, %v5922
      %v5951 = vpack.c.b16 %v5925, %v5924
      %v5952 = vpack.c.b16 %v5927, %v5926
      %v5953 = vpack.c.b16 %v5929, %v5928
      %5978 = vmatprep.subr.bf16.mxu0 0
      %5979 = vmatpush1.bf16.msra.mxu0 %v5930
      %5980 = vmatprep.subr.bf16.mxu0 0
      %5981 = vmatpush1.bf16.msra.mxu0 %v5931
      %5982 = vmatprep.subr.bf16.mxu0 0
      %5983 = vmatpush1.bf16.msra.mxu0 %v5932
      %5984 = vmatprep.subr.bf16.mxu0 0
      %5985 = vmatpush1.bf16.msra.mxu0 %v5933
      %5986 = vmatprep.subr.bf16.mxu0 0
      %5987 = vmatpush1.bf16.msra.mxu0 %v5934
      %5988 = vmatprep.subr.bf16.mxu0 0
      %5989 = vmatpush1.bf16.msra.mxu0 %v5935
      %5990 = vmatprep.subr.bf16.mxu0 0
      %5991 = vmatpush1.bf16.msra.mxu0 %v5936
      %5992 = vmatprep.subr.bf16.mxu0 0
      %5993 = vmatpush1.bf16.msra.mxu0 %v5937
      %5994 = vmatprep.subr.bf16.mxu0 0
      %5995 = vmatpush1.bf16.msra.mxu0 %v5938
      %5996 = vmatprep.subr.bf16.mxu0 0
      %5997 = vmatpush1.bf16.msra.mxu0 %v5939
      %5998 = vmatprep.subr.bf16.mxu0 0
      %5999 = vmatpush1.bf16.msra.mxu0 %v5940
      %6000 = vmatprep.subr.bf16.mxu0 0
      %6001 = vmatpush1.bf16.msra.mxu0 %v5941
      %6002 = vmatprep.subr.bf16.mxu0 0
      %6003 = vmatpush1.bf16.msra.mxu0 %v5942
      %6004 = vmatprep.subr.bf16.mxu0 0
      %6005 = vmatpush1.bf16.msra.mxu0 %v5943
      %6006 = vmatprep.subr.bf16.mxu0 0
      %6007 = vmatpush1.bf16.msra.mxu0 %v5944
      %6008 = vmatprep.subr.bf16.mxu0 0
      %6009 = vmatpush1.bf16.msra.mxu0 %v5945
      %6010 = vmatprep.mubr.bf16.mxu0 %v3959
      %6011 = vmatmul.mubr.bf16.gmra.mrb[0].mxu0 %v3950
      %v6012 = vpop.f32.mrb[0].mxu0
      %v6013 = vadd.f32 0.0, %v6012
      %v6014 = vpop.f32.mrb[0].mxu0
      %v6015 = vpop.f32.mrb[0].mxu0
      %v6016 = vadd.f32 0.0, %v6015
      %v6017 = vpop.f32.mrb[0].mxu0
      %6018 = vmatprep.mubr.bf16.mxu0 %v3981
      %6019 = vmatmul.mubr.bf16.gmra.mrb[0].mxu0 %v3972
      %v6020 = vpop.f32.mrb[0].mxu0
      %v6021 = vadd.f32 0.0, %v6020
      %v6022 = vpop.f32.mrb[0].mxu0
      %v6023 = vpop.f32.mrb[0].mxu0
      %v6024 = vadd.f32 0.0, %v6023
      %v6025 = vpop.f32.mrb[0].mxu0
      %6026 = vmatprep.mubr.bf16.mxu0 %v4003
      %6027 = vmatmul.mubr.bf16.gmra.mrb[0].mxu0 %v3994
      %v6028 = vpop.f32.mrb[0].mxu0
      %v6029 = vadd.f32 0.0, %v6028
      %v6030 = vpop.f32.mrb[0].mxu0
      %v6031 = vpop.f32.mrb[0].mxu0
      %v6032 = vadd.f32 0.0, %v6031
      %v6033 = vpop.f32.mrb[0].mxu0
      %6034 = vmatprep.mubr.bf16.mxu0 %v4025
      %6035 = vmatmul.mubr.bf16.gmra.mrb[0].mxu0 %v4016
      %v6036 = vpop.f32.mrb[0].mxu0
      %v6037 = vadd.f32 0.0, %v6036
      %v6038 = vpop.f32.mrb[0].mxu0
      %v6039 = vpop.f32.mrb[0].mxu0
      %v6040 = vadd.f32 0.0, %v6039
      %v6041 = vpop.f32.mrb[0].mxu0
      %6042 = vmatprep.mubr.bf16.mxu0 %v4047
      %6043 = vmatmul.mubr.bf16.gmra.mrb[0].mxu0 %v4038
      %v6044 = vpop.f32.mrb[0].mxu0
      %v6045 = vadd.f32 0.0, %v6044
      %v6046 = vpop.f32.mrb[0].mxu0
      %v6047 = vpop.f32.mrb[0].mxu0
      %v6048 = vadd.f32 0.0, %v6047
      %v6049 = vpop.f32.mrb[0].mxu0
      %6050 = vmatprep.mubr.bf16.mxu0 %v4069
      %6051 = vmatmul.mubr.bf16.gmra.mrb[0].mxu0 %v4060
      %v6052 = vpop.f32.mrb[0].mxu0
      %v6053 = vadd.f32 0.0, %v6052
      %v6054 = vpop.f32.mrb[0].mxu0
      %v6055 = vpop.f32.mrb[0].mxu0
      %v6056 = vadd.f32 0.0, %v6055
      %v6057 = vpop.f32.mrb[0].mxu0
      %6058 = vmatprep.mubr.bf16.mxu0 %v4091
      %6059 = vmatmul.mubr.bf16.gmra.mrb[0].mxu0 %v4082
      %v6060 = vpop.f32.mrb[0].mxu0
      %v6061 = vadd.f32 0.0, %v6060
      %v6062 = vpop.f32.mrb[0].mxu0
      %v6063 = vpop.f32.mrb[0].mxu0
      %v6064 = vadd.f32 0.0, %v6063
      %v6065 = vpop.f32.mrb[0].mxu0
      %6066 = vmatprep.mubr.bf16.mxu0 %v4113
      %6067 = vmatmul.mubr.bf16.gmra.mrb[0].mxu0 %v4104
      %v6068 = vpop.f32.mrb[0].mxu0
      %v6069 = vadd.f32 0.0, %v6068
      %v6070 = vpop.f32.mrb[0].mxu0
      %v6071 = vpop.f32.mrb[0].mxu0
      %v6072 = vadd.f32 0.0, %v6071
      %v6073 = vpop.f32.mrb[0].mxu0
      %6074 = vmatprep.mubr.bf16.mxu0 %v4135
      %6075 = vmatmul.mubr.bf16.gmra.mrb[0].mxu0 %v4126
      %v6076 = vpop.f32.mrb[0].mxu0
      %v6077 = vadd.f32 0.0, %v6076
      %v6078 = vpop.f32.mrb[0].mxu0
      %v6079 = vpop.f32.mrb[0].mxu0
      %v6080 = vadd.f32 0.0, %v6079
      %v6081 = vpop.f32.mrb[0].mxu0
      %6082 = vmatprep.mubr.bf16.mxu0 %v4157
      %6083 = vmatmul.mubr.bf16.gmra.mrb[0].mxu0 %v4148
      %v6084 = vpop.f32.mrb[0].mxu0
      %v6085 = vadd.f32 0.0, %v6084
      %v6086 = vpop.f32.mrb[0].mxu0
      %v6087 = vpop.f32.mrb[0].mxu0
      %v6088 = vadd.f32 0.0, %v6087
      %v6089 = vpop.f32.mrb[0].mxu0
      %6090 = vmatprep.mubr.bf16.mxu0 %v4179
      %6091 = vmatmul.mubr.bf16.gmra.mrb[0].mxu0 %v4170
      %v6092 = vpop.f32.mrb[0].mxu0
      %v6093 = vadd.f32 0.0, %v6092
      %v6094 = vpop.f32.mrb[0].mxu0
      %v6095 = vpop.f32.mrb[0].mxu0
      %v6096 = vadd.f32 0.0, %v6095
      %v6097 = vpop.f32.mrb[0].mxu0
      %6098 = vmatprep.mubr.bf16.mxu0 %v4201
      %6099 = vmatmul.mubr.bf16.gmra.mrb[0].mxu0 %v4192
      %v6100 = vpop.f32.mrb[0].mxu0
      %v6101 = vadd.f32 0.0, %v6100
      %v6102 = vpop.f32.mrb[0].mxu0
      %v6103 = vpop.f32.mrb[0].mxu0
      %v6104 = vadd.f32 0.0, %v6103
      %v6105 = vpop.f32.mrb[0].mxu0
      %6106 = vmatprep.mubr.bf16.mxu0 %v5757
      %6107 = vmatmul.mubr.bf16.gmra.mrb[0].mxu0 %v4214
      %v6108 = vpop.f32.mrb[0].mxu0
      %v6109 = vadd.f32 0.0, %v6108
      %v6110 = vpop.f32.mrb[0].mxu0
      %v6111 = vpop.f32.mrb[0].mxu0
      %v6112 = vadd.f32 0.0, %v6111
      %v6113 = vpop.f32.mrb[0].mxu0
      %6114 = vmatprep.mubr.bf16.mxu0 %v5774
      %6115 = vmatmul.mubr.bf16.gmra.mrb[0].mxu0 %v5765
      %v6116 = vpop.f32.mrb[0].mxu0
      %v6117 = vadd.f32 0.0, %v6116
      %v6118 = vpop.f32.mrb[0].mxu0
      %v6119 = vpop.f32.mrb[0].mxu0
      %v6120 = vadd.f32 0.0, %v6119
      %v6121 = vpop.f32.mrb[0].mxu0
      %6122 = vmatprep.mubr.bf16.mxu0 %v5791
      %6123 = vmatmul.mubr.bf16.gmra.mrb[0].mxu0 %v5782
      %v6124 = vpop.f32.mrb[0].mxu0
      %v6125 = vadd.f32 0.0, %v6124
      %v6126 = vpop.f32.mrb[0].mxu0
      %v6127 = vpop.f32.mrb[0].mxu0
      %v6128 = vadd.f32 0.0, %v6127
      %v6129 = vpop.f32.mrb[0].mxu0
      %6130 = vmatprep.mubr.bf16.mxu0 %v5813
      %6131 = vmatmul.mubr.bf16.gmra.mrb[0].mxu0 %v5804
      %v6132 = vpop.f32.mrb[0].mxu0
      %v6133 = vadd.f32 0.0, %v6132
      %v6134 = vpop.f32.mrb[0].mxu0
      %v6135 = vpop.f32.mrb[0].mxu0
      %v6136 = vadd.f32 0.0, %v6135
      %v6137 = vpop.f32.mrb[0].mxu0
      %6138 = vdwg.mxu0
      %6139 = vmatprep.subr.bf16.mxu0 0
      %6140 = vmatpush1.bf16.msra.mxu0 %v5946
      %6141 = vmatprep.subr.bf16.mxu0 0
      %6142 = vmatpush1.bf16.msra.mxu0 %v5947
      %6143 = vmatprep.subr.bf16.mxu0 0
      %6144 = vmatpush1.bf16.msra.mxu0 %v5948
      %6145 = vmatprep.subr.bf16.mxu0 0
      %6146 = vmatpush1.bf16.msra.mxu0 %v5949
      %6147 = vmatprep.subr.bf16.mxu0 0
      %6148 = vmatpush1.bf16.msra.mxu0 %v5950
      %6149 = vmatprep.subr.bf16.mxu0 0
      %6150 = vmatpush1.bf16.msra.mxu0 %v5951
      %6151 = vmatprep.subr.bf16.mxu0 0
      %6152 = vmatpush1.bf16.msra.mxu0 %v5952
      %6153 = vmatprep.subr.bf16.mxu0 0
      %6154 = vmatpush1.bf16.msra.mxu0 %v5953
      %6155 = vmatprep.subr.bf16.mxu0 0
      %6156 = vmatpush1.bf16.msra.mxu0 0
      %6157 = vmatprep.subr.bf16.mxu0 0
      %6158 = vmatpush1.bf16.msra.mxu0 0
      %6159 = vmatprep.subr.bf16.mxu0 0
      %6160 = vmatpush1.bf16.msra.mxu0 0
      %6161 = vmatprep.subr.bf16.mxu0 0
      %6162 = vmatpush1.bf16.msra.mxu0 0
      %6163 = vmatprep.subr.bf16.mxu0 0
      %6164 = vmatpush1.bf16.msra.mxu0 0
      %6165 = vmatprep.subr.bf16.mxu0 0
      %6166 = vmatpush1.bf16.msra.mxu0 0
      %6167 = vmatprep.subr.bf16.mxu0 0
      %6168 = vmatpush1.bf16.msra.mxu0 0
      %6169 = vmatprep.subr.bf16.mxu0 0
      %6170 = vmatpush1.bf16.msra.mxu0 0
      %6171 = vmatprep.mubr.bf16.mxu0 0
      %6172 = vmatmul.mubr.bf16.gmra.mrb[0].mxu0 %v3968
      %v6173 = vpop.f32.mrb[0].mxu0
      %v6174 = vadd.f32 %v6013, %v6173
      %v6175 = vpop.f32.mrb[0].mxu0
      %v6176 = vpop.f32.mrb[0].mxu0
      %v6177 = vadd.f32 %v6016, %v6176
      %v6178 = vpop.f32.mrb[0].mxu0
      %6179 = vmatprep.mubr.bf16.mxu0 0
      %6180 = vmatmul.mubr.bf16.gmra.mrb[0].mxu0 %v3990
      %v6181 = vpop.f32.mrb[0].mxu0
      %v6182 = vadd.f32 %v6021, %v6181
      %v6183 = vpop.f32.mrb[0].mxu0
      %v6184 = vpop.f32.mrb[0].mxu0
      %v6185 = vadd.f32 %v6024, %v6184
      %v6186 = vpop.f32.mrb[0].mxu0
      %6187 = vmatprep.mubr.bf16.mxu0 0
      %6188 = vmatmul.mubr.bf16.gmra.mrb[0].mxu0 %v4012
      %v6189 = vpop.f32.mrb[0].mxu0
      %v6190 = vadd.f32 %v6029, %v6189
      %v6191 = vpop.f32.mrb[0].mxu0
      %v6192 = vpop.f32.mrb[0].mxu0
      %v6193 = vadd.f32 %v6032, %v6192
      %v6194 = vpop.f32.mrb[0].mxu0
      %6195 = vmatprep.mubr.bf16.mxu0 0
      %6196 = vmatmul.mubr.bf16.gmra.mrb[0].mxu0 %v4034
      %v6197 = vpop.f32.mrb[0].mxu0
      %v6198 = vadd.f32 %v6037, %v6197
      %v6199 = vpop.f32.mrb[0].mxu0
      %v6200 = vpop.f32.mrb[0].mxu0
      %v6201 = vadd.f32 %v6040, %v6200
      %v6202 = vpop.f32.mrb[0].mxu0
      %6203 = vmatprep.mubr.bf16.mxu0 0
      %6204 = vmatmul.mubr.bf16.gmra.mrb[0].mxu0 %v4056
      %v6205 = vpop.f32.mrb[0].mxu0
      %v6206 = vadd.f32 %v6045, %v6205
      %v6207 = vpop.f32.mrb[0].mxu0
      %v6208 = vpop.f32.mrb[0].mxu0
      %v6209 = vadd.f32 %v6048, %v6208
      %v6210 = vpop.f32.mrb[0].mxu0
      %6211 = vmatprep.mubr.bf16.mxu0 0
      %6212 = vmatmul.mubr.bf16.gmra.mrb[0].mxu0 %v4078
      %v6213 = vpop.f32.mrb[0].mxu0
      %v6214 = vadd.f32 %v6053, %v6213
      %v6215 = vpop.f32.mrb[0].mxu0
      %v6216 = vpop.f32.mrb[0].mxu0
      %v6217 = vadd.f32 %v6056, %v6216
      %v6218 = vpop.f32.mrb[0].mxu0
      %6219 = vmatprep.mubr.bf16.mxu0 0
      %6220 = vmatmul.mubr.bf16.gmra.mrb[0].mxu0 %v4100
      %v6221 = vpop.f32.mrb[0].mxu0
      %v6222 = vadd.f32 %v6061, %v6221
      %v6223 = vpop.f32.mrb[0].mxu0
      %v6224 = vpop.f32.mrb[0].mxu0
      %v6225 = vadd.f32 %v6064, %v6224
      %v6226 = vpop.f32.mrb[0].mxu0
      %6227 = vmatprep.mubr.bf16.mxu0 0
      %6228 = vmatmul.mubr.bf16.gmra.mrb[0].mxu0 %v4122
      %v6229 = vpop.f32.mrb[0].mxu0
      %v6230 = vadd.f32 %v6069, %v6229
      %v6231 = vpop.f32.mrb[0].mxu0
      %v6232 = vpop.f32.mrb[0].mxu0
      %v6233 = vadd.f32 %v6072, %v6232
      %v6234 = vpop.f32.mrb[0].mxu0
      %6235 = vmatprep.mubr.bf16.mxu0 0
      %6236 = vmatmul.mubr.bf16.gmra.mrb[0].mxu0 %v4144
      %v6237 = vpop.f32.mrb[0].mxu0
      %v6238 = vadd.f32 %v6077, %v6237
      %v6239 = vpop.f32.mrb[0].mxu0
      %v6240 = vpop.f32.mrb[0].mxu0
      %v6241 = vadd.f32 %v6080, %v6240
      %v6242 = vpop.f32.mrb[0].mxu0
      %6243 = vmatprep.mubr.bf16.mxu0 0
      %6244 = vmatmul.mubr.bf16.gmra.mrb[0].mxu0 %v4166
      %v6245 = vpop.f32.mrb[0].mxu0
      %v6246 = vadd.f32 %v6085, %v6245
      %v6247 = vpop.f32.mrb[0].mxu0
      %v6248 = vpop.f32.mrb[0].mxu0
      %v6249 = vadd.f32 %v6088, %v6248
      %v6250 = vpop.f32.mrb[0].mxu0
      %6251 = vmatprep.mubr.bf16.mxu0 0
      %6252 = vmatmul.mubr.bf16.gmra.mrb[0].mxu0 %v4188
      %v6253 = vpop.f32.mrb[0].mxu0
      %v6254 = vadd.f32 %v6093, %v6253
      %v6255 = vpop.f32.mrb[0].mxu0
      %v6256 = vpop.f32.mrb[0].mxu0
      %v6257 = vadd.f32 %v6096, %v6256
      %v6258 = vpop.f32.mrb[0].mxu0
      %6259 = vmatprep.mubr.bf16.mxu0 0
      %6260 = vmatmul.mubr.bf16.gmra.mrb[0].mxu0 %v4210
      %v6261 = vpop.f32.mrb[0].mxu0
      %v6262 = vadd.f32 %v6101, %v6261
      %v6263 = vpop.f32.mrb[0].mxu0
      %v6264 = vpop.f32.mrb[0].mxu0
      %v6265 = vadd.f32 %v6104, %v6264
      %v6266 = vpop.f32.mrb[0].mxu0
      %6267 = vmatprep.mubr.bf16.mxu0 0
      %6268 = vmatmul.mubr.bf16.gmra.mrb[0].mxu0 %v5761
      %v6269 = vpop.f32.mrb[0].mxu0
      %v6270 = vadd.f32 %v6109, %v6269
      %v6271 = vpop.f32.mrb[0].mxu0
      %v6272 = vpop.f32.mrb[0].mxu0
      %v6273 = vadd.f32 %v6112, %v6272
      %v6274 = vpop.f32.mrb[0].mxu0
      %6275 = vmatprep.mubr.bf16.mxu0 0
      %6276 = vmatmul.mubr.bf16.gmra.mrb[0].mxu0 %v5778
      %v6277 = vpop.f32.mrb[0].mxu0
      %v6278 = vadd.f32 %v6117, %v6277
      %v6279 = vpop.f32.mrb[0].mxu0
      %v6280 = vpop.f32.mrb[0].mxu0
      %v6281 = vadd.f32 %v6120, %v6280
      %v6282 = vpop.f32.mrb[0].mxu0
      %6283 = vmatprep.mubr.bf16.mxu0 0
      %6284 = vmatmul.mubr.bf16.gmra.mrb[0].mxu0 %v5800
      %v6285 = vpop.f32.mrb[0].mxu0
      %v6286 = vadd.f32 %v6125, %v6285
      %v6287 = vpop.f32.mrb[0].mxu0
      %v6288 = vpop.f32.mrb[0].mxu0
      %v6289 = vadd.f32 %v6128, %v6288
      %v6290 = vpop.f32.mrb[0].mxu0
      %6291 = vmatprep.mubr.bf16.mxu0 0
      %6292 = vmatmul.mubr.bf16.gmra.mrb[0].mxu0 %v5822
      %v6293 = vpop.f32.mrb[0].mxu0
      %v6294 = vadd.f32 %v6133, %v6293
      %v6295 = vpop.f32.mrb[0].mxu0
      %v6296 = vpop.f32.mrb[0].mxu0
      %v6297 = vadd.f32 %v6136, %v6296
      %v6298 = vpop.f32.mrb[0].mxu0
      %6299 = vdwg.mxu0
      %v6300 = vld [vmem:[#allocation2] sm:$0xff]
      %v6301 = vld [vmem:[#allocation2 + $0x8] sm:$0xff]
      %v6302 = vld [vmem:[#allocation2 + $0x10] sm:$0xff]
      %v6303 = vld [vmem:[#allocation2 + $0x18] sm:$0xff]
      %v6304 = vld [vmem:[#allocation2 + $0x20] sm:$0xff]
      %v6305 = vld [vmem:[#allocation2 + $0x28] sm:$0xff]
      %v6306 = vld [vmem:[#allocation2 + $0x30] sm:$0xff]
      %v6307 = vld [vmem:[#allocation2 + $0x38] sm:$0xff]
      %v6308 = vld [vmem:[#allocation2 + $0x40] sm:$0xff]
      %v6309 = vld [vmem:[#allocation2 + $0x48] sm:$0xff]
      %v6310 = vld [vmem:[#allocation2 + $0x50] sm:$0xff]
      %v6311 = vld [vmem:[#allocation2 + $0x58] sm:$0xff]
      %v6312 = vld [vmem:[#allocation2 + $0x60] sm:$0xff]
      %v6313 = vld [vmem:[#allocation2 + $0x68] sm:$0xff]
      %v6314 = vld [vmem:[#allocation2 + $0x70] sm:$0xff]
      %v6315 = vld [vmem:[#allocation2 + $0x78] sm:$0xff]
      %v6316 = vld [vmem:[#allocation2 + $0x80] sm:$0xff]
      %v6317 = vld [vmem:[#allocation2 + $0x88] sm:$0xff]
      %v6318 = vld [vmem:[#allocation2 + $0x90] sm:$0xff]
      %v6319 = vld [vmem:[#allocation2 + $0x98] sm:$0xff]
      %v6320 = vld [vmem:[#allocation2 + $0xa0] sm:$0xff]
      %v6321 = vld [vmem:[#allocation2 + $0xa8] sm:$0xff]
      %v6322 = vld [vmem:[#allocation2 + $0xb0] sm:$0xff]
      %v6323 = vld [vmem:[#allocation2 + $0xb8] sm:$0xff]
      %v6324 = vld [vmem:[#allocation2 + $0xc0] sm:$0xff]
      %v6325 = vld [vmem:[#allocation2 + $0xc8] sm:$0xff]
      %v6326 = vld [vmem:[#allocation2 + $0xd0] sm:$0xff]
      %v6327 = vld [vmem:[#allocation2 + $0xd8] sm:$0xff]
      %v6328 = vld [vmem:[#allocation2 + $0xe0] sm:$0xff]
      %v6329 = vld [vmem:[#allocation2 + $0xe8] sm:$0xff]
      %v6330 = vld [vmem:[#allocation2 + $0xf0] sm:$0xff]
      %v6331 = vld [vmem:[#allocation2 + $0xf8] sm:$0xff]
      %v6332 = vadd.f32 %v6300, %v6174
      %v6333 = vadd.f32 %v6301, %v6177
      %v6334 = vadd.f32 %v6302, %v6182
      %v6335 = vadd.f32 %v6303, %v6185
      %v6336 = vadd.f32 %v6304, %v6190
      %v6337 = vadd.f32 %v6305, %v6193
      %v6338 = vadd.f32 %v6306, %v6198
      %v6339 = vadd.f32 %v6307, %v6201
      %v6340 = vadd.f32 %v6308, %v6206
      %v6341 = vadd.f32 %v6309, %v6209
      %v6342 = vadd.f32 %v6310, %v6214
      %v6343 = vadd.f32 %v6311, %v6217
      %v6344 = vadd.f32 %v6312, %v6222
      %v6345 = vadd.f32 %v6313, %v6225
      %v6346 = vadd.f32 %v6314, %v6230
      %v6347 = vadd.f32 %v6315, %v6233
      %v6348 = vadd.f32 %v6316, %v6238
      %v6349 = vadd.f32 %v6317, %v6241
      %v6350 = vadd.f32 %v6318, %v6246
      %v6351 = vadd.f32 %v6319, %v6249
      %v6352 = vadd.f32 %v6320, %v6254
      %v6353 = vadd.f32 %v6321, %v6257
      %v6354 = vadd.f32 %v6322, %v6262
      %v6355 = vadd.f32 %v6323, %v6265
      %v6356 = vadd.f32 %v6324, %v6270
      %v6357 = vadd.f32 %v6325, %v6273
      %v6358 = vadd.f32 %v6326, %v6278
      %v6359 = vadd.f32 %v6327, %v6281
      %v6360 = vadd.f32 %v6328, %v6286
      %v6361 = vadd.f32 %v6329, %v6289
      %v6362 = vadd.f32 %v6330, %v6294
      %v6363 = vadd.f32 %v6331, %v6297
      %6364 = vst [vmem:[#allocation2] sm:$0xff] %v6332
      %6365 = vst [vmem:[#allocation2 + $0x8] sm:$0xff] %v6333
      %6366 = vst [vmem:[#allocation2 + $0x10] sm:$0xff] %v6334
      %6367 = vst [vmem:[#allocation2 + $0x18] sm:$0xff] %v6335
      %6368 = vst [vmem:[#allocation2 + $0x20] sm:$0xff] %v6336
      %6369 = vst [vmem:[#allocation2 + $0x28] sm:$0xff] %v6337
      %6370 = vst [vmem:[#allocation2 + $0x30] sm:$0xff] %v6338
      %6371 = vst [vmem:[#allocation2 + $0x38] sm:$0xff] %v6339
      %6372 = vst [vmem:[#allocation2 + $0x40] sm:$0xff] %v6340
      %6373 = vst [vmem:[#allocation2 + $0x48] sm:$0xff] %v6341
      %6374 = vst [vmem:[#allocation2 + $0x50] sm:$0xff] %v6342
      %6375 = vst [vmem:[#allocation2 + $0x58] sm:$0xff] %v6343
      %6376 = vst [vmem:[#allocation2 + $0x60] sm:$0xff] %v6344
      %6377 = vst [vmem:[#allocation2 + $0x68] sm:$0xff] %v6345
      %6378 = vst [vmem:[#allocation2 + $0x70] sm:$0xff] %v6346
      %6379 = vst [vmem:[#allocation2 + $0x78] sm:$0xff] %v6347
      %6380 = vst [vmem:[#allocation2 + $0x80] sm:$0xff] %v6348
      %6381 = vst [vmem:[#allocation2 + $0x88] sm:$0xff] %v6349
      %6382 = vst [vmem:[#allocation2 + $0x90] sm:$0xff] %v6350
      %6383 = vst [vmem:[#allocation2 + $0x98] sm:$0xff] %v6351
      %6384 = vst [vmem:[#allocation2 + $0xa0] sm:$0xff] %v6352
      %6385 = vst [vmem:[#allocation2 + $0xa8] sm:$0xff] %v6353
      %6386 = vst [vmem:[#allocation2 + $0xb0] sm:$0xff] %v6354
      %6387 = vst [vmem:[#allocation2 + $0xb8] sm:$0xff] %v6355
      %6388 = vst [vmem:[#allocation2 + $0xc0] sm:$0xff] %v6356
      %6389 = vst [vmem:[#allocation2 + $0xc8] sm:$0xff] %v6357
      %6390 = vst [vmem:[#allocation2 + $0xd0] sm:$0xff] %v6358
      %6391 = vst [vmem:[#allocation2 + $0xd8] sm:$0xff] %v6359
      %6392 = vst [vmem:[#allocation2 + $0xe0] sm:$0xff] %v6360
      %6393 = vst [vmem:[#allocation2 + $0xe8] sm:$0xff] %v6361
      %6394 = vst [vmem:[#allocation2 + $0xf0] sm:$0xff] %v6362
      %6395 = vst [vmem:[#allocation2 + $0xf8] sm:$0xff] %v6363
      %v6396 = vld [vmem:[#allocation2] sm:$0xff]
      %v6397 = vld [vmem:[#allocation2 + $0x8] sm:$0xff]
      %v6398 = vld [vmem:[#allocation2 + $0x10] sm:$0xff]
      %v6399 = vld [vmem:[#allocation2 + $0x18] sm:$0xff]
      %v6400 = vld [vmem:[#allocation2 + $0x20] sm:$0xff]
      %v6401 = vld [vmem:[#allocation2 + $0x28] sm:$0xff]
      %v6402 = vld [vmem:[#allocation2 + $0x30] sm:$0xff]
      %v6403 = vld [vmem:[#allocation2 + $0x38] sm:$0xff]
      %v6404 = vld [vmem:[#allocation2 + $0x40] sm:$0xff]
      %v6405 = vld [vmem:[#allocation2 + $0x48] sm:$0xff]
      %v6406 = vld [vmem:[#allocation2 + $0x50] sm:$0xff]
      %v6407 = vld [vmem:[#allocation2 + $0x58] sm:$0xff]
      %v6408 = vld [vmem:[#allocation2 + $0x60] sm:$0xff]
      %v6409 = vld [vmem:[#allocation2 + $0x68] sm:$0xff]
      %v6410 = vld [vmem:[#allocation2 + $0x70] sm:$0xff]
      %v6411 = vld [vmem:[#allocation2 + $0x78] sm:$0xff]
      %v6412 = vld [vmem:[#allocation2 + $0x80] sm:$0xff]
      %v6413 = vld [vmem:[#allocation2 + $0x88] sm:$0xff]
      %v6414 = vld [vmem:[#allocation2 + $0x90] sm:$0xff]
      %v6415 = vld [vmem:[#allocation2 + $0x98] sm:$0xff]
      %v6416 = vld [vmem:[#allocation2 + $0xa0] sm:$0xff]
      %v6417 = vld [vmem:[#allocation2 + $0xa8] sm:$0xff]
      %v6418 = vld [vmem:[#allocation2 + $0xb0] sm:$0xff]
      %v6419 = vld [vmem:[#allocation2 + $0xb8] sm:$0xff]
      %v6420 = vld [vmem:[#allocation2 + $0xc0] sm:$0xff]
      %v6421 = vld [vmem:[#allocation2 + $0xc8] sm:$0xff]
      %v6422 = vld [vmem:[#allocation2 + $0xd0] sm:$0xff]
      %v6423 = vld [vmem:[#allocation2 + $0xd8] sm:$0xff]
      %v6424 = vld [vmem:[#allocation2 + $0xe0] sm:$0xff]
      %v6425 = vld [vmem:[#allocation2 + $0xe8] sm:$0xff]
      %v6426 = vld [vmem:[#allocation2 + $0xf0] sm:$0xff]
      %v6427 = vld [vmem:[#allocation2 + $0xf8] sm:$0xff]
      %v6428 = vld [vmem:[%s659] sm:$0x1]
      %v6430 = vlaneseq
      %v6431 = vshrl.u32 %v6430, 7
      %v6432 = vsub.s32 0, %v6431
      %v6433 = vrot.slane %v6428, %v6432
      %v6435 = vadd.f32 %v6396, %v6433
      %v6436 = vadd.f32 %v6397, %v6433
      %v6437 = vadd.f32 %v6398, %v6433
      %v6438 = vadd.f32 %v6399, %v6433
      %v6439 = vadd.f32 %v6400, %v6433
      %v6440 = vadd.f32 %v6401, %v6433
      %v6441 = vadd.f32 %v6402, %v6433
      %v6442 = vadd.f32 %v6403, %v6433
      %v6443 = vadd.f32 %v6404, %v6433
      %v6444 = vadd.f32 %v6405, %v6433
      %v6445 = vadd.f32 %v6406, %v6433
      %v6446 = vadd.f32 %v6407, %v6433
      %v6447 = vadd.f32 %v6408, %v6433
      %v6448 = vadd.f32 %v6409, %v6433
      %v6449 = vadd.f32 %v6410, %v6433
      %v6450 = vadd.f32 %v6411, %v6433
      %v6451 = vadd.f32 %v6412, %v6433
      %v6452 = vadd.f32 %v6413, %v6433
      %v6453 = vadd.f32 %v6414, %v6433
      %v6454 = vadd.f32 %v6415, %v6433
      %v6455 = vadd.f32 %v6416, %v6433
      %v6456 = vadd.f32 %v6417, %v6433
      %v6457 = vadd.f32 %v6418, %v6433
      %v6458 = vadd.f32 %v6419, %v6433
      %v6459 = vadd.f32 %v6420, %v6433
      %v6460 = vadd.f32 %v6421, %v6433
      %v6461 = vadd.f32 %v6422, %v6433
      %v6462 = vadd.f32 %v6423, %v6433
      %v6463 = vadd.f32 %v6424, %v6433
      %v6464 = vadd.f32 %v6425, %v6433
      %v6465 = vadd.f32 %v6426, %v6433
      %v6466 = vadd.f32 %v6427, %v6433
      %v6467 = vmax.f32 %v6435, 0.0
      %v6468 = vmax.f32 %v6436, 0.0
      %v6469 = vmax.f32 %v6437, 0.0
      %v6470 = vmax.f32 %v6438, 0.0
      %v6471 = vmax.f32 %v6439, 0.0
      %v6472 = vmax.f32 %v6440, 0.0
      %v6473 = vmax.f32 %v6441, 0.0
      %v6474 = vmax.f32 %v6442, 0.0
      %v6475 = vmax.f32 %v6443, 0.0
      %v6476 = vmax.f32 %v6444, 0.0
      %v6477 = vmax.f32 %v6445, 0.0
      %v6478 = vmax.f32 %v6446, 0.0
      %v6479 = vmax.f32 %v6447, 0.0
      %v6480 = vmax.f32 %v6448, 0.0
      %v6481 = vmax.f32 %v6449, 0.0
      %v6482 = vmax.f32 %v6450, 0.0
      %v6483 = vmax.f32 %v6451, 0.0
      %v6484 = vmax.f32 %v6452, 0.0
      %v6485 = vmax.f32 %v6453, 0.0
      %v6486 = vmax.f32 %v6454, 0.0
      %v6487 = vmax.f32 %v6455, 0.0
      %v6488 = vmax.f32 %v6456, 0.0
      %v6489 = vmax.f32 %v6457, 0.0
      %v6490 = vmax.f32 %v6458, 0.0
      %v6491 = vmax.f32 %v6459, 0.0
      %v6492 = vmax.f32 %v6460, 0.0
      %v6493 = vmax.f32 %v6461, 0.0
      %v6494 = vmax.f32 %v6462, 0.0
      %v6495 = vmax.f32 %v6463, 0.0
      %v6496 = vmax.f32 %v6464, 0.0
      %v6497 = vmax.f32 %v6465, 0.0
      %v6498 = vmax.f32 %v6466, 0.0
      %v6499 = vld [vmem:[%s664] sm:$0xff]
      %v6500 = vld [vmem:[%s664 + $0x8] sm:$0xff]
      %v6501 = vld [vmem:[%s664 + $0x10] sm:$0xff]
      %v6502 = vld [vmem:[%s664 + $0x18] sm:$0xff]
      %v6503 = vld [vmem:[%s664 + $0x20] sm:$0xff]
      %v6504 = vld [vmem:[%s664 + $0x28] sm:$0xff]
      %v6505 = vld [vmem:[%s664 + $0x30] sm:$0xff]
      %v6506 = vld [vmem:[%s664 + $0x38] sm:$0xff]
      %v6507 = vld [vmem:[%s664 + $0x40] sm:$0xff]
      %v6508 = vld [vmem:[%s664 + $0x48] sm:$0xff]
      %v6509 = vld [vmem:[%s664 + $0x50] sm:$0xff]
      %v6510 = vld [vmem:[%s664 + $0x58] sm:$0xff]
      %v6511 = vld [vmem:[%s664 + $0x60] sm:$0xff]
      %v6512 = vld [vmem:[%s664 + $0x68] sm:$0xff]
      %v6513 = vld [vmem:[%s664 + $0x70] sm:$0xff]
      %v6514 = vld [vmem:[%s664 + $0x78] sm:$0xff]
      %v6515 = vld [vmem:[%s664 + $0x80] sm:$0xff]
      %v6516 = vld [vmem:[%s664 + $0x88] sm:$0xff]
      %v6517 = vld [vmem:[%s664 + $0x90] sm:$0xff]
      %v6518 = vld [vmem:[%s664 + $0x98] sm:$0xff]
      %v6519 = vld [vmem:[%s664 + $0xa0] sm:$0xff]
      %v6520 = vld [vmem:[%s664 + $0xa8] sm:$0xff]
      %v6521 = vld [vmem:[%s664 + $0xb0] sm:$0xff]
      %v6522 = vld [vmem:[%s664 + $0xb8] sm:$0xff]
      %v6523 = vld [vmem:[%s664 + $0xc0] sm:$0xff]
      %v6524 = vld [vmem:[%s664 + $0xc8] sm:$0xff]
      %v6525 = vld [vmem:[%s664 + $0xd0] sm:$0xff]
      %v6526 = vld [vmem:[%s664 + $0xd8] sm:$0xff]
      %v6527 = vld [vmem:[%s664 + $0xe0] sm:$0xff]
      %v6528 = vld [vmem:[%s664 + $0xe8] sm:$0xff]
      %v6529 = vld [vmem:[%s664 + $0xf0] sm:$0xff]
      %v6530 = vld [vmem:[%s664 + $0xf8] sm:$0xff]
      %vm6531 = vcmp.gt.f32.partialorder %v6499, 0.0
      %vm6532 = vcmp.gt.f32.partialorder %v6500, 0.0
      %vm6533 = vcmp.gt.f32.partialorder %v6501, 0.0
      %vm6534 = vcmp.gt.f32.partialorder %v6502, 0.0
      %vm6535 = vcmp.gt.f32.partialorder %v6503, 0.0
      %vm6536 = vcmp.gt.f32.partialorder %v6504, 0.0
      %vm6537 = vcmp.gt.f32.partialorder %v6505, 0.0
      %vm6538 = vcmp.gt.f32.partialorder %v6506, 0.0
      %vm6539 = vcmp.gt.f32.partialorder %v6507, 0.0
      %vm6540 = vcmp.gt.f32.partialorder %v6508, 0.0
      %vm6541 = vcmp.gt.f32.partialorder %v6509, 0.0
      %vm6542 = vcmp.gt.f32.partialorder %v6510, 0.0
      %vm6543 = vcmp.gt.f32.partialorder %v6511, 0.0
      %vm6544 = vcmp.gt.f32.partialorder %v6512, 0.0
      %vm6545 = vcmp.gt.f32.partialorder %v6513, 0.0
      %vm6546 = vcmp.gt.f32.partialorder %v6514, 0.0
      %vm6547 = vcmp.gt.f32.partialorder %v6515, 0.0
      %vm6548 = vcmp.gt.f32.partialorder %v6516, 0.0
      %vm6549 = vcmp.gt.f32.partialorder %v6517, 0.0
      %vm6550 = vcmp.gt.f32.partialorder %v6518, 0.0
      %vm6551 = vcmp.gt.f32.partialorder %v6519, 0.0
      %vm6552 = vcmp.gt.f32.partialorder %v6520, 0.0
      %vm6553 = vcmp.gt.f32.partialorder %v6521, 0.0
      %vm6554 = vcmp.gt.f32.partialorder %v6522, 0.0
      %vm6555 = vcmp.gt.f32.partialorder %v6523, 0.0
      %vm6556 = vcmp.gt.f32.partialorder %v6524, 0.0
      %vm6557 = vcmp.gt.f32.partialorder %v6525, 0.0
      %vm6558 = vcmp.gt.f32.partialorder %v6526, 0.0
      %vm6559 = vcmp.gt.f32.partialorder %v6527, 0.0
      %vm6560 = vcmp.gt.f32.partialorder %v6528, 0.0
      %vm6561 = vcmp.gt.f32.partialorder %v6529, 0.0
      %vm6562 = vcmp.gt.f32.partialorder %v6530, 0.0
      %v6563 = vsel %vm6531, 1, 0
      %v6564 = vsel %vm6532, 1, 0
      %v6565 = vsel %vm6533, 1, 0
      %v6566 = vsel %vm6534, 1, 0
      %v6567 = vsel %vm6535, 1, 0
      %v6568 = vsel %vm6536, 1, 0
      %v6569 = vsel %vm6537, 1, 0
      %v6570 = vsel %vm6538, 1, 0
      %v6571 = vsel %vm6539, 1, 0
      %v6572 = vsel %vm6540, 1, 0
      %v6573 = vsel %vm6541, 1, 0
      %v6574 = vsel %vm6542, 1, 0
      %v6575 = vsel %vm6543, 1, 0
      %v6576 = vsel %vm6544, 1, 0
      %v6577 = vsel %vm6545, 1, 0
      %v6578 = vsel %vm6546, 1, 0
      %v6579 = vsel %vm6547, 1, 0
      %v6580 = vsel %vm6548, 1, 0
      %v6581 = vsel %vm6549, 1, 0
      %v6582 = vsel %vm6550, 1, 0
      %v6583 = vsel %vm6551, 1, 0
      %v6584 = vsel %vm6552, 1, 0
      %v6585 = vsel %vm6553, 1, 0
      %v6586 = vsel %vm6554, 1, 0
      %v6587 = vsel %vm6555, 1, 0
      %v6588 = vsel %vm6556, 1, 0
      %v6589 = vsel %vm6557, 1, 0
      %v6590 = vsel %vm6558, 1, 0
      %v6591 = vsel %vm6559, 1, 0
      %v6592 = vsel %vm6560, 1, 0
      %v6593 = vsel %vm6561, 1, 0
      %v6594 = vsel %vm6562, 1, 0
      %6595 = vset.pattern.permute.xlu0 0
      %6596 = vperm.xlu0 %6595, %v6563
      %v6597 = vpop.permute.xlu0 %6596
      %6598 = vset.pattern.permute.xlu0 0
      %6599 = vperm.xlu0 %6598, %v6564
      %v6600 = vpop.permute.xlu0 %6599
      %6601 = vset.pattern.permute.xlu0 0
      %6602 = vperm.xlu0 %6601, %v6565
      %v6603 = vpop.permute.xlu0 %6602
      %6604 = vset.pattern.permute.xlu0 0
      %6605 = vperm.xlu0 %6604, %v6566
      %v6606 = vpop.permute.xlu0 %6605
      %6607 = vset.pattern.permute.xlu0 0
      %6608 = vperm.xlu0 %6607, %v6567
      %v6609 = vpop.permute.xlu0 %6608
      %6610 = vset.pattern.permute.xlu0 0
      %6611 = vperm.xlu0 %6610, %v6568
      %v6612 = vpop.permute.xlu0 %6611
      %6613 = vset.pattern.permute.xlu0 0
      %6614 = vperm.xlu0 %6613, %v6569
      %v6615 = vpop.permute.xlu0 %6614
      %6616 = vset.pattern.permute.xlu0 0
      %6617 = vperm.xlu0 %6616, %v6570
      %v6618 = vpop.permute.xlu0 %6617
      %6619 = vset.pattern.permute.xlu0 0
      %6620 = vperm.xlu0 %6619, %v6571
      %v6621 = vpop.permute.xlu0 %6620
      %6622 = vset.pattern.permute.xlu0 0
      %6623 = vperm.xlu0 %6622, %v6572
      %v6624 = vpop.permute.xlu0 %6623
      %6625 = vset.pattern.permute.xlu0 0
      %6626 = vperm.xlu0 %6625, %v6573
      %v6627 = vpop.permute.xlu0 %6626
      %6628 = vset.pattern.permute.xlu0 0
      %6629 = vperm.xlu0 %6628, %v6574
      %v6630 = vpop.permute.xlu0 %6629
      %6631 = vset.pattern.permute.xlu0 0
      %6632 = vperm.xlu0 %6631, %v6575
      %v6633 = vpop.permute.xlu0 %6632
      %6634 = vset.pattern.permute.xlu0 0
      %6635 = vperm.xlu0 %6634, %v6576
      %v6636 = vpop.permute.xlu0 %6635
      %6637 = vset.pattern.permute.xlu0 0
      %6638 = vperm.xlu0 %6637, %v6577
      %v6639 = vpop.permute.xlu0 %6638
      %6640 = vset.pattern.permute.xlu0 0
      %6641 = vperm.xlu0 %6640, %v6578
      %v6642 = vpop.permute.xlu0 %6641
      %6643 = vset.pattern.permute.xlu0 0
      %6644 = vperm.xlu0 %6643, %v6579
      %v6645 = vpop.permute.xlu0 %6644
      %6646 = vset.pattern.permute.xlu0 0
      %6647 = vperm.xlu0 %6646, %v6580
      %v6648 = vpop.permute.xlu0 %6647
      %6649 = vset.pattern.permute.xlu0 0
      %6650 = vperm.xlu0 %6649, %v6581
      %v6651 = vpop.permute.xlu0 %6650
      %6652 = vset.pattern.permute.xlu0 0
      %6653 = vperm.xlu0 %6652, %v6582
      %v6654 = vpop.permute.xlu0 %6653
      %6655 = vset.pattern.permute.xlu0 0
      %6656 = vperm.xlu0 %6655, %v6583
      %v6657 = vpop.permute.xlu0 %6656
      %6658 = vset.pattern.permute.xlu0 0
      %6659 = vperm.xlu0 %6658, %v6584
      %v6660 = vpop.permute.xlu0 %6659
      %6661 = vset.pattern.permute.xlu0 0
      %6662 = vperm.xlu0 %6661, %v6585
      %v6663 = vpop.permute.xlu0 %6662
      %6664 = vset.pattern.permute.xlu0 0
      %6665 = vperm.xlu0 %6664, %v6586
      %v6666 = vpop.permute.xlu0 %6665
      %6667 = vset.pattern.permute.xlu0 0
      %6668 = vperm.xlu0 %6667, %v6587
      %v6669 = vpop.permute.xlu0 %6668
      %6670 = vset.pattern.permute.xlu0 0
      %6671 = vperm.xlu0 %6670, %v6588
      %v6672 = vpop.permute.xlu0 %6671
      %6673 = vset.pattern.permute.xlu0 0
      %6674 = vperm.xlu0 %6673, %v6589
      %v6675 = vpop.permute.xlu0 %6674
      %6676 = vset.pattern.permute.xlu0 0
      %6677 = vperm.xlu0 %6676, %v6590
      %v6678 = vpop.permute.xlu0 %6677
      %6679 = vset.pattern.permute.xlu0 0
      %6680 = vperm.xlu0 %6679, %v6591
      %v6681 = vpop.permute.xlu0 %6680
      %6682 = vset.pattern.permute.xlu0 0
      %6683 = vperm.xlu0 %6682, %v6592
      %v6684 = vpop.permute.xlu0 %6683
      %6685 = vset.pattern.permute.xlu0 0
      %6686 = vperm.xlu0 %6685, %v6593
      %v6687 = vpop.permute.xlu0 %6686
      %6688 = vset.pattern.permute.xlu0 0
      %6689 = vperm.xlu0 %6688, %v6594
      %v6690 = vpop.permute.xlu0 %6689
      %vm6691 = vcmp.eq.s32.totalorder %v6597, 1
      %vm6692 = vcmp.eq.s32.totalorder %v6600, 1
      %vm6693 = vcmp.eq.s32.totalorder %v6603, 1
      %vm6694 = vcmp.eq.s32.totalorder %v6606, 1
      %vm6695 = vcmp.eq.s32.totalorder %v6609, 1
      %vm6696 = vcmp.eq.s32.totalorder %v6612, 1
      %vm6697 = vcmp.eq.s32.totalorder %v6615, 1
      %vm6698 = vcmp.eq.s32.totalorder %v6618, 1
      %vm6699 = vcmp.eq.s32.totalorder %v6621, 1
      %vm6700 = vcmp.eq.s32.totalorder %v6624, 1
      %vm6701 = vcmp.eq.s32.totalorder %v6627, 1
      %vm6702 = vcmp.eq.s32.totalorder %v6630, 1
      %vm6703 = vcmp.eq.s32.totalorder %v6633, 1
      %vm6704 = vcmp.eq.s32.totalorder %v6636, 1
      %vm6705 = vcmp.eq.s32.totalorder %v6639, 1
      %vm6706 = vcmp.eq.s32.totalorder %v6642, 1
      %vm6707 = vcmp.eq.s32.totalorder %v6645, 1
      %vm6708 = vcmp.eq.s32.totalorder %v6648, 1
      %vm6709 = vcmp.eq.s32.totalorder %v6651, 1
      %vm6710 = vcmp.eq.s32.totalorder %v6654, 1
      %vm6711 = vcmp.eq.s32.totalorder %v6657, 1
      %vm6712 = vcmp.eq.s32.totalorder %v6660, 1
      %vm6713 = vcmp.eq.s32.totalorder %v6663, 1
      %vm6714 = vcmp.eq.s32.totalorder %v6666, 1
      %vm6715 = vcmp.eq.s32.totalorder %v6669, 1
      %vm6716 = vcmp.eq.s32.totalorder %v6672, 1
      %vm6717 = vcmp.eq.s32.totalorder %v6675, 1
      %vm6718 = vcmp.eq.s32.totalorder %v6678, 1
      %vm6719 = vcmp.eq.s32.totalorder %v6681, 1
      %vm6720 = vcmp.eq.s32.totalorder %v6684, 1
      %vm6721 = vcmp.eq.s32.totalorder %v6687, 1
      %vm6722 = vcmp.eq.s32.totalorder %v6690, 1
      %v6723 = vsel %vm6691, %v6467, 0.0
      %v6724 = vsel %vm6692, %v6468, 0.0
      %v6725 = vsel %vm6693, %v6469, 0.0
      %v6726 = vsel %vm6694, %v6470, 0.0
      %v6727 = vsel %vm6695, %v6471, 0.0
      %v6728 = vsel %vm6696, %v6472, 0.0
      %v6729 = vsel %vm6697, %v6473, 0.0
      %v6730 = vsel %vm6698, %v6474, 0.0
      %v6731 = vsel %vm6699, %v6475, 0.0
      %v6732 = vsel %vm6700, %v6476, 0.0
      %v6733 = vsel %vm6701, %v6477, 0.0
      %v6734 = vsel %vm6702, %v6478, 0.0
      %v6735 = vsel %vm6703, %v6479, 0.0
      %v6736 = vsel %vm6704, %v6480, 0.0
      %v6737 = vsel %vm6705, %v6481, 0.0
      %v6738 = vsel %vm6706, %v6482, 0.0
      %v6739 = vsel %vm6707, %v6483, 0.0
      %v6740 = vsel %vm6708, %v6484, 0.0
      %v6741 = vsel %vm6709, %v6485, 0.0
      %v6742 = vsel %vm6710, %v6486, 0.0
      %v6743 = vsel %vm6711, %v6487, 0.0
      %v6744 = vsel %vm6712, %v6488, 0.0
      %v6745 = vsel %vm6713, %v6489, 0.0
      %v6746 = vsel %vm6714, %v6490, 0.0
      %v6747 = vsel %vm6715, %v6491, 0.0
      %v6748 = vsel %vm6716, %v6492, 0.0
      %v6749 = vsel %vm6717, %v6493, 0.0
      %v6750 = vsel %vm6718, %v6494, 0.0
      %v6751 = vsel %vm6719, %v6495, 0.0
      %v6752 = vsel %vm6720, %v6496, 0.0
      %v6753 = vsel %vm6721, %v6497, 0.0
      %v6754 = vsel %vm6722, %v6498, 0.0
      %v6755 = vpack.c.bf16 %v6724, %v6723
      %v6756 = vpack.c.bf16 %v6726, %v6725
      %v6757 = vpack.c.bf16 %v6728, %v6727
      %v6758 = vpack.c.bf16 %v6730, %v6729
      %v6759 = vpack.c.bf16 %v6732, %v6731
      %v6760 = vpack.c.bf16 %v6734, %v6733
      %v6761 = vpack.c.bf16 %v6736, %v6735
      %v6762 = vpack.c.bf16 %v6738, %v6737
      %v6763 = vpack.c.bf16 %v6740, %v6739
      %v6764 = vpack.c.bf16 %v6742, %v6741
      %v6765 = vpack.c.bf16 %v6744, %v6743
      %v6766 = vpack.c.bf16 %v6746, %v6745
      %v6767 = vpack.c.bf16 %v6748, %v6747
      %v6768 = vpack.c.bf16 %v6750, %v6749
      %v6769 = vpack.c.bf16 %v6752, %v6751
      %v6770 = vpack.c.bf16 %v6754, %v6753
      %v6787 = vunpack.c.l.b16 %v6755
      %v6788 = vunpack.c.h.b16 %v6755
      %v6789 = vunpack.c.l.b16 %v6756
      %v6790 = vunpack.c.h.b16 %v6756
      %v6791 = vunpack.c.l.b16 %v6757
      %v6792 = vunpack.c.h.b16 %v6757
      %v6793 = vunpack.c.l.b16 %v6758
      %v6794 = vunpack.c.h.b16 %v6758
      %v6795 = vunpack.c.l.b16 %v6759
      %v6796 = vunpack.c.h.b16 %v6759
      %v6797 = vunpack.c.l.b16 %v6760
      %v6798 = vunpack.c.h.b16 %v6760
      %v6799 = vunpack.c.l.b16 %v6761
      %v6800 = vunpack.c.h.b16 %v6761
      %v6801 = vunpack.c.l.b16 %v6762
      %v6802 = vunpack.c.h.b16 %v6762
      %v6803 = vunpack.c.l.b16 %v6763
      %v6804 = vunpack.c.h.b16 %v6763
      %v6805 = vunpack.c.l.b16 %v6764
      %v6806 = vunpack.c.h.b16 %v6764
      %v6807 = vunpack.c.l.b16 %v6765
      %v6808 = vunpack.c.h.b16 %v6765
      %v6809 = vunpack.c.l.b16 %v6766
      %v6810 = vunpack.c.h.b16 %v6766
      %v6811 = vunpack.c.l.b16 %v6767
      %v6812 = vunpack.c.h.b16 %v6767
      %v6813 = vunpack.c.l.b16 %v6768
      %v6814 = vunpack.c.h.b16 %v6768
      %v6815 = vunpack.c.l.b16 %v6769
      %v6816 = vunpack.c.h.b16 %v6769
      %v6817 = vunpack.c.l.b16 %v6770
      %v6818 = vunpack.c.h.b16 %v6770
      %v6819 = vpack.c.b16 %v6787, %v6787
      %v6820 = vpack.c.b16 %v6788, %v6788
      %v6821 = vpack.c.b16 %v6789, %v6789
      %v6822 = vpack.c.b16 %v6790, %v6790
      %v6823 = vpack.c.b16 %v6791, %v6791
      %v6824 = vpack.c.b16 %v6792, %v6792
      %v6825 = vpack.c.b16 %v6793, %v6793
      %v6826 = vpack.c.b16 %v6794, %v6794
      %v6827 = vpack.c.b16 %v6795, %v6795
      %v6828 = vpack.c.b16 %v6796, %v6796
      %v6829 = vpack.c.b16 %v6797, %v6797
      %v6830 = vpack.c.b16 %v6798, %v6798
      %v6831 = vpack.c.b16 %v6799, %v6799
      %v6832 = vpack.c.b16 %v6800, %v6800
      %v6833 = vpack.c.b16 %v6801, %v6801
      %v6834 = vpack.c.b16 %v6802, %v6802
      %v6835 = vpack.c.b16 %v6803, %v6803
      %v6836 = vpack.c.b16 %v6804, %v6804
      %v6837 = vpack.c.b16 %v6805, %v6805
      %v6838 = vpack.c.b16 %v6806, %v6806
      %v6839 = vpack.c.b16 %v6807, %v6807
      %v6840 = vpack.c.b16 %v6808, %v6808
      %v6841 = vpack.c.b16 %v6809, %v6809
      %v6842 = vpack.c.b16 %v6810, %v6810
      %v6843 = vpack.c.b16 %v6811, %v6811
      %v6844 = vpack.c.b16 %v6812, %v6812
      %v6845 = vpack.c.b16 %v6813, %v6813
      %v6846 = vpack.c.b16 %v6814, %v6814
      %v6847 = vpack.c.b16 %v6815, %v6815
      %v6848 = vpack.c.b16 %v6816, %v6816
      %v6849 = vpack.c.b16 %v6817, %v6817
      %v6850 = vpack.c.b16 %v6818, %v6818
      %6883 = vst [vmem:[%s673] sm:$0xf] %v6819
      %6884 = vst [vmem:[%s673 + $0x4] sm:$0xf] %v6820
      %6885 = vst [vmem:[%s673 + $0x8] sm:$0xf] %v6821
      %6886 = vst [vmem:[%s673 + $0xc] sm:$0xf] %v6822
      %6887 = vst [vmem:[%s673 + $0x10] sm:$0xf] %v6823
      %6888 = vst [vmem:[%s673 + $0x14] sm:$0xf] %v6824
      %6889 = vst [vmem:[%s673 + $0x18] sm:$0xf] %v6825
      %6890 = vst [vmem:[%s673 + $0x1c] sm:$0xf] %v6826
      %6891 = vst [vmem:[%s673 + $0x20] sm:$0xf] %v6827
      %6892 = vst [vmem:[%s673 + $0x24] sm:$0xf] %v6828
      %6893 = vst [vmem:[%s673 + $0x28] sm:$0xf] %v6829
      %6894 = vst [vmem:[%s673 + $0x2c] sm:$0xf] %v6830
      %6895 = vst [vmem:[%s673 + $0x30] sm:$0xf] %v6831
      %6896 = vst [vmem:[%s673 + $0x34] sm:$0xf] %v6832
      %6897 = vst [vmem:[%s673 + $0x38] sm:$0xf] %v6833
      %6898 = vst [vmem:[%s673 + $0x3c] sm:$0xf] %v6834
      %6899 = vst [vmem:[%s673 + $0x40] sm:$0xf] %v6835
      %6900 = vst [vmem:[%s673 + $0x44] sm:$0xf] %v6836
      %6901 = vst [vmem:[%s673 + $0x48] sm:$0xf] %v6837
      %6902 = vst [vmem:[%s673 + $0x4c] sm:$0xf] %v6838
      %6903 = vst [vmem:[%s673 + $0x50] sm:$0xf] %v6839
      %6904 = vst [vmem:[%s673 + $0x54] sm:$0xf] %v6840
      %6905 = vst [vmem:[%s673 + $0x58] sm:$0xf] %v6841
      %6906 = vst [vmem:[%s673 + $0x5c] sm:$0xf] %v6842
      %6907 = vst [vmem:[%s673 + $0x60] sm:$0xf] %v6843
      %6908 = vst [vmem:[%s673 + $0x64] sm:$0xf] %v6844
      %6909 = vst [vmem:[%s673 + $0x68] sm:$0xf] %v6845
      %6910 = vst [vmem:[%s673 + $0x6c] sm:$0xf] %v6846
      %6911 = vst [vmem:[%s673 + $0x70] sm:$0xf] %v6847
      %6912 = vst [vmem:[%s673 + $0x74] sm:$0xf] %v6848
      %6913 = vst [vmem:[%s673 + $0x78] sm:$0xf] %v6849
      %6914 = vst [vmem:[%s673 + $0x7c] sm:$0xf] %v6850
      %s6915 = smul.u32 32, %s26
      %p6916 = scmp.lt.s32.totalorder %s6915, 127
      %s6917 = scalar_select %p6916, %s6915, 127
      %p6918 = scmp.lt.s32.totalorder %s25, 0
      %s6919 = scalar_select %p6918, %s25, 0
      %s6920 = sadd.s32 %s6919, %s6917
      %s6921 = smul.addr %s6920, 4
      %s6922 = scalar_lea.vmem %s10, %s6921
      // Predicated region
      $region61: #{unet_up_forward.4} parent=59 // pred_check
        %p6923 = pneg %p345
      $region62: #{unet_up_forward.4} parent=59 // pred_check_branch
        %6925 = sbr.rel (%p6923) target = $region64
      $region63: #{unet_up_forward.4} parent=59 // pred_region
        %s6926 = smul.u32 32, %s26
      $region64: #{unet_up_forward.4} parent=59 // pred_fallthru
        _
    $region60: #{unet_up_forward.4} parent=5 // pred_fallthru
      _
    %p6927 = scmp.le.s32.totalorder 2, %s16
    // Predicated region
    $region65: #{unet_up_forward.4} parent=5 // pred_check
      %p6928 = pneg %p6927
    $region66: #{unet_up_forward.4} parent=5 // pred_check_branch
      %6930 = sbr.rel (%p6928) target = $region68
    $region67: #{unet_up_forward.4} parent=5 // pred_region
      %s6931 = ssub.s32 %s16, 2
      // Predicated region
      $region69: #{unet_up_forward.4} parent=67 // pred_check
        %p6932 = pneg %p351
      $region70: #{unet_up_forward.4} parent=67 // pred_check_branch
        %6934 = sbr.rel (%p6932) target = $region72
      $region71: #{unet_up_forward.4} parent=67 // pred_region
        %s6935 = smul.u32 32, %s28
        %p6936 = scmp.lt.s32.totalorder %s6935, 127
        %s6937 = scalar_select %p6936, %s6935, 127
        %p6938 = scmp.lt.s32.totalorder %s27, 0
        %s6939 = scalar_select %p6938, %s27, 0
        %s6940 = sadd.s32 %s6939, %s6937
        %s6941 = smul.addr %s6940, 4
        %s6942 = scalar_lea.vmem %s10, %s6941
      $region72: #{unet_up_forward.4} parent=67 // pred_fallthru
        _
    $region68: #{unet_up_forward.4} parent=5 // pred_fallthru
      _
  $region6: #{unet_up_forward.4} parent=0 // loop_footer
    %s20 = sadd.s32 1, %s16
  $region7: #{unet_up_forward.4} parent=0 // loop_footer_branch
    %15 = sbr.rel target = $region3
  $region8: #{unet_up_forward.4} parent=0 // loop_exit
    _

</llo_original>
